<compile_context>
chip_gen: v7x
topology: tpu7x:2x2x1
jax: 0.10.0
libtpu: 0.0.40
codegen_flags: <defaults>
</compile_context>

<pallas_src>
import functools

import numpy as np
import jax
import jax.numpy as jnp
from jax import lax
from jax.experimental import pallas as pl
from jax.experimental.pallas import tpu as pltpu


# ---------------------------------------------------------------------------
# helpers
# ---------------------------------------------------------------------------
def _shift_rows(x, d):
    """out[h] = x[h + d], zero-filled outside [0, H)."""
    if d == 0:
        return x
    h, wc = x.shape
    pad = jnp.zeros((abs(d), wc), x.dtype)
    if d > 0:
        return jnp.concatenate([x[d:, :], pad], axis=0)
    return jnp.concatenate([pad, x[:h + d, :]], axis=0)


# ---------------------------------------------------------------------------
# Pallas kernel (one image per grid step, lane-dense (H, W*C) layout)
# ---------------------------------------------------------------------------
def _translayer2_kernel(x_ref, mp_ref, gp_ref, gamma_ref, beta_ref,
                        whm_ref, hm_b_ref, wm_ref, wm_b_ref,
                        pwm_ref, tmask_ref, cw_ref, cb_ref,
                        aw1_ref, ab1_ref, aw2_ref, ab2_ref,
                        prw_ref, prb_ref,
                        o_ref, *, K, K2, mid, eps):
    _, Hh, WC = x_ref.shape
    x = x_ref[0]                                                # (H, W*C) f32

    # ---- LayerNorm4D: channel mean/var via per-pixel pooling matmul (f32) ---
    mean_b = jnp.dot(x, mp_ref[...], preferred_element_type=jnp.float32)
    xc = x - mean_b
    var_b = jnp.dot(xc * xc, mp_ref[...], preferred_element_type=jnp.float32)
    xn = xc * lax.rsqrt(var_b + eps) * gamma_ref[...] + beta_ref[...]

    # ---- h_mixer: Conv3d(1,1,(K,K,1)) over (C,H); one bf16 matmul per H-tap -
    P = K // 2
    h_acc = jnp.zeros((Hh, WC), jnp.float32)
    for jh in range(K):
        tap = _shift_rows(xn, jh - P).astype(jnp.bfloat16)
        h_acc = h_acc + jnp.dot(tap, whm_ref[jh],
                                preferred_element_type=jnp.float32)
    h_out = h_acc + hm_b_ref[0]

    # ---- w_mixer: Conv3d(1,1,(1,1,K)); all W-taps in one banded matmul ------
    xb = xn.astype(jnp.bfloat16)
    w_out = jnp.dot(xb, wm_ref[...],
                    preferred_element_type=jnp.float32) + wm_b_ref[0]

    # _hw = x + h_mixer(x) * w_mixer(x)
    hw = xn + h_out * w_out

    # ---- PConv: K2xK2 conv on the first T channels; one matmul per H-tap ----
    P2 = K2 // 2
    p_acc = jnp.zeros((Hh, WC), jnp.float32)
    for kh in range(K2):
        tap = _shift_rows(hw, kh - P2).astype(jnp.bfloat16)
        p_acc = p_acc + jnp.dot(tap, pwm_ref[kh],
                                preferred_element_type=jnp.float32)
    tm = tmask_ref[...]                          # (1, W*C): 1.0 on touched lanes
    hw2 = tm * p_acc + (1.0 - tm) * hw           # exact blend (tm is 0/1)

    # ---- c_mixer (1x1 conv) --------------------------------------------------
    h2b = hw2.astype(jnp.bfloat16)
    chw1 = jnp.dot(h2b, cw_ref[...],
                   preferred_element_type=jnp.float32) + cb_ref[...]

    # ---- channel attention (CALayer, RCAN-style squeeze/excite) -------------
    row_mean = jnp.dot(hw2, gp_ref[...],
                       preferred_element_type=jnp.float32)     # mean over W / channel
    pooled = jnp.mean(row_mean, axis=0, keepdims=True)         # (1, W*C) global mean
    a = ab2_ref[...]
    for m in range(mid):
        zm = jnp.sum(pooled * aw1_ref[m:m + 1, :], axis=-1,
                     keepdims=True) + ab1_ref[m]                # (1, 1)
        zm = jnp.maximum(zm, 0.0)
        a = a + zm * aw2_ref[m:m + 1, :]
    att = 1.0 / (1.0 + jnp.exp(-a))                             # (1, W*C)
    chw2 = hw2 * att

    # _chw = _hw + _chw1 * _chw2 ; proj ; outer residual
    chw = hw2 + chw1 * chw2
    y = jnp.dot(chw.astype(jnp.bfloat16), prw_ref[...],
                preferred_element_type=jnp.float32) + prb_ref[...]
    o_ref[0] = x + y


def translayer2_forward(x_dense, packed, *, K, K2, mid, eps=1e-5):
    """x_dense: (B, H, W*C) f32 lane-dense input; returns same shape."""
    B, H, WC = x_dense.shape
    p = packed

    def vspec(arr):
        shape = tuple(arr.shape)
        return pl.BlockSpec(shape, lambda b, _n=len(shape): (0,) * _n)

    smem = pl.BlockSpec(memory_space=pltpu.MemorySpace.SMEM)

    in_specs = [
        pl.BlockSpec((1, H, WC), lambda b: (b, 0, 0)),   # x (lane-dense block)
        vspec(p['mp']), vspec(p['gp']),                  # pooling matrices (f32)
        vspec(p['gamma_t']), vspec(p['beta_t']),         # LN affine (tiled rows)
        vspec(p['whm']), smem,                           # h_mixer mats, bias
        vspec(p['wm']), smem,                            # w_mixer mat, bias
        vspec(p['pwm']), vspec(p['tmask']),              # PConv mats, touched mask
        vspec(p['cw']), vspec(p['cb_t']),                # c_mixer
        vspec(p['aw1_t']), smem,                         # CA conv1 w, b
        vspec(p['aw2_t']), vspec(p['ab2_t']),            # CA conv2 w, b
        vspec(p['prw']), vspec(p['prb_t']),              # proj
    ]
    out_spec = pl.BlockSpec((1, H, WC), lambda b: (b, 0, 0))

    kernel = functools.partial(_translayer2_kernel, K=K, K2=K2, mid=mid, eps=eps)
    return pl.pallas_call(
        kernel,
        out_shape=jax.ShapeDtypeStruct((B, H, WC), jnp.float32),
        grid=(B,),
        in_specs=in_specs,
        out_specs=out_spec,
        input_output_aliases={0: 0},
        compiler_params=pltpu.CompilerParams(
            dimension_semantics=("parallel",),
            vmem_limit_bytes=32 * 1024 * 1024),
    )(x_dense, p['mp'], p['gp'], p['gamma_t'], p['beta_t'],
      p['whm'], p['hm_b'], p['wm'], p['wm_b'],
      p['pwm'], p['tmask'], p['cw'], p['cb_t'],
      p['aw1_t'], p['ab1'], p['aw2_t'], p['ab2_t'],
      p['prw'], p['prb_t'])


# ---------------------------------------------------------------------------
# host-side packing of raw (torch-layout) weights into lane-dense matrices
# ---------------------------------------------------------------------------
def pack_params(raw, H, W):
    (gamma, beta, hm_w, hm_b, wm_w, wm_b, pconv_w, cw, cb,
     aw1, ab1, aw2, ab2, prw, prb) = [np.asarray(p, np.float32) for p in raw]
    C = gamma.shape[0]
    T = pconv_w.shape[0]
    MID = aw1.shape[0]
    K = hm_w.shape[0]
    K2 = pconv_w.shape[2]
    P, P2 = K // 2, K2 // 2
    WC = W * C
    eyeC = np.eye(C, dtype=np.float32)
    eyeW = np.eye(W, dtype=np.float32)

    def wshift(d):
        m = np.zeros((W, W), np.float32)
        for wo in range(W):
            wi = wo + d
            if 0 <= wi < W:
                m[wi, wo] = 1.0
        return m

    # LayerNorm: per-pixel channel-mean broadcast
    mp = np.kron(eyeW, np.full((C, C), 1.0 / C, np.float32))
    # CALayer: per-channel mean over W (broadcast to every pixel slot)
    gp = np.kron(np.full((W, W), 1.0 / W, np.float32), eyeC)

    # h_mixer: per-H-tap banded channel-mixing matrices, block-diag over pixels
    whm = np.zeros((K, WC, WC), np.float32)
    for jh in range(K):
        s = np.zeros((C, C), np.float32)
        for kd in range(K):
            d = kd - P
            for co in range(C):
                ci = co + d
                if 0 <= ci < C:
                    s[ci, co] = hm_w[kd, jh]
            # (channel zero padding handled by leaving out-of-range ci at zero)
        whm[jh] = np.kron(eyeW, s)

    # w_mixer: banded pixel mixing, channel-diagonal (W zero padding included)
    wm = np.zeros((WC, WC), np.float32)
    for kw in range(K):
        wm += wm_w[kw] * np.kron(wshift(kw - P), eyeC)

    # PConv: per-H-tap (pixel band x touched-channel block) matrices
    pwm = np.zeros((K2, WC, WC), np.float32)
    for kh in range(K2):
        for kw in range(K2):
            blk = np.zeros((C, C), np.float32)
            blk[:T, :T] = pconv_w[:, :, kh, kw].T        # [ci, co]
            pwm[kh] += np.kron(wshift(kw - P2), blk)

    # 1x1 convs as block-diagonal matrices (block [ci, co] = torch_w[co, ci])
    cw_bd = np.kron(eyeW, cw.T)
    prw_bd = np.kron(eyeW, prw.T)

    def tile_row(v):                                     # (C,) -> (1, W*C)
        return np.tile(np.asarray(v, np.float32).reshape(1, C), (1, W))

    gamma_t = tile_row(gamma)
    beta_t = tile_row(beta)
    cb_t = tile_row(cb)
    prb_t = tile_row(prb)
    ab2_t = tile_row(ab2)
    tmask = np.tile((np.arange(C) < T).astype(np.float32).reshape(1, C), (1, W))
    aw1_t = np.tile(aw1.reshape(MID, 1, C), (1, W, 1)).reshape(MID, WC) / W
    aw2_t = np.tile(aw2.T.reshape(MID, 1, C), (1, W, 1)).reshape(MID, WC)

    bf16 = jnp.bfloat16
    return dict(
        mp=jnp.asarray(mp), gp=jnp.asarray(gp),
        gamma_t=jnp.asarray(gamma_t), beta_t=jnp.asarray(beta_t),
        whm=jnp.asarray(whm, bf16), hm_b=jnp.asarray(hm_b, jnp.float32),
        wm=jnp.asarray(wm, bf16), wm_b=jnp.asarray(wm_b, jnp.float32),
        pwm=jnp.asarray(pwm, bf16), tmask=jnp.asarray(tmask),
        cw=jnp.asarray(cw_bd, bf16), cb_t=jnp.asarray(cb_t),
        aw1_t=jnp.asarray(aw1_t), ab1=jnp.asarray(ab1, jnp.float32),
        aw2_t=jnp.asarray(aw2_t), ab2_t=jnp.asarray(ab2_t),
        prw=jnp.asarray(prw_bd, bf16), prb_t=jnp.asarray(prb_t),
    )


# ---------------------------------------------------------------------------
# plain-JAX reference built directly from the raw (torch-layout) weights,
# with bf16 operand rounding at the same points as the kernel
# ---------------------------------------------------------------------------
def translayer2_reference(x_nhwc, raw, *, K, K2, T, eps=1e-5):
    (gamma, beta, hm_w, hm_b, wm_w, wm_b, pconv_w, cw, cb,
     aw1, ab1, aw2, ab2, prw, prb) = raw
    B, H, W, C = x_nhwc.shape
    P, P2 = K // 2, K2 // 2
    f32 = jnp.float32

    def bf(a):                                   # emulate bf16 MXU operands
        return a.astype(jnp.bfloat16).astype(f32)

    x = x_nhwc
    u = jnp.mean(x, axis=-1, keepdims=True)
    xc = x - u
    s = jnp.mean(xc * xc, axis=-1, keepdims=True)
    xn = xc * lax.rsqrt(s + eps) * gamma + beta

    xb = bf(xn)
    hm_wr = bf(hm_w)
    xpad = jnp.pad(xb, ((0, 0), (P, P), (0, 0), (P, P)))     # pad H and C
    h_out = jnp.zeros_like(x)
    for kd in range(K):
        for kh in range(K):
            h_out = h_out + hm_wr[kd, kh] * xpad[:, kh:kh + H, :, kd:kd + C]
    h_out = h_out + hm_b[0]

    wm_wr = bf(wm_w)
    xpw = jnp.pad(xb, ((0, 0), (0, 0), (P, P), (0, 0)))      # pad W
    w_out = jnp.zeros_like(x)
    for kw in range(K):
        w_out = w_out + wm_wr[kw] * xpw[:, :, kw:kw + W, :]
    w_out = w_out + wm_b[0]

    hw = xn + h_out * w_out

    hb = bf(hw[..., :T])
    pwr = bf(pconv_w)                                        # (T, T, K2, K2)
    hpad = jnp.pad(hb, ((0, 0), (P2, P2), (P2, P2), (0, 0)))
    pc = jnp.zeros((B, H, W, T), f32)
    for kh in range(K2):
        for kw in range(K2):
            pc = pc + jnp.einsum('bhwi,oi->bhwo',
                                 hpad[:, kh:kh + H, kw:kw + W, :],
                                 pwr[:, :, kh, kw])
    hw2 = jnp.concatenate([pc, hw[..., T:]], axis=-1)

    chw1 = jnp.einsum('bhwi,oi->bhwo', bf(hw2), bf(cw)) + cb

    pooled = jnp.mean(hw2, axis=(1, 2))                      # (B, C)
    z = jnp.maximum(pooled @ aw1.T + ab1, 0.0)               # (B, MID)
    a = z @ aw2.T + ab2                                      # (B, C)
    att = 1.0 / (1.0 + jnp.exp(-a))
    chw2 = hw2 * att[:, None, None, :]

    chw = hw2 + chw1 * chw2
    y = jnp.einsum('bhwi,oi->bhwo', bf(chw), bf(prw)) + prb
    return x + y


# ---------------------------------------------------------------------------
# deterministic raw parameter construction (shapes follow the PyTorch __init__)
# ---------------------------------------------------------------------------
def init_raw_params(key, C, K, K2, T, MID):
    ks = jax.random.split(key, 16)

    def w(k, shape, scale=0.1):
        return scale * jax.random.normal(k, shape, dtype=jnp.float32)

    gamma = jnp.ones((C,), jnp.float32) + w(ks[0], (C,), 0.05)   # LayerNorm4D
    beta = w(ks[1], (C,), 0.05)
    hm_w = w(ks[2], (K, K))              # Conv3d(1,1,(K,K,1)) weight [kD, kH]
    hm_b = w(ks[3], (1,))
    wm_w = w(ks[4], (K,))                # Conv3d(1,1,(1,1,K)) weight [kW]
    wm_b = w(ks[5], (1,))
    pconv_w = w(ks[6], (T, T, K2, K2))   # PConv Conv2d weight [co, ci, kh, kw]
    cw = w(ks[7], (C, C))                # c_mixer 1x1 [co, ci]
    cb = w(ks[8], (C,))
    aw1 = w(ks[9], (MID, C))             # CALayer conv1 [mid, C]
    ab1 = w(ks[10], (MID,))
    aw2 = w(ks[11], (C, MID))            # CALayer conv2 [C, mid]
    ab2 = w(ks[12], (C,))
    prw = w(ks[13], (C, C))              # proj 1x1 [co, ci]
    prb = w(ks[14], (C,))
    return (gamma, beta, hm_w, hm_b, wm_w, wm_b, pconv_w, cw, cb,
            aw1, ab1, aw2, ab2, prw, prb)


# ---------------------------------------------------------------------------
if __name__ == "__main__":
    B, C, H, W = 2, 32, 16, 16           # planes=32
    K, K2, PRATIO2 = 3, 3, 4             # kernel_size=3, pks2=3, pratio2=4
    T = C // PRATIO2                     # PConv touched channels
    MID = max(C // 16, 1)                # CALayer reduction=16
    EPS = 1e-5

    key = jax.random.PRNGKey(0)
    kx, kp = jax.random.split(key)

    # PyTorch-style NCHW input
    x_nchw = jax.random.normal(kx, (B, C, H, W), dtype=jnp.float32)
    raw = init_raw_params(kp, C, K, K2, T, MID)

    # reference first (the kernel aliases/donates its input buffer)
    x_nhwc = jnp.transpose(x_nchw, (0, 2, 3, 1))
    y_ref_nhwc = translayer2_reference(x_nhwc, raw, K=K, K2=K2, T=T, eps=EPS)
    y_ref = jnp.transpose(y_ref_nhwc, (0, 3, 1, 2))
    jax.block_until_ready(y_ref)

    # kernel runs on a lane-dense (B, H, W*C) view; convert in/out
    packed = pack_params(raw, H, W)
    x_dense = x_nhwc.reshape(B, H, W * C)
    y_dense = translayer2_forward(x_dense, packed, K=K, K2=K2, mid=MID, eps=EPS)
    y = jnp.transpose(y_dense.reshape(B, H, W, C), (0, 3, 1, 2))
    jax.block_until_ready(y)

    assert y.shape == (B, C, H, W)
    assert bool(jnp.all(jnp.isfinite(y)))
    assert bool(jnp.allclose(y, y_ref, rtol=2e-2, atol=2e-2)), \
        "mismatch vs reference"
    print("KERNEL_OK")
</pallas_src>

<mosaic_0001>
module attributes {stable_mosaic.version = 11 : i64} {
  func.func @_translayer2_kernel(%arg0: i32, %arg1: memref<1x16x512xf32, #tpu.memory_space<vmem>>, %arg2: memref<512x512xf32, #tpu.memory_space<vmem>>, %arg3: memref<512x512xf32, #tpu.memory_space<vmem>>, %arg4: memref<1x512xf32, #tpu.memory_space<vmem>>, %arg5: memref<1x512xf32, #tpu.memory_space<vmem>>, %arg6: memref<3x512x512xbf16, #tpu.memory_space<vmem>>, %arg7: memref<1xf32, #tpu.memory_space<smem>>, %arg8: memref<512x512xbf16, #tpu.memory_space<vmem>>, %arg9: memref<1xf32, #tpu.memory_space<smem>>, %arg10: memref<3x512x512xbf16, #tpu.memory_space<vmem>>, %arg11: memref<1x512xf32, #tpu.memory_space<vmem>>, %arg12: memref<512x512xbf16, #tpu.memory_space<vmem>>, %arg13: memref<1x512xf32, #tpu.memory_space<vmem>>, %arg14: memref<2x512xf32, #tpu.memory_space<vmem>>, %arg15: memref<2xf32, #tpu.memory_space<smem>>, %arg16: memref<2x512xf32, #tpu.memory_space<vmem>>, %arg17: memref<1x512xf32, #tpu.memory_space<vmem>>, %arg18: memref<512x512xbf16, #tpu.memory_space<vmem>>, %arg19: memref<1x512xf32, #tpu.memory_space<vmem>>, %arg20: memref<1x16x512xf32, #tpu.memory_space<vmem>>) attributes {dimension_semantics = [#tpu.dimension_semantics<parallel>], iteration_bounds = array<i64: 2>, scalar_prefetch = 0 : i64, scratch_operands = 0 : i64, tpu.core_type = #tpu.core_type<tc>, window_params = [{transform_indices = @transform_0, window_bounds = array<i64: 1, 16, 512>}, {pipeline_mode = #tpu.pipeline_mode<synchronous>, transform_indices = @transform_1, window_bounds = array<i64: 512, 512>}, {pipeline_mode = #tpu.pipeline_mode<synchronous>, transform_indices = @transform_2, window_bounds = array<i64: 512, 512>}, {pipeline_mode = #tpu.pipeline_mode<synchronous>, transform_indices = @transform_3, window_bounds = array<i64: 1, 512>}, {pipeline_mode = #tpu.pipeline_mode<synchronous>, transform_indices = @transform_4, window_bounds = array<i64: 1, 512>}, {pipeline_mode = #tpu.pipeline_mode<synchronous>, transform_indices = @transform_5, window_bounds = array<i64: 3, 512, 512>}, {transform_indices = @transform_6, window_bounds = array<i64: 1>}, {pipeline_mode = #tpu.pipeline_mode<synchronous>, transform_indices = @transform_7, window_bounds = array<i64: 512, 512>}, {transform_indices = @transform_8, window_bounds = array<i64: 1>}, {pipeline_mode = #tpu.pipeline_mode<synchronous>, transform_indices = @transform_9, window_bounds = array<i64: 3, 512, 512>}, {pipeline_mode = #tpu.pipeline_mode<synchronous>, transform_indices = @transform_10, window_bounds = array<i64: 1, 512>}, {pipeline_mode = #tpu.pipeline_mode<synchronous>, transform_indices = @transform_11, window_bounds = array<i64: 512, 512>}, {pipeline_mode = #tpu.pipeline_mode<synchronous>, transform_indices = @transform_12, window_bounds = array<i64: 1, 512>}, {pipeline_mode = #tpu.pipeline_mode<synchronous>, transform_indices = @transform_13, window_bounds = array<i64: 2, 512>}, {transform_indices = @transform_14, window_bounds = array<i64: 2>}, {pipeline_mode = #tpu.pipeline_mode<synchronous>, transform_indices = @transform_15, window_bounds = array<i64: 2, 512>}, {pipeline_mode = #tpu.pipeline_mode<synchronous>, transform_indices = @transform_16, window_bounds = array<i64: 1, 512>}, {pipeline_mode = #tpu.pipeline_mode<synchronous>, transform_indices = @transform_17, window_bounds = array<i64: 512, 512>}, {pipeline_mode = #tpu.pipeline_mode<synchronous>, transform_indices = @transform_18, window_bounds = array<i64: 1, 512>}, {transform_indices = @transform_19, window_bounds = array<i64: 1, 16, 512>}]} {
    %c0 = arith.constant 0 : index
    %c0_0 = arith.constant 0 : index
    %c0_1 = arith.constant 0 : index
    %0 = vector.load %arg1[%c0, %c0_0, %c0_1] : memref<1x16x512xf32, #tpu.memory_space<vmem>>, vector<1x16x512xf32>
    %1 = vector.shape_cast %0 : vector<1x16x512xf32> to vector<16x512xf32>
    %c0_2 = arith.constant 0 : index
    %c0_3 = arith.constant 0 : index
    %2 = vector.load %arg2[%c0_2, %c0_3] : memref<512x512xf32, #tpu.memory_space<vmem>>, vector<512x512xf32>
    %cst = arith.constant dense<0.000000e+00> : vector<16x512xf32>
    %3 = tpu.matmul %1, %2, %cst {dimension_numbers = #tpu.dot_dimension_numbers<[1], [0], [0], [1], [0, 0, 1, 1], [], []>} : vector<16x512xf32>, vector<512x512xf32>, vector<16x512xf32> -> vector<16x512xf32>
    %4 = arith.subf %1, %3 : vector<16x512xf32>
    %5 = arith.mulf %4, %4 : vector<16x512xf32>
    %c0_4 = arith.constant 0 : index
    %c0_5 = arith.constant 0 : index
    %6 = vector.load %arg2[%c0_4, %c0_5] : memref<512x512xf32, #tpu.memory_space<vmem>>, vector<512x512xf32>
    %cst_6 = arith.constant dense<0.000000e+00> : vector<16x512xf32>
    %7 = tpu.matmul %5, %6, %cst_6 {dimension_numbers = #tpu.dot_dimension_numbers<[1], [0], [0], [1], [0, 0, 1, 1], [], []>} : vector<16x512xf32>, vector<512x512xf32>, vector<16x512xf32> -> vector<16x512xf32>
    %cst_7 = arith.constant 9.99999974E-6 : f32
    %8 = vector.broadcast %cst_7 : f32 to vector<16x512xf32>
    %9 = arith.addf %7, %8 : vector<16x512xf32>
    %10 = math.rsqrt %9 : vector<16x512xf32>
    %11 = arith.mulf %4, %10 : vector<16x512xf32>
    %c0_8 = arith.constant 0 : index
    %c0_9 = arith.constant 0 : index
    %12 = vector.load %arg4[%c0_8, %c0_9] : memref<1x512xf32, #tpu.memory_space<vmem>>, vector<1x512xf32>
    %13 = vector.broadcast %12 : vector<1x512xf32> to vector<16x512xf32>
    %14 = arith.mulf %11, %13 : vector<16x512xf32>
    %c0_10 = arith.constant 0 : index
    %c0_11 = arith.constant 0 : index
    %15 = vector.load %arg5[%c0_10, %c0_11] : memref<1x512xf32, #tpu.memory_space<vmem>>, vector<1x512xf32>
    %16 = vector.broadcast %15 : vector<1x512xf32> to vector<16x512xf32>
    %17 = arith.addf %14, %16 : vector<16x512xf32>
    %cst_12 = arith.constant 0.000000e+00 : f32
    %18 = vector.broadcast %cst_12 : f32 to vector<16x512xf32>
    %cst_13 = arith.constant 0.000000e+00 : f32
    %19 = vector.broadcast %cst_13 : f32 to vector<1x512xf32>
    %20 = vector.extract_strided_slice %17 {offsets = [0, 0], sizes = [15, 512], strides = [1, 1]} : vector<16x512xf32> to vector<15x512xf32>
    %21 = tpu.concatenate %19, %20 in 0 : vector<1x512xf32>, vector<15x512xf32> -> vector<16x512xf32>
    %22 = arith.truncf %21 : vector<16x512xf32> to vector<16x512xbf16>
    %c0_14 = arith.constant 0 : index
    %c0_15 = arith.constant 0 : index
    %c0_16 = arith.constant 0 : index
    %23 = vector.load %arg6[%c0_14, %c0_15, %c0_16] : memref<3x512x512xbf16, #tpu.memory_space<vmem>>, vector<1x512x512xbf16>
    %24 = vector.shape_cast %23 : vector<1x512x512xbf16> to vector<512x512xbf16>
    %cst_17 = arith.constant dense<0.000000e+00> : vector<16x512xf32>
    %25 = tpu.matmul %22, %24, %cst_17 {dimension_numbers = #tpu.dot_dimension_numbers<[1], [0], [0], [1], [0, 0, 1, 1], [], []>} : vector<16x512xbf16>, vector<512x512xbf16>, vector<16x512xf32> -> vector<16x512xf32>
    %26 = arith.addf %18, %25 : vector<16x512xf32>
    %27 = arith.truncf %17 : vector<16x512xf32> to vector<16x512xbf16>
    %c1 = arith.constant 1 : index
    %c0_18 = arith.constant 0 : index
    %c0_19 = arith.constant 0 : index
    %28 = vector.load %arg6[%c1, %c0_18, %c0_19] : memref<3x512x512xbf16, #tpu.memory_space<vmem>>, vector<1x512x512xbf16>
    %29 = vector.shape_cast %28 : vector<1x512x512xbf16> to vector<512x512xbf16>
    %cst_20 = arith.constant dense<0.000000e+00> : vector<16x512xf32>
    %30 = tpu.matmul %27, %29, %cst_20 {dimension_numbers = #tpu.dot_dimension_numbers<[1], [0], [0], [1], [0, 0, 1, 1], [], []>} : vector<16x512xbf16>, vector<512x512xbf16>, vector<16x512xf32> -> vector<16x512xf32>
    %31 = arith.addf %26, %30 : vector<16x512xf32>
    %cst_21 = arith.constant 0.000000e+00 : f32
    %32 = vector.broadcast %cst_21 : f32 to vector<1x512xf32>
    %33 = vector.extract_strided_slice %17 {offsets = [1, 0], sizes = [15, 512], strides = [1, 1]} : vector<16x512xf32> to vector<15x512xf32>
    %34 = tpu.concatenate %33, %32 in 0 : vector<15x512xf32>, vector<1x512xf32> -> vector<16x512xf32>
    %35 = arith.truncf %34 : vector<16x512xf32> to vector<16x512xbf16>
    %c2 = arith.constant 2 : index
    %c0_22 = arith.constant 0 : index
    %c0_23 = arith.constant 0 : index
    %36 = vector.load %arg6[%c2, %c0_22, %c0_23] : memref<3x512x512xbf16, #tpu.memory_space<vmem>>, vector<1x512x512xbf16>
    %37 = vector.shape_cast %36 : vector<1x512x512xbf16> to vector<512x512xbf16>
    %cst_24 = arith.constant dense<0.000000e+00> : vector<16x512xf32>
    %38 = tpu.matmul %35, %37, %cst_24 {dimension_numbers = #tpu.dot_dimension_numbers<[1], [0], [0], [1], [0, 0, 1, 1], [], []>} : vector<16x512xbf16>, vector<512x512xbf16>, vector<16x512xf32> -> vector<16x512xf32>
    %39 = arith.addf %31, %38 : vector<16x512xf32>
    %c0_25 = arith.constant 0 : index
    %40 = memref.load %arg7[%c0_25] : memref<1xf32, #tpu.memory_space<smem>>
    %41 = vector.broadcast %40 : f32 to vector<16x512xf32>
    %42 = arith.addf %39, %41 : vector<16x512xf32>
    %43 = arith.truncf %17 : vector<16x512xf32> to vector<16x512xbf16>
    %c0_26 = arith.constant 0 : index
    %c0_27 = arith.constant 0 : index
    %44 = vector.load %arg8[%c0_26, %c0_27] : memref<512x512xbf16, #tpu.memory_space<vmem>>, vector<512x512xbf16>
    %cst_28 = arith.constant dense<0.000000e+00> : vector<16x512xf32>
    %45 = tpu.matmul %43, %44, %cst_28 {dimension_numbers = #tpu.dot_dimension_numbers<[1], [0], [0], [1], [0, 0, 1, 1], [], []>} : vector<16x512xbf16>, vector<512x512xbf16>, vector<16x512xf32> -> vector<16x512xf32>
    %c0_29 = arith.constant 0 : index
    %46 = memref.load %arg9[%c0_29] : memref<1xf32, #tpu.memory_space<smem>>
    %47 = vector.broadcast %46 : f32 to vector<16x512xf32>
    %48 = arith.addf %45, %47 : vector<16x512xf32>
    %49 = arith.mulf %42, %48 : vector<16x512xf32>
    %50 = arith.addf %17, %49 : vector<16x512xf32>
    %cst_30 = arith.constant 0.000000e+00 : f32
    %51 = vector.broadcast %cst_30 : f32 to vector<16x512xf32>
    %cst_31 = arith.constant 0.000000e+00 : f32
    %52 = vector.broadcast %cst_31 : f32 to vector<1x512xf32>
    %53 = vector.extract_strided_slice %50 {offsets = [0, 0], sizes = [15, 512], strides = [1, 1]} : vector<16x512xf32> to vector<15x512xf32>
    %54 = tpu.concatenate %52, %53 in 0 : vector<1x512xf32>, vector<15x512xf32> -> vector<16x512xf32>
    %55 = arith.truncf %54 : vector<16x512xf32> to vector<16x512xbf16>
    %c0_32 = arith.constant 0 : index
    %c0_33 = arith.constant 0 : index
    %c0_34 = arith.constant 0 : index
    %56 = vector.load %arg10[%c0_32, %c0_33, %c0_34] : memref<3x512x512xbf16, #tpu.memory_space<vmem>>, vector<1x512x512xbf16>
    %57 = vector.shape_cast %56 : vector<1x512x512xbf16> to vector<512x512xbf16>
    %cst_35 = arith.constant dense<0.000000e+00> : vector<16x512xf32>
    %58 = tpu.matmul %55, %57, %cst_35 {dimension_numbers = #tpu.dot_dimension_numbers<[1], [0], [0], [1], [0, 0, 1, 1], [], []>} : vector<16x512xbf16>, vector<512x512xbf16>, vector<16x512xf32> -> vector<16x512xf32>
    %59 = arith.addf %51, %58 : vector<16x512xf32>
    %60 = arith.truncf %50 : vector<16x512xf32> to vector<16x512xbf16>
    %c1_36 = arith.constant 1 : index
    %c0_37 = arith.constant 0 : index
    %c0_38 = arith.constant 0 : index
    %61 = vector.load %arg10[%c1_36, %c0_37, %c0_38] : memref<3x512x512xbf16, #tpu.memory_space<vmem>>, vector<1x512x512xbf16>
    %62 = vector.shape_cast %61 : vector<1x512x512xbf16> to vector<512x512xbf16>
    %cst_39 = arith.constant dense<0.000000e+00> : vector<16x512xf32>
    %63 = tpu.matmul %60, %62, %cst_39 {dimension_numbers = #tpu.dot_dimension_numbers<[1], [0], [0], [1], [0, 0, 1, 1], [], []>} : vector<16x512xbf16>, vector<512x512xbf16>, vector<16x512xf32> -> vector<16x512xf32>
    %64 = arith.addf %59, %63 : vector<16x512xf32>
    %cst_40 = arith.constant 0.000000e+00 : f32
    %65 = vector.broadcast %cst_40 : f32 to vector<1x512xf32>
    %66 = vector.extract_strided_slice %50 {offsets = [1, 0], sizes = [15, 512], strides = [1, 1]} : vector<16x512xf32> to vector<15x512xf32>
    %67 = tpu.concatenate %66, %65 in 0 : vector<15x512xf32>, vector<1x512xf32> -> vector<16x512xf32>
    %68 = arith.truncf %67 : vector<16x512xf32> to vector<16x512xbf16>
    %c2_41 = arith.constant 2 : index
    %c0_42 = arith.constant 0 : index
    %c0_43 = arith.constant 0 : index
    %69 = vector.load %arg10[%c2_41, %c0_42, %c0_43] : memref<3x512x512xbf16, #tpu.memory_space<vmem>>, vector<1x512x512xbf16>
    %70 = vector.shape_cast %69 : vector<1x512x512xbf16> to vector<512x512xbf16>
    %cst_44 = arith.constant dense<0.000000e+00> : vector<16x512xf32>
    %71 = tpu.matmul %68, %70, %cst_44 {dimension_numbers = #tpu.dot_dimension_numbers<[1], [0], [0], [1], [0, 0, 1, 1], [], []>} : vector<16x512xbf16>, vector<512x512xbf16>, vector<16x512xf32> -> vector<16x512xf32>
    %72 = arith.addf %64, %71 : vector<16x512xf32>
    %c0_45 = arith.constant 0 : index
    %c0_46 = arith.constant 0 : index
    %73 = vector.load %arg11[%c0_45, %c0_46] : memref<1x512xf32, #tpu.memory_space<vmem>>, vector<1x512xf32>
    %74 = vector.broadcast %73 : vector<1x512xf32> to vector<16x512xf32>
    %75 = arith.mulf %74, %72 : vector<16x512xf32>
    %cst_47 = arith.constant 1.000000e+00 : f32
    %76 = vector.broadcast %cst_47 : f32 to vector<1x512xf32>
    %77 = arith.subf %76, %73 : vector<1x512xf32>
    %78 = vector.broadcast %77 : vector<1x512xf32> to vector<16x512xf32>
    %79 = arith.mulf %78, %50 : vector<16x512xf32>
    %80 = arith.addf %75, %79 : vector<16x512xf32>
    %81 = arith.truncf %80 : vector<16x512xf32> to vector<16x512xbf16>
    %c0_48 = arith.constant 0 : index
    %c0_49 = arith.constant 0 : index
    %82 = vector.load %arg12[%c0_48, %c0_49] : memref<512x512xbf16, #tpu.memory_space<vmem>>, vector<512x512xbf16>
    %cst_50 = arith.constant dense<0.000000e+00> : vector<16x512xf32>
    %83 = tpu.matmul %81, %82, %cst_50 {dimension_numbers = #tpu.dot_dimension_numbers<[1], [0], [0], [1], [0, 0, 1, 1], [], []>} : vector<16x512xbf16>, vector<512x512xbf16>, vector<16x512xf32> -> vector<16x512xf32>
    %c0_51 = arith.constant 0 : index
    %c0_52 = arith.constant 0 : index
    %84 = vector.load %arg13[%c0_51, %c0_52] : memref<1x512xf32, #tpu.memory_space<vmem>>, vector<1x512xf32>
    %85 = vector.broadcast %84 : vector<1x512xf32> to vector<16x512xf32>
    %86 = arith.addf %83, %85 : vector<16x512xf32>
    %c0_53 = arith.constant 0 : index
    %c0_54 = arith.constant 0 : index
    %87 = vector.load %arg3[%c0_53, %c0_54] : memref<512x512xf32, #tpu.memory_space<vmem>>, vector<512x512xf32>
    %cst_55 = arith.constant dense<0.000000e+00> : vector<16x512xf32>
    %88 = tpu.matmul %80, %87, %cst_55 {dimension_numbers = #tpu.dot_dimension_numbers<[1], [0], [0], [1], [0, 0, 1, 1], [], []>} : vector<16x512xf32>, vector<512x512xf32>, vector<16x512xf32> -> vector<16x512xf32>
    %cst_56 = arith.constant dense<0.000000e+00> : vector<512xf32>
    %89 = vector.multi_reduction <add>, %88, %cst_56 [0] : vector<16x512xf32> to vector<512xf32>
    %90 = vector.shape_cast %89 : vector<512xf32> to vector<1x512xf32>
    %cst_57 = arith.constant 1.600000e+01 : f32
    %91 = vector.broadcast %cst_57 : f32 to vector<1x512xf32>
    %92 = arith.divf %90, %91 : vector<1x512xf32>
    %c0_58 = arith.constant 0 : index
    %c0_59 = arith.constant 0 : index
    %93 = vector.load %arg17[%c0_58, %c0_59] : memref<1x512xf32, #tpu.memory_space<vmem>>, vector<1x512xf32>
    %c0_60 = arith.constant 0 : index
    %c0_61 = arith.constant 0 : index
    %94 = vector.load %arg14[%c0_60, %c0_61] : memref<2x512xf32, #tpu.memory_space<vmem>>, vector<1x512xf32>
    %95 = arith.mulf %92, %94 : vector<1x512xf32>
    %cst_62 = arith.constant dense<0.000000e+00> : vector<1xf32>
    %96 = vector.multi_reduction <add>, %95, %cst_62 [1] : vector<1x512xf32> to vector<1xf32>
    %97 = vector.shape_cast %96 : vector<1xf32> to vector<1x1xf32>
    %c0_63 = arith.constant 0 : index
    %98 = memref.load %arg15[%c0_63] : memref<2xf32, #tpu.memory_space<smem>>
    %99 = vector.broadcast %98 : f32 to vector<1x1xf32>
    %100 = arith.addf %97, %99 : vector<1x1xf32>
    %cst_64 = arith.constant 0.000000e+00 : f32
    %101 = vector.broadcast %cst_64 : f32 to vector<1x1xf32>
    %102 = arith.maximumf %100, %101 : vector<1x1xf32>
    %c0_65 = arith.constant 0 : index
    %c0_66 = arith.constant 0 : index
    %103 = vector.load %arg16[%c0_65, %c0_66] : memref<2x512xf32, #tpu.memory_space<vmem>>, vector<1x512xf32>
    %104 = vector.broadcast %102 : vector<1x1xf32> to vector<1x512xf32>
    %105 = arith.mulf %104, %103 : vector<1x512xf32>
    %106 = arith.addf %93, %105 : vector<1x512xf32>
    %c1_67 = arith.constant 1 : index
    %c0_68 = arith.constant 0 : index
    %107 = vector.load %arg14[%c1_67, %c0_68] : memref<2x512xf32, #tpu.memory_space<vmem>>, vector<1x512xf32>
    %108 = arith.mulf %92, %107 : vector<1x512xf32>
    %cst_69 = arith.constant dense<0.000000e+00> : vector<1xf32>
    %109 = vector.multi_reduction <add>, %108, %cst_69 [1] : vector<1x512xf32> to vector<1xf32>
    %110 = vector.shape_cast %109 : vector<1xf32> to vector<1x1xf32>
    %c1_70 = arith.constant 1 : index
    %111 = memref.load %arg15[%c1_70] : memref<2xf32, #tpu.memory_space<smem>>
    %112 = vector.broadcast %111 : f32 to vector<1x1xf32>
    %113 = arith.addf %110, %112 : vector<1x1xf32>
    %cst_71 = arith.constant 0.000000e+00 : f32
    %114 = vector.broadcast %cst_71 : f32 to vector<1x1xf32>
    %115 = arith.maximumf %113, %114 : vector<1x1xf32>
    %c1_72 = arith.constant 1 : index
    %c0_73 = arith.constant 0 : index
    %116 = vector.load %arg16[%c1_72, %c0_73] : memref<2x512xf32, #tpu.memory_space<vmem>>, vector<1x512xf32>
    %117 = vector.broadcast %115 : vector<1x1xf32> to vector<1x512xf32>
    %118 = arith.mulf %117, %116 : vector<1x512xf32>
    %119 = arith.addf %106, %118 : vector<1x512xf32>
    %cst_74 = arith.constant 0.000000e+00 : f32
    %120 = vector.broadcast %cst_74 : f32 to vector<1x512xf32>
    %121 = arith.subf %120, %119 : vector<1x512xf32>
    %122 = math.exp %121 : vector<1x512xf32>
    %cst_75 = arith.constant 1.000000e+00 : f32
    %123 = vector.broadcast %cst_75 : f32 to vector<1x512xf32>
    %124 = arith.addf %123, %122 : vector<1x512xf32>
    %cst_76 = arith.constant 1.000000e+00 : f32
    %125 = vector.broadcast %cst_76 : f32 to vector<1x512xf32>
    %126 = arith.divf %125, %124 : vector<1x512xf32>
    %127 = vector.broadcast %126 : vector<1x512xf32> to vector<16x512xf32>
    %128 = arith.mulf %80, %127 : vector<16x512xf32>
    %129 = arith.mulf %86, %128 : vector<16x512xf32>
    %130 = arith.addf %80, %129 : vector<16x512xf32>
    %131 = arith.truncf %130 : vector<16x512xf32> to vector<16x512xbf16>
    %c0_77 = arith.constant 0 : index
    %c0_78 = arith.constant 0 : index
    %132 = vector.load %arg18[%c0_77, %c0_78] : memref<512x512xbf16, #tpu.memory_space<vmem>>, vector<512x512xbf16>
    %cst_79 = arith.constant dense<0.000000e+00> : vector<16x512xf32>
    %133 = tpu.matmul %131, %132, %cst_79 {dimension_numbers = #tpu.dot_dimension_numbers<[1], [0], [0], [1], [0, 0, 1, 1], [], []>} : vector<16x512xbf16>, vector<512x512xbf16>, vector<16x512xf32> -> vector<16x512xf32>
    %c0_80 = arith.constant 0 : index
    %c0_81 = arith.constant 0 : index
    %134 = vector.load %arg19[%c0_80, %c0_81] : memref<1x512xf32, #tpu.memory_space<vmem>>, vector<1x512xf32>
    %135 = vector.broadcast %134 : vector<1x512xf32> to vector<16x512xf32>
    %136 = arith.addf %133, %135 : vector<16x512xf32>
    %137 = arith.addf %1, %136 : vector<16x512xf32>
    %c0_82 = arith.constant 0 : index
    %c0_83 = arith.constant 0 : index
    %c0_84 = arith.constant 0 : index
    %138 = vector.load %arg20[%c0_82, %c0_83, %c0_84] : memref<1x16x512xf32, #tpu.memory_space<vmem>>, vector<1x16x512xf32>
    %139 = vector.shape_cast %138 : vector<1x16x512xf32> to vector<16x512xf32>
    %140 = vector.shape_cast %137 : vector<16x512xf32> to vector<1x16x512xf32>
    tpu.vector_store %arg20[%c0_82, %c0_83, %c0_84], %140 {strides = array<i32>} : memref<1x16x512xf32, #tpu.memory_space<vmem>>, vector<1x16x512xf32>,
    return
  }
  func.func @transform_0(%arg0: i32) -> (i32, i32, i32) {
    %c0_i32 = arith.constant 0 : i32
    %c0_i32_0 = arith.constant 0 : i32
    %c0_i32_1 = arith.constant 0 : i32
    return %arg0, %c0_i32, %c0_i32_0 : i32, i32, i32
  }
  func.func @transform_1(%arg0: i32) -> (i32, i32) {
    %c0_i32 = arith.constant 0 : i32
    %c0_i32_0 = arith.constant 0 : i32
    %c0_i32_1 = arith.constant 0 : i32
    return %c0_i32, %c0_i32_0 : i32, i32
  }
  func.func @transform_2(%arg0: i32) -> (i32, i32) {
    %c0_i32 = arith.constant 0 : i32
    %c0_i32_0 = arith.constant 0 : i32
    %c0_i32_1 = arith.constant 0 : i32
    return %c0_i32, %c0_i32_0 : i32, i32
  }
  func.func @transform_3(%arg0: i32) -> (i32, i32) {
    %c0_i32 = arith.constant 0 : i32
    %c0_i32_0 = arith.constant 0 : i32
    %c0_i32_1 = arith.constant 0 : i32
    return %c0_i32, %c0_i32_0 : i32, i32
  }
  func.func @transform_4(%arg0: i32) -> (i32, i32) {
    %c0_i32 = arith.constant 0 : i32
    %c0_i32_0 = arith.constant 0 : i32
    %c0_i32_1 = arith.constant 0 : i32
    return %c0_i32, %c0_i32_0 : i32, i32
  }
  func.func @transform_5(%arg0: i32) -> (i32, i32, i32) {
    %c0_i32 = arith.constant 0 : i32
    %c0_i32_0 = arith.constant 0 : i32
    %c0_i32_1 = arith.constant 0 : i32
    %c0_i32_2 = arith.constant 0 : i32
    return %c0_i32, %c0_i32_0, %c0_i32_1 : i32, i32, i32
  }
  func.func @transform_6(%arg0: i32) -> i32 {
    %c0_i32 = arith.constant 0 : i32
    %c0_i32_0 = arith.constant 0 : i32
    return %c0_i32 : i32
  }
  func.func @transform_7(%arg0: i32) -> (i32, i32) {
    %c0_i32 = arith.constant 0 : i32
    %c0_i32_0 = arith.constant 0 : i32
    %c0_i32_1 = arith.constant 0 : i32
    return %c0_i32, %c0_i32_0 : i32, i32
  }
  func.func @transform_8(%arg0: i32) -> i32 {
    %c0_i32 = arith.constant 0 : i32
    %c0_i32_0 = arith.constant 0 : i32
    return %c0_i32 : i32
  }
  func.func @transform_9(%arg0: i32) -> (i32, i32, i32) {
    %c0_i32 = arith.constant 0 : i32
    %c0_i32_0 = arith.constant 0 : i32
    %c0_i32_1 = arith.constant 0 : i32
    %c0_i32_2 = arith.constant 0 : i32
    return %c0_i32, %c0_i32_0, %c0_i32_1 : i32, i32, i32
  }
  func.func @transform_10(%arg0: i32) -> (i32, i32) {
    %c0_i32 = arith.constant 0 : i32
    %c0_i32_0 = arith.constant 0 : i32
    %c0_i32_1 = arith.constant 0 : i32
    return %c0_i32, %c0_i32_0 : i32, i32
  }
  func.func @transform_11(%arg0: i32) -> (i32, i32) {
    %c0_i32 = arith.constant 0 : i32
    %c0_i32_0 = arith.constant 0 : i32
    %c0_i32_1 = arith.constant 0 : i32
    return %c0_i32, %c0_i32_0 : i32, i32
  }
  func.func @transform_12(%arg0: i32) -> (i32, i32) {
    %c0_i32 = arith.constant 0 : i32
    %c0_i32_0 = arith.constant 0 : i32
    %c0_i32_1 = arith.constant 0 : i32
    return %c0_i32, %c0_i32_0 : i32, i32
  }
  func.func @transform_13(%arg0: i32) -> (i32, i32) {
    %c0_i32 = arith.constant 0 : i32
    %c0_i32_0 = arith.constant 0 : i32
    %c0_i32_1 = arith.constant 0 : i32
    return %c0_i32, %c0_i32_0 : i32, i32
  }
  func.func @transform_14(%arg0: i32) -> i32 {
    %c0_i32 = arith.constant 0 : i32
    %c0_i32_0 = arith.constant 0 : i32
    return %c0_i32 : i32
  }
  func.func @transform_15(%arg0: i32) -> (i32, i32) {
    %c0_i32 = arith.constant 0 : i32
    %c0_i32_0 = arith.constant 0 : i32
    %c0_i32_1 = arith.constant 0 : i32
    return %c0_i32, %c0_i32_0 : i32, i32
  }
  func.func @transform_16(%arg0: i32) -> (i32, i32) {
    %c0_i32 = arith.constant 0 : i32
    %c0_i32_0 = arith.constant 0 : i32
    %c0_i32_1 = arith.constant 0 : i32
    return %c0_i32, %c0_i32_0 : i32, i32
  }
  func.func @transform_17(%arg0: i32) -> (i32, i32) {
    %c0_i32 = arith.constant 0 : i32
    %c0_i32_0 = arith.constant 0 : i32
    %c0_i32_1 = arith.constant 0 : i32
    return %c0_i32, %c0_i32_0 : i32, i32
  }
  func.func @transform_18(%arg0: i32) -> (i32, i32) {
    %c0_i32 = arith.constant 0 : i32
    %c0_i32_0 = arith.constant 0 : i32
    %c0_i32_1 = arith.constant 0 : i32
    return %c0_i32, %c0_i32_0 : i32, i32
  }
  func.func @transform_19(%arg0: i32) -> (i32, i32, i32) {
    %c0_i32 = arith.constant 0 : i32
    %c0_i32_0 = arith.constant 0 : i32
    %c0_i32_1 = arith.constant 0 : i32
    return %arg0, %c0_i32, %c0_i32_0 : i32, i32, i32
  }
}

</mosaic_0001>

<llo_original>
// kernel: tpu_custom_call.1
$region0: #{tpu_custom_call.1}
  #allocation0 [shape = 'u32[]', space=smem, size = 0x4, offset = 0x4, fixed_abs, tag = 'smem constant byte address 0x4 - core index']
  #allocation1 [shape = 'u32[144,128]{1,0:T(1,128)}', space=vmem, size = 0x12000, scoped, tag = 'internal scratch']
  #allocation2 [shape = 'f32[1]{0:T(128)S(6)}', space=smem, size = 0x200, scoped, tag = 'scoped memory for tpu_custom_call.1']
  #allocation3 [shape = 'f32[1]{0:T(128)S(6)}', space=smem, size = 0x200, scoped, tag = 'scoped memory for tpu_custom_call.1']
  %s0 = inlined_call_operand.hbm [shape: f32[2,16,512], index: 0, kind: input, shape index: {}, may-alias: {0,19}]
  %s1 = inlined_call_operand.hbm [shape: f32[512,512], index: 1, kind: input, shape index: {}]
  %s2 = inlined_call_operand.hbm [shape: f32[512,512], index: 2, kind: input, shape index: {}]
  %s3 = inlined_call_operand.hbm [shape: f32[1,512], index: 3, kind: input, shape index: {}]
  %s4 = inlined_call_operand.hbm [shape: f32[1,512], index: 4, kind: input, shape index: {}]
  %s5 = inlined_call_operand.hbm [shape: bf16[3,512,512], index: 5, kind: input, shape index: {}]
  %s6 = inlined_call_operand.<no memory space> [shape: f32[1], index: 6, kind: input, shape index: {}]
  %s7 = inlined_call_operand.hbm [shape: bf16[512,512], index: 7, kind: input, shape index: {}]
  %s8 = inlined_call_operand.<no memory space> [shape: f32[1], index: 8, kind: input, shape index: {}]
  %s9 = inlined_call_operand.hbm [shape: bf16[3,512,512], index: 9, kind: input, shape index: {}]
  %s10 = inlined_call_operand.hbm [shape: f32[1,512], index: 10, kind: input, shape index: {}]
  %s11 = inlined_call_operand.hbm [shape: bf16[512,512], index: 11, kind: input, shape index: {}]
  %s12 = inlined_call_operand.hbm [shape: f32[1,512], index: 12, kind: input, shape index: {}]
  %s13 = inlined_call_operand.hbm [shape: f32[2,512], index: 13, kind: input, shape index: {}]
  %s14 = inlined_call_operand.hbm [shape: f32[2], index: 14, kind: input, shape index: {}]
  %s15 = inlined_call_operand.hbm [shape: f32[2,512], index: 15, kind: input, shape index: {}]
  %s16 = inlined_call_operand.hbm [shape: f32[1,512], index: 16, kind: input, shape index: {}]
  %s17 = inlined_call_operand.hbm [shape: bf16[512,512], index: 17, kind: input, shape index: {}]
  %s18 = inlined_call_operand.hbm [shape: f32[1,512], index: 18, kind: input, shape index: {}]
  %s19 = inlined_call_operand.hbm [shape: f32[2,16,512], index: 19, kind: output, shape index: {}, may-alias: {0,19}]
  %s20 = sld [smem:[#allocation0]]
  $region177: #{tpu_custom_call.1} parent=0
    _
  %s22 = ssub.s32 1, %s20
  %s23 = scalar_select 0, %s22, %s20
  %24 = sst [smem:[#allocation2]] %s6
  %25 = sst [smem:[#allocation3]] %s8
  $region1: #{tpu_custom_call.1} parent=0
    #allocation4 [shape = 'u8[65536]{0}', space=vmem, size = 0x10000, scoped, tag = 'input window, operand 0']
    #allocation5 [shape = 's32[2]{0}', space=sflag, size = 0x8, scoped, tag = 'scoped memory for tpu_custom_call.1']
    #allocation6 [shape = 's32[2]{0}', space=sflag, size = 0x8, scoped, tag = 'scoped memory for tpu_custom_call.1']
    #allocation7 [shape = 's32[2]{0}', space=sflag, size = 0x8, scoped, tag = 'scoped memory for tpu_custom_call.1']
    #allocation8 [shape = 'u8[1048576]{0}', space=vmem, size = 0x100000, scoped, tag = 'input window, operand 1, single buffered']
    #allocation9 [shape = 's32[1]{0}', space=sflag, size = 0x4, scoped, tag = 'scoped memory for tpu_custom_call.1']
    #allocation10 [shape = 'u8[1048576]{0}', space=vmem, size = 0x100000, scoped, tag = 'input window, operand 2, single buffered']
    #allocation11 [shape = 'u8[2048]{0}', space=vmem, size = 0x800, scoped, tag = 'input window, operand 3, single buffered']
    #allocation12 [shape = 's32[1]{0}', space=sflag, size = 0x4, scoped, tag = 'scoped memory for tpu_custom_call.1']
    #allocation13 [shape = 'u8[2048]{0}', space=vmem, size = 0x800, scoped, tag = 'input window, operand 4, single buffered']
    #allocation14 [shape = 'u8[1572864]{0}', space=vmem, size = 0x180000, scoped, tag = 'input window, operand 5, single buffered']
    #allocation15 [shape = 's32[1]{0}', space=sflag, size = 0x4, scoped, tag = 'scoped memory for tpu_custom_call.1']
    #allocation16 [shape = 'u8[524288]{0}', space=vmem, size = 0x80000, scoped, tag = 'input window, operand 7, single buffered']
    #allocation17 [shape = 'u8[1572864]{0}', space=vmem, size = 0x180000, scoped, tag = 'input window, operand 9, single buffered']
    #allocation18 [shape = 's32[1]{0}', space=sflag, size = 0x4, scoped, tag = 'scoped memory for tpu_custom_call.1']
    #allocation19 [shape = 'u8[2048]{0}', space=vmem, size = 0x800, scoped, tag = 'input window, operand 10, single buffered']
    #allocation20 [shape = 'u8[524288]{0}', space=vmem, size = 0x80000, scoped, tag = 'input window, operand 11, single buffered']
    #allocation21 [shape = 's32[1]{0}', space=sflag, size = 0x4, scoped, tag = 'scoped memory for tpu_custom_call.1']
    #allocation22 [shape = 'u8[2048]{0}', space=vmem, size = 0x800, scoped, tag = 'input window, operand 12, single buffered']
    #allocation23 [shape = 'u8[4096]{0}', space=vmem, size = 0x1000, scoped, tag = 'input window, operand 13, single buffered']
    #allocation24 [shape = 's32[1]{0}', space=sflag, size = 0x4, scoped, tag = 'scoped memory for tpu_custom_call.1']
    #allocation25 [shape = 'u8[512]{0}', space=smem, size = 0x200, scoped, tag = 'input window, operand 14, single buffered']
    #allocation26 [shape = 'u8[4096]{0}', space=vmem, size = 0x1000, scoped, tag = 'input window, operand 15, single buffered']
    #allocation27 [shape = 'u8[2048]{0}', space=vmem, size = 0x800, scoped, tag = 'input window, operand 16, single buffered']
    #allocation28 [shape = 's32[1]{0}', space=sflag, size = 0x4, scoped, tag = 'scoped memory for tpu_custom_call.1']
    #allocation29 [shape = 'u8[524288]{0}', space=vmem, size = 0x80000, scoped, tag = 'input window, operand 17, single buffered']
    #allocation30 [shape = 'u8[2048]{0}', space=vmem, size = 0x800, scoped, tag = 'input window, operand 18, single buffered']
    #allocation31 [shape = 's32[1]{0}', space=sflag, size = 0x4, scoped, tag = 'scoped memory for tpu_custom_call.1']
    #allocation32 [shape = 'u8[65536]{0}', space=vmem, size = 0x10000, scoped, tag = 'output window, operand 0']
    %26 = vsyncpa [#allocation5], 0
    %s27 = scalar_lea.sflag [#allocation5], 1
    %28 = vsyncpa %s27, 0
    %29 = vsyncpa [#allocation9], 0
    %30 = vsyncpa [#allocation12], 0
    %31 = vsyncpa [#allocation15], 0
    %32 = vsyncpa [#allocation18], 0
    %33 = vsyncpa [#allocation21], 0
    %34 = vsyncpa [#allocation24], 0
    %35 = vsyncpa [#allocation7], 0
    %36 = vsyncpa [#allocation28], 0
    %37 = vsyncpa [#allocation31], 0
    %38 = vsyncpa [#allocation6], 0
    %s39 = scalar_lea.sflag [#allocation6], 1
    %40 = vsyncpa %s39, 0
    loop: start=0, step=1, limit=4
    $region2: #{tpu_custom_call.1} parent=1 // loop_pre_header
      _
    $region3: #{tpu_custom_call.1} parent=1 // loop_header
      %s42 = sphi 0, %s46
      %p43 = scmp.ge.s32.totalorder %s42, 4
      %s52 = sphi 0, %s54
      %s55 = sphi 0, %s52
      %s56 = sphi 0, %s55
      %s72 = sphi 0, %s56
      %s76 = sphi 0, %s76
      %s78 = sphi 0, %s76
      %s79 = sphi 0, %s78
      %s93 = sphi 0, %s79
      %s97 = sphi 0, %s97
      %s99 = sphi 0, %s97
      %s100 = sphi 0, %s99
      %s114 = sphi 0, %s100
      %s118 = sphi 0, %s118
      %s120 = sphi 0, %s118
      %s121 = sphi 0, %s120
      %s135 = sphi 0, %s121
      %s139 = sphi 0, %s139
      %s141 = sphi 0, %s139
      %s142 = sphi 0, %s141
      %s156 = sphi 0, %s142
      %s160 = sphi 0, %s160
      %s162 = sphi 0, %s160
      %s163 = sphi 0, %s162
      %s177 = sphi 0, %s163
      %s181 = sphi 0, %s181
      %s183 = sphi 0, %s181
      %s184 = sphi 0, %s183
      %s198 = sphi 0, %s184
      %s202 = sphi 0, %s202
      %s204 = sphi 0, %s202
      %s205 = sphi 0, %s204
      %s219 = sphi 0, %s205
      %s223 = sphi 0, %s223
      %s225 = sphi 0, %s223
      %s226 = sphi 0, %s225
      %s240 = sphi 0, %s226
      %s244 = sphi 0, %s244
      %s246 = sphi 0, %s244
      %s247 = sphi 0, %s246
      %s261 = sphi 0, %s247
      %s265 = sphi 0, %s265
      %s267 = sphi 0, %s265
      %s268 = sphi 0, %s267
      %s282 = sphi 0, %s268
      %s286 = sphi 0, %s286
      %s288 = sphi 0, %s286
      %s289 = sphi 0, %s288
      %s303 = sphi 0, %s289
      %s307 = sphi 0, %s307
      %s309 = sphi 0, %s307
      %s310 = sphi 0, %s309
      %s324 = sphi 0, %s310
      %s328 = sphi 0, %s328
      %s330 = sphi 0, %s328
      %s331 = sphi 0, %s330
      %s345 = sphi 0, %s331
      %s349 = sphi 0, %s349
      %s351 = sphi 0, %s349
      %s352 = sphi 0, %s351
      %s366 = sphi 0, %s352
      %s370 = sphi 0, %s370
      %s372 = sphi 0, %s370
      %s373 = sphi 0, %s372
      %s387 = sphi 0, %s373
      %s391 = sphi 0, %s391
      %s393 = sphi 0, %s391
      %s394 = sphi 0, %s393
      %s408 = sphi 0, %s394
      %s412 = sphi 0, %s412
      %s414 = sphi 0, %s412
      %s415 = sphi 0, %s414
      %s429 = sphi 0, %s415
      %s433 = sphi 0, %s433
      %s435 = sphi 0, %s433
      %s436 = sphi 0, %s435
      %s450 = sphi 0, %s436
      %s456 = sphi 0, %s458
      %s459 = sphi 0, %s456
      %s460 = sphi 0, %s459
      %s476 = sphi 0, %s460
    $region4: #{tpu_custom_call.1} parent=1 // loop_header_branch
      %45 = sbr.rel (%p43) target = $region8
    $region5: #{tpu_custom_call.1} parent=1 // loop_body
      %s47 = ssub.s32 %s42, 1
      %s48 = ssub.s32 %s42, 2
      %s49 = sadd.s32 %s42, 1
      %s50 = ssub.s32 %s42, %s49
      %p51 = scmp.eq.s32.totalorder %s50, 0
      %s53 = sadd.s32 %s52, 1
      %s54 = scalar_select %p51, %s52, %s53
      %p57 = pneg %p51
      %p58 = scmp.eq.s32.totalorder %s42, 1
      %p59 = por %p57, %p58
      %p60 = scmp.ne.s32.totalorder %s52, %s55
      %p61 = scmp.eq.s32.totalorder %s42, 0
      %p62 = por %p60, %p61
      %p63 = scmp.ne.s32.totalorder %s52, %s55
      %p64 = scmp.eq.s32.totalorder %s47, 1
      %p65 = por %p63, %p64
      %p66 = scmp.ne.s32.totalorder %s55, %s56
      %p67 = scmp.eq.s32.totalorder %s47, 0
      %p68 = por %p66, %p67
      %p69 = scmp.ne.s32.totalorder %s55, %s56
      %p70 = scmp.eq.s32.totalorder %s48, 1
      %p71 = por %p69, %p70
      %p73 = scmp.ne.s32.totalorder %s56, %s72
      %p74 = scmp.eq.s32.totalorder %s48, 0
      %p75 = por %p73, %p74
      %s77 = sadd.s32 %s76, 1
      %p80 = scmp.eq.s32.totalorder %s42, 1
      %p81 = scmp.ne.s32.totalorder %s76, %s78
      %p82 = scmp.eq.s32.totalorder %s42, 0
      %p83 = por %p81, %p82
      %p84 = scmp.ne.s32.totalorder %s76, %s78
      %p85 = scmp.eq.s32.totalorder %s47, 1
      %p86 = por %p84, %p85
      %p87 = scmp.ne.s32.totalorder %s78, %s79
      %p88 = scmp.eq.s32.totalorder %s47, 0
      %p89 = por %p87, %p88
      %p90 = scmp.ne.s32.totalorder %s78, %s79
      %p91 = scmp.eq.s32.totalorder %s48, 1
      %p92 = por %p90, %p91
      %p94 = scmp.ne.s32.totalorder %s79, %s93
      %p95 = scmp.eq.s32.totalorder %s48, 0
      %p96 = por %p94, %p95
      %s98 = sadd.s32 %s97, 1
      %p101 = scmp.eq.s32.totalorder %s42, 1
      %p102 = scmp.ne.s32.totalorder %s97, %s99
      %p103 = scmp.eq.s32.totalorder %s42, 0
      %p104 = por %p102, %p103
      %p105 = scmp.ne.s32.totalorder %s97, %s99
      %p106 = scmp.eq.s32.totalorder %s47, 1
      %p107 = por %p105, %p106
      %p108 = scmp.ne.s32.totalorder %s99, %s100
      %p109 = scmp.eq.s32.totalorder %s47, 0
      %p110 = por %p108, %p109
      %p111 = scmp.ne.s32.totalorder %s99, %s100
      %p112 = scmp.eq.s32.totalorder %s48, 1
      %p113 = por %p111, %p112
      %p115 = scmp.ne.s32.totalorder %s100, %s114
      %p116 = scmp.eq.s32.totalorder %s48, 0
      %p117 = por %p115, %p116
      %s119 = sadd.s32 %s118, 1
      %p122 = scmp.eq.s32.totalorder %s42, 1
      %p123 = scmp.ne.s32.totalorder %s118, %s120
      %p124 = scmp.eq.s32.totalorder %s42, 0
      %p125 = por %p123, %p124
      %p126 = scmp.ne.s32.totalorder %s118, %s120
      %p127 = scmp.eq.s32.totalorder %s47, 1
      %p128 = por %p126, %p127
      %p129 = scmp.ne.s32.totalorder %s120, %s121
      %p130 = scmp.eq.s32.totalorder %s47, 0
      %p131 = por %p129, %p130
      %p132 = scmp.ne.s32.totalorder %s120, %s121
      %p133 = scmp.eq.s32.totalorder %s48, 1
      %p134 = por %p132, %p133
      %p136 = scmp.ne.s32.totalorder %s121, %s135
      %p137 = scmp.eq.s32.totalorder %s48, 0
      %p138 = por %p136, %p137
      %s140 = sadd.s32 %s139, 1
      %p143 = scmp.eq.s32.totalorder %s42, 1
      %p144 = scmp.ne.s32.totalorder %s139, %s141
      %p145 = scmp.eq.s32.totalorder %s42, 0
      %p146 = por %p144, %p145
      %p147 = scmp.ne.s32.totalorder %s139, %s141
      %p148 = scmp.eq.s32.totalorder %s47, 1
      %p149 = por %p147, %p148
      %p150 = scmp.ne.s32.totalorder %s141, %s142
      %p151 = scmp.eq.s32.totalorder %s47, 0
      %p152 = por %p150, %p151
      %p153 = scmp.ne.s32.totalorder %s141, %s142
      %p154 = scmp.eq.s32.totalorder %s48, 1
      %p155 = por %p153, %p154
      %p157 = scmp.ne.s32.totalorder %s142, %s156
      %p158 = scmp.eq.s32.totalorder %s48, 0
      %p159 = por %p157, %p158
      %s161 = sadd.s32 %s160, 1
      %p164 = scmp.eq.s32.totalorder %s42, 1
      %p165 = scmp.ne.s32.totalorder %s160, %s162
      %p166 = scmp.eq.s32.totalorder %s42, 0
      %p167 = por %p165, %p166
      %p168 = scmp.ne.s32.totalorder %s160, %s162
      %p169 = scmp.eq.s32.totalorder %s47, 1
      %p170 = por %p168, %p169
      %p171 = scmp.ne.s32.totalorder %s162, %s163
      %p172 = scmp.eq.s32.totalorder %s47, 0
      %p173 = por %p171, %p172
      %p174 = scmp.ne.s32.totalorder %s162, %s163
      %p175 = scmp.eq.s32.totalorder %s48, 1
      %p176 = por %p174, %p175
      %p178 = scmp.ne.s32.totalorder %s163, %s177
      %p179 = scmp.eq.s32.totalorder %s48, 0
      %p180 = por %p178, %p179
      %s182 = sadd.s32 %s181, 1
      %p185 = scmp.eq.s32.totalorder %s42, 1
      %p186 = scmp.ne.s32.totalorder %s181, %s183
      %p187 = scmp.eq.s32.totalorder %s42, 0
      %p188 = por %p186, %p187
      %p189 = scmp.ne.s32.totalorder %s181, %s183
      %p190 = scmp.eq.s32.totalorder %s47, 1
      %p191 = por %p189, %p190
      %p192 = scmp.ne.s32.totalorder %s183, %s184
      %p193 = scmp.eq.s32.totalorder %s47, 0
      %p194 = por %p192, %p193
      %p195 = scmp.ne.s32.totalorder %s183, %s184
      %p196 = scmp.eq.s32.totalorder %s48, 1
      %p197 = por %p195, %p196
      %p199 = scmp.ne.s32.totalorder %s184, %s198
      %p200 = scmp.eq.s32.totalorder %s48, 0
      %p201 = por %p199, %p200
      %s203 = sadd.s32 %s202, 1
      %p206 = scmp.eq.s32.totalorder %s42, 1
      %p207 = scmp.ne.s32.totalorder %s202, %s204
      %p208 = scmp.eq.s32.totalorder %s42, 0
      %p209 = por %p207, %p208
      %p210 = scmp.ne.s32.totalorder %s202, %s204
      %p211 = scmp.eq.s32.totalorder %s47, 1
      %p212 = por %p210, %p211
      %p213 = scmp.ne.s32.totalorder %s204, %s205
      %p214 = scmp.eq.s32.totalorder %s47, 0
      %p215 = por %p213, %p214
      %p216 = scmp.ne.s32.totalorder %s204, %s205
      %p217 = scmp.eq.s32.totalorder %s48, 1
      %p218 = por %p216, %p217
      %p220 = scmp.ne.s32.totalorder %s205, %s219
      %p221 = scmp.eq.s32.totalorder %s48, 0
      %p222 = por %p220, %p221
      %s224 = sadd.s32 %s223, 1
      %p227 = scmp.eq.s32.totalorder %s42, 1
      %p228 = scmp.ne.s32.totalorder %s223, %s225
      %p229 = scmp.eq.s32.totalorder %s42, 0
      %p230 = por %p228, %p229
      %p231 = scmp.ne.s32.totalorder %s223, %s225
      %p232 = scmp.eq.s32.totalorder %s47, 1
      %p233 = por %p231, %p232
      %p234 = scmp.ne.s32.totalorder %s225, %s226
      %p235 = scmp.eq.s32.totalorder %s47, 0
      %p236 = por %p234, %p235
      %p237 = scmp.ne.s32.totalorder %s225, %s226
      %p238 = scmp.eq.s32.totalorder %s48, 1
      %p239 = por %p237, %p238
      %p241 = scmp.ne.s32.totalorder %s226, %s240
      %p242 = scmp.eq.s32.totalorder %s48, 0
      %p243 = por %p241, %p242
      %s245 = sadd.s32 %s244, 1
      %p248 = scmp.eq.s32.totalorder %s42, 1
      %p249 = scmp.ne.s32.totalorder %s244, %s246
      %p250 = scmp.eq.s32.totalorder %s42, 0
      %p251 = por %p249, %p250
      %p252 = scmp.ne.s32.totalorder %s244, %s246
      %p253 = scmp.eq.s32.totalorder %s47, 1
      %p254 = por %p252, %p253
      %p255 = scmp.ne.s32.totalorder %s246, %s247
      %p256 = scmp.eq.s32.totalorder %s47, 0
      %p257 = por %p255, %p256
      %p258 = scmp.ne.s32.totalorder %s246, %s247
      %p259 = scmp.eq.s32.totalorder %s48, 1
      %p260 = por %p258, %p259
      %p262 = scmp.ne.s32.totalorder %s247, %s261
      %p263 = scmp.eq.s32.totalorder %s48, 0
      %p264 = por %p262, %p263
      %s266 = sadd.s32 %s265, 1
      %p269 = scmp.eq.s32.totalorder %s42, 1
      %p270 = scmp.ne.s32.totalorder %s265, %s267
      %p271 = scmp.eq.s32.totalorder %s42, 0
      %p272 = por %p270, %p271
      %p273 = scmp.ne.s32.totalorder %s265, %s267
      %p274 = scmp.eq.s32.totalorder %s47, 1
      %p275 = por %p273, %p274
      %p276 = scmp.ne.s32.totalorder %s267, %s268
      %p277 = scmp.eq.s32.totalorder %s47, 0
      %p278 = por %p276, %p277
      %p279 = scmp.ne.s32.totalorder %s267, %s268
      %p280 = scmp.eq.s32.totalorder %s48, 1
      %p281 = por %p279, %p280
      %p283 = scmp.ne.s32.totalorder %s268, %s282
      %p284 = scmp.eq.s32.totalorder %s48, 0
      %p285 = por %p283, %p284
      %s287 = sadd.s32 %s286, 1
      %p290 = scmp.eq.s32.totalorder %s42, 1
      %p291 = scmp.ne.s32.totalorder %s286, %s288
      %p292 = scmp.eq.s32.totalorder %s42, 0
      %p293 = por %p291, %p292
      %p294 = scmp.ne.s32.totalorder %s286, %s288
      %p295 = scmp.eq.s32.totalorder %s47, 1
      %p296 = por %p294, %p295
      %p297 = scmp.ne.s32.totalorder %s288, %s289
      %p298 = scmp.eq.s32.totalorder %s47, 0
      %p299 = por %p297, %p298
      %p300 = scmp.ne.s32.totalorder %s288, %s289
      %p301 = scmp.eq.s32.totalorder %s48, 1
      %p302 = por %p300, %p301
      %p304 = scmp.ne.s32.totalorder %s289, %s303
      %p305 = scmp.eq.s32.totalorder %s48, 0
      %p306 = por %p304, %p305
      %s308 = sadd.s32 %s307, 1
      %p311 = scmp.eq.s32.totalorder %s42, 1
      %p312 = scmp.ne.s32.totalorder %s307, %s309
      %p313 = scmp.eq.s32.totalorder %s42, 0
      %p314 = por %p312, %p313
      %p315 = scmp.ne.s32.totalorder %s307, %s309
      %p316 = scmp.eq.s32.totalorder %s47, 1
      %p317 = por %p315, %p316
      %p318 = scmp.ne.s32.totalorder %s309, %s310
      %p319 = scmp.eq.s32.totalorder %s47, 0
      %p320 = por %p318, %p319
      %p321 = scmp.ne.s32.totalorder %s309, %s310
      %p322 = scmp.eq.s32.totalorder %s48, 1
      %p323 = por %p321, %p322
      %p325 = scmp.ne.s32.totalorder %s310, %s324
      %p326 = scmp.eq.s32.totalorder %s48, 0
      %p327 = por %p325, %p326
      %s329 = sadd.s32 %s328, 1
      %p332 = scmp.eq.s32.totalorder %s42, 1
      %p333 = scmp.ne.s32.totalorder %s328, %s330
      %p334 = scmp.eq.s32.totalorder %s42, 0
      %p335 = por %p333, %p334
      %p336 = scmp.ne.s32.totalorder %s328, %s330
      %p337 = scmp.eq.s32.totalorder %s47, 1
      %p338 = por %p336, %p337
      %p339 = scmp.ne.s32.totalorder %s330, %s331
      %p340 = scmp.eq.s32.totalorder %s47, 0
      %p341 = por %p339, %p340
      %p342 = scmp.ne.s32.totalorder %s330, %s331
      %p343 = scmp.eq.s32.totalorder %s48, 1
      %p344 = por %p342, %p343
      %p346 = scmp.ne.s32.totalorder %s331, %s345
      %p347 = scmp.eq.s32.totalorder %s48, 0
      %p348 = por %p346, %p347
      %s350 = sadd.s32 %s349, 1
      %p353 = scmp.eq.s32.totalorder %s42, 1
      %p354 = scmp.ne.s32.totalorder %s349, %s351
      %p355 = scmp.eq.s32.totalorder %s42, 0
      %p356 = por %p354, %p355
      %p357 = scmp.ne.s32.totalorder %s349, %s351
      %p358 = scmp.eq.s32.totalorder %s47, 1
      %p359 = por %p357, %p358
      %p360 = scmp.ne.s32.totalorder %s351, %s352
      %p361 = scmp.eq.s32.totalorder %s47, 0
      %p362 = por %p360, %p361
      %p363 = scmp.ne.s32.totalorder %s351, %s352
      %p364 = scmp.eq.s32.totalorder %s48, 1
      %p365 = por %p363, %p364
      %p367 = scmp.ne.s32.totalorder %s352, %s366
      %p368 = scmp.eq.s32.totalorder %s48, 0
      %p369 = por %p367, %p368
      %s371 = sadd.s32 %s370, 1
      %p374 = scmp.eq.s32.totalorder %s42, 1
      %p375 = scmp.ne.s32.totalorder %s370, %s372
      %p376 = scmp.eq.s32.totalorder %s42, 0
      %p377 = por %p375, %p376
      %p378 = scmp.ne.s32.totalorder %s370, %s372
      %p379 = scmp.eq.s32.totalorder %s47, 1
      %p380 = por %p378, %p379
      %p381 = scmp.ne.s32.totalorder %s372, %s373
      %p382 = scmp.eq.s32.totalorder %s47, 0
      %p383 = por %p381, %p382
      %p384 = scmp.ne.s32.totalorder %s372, %s373
      %p385 = scmp.eq.s32.totalorder %s48, 1
      %p386 = por %p384, %p385
      %p388 = scmp.ne.s32.totalorder %s373, %s387
      %p389 = scmp.eq.s32.totalorder %s48, 0
      %p390 = por %p388, %p389
      %s392 = sadd.s32 %s391, 1
      %p395 = scmp.eq.s32.totalorder %s42, 1
      %p396 = scmp.ne.s32.totalorder %s391, %s393
      %p397 = scmp.eq.s32.totalorder %s42, 0
      %p398 = por %p396, %p397
      %p399 = scmp.ne.s32.totalorder %s391, %s393
      %p400 = scmp.eq.s32.totalorder %s47, 1
      %p401 = por %p399, %p400
      %p402 = scmp.ne.s32.totalorder %s393, %s394
      %p403 = scmp.eq.s32.totalorder %s47, 0
      %p404 = por %p402, %p403
      %p405 = scmp.ne.s32.totalorder %s393, %s394
      %p406 = scmp.eq.s32.totalorder %s48, 1
      %p407 = por %p405, %p406
      %p409 = scmp.ne.s32.totalorder %s394, %s408
      %p410 = scmp.eq.s32.totalorder %s48, 0
      %p411 = por %p409, %p410
      %s413 = sadd.s32 %s412, 1
      %p416 = scmp.eq.s32.totalorder %s42, 1
      %p417 = scmp.ne.s32.totalorder %s412, %s414
      %p418 = scmp.eq.s32.totalorder %s42, 0
      %p419 = por %p417, %p418
      %p420 = scmp.ne.s32.totalorder %s412, %s414
      %p421 = scmp.eq.s32.totalorder %s47, 1
      %p422 = por %p420, %p421
      %p423 = scmp.ne.s32.totalorder %s414, %s415
      %p424 = scmp.eq.s32.totalorder %s47, 0
      %p425 = por %p423, %p424
      %p426 = scmp.ne.s32.totalorder %s414, %s415
      %p427 = scmp.eq.s32.totalorder %s48, 1
      %p428 = por %p426, %p427
      %p430 = scmp.ne.s32.totalorder %s415, %s429
      %p431 = scmp.eq.s32.totalorder %s48, 0
      %p432 = por %p430, %p431
      %s434 = sadd.s32 %s433, 1
      %p437 = scmp.eq.s32.totalorder %s42, 1
      %p438 = scmp.ne.s32.totalorder %s433, %s435
      %p439 = scmp.eq.s32.totalorder %s42, 0
      %p440 = por %p438, %p439
      %p441 = scmp.ne.s32.totalorder %s433, %s435
      %p442 = scmp.eq.s32.totalorder %s47, 1
      %p443 = por %p441, %p442
      %p444 = scmp.ne.s32.totalorder %s435, %s436
      %p445 = scmp.eq.s32.totalorder %s47, 0
      %p446 = por %p444, %p445
      %p447 = scmp.ne.s32.totalorder %s435, %s436
      %p448 = scmp.eq.s32.totalorder %s48, 1
      %p449 = por %p447, %p448
      %p451 = scmp.ne.s32.totalorder %s436, %s450
      %p452 = scmp.eq.s32.totalorder %s48, 0
      %p453 = por %p451, %p452
      %s454 = ssub.s32 %s42, %s49
      %p455 = scmp.eq.s32.totalorder %s454, 0
      %s457 = sadd.s32 %s456, 1
      %s458 = scalar_select %p455, %s456, %s457
      %p461 = pneg %p455
      %p462 = scmp.eq.s32.totalorder %s42, 1
      %p463 = por %p461, %p462
      %p464 = scmp.ne.s32.totalorder %s456, %s459
      %p465 = scmp.eq.s32.totalorder %s42, 0
      %p466 = por %p464, %p465
      %p467 = scmp.ne.s32.totalorder %s456, %s459
      %p468 = scmp.eq.s32.totalorder %s47, 1
      %p469 = por %p467, %p468
      %p470 = scmp.ne.s32.totalorder %s459, %s460
      %p471 = scmp.eq.s32.totalorder %s47, 0
      %p472 = por %p470, %p471
      %p473 = scmp.ne.s32.totalorder %s459, %s460
      %p474 = scmp.eq.s32.totalorder %s48, 1
      %p475 = por %p473, %p474
      %p477 = scmp.ne.s32.totalorder %s460, %s476
      %p478 = scmp.eq.s32.totalorder %s48, 0
      %p479 = por %p477, %p478
      %p480 = scmp.le.s32.totalorder 1, %s42
      %p481 = scmp.lt.s32.totalorder %s42, 3
      %p482 = pnand %p480, %p481
      %p483 = pneg %p482
      // Predicated region
      $region9: #{tpu_custom_call.1} parent=5 // pred_check
        _
      $region10: #{tpu_custom_call.1} parent=5 // pred_check_branch
        %485 = sbr.rel (%p482) target = $region12
      $region11: #{tpu_custom_call.1} parent=5 // pred_region
        %s486 = ssub.s32 %s42, 1
        // Predicated region
        $region13: #{tpu_custom_call.1} parent=11 // pred_check
          %p487 = pneg %p89
        $region14: #{tpu_custom_call.1} parent=11 // pred_check_branch
          %489 = sbr.rel (%p487) target = $region16
        $region15: #{tpu_custom_call.1} parent=11 // pred_region
          %s491 = ssub.s32 32768, 32768
          %492 = vsyncadd [#allocation9], %s491
          %s493 = sshll.u32 [#allocation8], 4
          %s494 = int_to_ptr.vmem [resolvable:$true] %s493
          %499 = dma.hbm_to_vmem [thread:$0]  %s1, 32768, %s494, [#allocation9], 512, 512, 32
        $region16: #{tpu_custom_call.1} parent=11 // pred_fallthru
          _
        // Predicated region
        $region17: #{tpu_custom_call.1} parent=11 // pred_check
          %p500 = pneg %p110
        $region18: #{tpu_custom_call.1} parent=11 // pred_check_branch
          %502 = sbr.rel (%p500) target = $region20
        $region19: #{tpu_custom_call.1} parent=11 // pred_region
          %s504 = ssub.s32 32768, 32768
          %505 = vsyncadd [#allocation9], %s504
          %s506 = sshll.u32 [#allocation10], 4
          %s507 = int_to_ptr.vmem [resolvable:$true] %s506
          %512 = dma.hbm_to_vmem [thread:$0]  %s2, 32768, %s507, [#allocation9], 512, 512, 32
        $region20: #{tpu_custom_call.1} parent=11 // pred_fallthru
          _
        // Predicated region
        $region21: #{tpu_custom_call.1} parent=11 // pred_check
          %p513 = pneg %p131
        $region22: #{tpu_custom_call.1} parent=11 // pred_check_branch
          %515 = sbr.rel (%p513) target = $region24
        $region23: #{tpu_custom_call.1} parent=11 // pred_region
          %s517 = ssub.s32 64, 64
          %518 = vsyncadd [#allocation12], %s517
          %s520 = sshll.u32 [#allocation11], 4
          %s521 = int_to_ptr.vmem [resolvable:$true] %s520
          %523 = dma.hbm_to_vmem [thread:$0]  %s3, 64, %s521, [#allocation12]
        $region24: #{tpu_custom_call.1} parent=11 // pred_fallthru
          _
        // Predicated region
        $region25: #{tpu_custom_call.1} parent=11 // pred_check
          %p524 = pneg %p152
        $region26: #{tpu_custom_call.1} parent=11 // pred_check_branch
          %526 = sbr.rel (%p524) target = $region28
        $region27: #{tpu_custom_call.1} parent=11 // pred_region
          %s528 = ssub.s32 64, 64
          %529 = vsyncadd [#allocation12], %s528
          %s531 = sshll.u32 [#allocation13], 4
          %s532 = int_to_ptr.vmem [resolvable:$true] %s531
          %534 = dma.hbm_to_vmem [thread:$0]  %s4, 64, %s532, [#allocation12]
        $region28: #{tpu_custom_call.1} parent=11 // pred_fallthru
          _
        // Predicated region
        $region29: #{tpu_custom_call.1} parent=11 // pred_check
          %p535 = pneg %p173
        $region30: #{tpu_custom_call.1} parent=11 // pred_check_branch
          %537 = sbr.rel (%p535) target = $region32
        $region31: #{tpu_custom_call.1} parent=11 // pred_region
          %s539 = ssub.s32 49152, 49152
          %540 = vsyncadd [#allocation15], %s539
          %s541 = sshll.u32 [#allocation14], 4
          %s542 = int_to_ptr.vmem [resolvable:$true] %s541
          %547 = dma.hbm_to_vmem [thread:$0]  %s5, 49152, %s542, [#allocation15], 256, 256, 16
        $region32: #{tpu_custom_call.1} parent=11 // pred_fallthru
          _
        // Predicated region
        $region33: #{tpu_custom_call.1} parent=11 // pred_check
          %p548 = pneg %p194
        $region34: #{tpu_custom_call.1} parent=11 // pred_check_branch
          %550 = sbr.rel (%p548) target = $region36
        $region35: #{tpu_custom_call.1} parent=11 // pred_region
          _
        $region36: #{tpu_custom_call.1} parent=11 // pred_fallthru
          _
        // Predicated region
        $region37: #{tpu_custom_call.1} parent=11 // pred_check
          %p551 = pneg %p215
        $region38: #{tpu_custom_call.1} parent=11 // pred_check_branch
          %553 = sbr.rel (%p551) target = $region40
        $region39: #{tpu_custom_call.1} parent=11 // pred_region
          %s555 = ssub.s32 16384, 16384
          %556 = vsyncadd [#allocation15], %s555
          %s557 = sshll.u32 [#allocation16], 4
          %s558 = int_to_ptr.vmem [resolvable:$true] %s557
          %563 = dma.hbm_to_vmem [thread:$0]  %s7, 16384, %s558, [#allocation15], 256, 256, 16
        $region40: #{tpu_custom_call.1} parent=11 // pred_fallthru
          _
        // Predicated region
        $region41: #{tpu_custom_call.1} parent=11 // pred_check
          %p564 = pneg %p236
        $region42: #{tpu_custom_call.1} parent=11 // pred_check_branch
          %566 = sbr.rel (%p564) target = $region44
        $region43: #{tpu_custom_call.1} parent=11 // pred_region
          _
        $region44: #{tpu_custom_call.1} parent=11 // pred_fallthru
          _
        // Predicated region
        $region45: #{tpu_custom_call.1} parent=11 // pred_check
          %p567 = pneg %p257
        $region46: #{tpu_custom_call.1} parent=11 // pred_check_branch
          %569 = sbr.rel (%p567) target = $region48
        $region47: #{tpu_custom_call.1} parent=11 // pred_region
          %s571 = ssub.s32 49152, 49152
          %572 = vsyncadd [#allocation18], %s571
          %s573 = sshll.u32 [#allocation17], 4
          %s574 = int_to_ptr.vmem [resolvable:$true] %s573
          %579 = dma.hbm_to_vmem [thread:$0]  %s9, 49152, %s574, [#allocation18], 256, 256, 16
        $region48: #{tpu_custom_call.1} parent=11 // pred_fallthru
          _
        // Predicated region
        $region49: #{tpu_custom_call.1} parent=11 // pred_check
          %p580 = pneg %p278
        $region50: #{tpu_custom_call.1} parent=11 // pred_check_branch
          %582 = sbr.rel (%p580) target = $region52
        $region51: #{tpu_custom_call.1} parent=11 // pred_region
          %s584 = ssub.s32 64, 64
          %585 = vsyncadd [#allocation18], %s584
          %s587 = sshll.u32 [#allocation19], 4
          %s588 = int_to_ptr.vmem [resolvable:$true] %s587
          %590 = dma.hbm_to_vmem [thread:$0]  %s10, 64, %s588, [#allocation18]
        $region52: #{tpu_custom_call.1} parent=11 // pred_fallthru
          _
        // Predicated region
        $region53: #{tpu_custom_call.1} parent=11 // pred_check
          %p591 = pneg %p299
        $region54: #{tpu_custom_call.1} parent=11 // pred_check_branch
          %593 = sbr.rel (%p591) target = $region56
        $region55: #{tpu_custom_call.1} parent=11 // pred_region
          %s595 = ssub.s32 16384, 16384
          %596 = vsyncadd [#allocation21], %s595
          %s597 = sshll.u32 [#allocation20], 4
          %s598 = int_to_ptr.vmem [resolvable:$true] %s597
          %603 = dma.hbm_to_vmem [thread:$0]  %s11, 16384, %s598, [#allocation21], 256, 256, 16
        $region56: #{tpu_custom_call.1} parent=11 // pred_fallthru
          _
        // Predicated region
        $region57: #{tpu_custom_call.1} parent=11 // pred_check
          %p604 = pneg %p320
        $region58: #{tpu_custom_call.1} parent=11 // pred_check_branch
          %606 = sbr.rel (%p604) target = $region60
        $region59: #{tpu_custom_call.1} parent=11 // pred_region
          %s608 = ssub.s32 64, 64
          %609 = vsyncadd [#allocation21], %s608
          %s611 = sshll.u32 [#allocation22], 4
          %s612 = int_to_ptr.vmem [resolvable:$true] %s611
          %614 = dma.hbm_to_vmem [thread:$0]  %s12, 64, %s612, [#allocation21]
        $region60: #{tpu_custom_call.1} parent=11 // pred_fallthru
          _
        // Predicated region
        $region61: #{tpu_custom_call.1} parent=11 // pred_check
          %p615 = pneg %p341
        $region62: #{tpu_custom_call.1} parent=11 // pred_check_branch
          %617 = sbr.rel (%p615) target = $region64
        $region63: #{tpu_custom_call.1} parent=11 // pred_region
          %s619 = ssub.s32 128, 128
          %620 = vsyncadd [#allocation24], %s619
          %s622 = sshll.u32 [#allocation23], 4
          %s623 = int_to_ptr.vmem [resolvable:$true] %s622
          %625 = dma.hbm_to_vmem [thread:$0]  %s13, 128, %s623, [#allocation24]
        $region64: #{tpu_custom_call.1} parent=11 // pred_fallthru
          _
        // Predicated region
        $region65: #{tpu_custom_call.1} parent=11 // pred_check
          %p626 = pneg %p362
        $region66: #{tpu_custom_call.1} parent=11 // pred_check_branch
          %628 = sbr.rel (%p626) target = $region68
        $region67: #{tpu_custom_call.1} parent=11 // pred_region
          %s630 = ssub.s32 16, 16
          %631 = vsyncadd [#allocation7], %s630
          %634 = dma.hbm_to_smem %s14, 16, [#allocation25], [#allocation7]
        $region68: #{tpu_custom_call.1} parent=11 // pred_fallthru
          _
        // Predicated region
        $region69: #{tpu_custom_call.1} parent=11 // pred_check
          %p635 = pneg %p383
        $region70: #{tpu_custom_call.1} parent=11 // pred_check_branch
          %637 = sbr.rel (%p635) target = $region72
        $region71: #{tpu_custom_call.1} parent=11 // pred_region
          %s639 = ssub.s32 128, 128
          %640 = vsyncadd [#allocation24], %s639
          %s642 = sshll.u32 [#allocation26], 4
          %s643 = int_to_ptr.vmem [resolvable:$true] %s642
          %645 = dma.hbm_to_vmem [thread:$0]  %s15, 128, %s643, [#allocation24]
        $region72: #{tpu_custom_call.1} parent=11 // pred_fallthru
          _
        // Predicated region
        $region73: #{tpu_custom_call.1} parent=11 // pred_check
          %p646 = pneg %p404
        $region74: #{tpu_custom_call.1} parent=11 // pred_check_branch
          %648 = sbr.rel (%p646) target = $region76
        $region75: #{tpu_custom_call.1} parent=11 // pred_region
          %s650 = ssub.s32 64, 64
          %651 = vsyncadd [#allocation28], %s650
          %s653 = sshll.u32 [#allocation27], 4
          %s654 = int_to_ptr.vmem [resolvable:$true] %s653
          %656 = dma.hbm_to_vmem [thread:$0]  %s16, 64, %s654, [#allocation28]
        $region76: #{tpu_custom_call.1} parent=11 // pred_fallthru
          _
        // Predicated region
        $region77: #{tpu_custom_call.1} parent=11 // pred_check
          %p657 = pneg %p425
        $region78: #{tpu_custom_call.1} parent=11 // pred_check_branch
          %659 = sbr.rel (%p657) target = $region80
        $region79: #{tpu_custom_call.1} parent=11 // pred_region
          %s661 = ssub.s32 16384, 16384
          %662 = vsyncadd [#allocation28], %s661
          %s663 = sshll.u32 [#allocation29], 4
          %s664 = int_to_ptr.vmem [resolvable:$true] %s663
          %669 = dma.hbm_to_vmem [thread:$0]  %s17, 16384, %s664, [#allocation28], 256, 256, 16
        $region80: #{tpu_custom_call.1} parent=11 // pred_fallthru
          _
        // Predicated region
        $region81: #{tpu_custom_call.1} parent=11 // pred_check
          %p670 = pneg %p446
        $region82: #{tpu_custom_call.1} parent=11 // pred_check_branch
          %672 = sbr.rel (%p670) target = $region84
        $region83: #{tpu_custom_call.1} parent=11 // pred_region
          %s674 = ssub.s32 64, 64
          %675 = vsyncadd [#allocation31], %s674
          %s677 = sshll.u32 [#allocation30], 4
          %s678 = int_to_ptr.vmem [resolvable:$true] %s677
          %680 = dma.hbm_to_vmem [thread:$0]  %s18, 64, %s678, [#allocation31]
        $region84: #{tpu_custom_call.1} parent=11 // pred_fallthru
          _
      $region12: #{tpu_custom_call.1} parent=5 // pred_fallthru
        _
      %p681 = scmp.lt.s32.totalorder %s42, 2
      // Predicated region
      $region85: #{tpu_custom_call.1} parent=5 // pred_check
        %p682 = pneg %p681
      $region86: #{tpu_custom_call.1} parent=5 // pred_check_branch
        %684 = sbr.rel (%p682) target = $region88
      $region87: #{tpu_custom_call.1} parent=5 // pred_region
        // Predicated region
        $region89: #{tpu_custom_call.1} parent=87 // pred_check
          %p685 = pneg %p62
        $region90: #{tpu_custom_call.1} parent=87 // pred_check_branch
          %687 = sbr.rel (%p685) target = $region92
        $region91: #{tpu_custom_call.1} parent=87 // pred_region
          %s688 = sand.u32 %s52, 1
          %s689 = scalar_lea.sflag [#allocation5], %s688
          %s690 = sand.u32 %s52, 1
          %s691 = smul.addr %s690, 64
          %s692 = scalar_lea.vmem [#allocation4], %s691
          %s694 = ssub.s32 1024, 1024
          %695 = vsyncadd %s689, %s694
          %s696 = smul.addr %s42, 8
          %s697 = smul.addr %s696, 128
          %s698 = scalar_lea.hbm %s0, %s697
          %s699 = sshll.u32 %s692, 4
          %s700 = int_to_ptr.vmem [resolvable:$true] %s699
          %705 = dma.hbm_to_vmem [thread:$0]  %s698, 1024, %s700, %s689, 512, 512, 32
        $region92: #{tpu_custom_call.1} parent=87 // pred_fallthru
          _
      $region88: #{tpu_custom_call.1} parent=5 // pred_fallthru
        _
      %p706 = scmp.le.s32.totalorder 1, %s42
      %p707 = scmp.lt.s32.totalorder %s42, 3
      %p708 = pnand %p706, %p707
      %p709 = pneg %p708
      // Predicated region
      $region93: #{tpu_custom_call.1} parent=5 // pred_check
        _
      $region94: #{tpu_custom_call.1} parent=5 // pred_check_branch
        %711 = sbr.rel (%p708) target = $region96
      $region95: #{tpu_custom_call.1} parent=5 // pred_region
        %s712 = ssub.s32 %s42, 1
        %s713 = sand.u32 %s55, 1
        %s714 = scalar_lea.sflag [#allocation5], %s713
        %s715 = sand.u32 %s55, 1
        %s716 = smul.addr %s715, 64
        %s717 = scalar_lea.vmem [#allocation4], %s716
        // Predicated region
        $region97: #{tpu_custom_call.1} parent=95 // pred_check
          %p718 = pneg %p68
        $region98: #{tpu_custom_call.1} parent=95 // pred_check_branch
          %720 = sbr.rel (%p718) target = $region100
        $region99: #{tpu_custom_call.1} parent=95 // pred_region
          %721 = dma.done %s714, 1024
        $region100: #{tpu_custom_call.1} parent=95 // pred_fallthru
          _
        // Predicated region
        $region101: #{tpu_custom_call.1} parent=95 // pred_check
          %p722 = pneg %p89
        $region102: #{tpu_custom_call.1} parent=95 // pred_check_branch
          %724 = sbr.rel (%p722) target = $region104
        $region103: #{tpu_custom_call.1} parent=95 // pred_region
          %725 = dma.done [#allocation9], 32768
        $region104: #{tpu_custom_call.1} parent=95 // pred_fallthru
          _
        // Predicated region
        $region105: #{tpu_custom_call.1} parent=95 // pred_check
          %p726 = pneg %p110
        $region106: #{tpu_custom_call.1} parent=95 // pred_check_branch
          %728 = sbr.rel (%p726) target = $region108
        $region107: #{tpu_custom_call.1} parent=95 // pred_region
          %729 = dma.done [#allocation9], 32768
        $region108: #{tpu_custom_call.1} parent=95 // pred_fallthru
          _
        // Predicated region
        $region109: #{tpu_custom_call.1} parent=95 // pred_check
          %p730 = pneg %p131
        $region110: #{tpu_custom_call.1} parent=95 // pred_check_branch
          %732 = sbr.rel (%p730) target = $region112
        $region111: #{tpu_custom_call.1} parent=95 // pred_region
          %733 = dma.done [#allocation12], 64
        $region112: #{tpu_custom_call.1} parent=95 // pred_fallthru
          _
        // Predicated region
        $region113: #{tpu_custom_call.1} parent=95 // pred_check
          %p734 = pneg %p152
        $region114: #{tpu_custom_call.1} parent=95 // pred_check_branch
          %736 = sbr.rel (%p734) target = $region116
        $region115: #{tpu_custom_call.1} parent=95 // pred_region
          %737 = dma.done [#allocation12], 64
        $region116: #{tpu_custom_call.1} parent=95 // pred_fallthru
          _
        // Predicated region
        $region117: #{tpu_custom_call.1} parent=95 // pred_check
          %p738 = pneg %p173
        $region118: #{tpu_custom_call.1} parent=95 // pred_check_branch
          %740 = sbr.rel (%p738) target = $region120
        $region119: #{tpu_custom_call.1} parent=95 // pred_region
          %741 = dma.done [#allocation15], 49152
        $region120: #{tpu_custom_call.1} parent=95 // pred_fallthru
          _
        // Predicated region
        $region121: #{tpu_custom_call.1} parent=95 // pred_check
          %p742 = pneg %p215
        $region122: #{tpu_custom_call.1} parent=95 // pred_check_branch
          %744 = sbr.rel (%p742) target = $region124
        $region123: #{tpu_custom_call.1} parent=95 // pred_region
          %745 = dma.done [#allocation15], 16384
        $region124: #{tpu_custom_call.1} parent=95 // pred_fallthru
          _
        // Predicated region
        $region125: #{tpu_custom_call.1} parent=95 // pred_check
          %p746 = pneg %p257
        $region126: #{tpu_custom_call.1} parent=95 // pred_check_branch
          %748 = sbr.rel (%p746) target = $region128
        $region127: #{tpu_custom_call.1} parent=95 // pred_region
          %749 = dma.done [#allocation18], 49152
        $region128: #{tpu_custom_call.1} parent=95 // pred_fallthru
          _
        // Predicated region
        $region129: #{tpu_custom_call.1} parent=95 // pred_check
          %p750 = pneg %p278
        $region130: #{tpu_custom_call.1} parent=95 // pred_check_branch
          %752 = sbr.rel (%p750) target = $region132
        $region131: #{tpu_custom_call.1} parent=95 // pred_region
          %753 = dma.done [#allocation18], 64
        $region132: #{tpu_custom_call.1} parent=95 // pred_fallthru
          _
        // Predicated region
        $region133: #{tpu_custom_call.1} parent=95 // pred_check
          %p754 = pneg %p299
        $region134: #{tpu_custom_call.1} parent=95 // pred_check_branch
          %756 = sbr.rel (%p754) target = $region136
        $region135: #{tpu_custom_call.1} parent=95 // pred_region
          %757 = dma.done [#allocation21], 16384
        $region136: #{tpu_custom_call.1} parent=95 // pred_fallthru
          _
        // Predicated region
        $region137: #{tpu_custom_call.1} parent=95 // pred_check
          %p758 = pneg %p320
        $region138: #{tpu_custom_call.1} parent=95 // pred_check_branch
          %760 = sbr.rel (%p758) target = $region140
        $region139: #{tpu_custom_call.1} parent=95 // pred_region
          %761 = dma.done [#allocation21], 64
        $region140: #{tpu_custom_call.1} parent=95 // pred_fallthru
          _
        // Predicated region
        $region141: #{tpu_custom_call.1} parent=95 // pred_check
          %p762 = pneg %p341
        $region142: #{tpu_custom_call.1} parent=95 // pred_check_branch
          %764 = sbr.rel (%p762) target = $region144
        $region143: #{tpu_custom_call.1} parent=95 // pred_region
          %765 = dma.done [#allocation24], 128
        $region144: #{tpu_custom_call.1} parent=95 // pred_fallthru
          _
        // Predicated region
        $region145: #{tpu_custom_call.1} parent=95 // pred_check
          %p766 = pneg %p362
        $region146: #{tpu_custom_call.1} parent=95 // pred_check_branch
          %768 = sbr.rel (%p766) target = $region148
        $region147: #{tpu_custom_call.1} parent=95 // pred_region
          %769 = dma.done [#allocation7], 16
        $region148: #{tpu_custom_call.1} parent=95 // pred_fallthru
          _
        // Predicated region
        $region149: #{tpu_custom_call.1} parent=95 // pred_check
          %p770 = pneg %p383
        $region150: #{tpu_custom_call.1} parent=95 // pred_check_branch
          %772 = sbr.rel (%p770) target = $region152
        $region151: #{tpu_custom_call.1} parent=95 // pred_region
          %773 = dma.done [#allocation24], 128
        $region152: #{tpu_custom_call.1} parent=95 // pred_fallthru
          _
        // Predicated region
        $region153: #{tpu_custom_call.1} parent=95 // pred_check
          %p774 = pneg %p404
        $region154: #{tpu_custom_call.1} parent=95 // pred_check_branch
          %776 = sbr.rel (%p774) target = $region156
        $region155: #{tpu_custom_call.1} parent=95 // pred_region
          %777 = dma.done [#allocation28], 64
        $region156: #{tpu_custom_call.1} parent=95 // pred_fallthru
          _
        // Predicated region
        $region157: #{tpu_custom_call.1} parent=95 // pred_check
          %p778 = pneg %p425
        $region158: #{tpu_custom_call.1} parent=95 // pred_check_branch
          %780 = sbr.rel (%p778) target = $region160
        $region159: #{tpu_custom_call.1} parent=95 // pred_region
          %781 = dma.done [#allocation28], 16384
        $region160: #{tpu_custom_call.1} parent=95 // pred_fallthru
          _
        // Predicated region
        $region161: #{tpu_custom_call.1} parent=95 // pred_check
          %p782 = pneg %p446
        $region162: #{tpu_custom_call.1} parent=95 // pred_check_branch
          %784 = sbr.rel (%p782) target = $region164
        $region163: #{tpu_custom_call.1} parent=95 // pred_region
          %785 = dma.done [#allocation31], 64
        $region164: #{tpu_custom_call.1} parent=95 // pred_fallthru
          _
        %786 = sfence
        %s787 = sand.u32 %s55, 1
        %s788 = scalar_lea.sflag [#allocation5], %s787
        %s789 = sand.u32 %s55, 1
        %s790 = smul.addr %s789, 64
        %s791 = scalar_lea.vmem [#allocation4], %s790
        %p792 = pneg %p68
        %p793 = pneg %p65
        %p794 = pneg %p89
        %p795 = pneg %p86
        %p796 = pneg %p110
        %p797 = pneg %p107
        %p798 = pneg %p131
        %p799 = pneg %p128
        %p800 = pneg %p152
        %p801 = pneg %p149
        %p802 = pneg %p173
        %p803 = pneg %p170
        %p804 = pneg %p194
        %p805 = pneg %p191
        %p806 = pneg %p215
        %p807 = pneg %p212
        %p808 = pneg %p236
        %p809 = pneg %p233
        %p810 = pneg %p257
        %p811 = pneg %p254
        %p812 = pneg %p278
        %p813 = pneg %p275
        %p814 = pneg %p299
        %p815 = pneg %p296
        %p816 = pneg %p320
        %p817 = pneg %p317
        %p818 = pneg %p341
        %p819 = pneg %p338
        %p820 = pneg %p362
        %p821 = pneg %p359
        %p822 = pneg %p383
        %p823 = pneg %p380
        %p824 = pneg %p404
        %p825 = pneg %p401
        %p826 = pneg %p425
        %p827 = pneg %p422
        %p828 = pneg %p446
        %p829 = pneg %p443
        %p830 = pneg %p472
        %p831 = pneg %p469
        %s832 = sand.u32 %s459, 1
        %s833 = scalar_lea.sflag [#allocation6], %s832
        %s834 = sand.u32 %s459, 1
        %s835 = smul.addr %s834, 64
        %s836 = scalar_lea.vmem [#allocation32], %s835
        %v837 = vld [vmem:[%s717] sm:$0xff]
        %v838 = vld [vmem:[%s717 + $0x8] sm:$0xff]
        %v839 = vld [vmem:[%s717 + $0x10] sm:$0xff]
        %v840 = vld [vmem:[%s717 + $0x18] sm:$0xff]
        %v841 = vld [vmem:[%s717 + $0x20] sm:$0xff]
        %v842 = vld [vmem:[%s717 + $0x28] sm:$0xff]
        %v843 = vld [vmem:[%s717 + $0x30] sm:$0xff]
        %v844 = vld [vmem:[%s717 + $0x38] sm:$0xff]
        %v845 = vld [vmem:[#allocation8] sm:$0xff]
        %v846 = vld [vmem:[#allocation8 + $0x8] sm:$0xff]
        %v847 = vld [vmem:[#allocation8 + $0x10] sm:$0xff]
        %v848 = vld [vmem:[#allocation8 + $0x18] sm:$0xff]
        %v849 = vld [vmem:[#allocation8 + $0x20] sm:$0xff]
        %v850 = vld [vmem:[#allocation8 + $0x28] sm:$0xff]
        %v851 = vld [vmem:[#allocation8 + $0x30] sm:$0xff]
        %v852 = vld [vmem:[#allocation8 + $0x38] sm:$0xff]
        %v853 = vld [vmem:[#allocation8 + $0x40] sm:$0xff]
        %v854 = vld [vmem:[#allocation8 + $0x48] sm:$0xff]
        %v855 = vld [vmem:[#allocation8 + $0x50] sm:$0xff]
        %v856 = vld [vmem:[#allocation8 + $0x58] sm:$0xff]
        %v857 = vld [vmem:[#allocation8 + $0x60] sm:$0xff]
        %v858 = vld [vmem:[#allocation8 + $0x68] sm:$0xff]
        %v859 = vld [vmem:[#allocation8 + $0x70] sm:$0xff]
        %v860 = vld [vmem:[#allocation8 + $0x78] sm:$0xff]
        %v861 = vld [vmem:[#allocation8 + $0x80] sm:$0xff]
        %v862 = vld [vmem:[#allocation8 + $0x88] sm:$0xff]
        %v863 = vld [vmem:[#allocation8 + $0x90] sm:$0xff]
        %v864 = vld [vmem:[#allocation8 + $0x98] sm:$0xff]
        %v865 = vld [vmem:[#allocation8 + $0xa0] sm:$0xff]
        %v866 = vld [vmem:[#allocation8 + $0xa8] sm:$0xff]
        %v867 = vld [vmem:[#allocation8 + $0xb0] sm:$0xff]
        %v868 = vld [vmem:[#allocation8 + $0xb8] sm:$0xff]
        %v869 = vld [vmem:[#allocation8 + $0xc0] sm:$0xff]
        %v870 = vld [vmem:[#allocation8 + $0xc8] sm:$0xff]
        %v871 = vld [vmem:[#allocation8 + $0xd0] sm:$0xff]
        %v872 = vld [vmem:[#allocation8 + $0xd8] sm:$0xff]
        %v873 = vld [vmem:[#allocation8 + $0xe0] sm:$0xff]
        %v874 = vld [vmem:[#allocation8 + $0xe8] sm:$0xff]
        %v875 = vld [vmem:[#allocation8 + $0xf0] sm:$0xff]
        %v876 = vld [vmem:[#allocation8 + $0xf8] sm:$0xff]
        %v877 = vld [vmem:[#allocation8 + $0x100] sm:$0xff]
        %v878 = vld [vmem:[#allocation8 + $0x108] sm:$0xff]
        %v879 = vld [vmem:[#allocation8 + $0x110] sm:$0xff]
        %v880 = vld [vmem:[#allocation8 + $0x118] sm:$0xff]
        %v881 = vld [vmem:[#allocation8 + $0x120] sm:$0xff]
        %v882 = vld [vmem:[#allocation8 + $0x128] sm:$0xff]
        %v883 = vld [vmem:[#allocation8 + $0x130] sm:$0xff]
        %v884 = vld [vmem:[#allocation8 + $0x138] sm:$0xff]
        %v885 = vld [vmem:[#allocation8 + $0x140] sm:$0xff]
        %v886 = vld [vmem:[#allocation8 + $0x148] sm:$0xff]
        %v887 = vld [vmem:[#allocation8 + $0x150] sm:$0xff]
        %v888 = vld [vmem:[#allocation8 + $0x158] sm:$0xff]
        %v889 = vld [vmem:[#allocation8 + $0x160] sm:$0xff]
        %v890 = vld [vmem:[#allocation8 + $0x168] sm:$0xff]
        %v891 = vld [vmem:[#allocation8 + $0x170] sm:$0xff]
        %v892 = vld [vmem:[#allocation8 + $0x178] sm:$0xff]
        %v893 = vld [vmem:[#allocation8 + $0x180] sm:$0xff]
        %v894 = vld [vmem:[#allocation8 + $0x188] sm:$0xff]
        %v895 = vld [vmem:[#allocation8 + $0x190] sm:$0xff]
        %v896 = vld [vmem:[#allocation8 + $0x198] sm:$0xff]
        %v897 = vld [vmem:[#allocation8 + $0x1a0] sm:$0xff]
        %v898 = vld [vmem:[#allocation8 + $0x1a8] sm:$0xff]
        %v899 = vld [vmem:[#allocation8 + $0x1b0] sm:$0xff]
        %v900 = vld [vmem:[#allocation8 + $0x1b8] sm:$0xff]
        %v901 = vld [vmem:[#allocation8 + $0x1c0] sm:$0xff]
        %v902 = vld [vmem:[#allocation8 + $0x1c8] sm:$0xff]
        %v903 = vld [vmem:[#allocation8 + $0x1d0] sm:$0xff]
        %v904 = vld [vmem:[#allocation8 + $0x1d8] sm:$0xff]
        %v905 = vld [vmem:[#allocation8 + $0x1e0] sm:$0xff]
        %v906 = vld [vmem:[#allocation8 + $0x1e8] sm:$0xff]
        %v907 = vld [vmem:[#allocation8 + $0x1f0] sm:$0xff]
        %v908 = vld [vmem:[#allocation8 + $0x1f8] sm:$0xff]
        %v909 = vld [vmem:[#allocation8 + $0x200] sm:$0xff]
        %v910 = vld [vmem:[#allocation8 + $0x208] sm:$0xff]
        %v911 = vld [vmem:[#allocation8 + $0x210] sm:$0xff]
        %v912 = vld [vmem:[#allocation8 + $0x218] sm:$0xff]
        %v913 = vld [vmem:[#allocation8 + $0x220] sm:$0xff]
        %v914 = vld [vmem:[#allocation8 + $0x228] sm:$0xff]
        %v915 = vld [vmem:[#allocation8 + $0x230] sm:$0xff]
        %v916 = vld [vmem:[#allocation8 + $0x238] sm:$0xff]
        %v917 = vld [vmem:[#allocation8 + $0x240] sm:$0xff]
        %v918 = vld [vmem:[#allocation8 + $0x248] sm:$0xff]
        %v919 = vld [vmem:[#allocation8 + $0x250] sm:$0xff]
        %v920 = vld [vmem:[#allocation8 + $0x258] sm:$0xff]
        %v921 = vld [vmem:[#allocation8 + $0x260] sm:$0xff]
        %v922 = vld [vmem:[#allocation8 + $0x268] sm:$0xff]
        %v923 = vld [vmem:[#allocation8 + $0x270] sm:$0xff]
        %v924 = vld [vmem:[#allocation8 + $0x278] sm:$0xff]
        %v925 = vld [vmem:[#allocation8 + $0x280] sm:$0xff]
        %v926 = vld [vmem:[#allocation8 + $0x288] sm:$0xff]
        %v927 = vld [vmem:[#allocation8 + $0x290] sm:$0xff]
        %v928 = vld [vmem:[#allocation8 + $0x298] sm:$0xff]
        %v929 = vld [vmem:[#allocation8 + $0x2a0] sm:$0xff]
        %v930 = vld [vmem:[#allocation8 + $0x2a8] sm:$0xff]
        %v931 = vld [vmem:[#allocation8 + $0x2b0] sm:$0xff]
        %v932 = vld [vmem:[#allocation8 + $0x2b8] sm:$0xff]
        %v933 = vld [vmem:[#allocation8 + $0x2c0] sm:$0xff]
        %v934 = vld [vmem:[#allocation8 + $0x2c8] sm:$0xff]
        %v935 = vld [vmem:[#allocation8 + $0x2d0] sm:$0xff]
        %v936 = vld [vmem:[#allocation8 + $0x2d8] sm:$0xff]
        %v937 = vld [vmem:[#allocation8 + $0x2e0] sm:$0xff]
        %v938 = vld [vmem:[#allocation8 + $0x2e8] sm:$0xff]
        %v939 = vld [vmem:[#allocation8 + $0x2f0] sm:$0xff]
        %v940 = vld [vmem:[#allocation8 + $0x2f8] sm:$0xff]
        %v941 = vld [vmem:[#allocation8 + $0x300] sm:$0xff]
        %v942 = vld [vmem:[#allocation8 + $0x308] sm:$0xff]
        %v943 = vld [vmem:[#allocation8 + $0x310] sm:$0xff]
        %v944 = vld [vmem:[#allocation8 + $0x318] sm:$0xff]
        %v945 = vld [vmem:[#allocation8 + $0x320] sm:$0xff]
        %v946 = vld [vmem:[#allocation8 + $0x328] sm:$0xff]
        %v947 = vld [vmem:[#allocation8 + $0x330] sm:$0xff]
        %v948 = vld [vmem:[#allocation8 + $0x338] sm:$0xff]
        %v949 = vld [vmem:[#allocation8 + $0x340] sm:$0xff]
        %v950 = vld [vmem:[#allocation8 + $0x348] sm:$0xff]
        %v951 = vld [vmem:[#allocation8 + $0x350] sm:$0xff]
        %v952 = vld [vmem:[#allocation8 + $0x358] sm:$0xff]
        %v953 = vld [vmem:[#allocation8 + $0x360] sm:$0xff]
        %v954 = vld [vmem:[#allocation8 + $0x368] sm:$0xff]
        %v955 = vld [vmem:[#allocation8 + $0x370] sm:$0xff]
        %v956 = vld [vmem:[#allocation8 + $0x378] sm:$0xff]
        %v957 = vld [vmem:[#allocation8 + $0x380] sm:$0xff]
        %v958 = vld [vmem:[#allocation8 + $0x388] sm:$0xff]
        %v959 = vld [vmem:[#allocation8 + $0x390] sm:$0xff]
        %v960 = vld [vmem:[#allocation8 + $0x398] sm:$0xff]
        %v961 = vld [vmem:[#allocation8 + $0x3a0] sm:$0xff]
        %v962 = vld [vmem:[#allocation8 + $0x3a8] sm:$0xff]
        %v963 = vld [vmem:[#allocation8 + $0x3b0] sm:$0xff]
        %v964 = vld [vmem:[#allocation8 + $0x3b8] sm:$0xff]
        %v965 = vld [vmem:[#allocation8 + $0x3c0] sm:$0xff]
        %v966 = vld [vmem:[#allocation8 + $0x3c8] sm:$0xff]
        %v967 = vld [vmem:[#allocation8 + $0x3d0] sm:$0xff]
        %v968 = vld [vmem:[#allocation8 + $0x3d8] sm:$0xff]
        %v969 = vld [vmem:[#allocation8 + $0x3e0] sm:$0xff]
        %v970 = vld [vmem:[#allocation8 + $0x3e8] sm:$0xff]
        %v971 = vld [vmem:[#allocation8 + $0x3f0] sm:$0xff]
        %v972 = vld [vmem:[#allocation8 + $0x3f8] sm:$0xff]
        %v973 = vld [vmem:[#allocation8 + $0x400] sm:$0xff]
        %v974 = vld [vmem:[#allocation8 + $0x408] sm:$0xff]
        %v975 = vld [vmem:[#allocation8 + $0x410] sm:$0xff]
        %v976 = vld [vmem:[#allocation8 + $0x418] sm:$0xff]
        %v977 = vld [vmem:[#allocation8 + $0x420] sm:$0xff]
        %v978 = vld [vmem:[#allocation8 + $0x428] sm:$0xff]
        %v979 = vld [vmem:[#allocation8 + $0x430] sm:$0xff]
        %v980 = vld [vmem:[#allocation8 + $0x438] sm:$0xff]
        %v981 = vld [vmem:[#allocation8 + $0x440] sm:$0xff]
        %v982 = vld [vmem:[#allocation8 + $0x448] sm:$0xff]
        %v983 = vld [vmem:[#allocation8 + $0x450] sm:$0xff]
        %v984 = vld [vmem:[#allocation8 + $0x458] sm:$0xff]
        %v985 = vld [vmem:[#allocation8 + $0x460] sm:$0xff]
        %v986 = vld [vmem:[#allocation8 + $0x468] sm:$0xff]
        %v987 = vld [vmem:[#allocation8 + $0x470] sm:$0xff]
        %v988 = vld [vmem:[#allocation8 + $0x478] sm:$0xff]
        %v989 = vld [vmem:[#allocation8 + $0x480] sm:$0xff]
        %v990 = vld [vmem:[#allocation8 + $0x488] sm:$0xff]
        %v991 = vld [vmem:[#allocation8 + $0x490] sm:$0xff]
        %v992 = vld [vmem:[#allocation8 + $0x498] sm:$0xff]
        %v993 = vld [vmem:[#allocation8 + $0x4a0] sm:$0xff]
        %v994 = vld [vmem:[#allocation8 + $0x4a8] sm:$0xff]
        %v995 = vld [vmem:[#allocation8 + $0x4b0] sm:$0xff]
        %v996 = vld [vmem:[#allocation8 + $0x4b8] sm:$0xff]
        %v997 = vld [vmem:[#allocation8 + $0x4c0] sm:$0xff]
        %v998 = vld [vmem:[#allocation8 + $0x4c8] sm:$0xff]
        %v999 = vld [vmem:[#allocation8 + $0x4d0] sm:$0xff]
        %v1000 = vld [vmem:[#allocation8 + $0x4d8] sm:$0xff]
        %v1001 = vld [vmem:[#allocation8 + $0x4e0] sm:$0xff]
        %v1002 = vld [vmem:[#allocation8 + $0x4e8] sm:$0xff]
        %v1003 = vld [vmem:[#allocation8 + $0x4f0] sm:$0xff]
        %v1004 = vld [vmem:[#allocation8 + $0x4f8] sm:$0xff]
        %v1005 = vld [vmem:[#allocation8 + $0x500] sm:$0xff]
        %v1006 = vld [vmem:[#allocation8 + $0x508] sm:$0xff]
        %v1007 = vld [vmem:[#allocation8 + $0x510] sm:$0xff]
        %v1008 = vld [vmem:[#allocation8 + $0x518] sm:$0xff]
        %v1009 = vld [vmem:[#allocation8 + $0x520] sm:$0xff]
        %v1010 = vld [vmem:[#allocation8 + $0x528] sm:$0xff]
        %v1011 = vld [vmem:[#allocation8 + $0x530] sm:$0xff]
        %v1012 = vld [vmem:[#allocation8 + $0x538] sm:$0xff]
        %v1013 = vld [vmem:[#allocation8 + $0x540] sm:$0xff]
        %v1014 = vld [vmem:[#allocation8 + $0x548] sm:$0xff]
        %v1015 = vld [vmem:[#allocation8 + $0x550] sm:$0xff]
        %v1016 = vld [vmem:[#allocation8 + $0x558] sm:$0xff]
        %v1017 = vld [vmem:[#allocation8 + $0x560] sm:$0xff]
        %v1018 = vld [vmem:[#allocation8 + $0x568] sm:$0xff]
        %v1019 = vld [vmem:[#allocation8 + $0x570] sm:$0xff]
        %v1020 = vld [vmem:[#allocation8 + $0x578] sm:$0xff]
        %v1021 = vld [vmem:[#allocation8 + $0x580] sm:$0xff]
        %v1022 = vld [vmem:[#allocation8 + $0x588] sm:$0xff]
        %v1023 = vld [vmem:[#allocation8 + $0x590] sm:$0xff]
        %v1024 = vld [vmem:[#allocation8 + $0x598] sm:$0xff]
        %v1025 = vld [vmem:[#allocation8 + $0x5a0] sm:$0xff]
        %v1026 = vld [vmem:[#allocation8 + $0x5a8] sm:$0xff]
        %v1027 = vld [vmem:[#allocation8 + $0x5b0] sm:$0xff]
        %v1028 = vld [vmem:[#allocation8 + $0x5b8] sm:$0xff]
        %v1029 = vld [vmem:[#allocation8 + $0x5c0] sm:$0xff]
        %v1030 = vld [vmem:[#allocation8 + $0x5c8] sm:$0xff]
        %v1031 = vld [vmem:[#allocation8 + $0x5d0] sm:$0xff]
        %v1032 = vld [vmem:[#allocation8 + $0x5d8] sm:$0xff]
        %v1033 = vld [vmem:[#allocation8 + $0x5e0] sm:$0xff]
        %v1034 = vld [vmem:[#allocation8 + $0x5e8] sm:$0xff]
        %v1035 = vld [vmem:[#allocation8 + $0x5f0] sm:$0xff]
        %v1036 = vld [vmem:[#allocation8 + $0x5f8] sm:$0xff]
        %v1037 = vld [vmem:[#allocation8 + $0x600] sm:$0xff]
        %v1038 = vld [vmem:[#allocation8 + $0x608] sm:$0xff]
        %v1039 = vld [vmem:[#allocation8 + $0x610] sm:$0xff]
        %v1040 = vld [vmem:[#allocation8 + $0x618] sm:$0xff]
        %v1041 = vld [vmem:[#allocation8 + $0x620] sm:$0xff]
        %v1042 = vld [vmem:[#allocation8 + $0x628] sm:$0xff]
        %v1043 = vld [vmem:[#allocation8 + $0x630] sm:$0xff]
        %v1044 = vld [vmem:[#allocation8 + $0x638] sm:$0xff]
        %v1045 = vld [vmem:[#allocation8 + $0x640] sm:$0xff]
        %v1046 = vld [vmem:[#allocation8 + $0x648] sm:$0xff]
        %v1047 = vld [vmem:[#allocation8 + $0x650] sm:$0xff]
        %v1048 = vld [vmem:[#allocation8 + $0x658] sm:$0xff]
        %v1049 = vld [vmem:[#allocation8 + $0x660] sm:$0xff]
        %v1050 = vld [vmem:[#allocation8 + $0x668] sm:$0xff]
        %v1051 = vld [vmem:[#allocation8 + $0x670] sm:$0xff]
        %v1052 = vld [vmem:[#allocation8 + $0x678] sm:$0xff]
        %v1053 = vld [vmem:[#allocation8 + $0x680] sm:$0xff]
        %v1054 = vld [vmem:[#allocation8 + $0x688] sm:$0xff]
        %v1055 = vld [vmem:[#allocation8 + $0x690] sm:$0xff]
        %v1056 = vld [vmem:[#allocation8 + $0x698] sm:$0xff]
        %v1057 = vld [vmem:[#allocation8 + $0x6a0] sm:$0xff]
        %v1058 = vld [vmem:[#allocation8 + $0x6a8] sm:$0xff]
        %v1059 = vld [vmem:[#allocation8 + $0x6b0] sm:$0xff]
        %v1060 = vld [vmem:[#allocation8 + $0x6b8] sm:$0xff]
        %v1061 = vld [vmem:[#allocation8 + $0x6c0] sm:$0xff]
        %v1062 = vld [vmem:[#allocation8 + $0x6c8] sm:$0xff]
        %v1063 = vld [vmem:[#allocation8 + $0x6d0] sm:$0xff]
        %v1064 = vld [vmem:[#allocation8 + $0x6d8] sm:$0xff]
        %v1065 = vld [vmem:[#allocation8 + $0x6e0] sm:$0xff]
        %v1066 = vld [vmem:[#allocation8 + $0x6e8] sm:$0xff]
        %v1067 = vld [vmem:[#allocation8 + $0x6f0] sm:$0xff]
        %v1068 = vld [vmem:[#allocation8 + $0x6f8] sm:$0xff]
        %v1069 = vld [vmem:[#allocation8 + $0x700] sm:$0xff]
        %v1070 = vld [vmem:[#allocation8 + $0x708] sm:$0xff]
        %v1071 = vld [vmem:[#allocation8 + $0x710] sm:$0xff]
        %v1072 = vld [vmem:[#allocation8 + $0x718] sm:$0xff]
        %v1073 = vld [vmem:[#allocation8 + $0x720] sm:$0xff]
        %v1074 = vld [vmem:[#allocation8 + $0x728] sm:$0xff]
        %v1075 = vld [vmem:[#allocation8 + $0x730] sm:$0xff]
        %v1076 = vld [vmem:[#allocation8 + $0x738] sm:$0xff]
        %v1077 = vld [vmem:[#allocation8 + $0x740] sm:$0xff]
        %v1078 = vld [vmem:[#allocation8 + $0x748] sm:$0xff]
        %v1079 = vld [vmem:[#allocation8 + $0x750] sm:$0xff]
        %v1080 = vld [vmem:[#allocation8 + $0x758] sm:$0xff]
        %v1081 = vld [vmem:[#allocation8 + $0x760] sm:$0xff]
        %v1082 = vld [vmem:[#allocation8 + $0x768] sm:$0xff]
        %v1083 = vld [vmem:[#allocation8 + $0x770] sm:$0xff]
        %v1084 = vld [vmem:[#allocation8 + $0x778] sm:$0xff]
        %v1085 = vld [vmem:[#allocation8 + $0x780] sm:$0xff]
        %v1086 = vld [vmem:[#allocation8 + $0x788] sm:$0xff]
        %v1087 = vld [vmem:[#allocation8 + $0x790] sm:$0xff]
        %v1088 = vld [vmem:[#allocation8 + $0x798] sm:$0xff]
        %v1089 = vld [vmem:[#allocation8 + $0x7a0] sm:$0xff]
        %v1090 = vld [vmem:[#allocation8 + $0x7a8] sm:$0xff]
        %v1091 = vld [vmem:[#allocation8 + $0x7b0] sm:$0xff]
        %v1092 = vld [vmem:[#allocation8 + $0x7b8] sm:$0xff]
        %v1093 = vld [vmem:[#allocation8 + $0x7c0] sm:$0xff]
        %v1094 = vld [vmem:[#allocation8 + $0x7c8] sm:$0xff]
        %v1095 = vld [vmem:[#allocation8 + $0x7d0] sm:$0xff]
        %v1096 = vld [vmem:[#allocation8 + $0x7d8] sm:$0xff]
        %v1097 = vld [vmem:[#allocation8 + $0x7e0] sm:$0xff]
        %v1098 = vld [vmem:[#allocation8 + $0x7e8] sm:$0xff]
        %v1099 = vld [vmem:[#allocation8 + $0x7f0] sm:$0xff]
        %v1100 = vld [vmem:[#allocation8 + $0x7f8] sm:$0xff]
        %1101 = vmatprep.subr.mxu0 %v846
        %1102 = vmatpush1.msra.mxu0 %v845
        %1103 = vmatprep.subr.mxu0 %v850
        %1104 = vmatpush1.msra.mxu0 %v849
        %1105 = vmatprep.subr.mxu0 %v854
        %1106 = vmatpush1.msra.mxu0 %v853
        %1107 = vmatprep.subr.mxu0 %v858
        %1108 = vmatpush1.msra.mxu0 %v857
        %1109 = vmatprep.subr.mxu0 %v862
        %1110 = vmatpush1.msra.mxu0 %v861
        %1111 = vmatprep.subr.mxu0 %v866
        %1112 = vmatpush1.msra.mxu0 %v865
        %1113 = vmatprep.subr.mxu0 %v870
        %1114 = vmatpush1.msra.mxu0 %v869
        %1115 = vmatprep.subr.mxu0 %v874
        %1116 = vmatpush1.msra.mxu0 %v873
        %1117 = vmatprep.subr.mxu0 %v878
        %1118 = vmatpush1.msra.mxu0 %v877
        %1119 = vmatprep.subr.mxu0 %v882
        %1120 = vmatpush1.msra.mxu0 %v881
        %1121 = vmatprep.subr.mxu0 %v886
        %1122 = vmatpush1.msra.mxu0 %v885
        %1123 = vmatprep.subr.mxu0 %v890
        %1124 = vmatpush1.msra.mxu0 %v889
        %1125 = vmatprep.subr.mxu0 %v894
        %1126 = vmatpush1.msra.mxu0 %v893
        %1127 = vmatprep.subr.mxu0 %v898
        %1128 = vmatpush1.msra.mxu0 %v897
        %1129 = vmatprep.subr.mxu0 %v902
        %1130 = vmatpush1.msra.mxu0 %v901
        %1131 = vmatprep.subr.mxu0 %v906
        %1132 = vmatpush1.msra.mxu0 %v905
        %1133 = vmatprep.subr.mxu0 %v910
        %1134 = vmatpush1.msra.mxu0 %v909
        %1135 = vmatprep.subr.mxu0 %v914
        %1136 = vmatpush1.msra.mxu0 %v913
        %1137 = vmatprep.subr.mxu0 %v918
        %1138 = vmatpush1.msra.mxu0 %v917
        %1139 = vmatprep.subr.mxu0 %v922
        %1140 = vmatpush1.msra.mxu0 %v921
        %1141 = vmatprep.subr.mxu0 %v926
        %1142 = vmatpush1.msra.mxu0 %v925
        %1143 = vmatprep.subr.mxu0 %v930
        %1144 = vmatpush1.msra.mxu0 %v929
        %1145 = vmatprep.subr.mxu0 %v934
        %1146 = vmatpush1.msra.mxu0 %v933
        %1147 = vmatprep.subr.mxu0 %v938
        %1148 = vmatpush1.msra.mxu0 %v937
        %1149 = vmatprep.subr.mxu0 %v942
        %1150 = vmatpush1.msra.mxu0 %v941
        %1151 = vmatprep.subr.mxu0 %v946
        %1152 = vmatpush1.msra.mxu0 %v945
        %1153 = vmatprep.subr.mxu0 %v950
        %1154 = vmatpush1.msra.mxu0 %v949
        %1155 = vmatprep.subr.mxu0 %v954
        %1156 = vmatpush1.msra.mxu0 %v953
        %1157 = vmatprep.subr.mxu0 %v958
        %1158 = vmatpush1.msra.mxu0 %v957
        %1159 = vmatprep.subr.mxu0 %v962
        %1160 = vmatpush1.msra.mxu0 %v961
        %1161 = vmatprep.subr.mxu0 %v966
        %1162 = vmatpush1.msra.mxu0 %v965
        %1163 = vmatprep.subr.mxu0 %v970
        %1164 = vmatpush1.msra.mxu0 %v969
        %1165 = vmatprep.mubr.f32.mxu0 %v838
        %1166 = vmatmul.mubr.f32.gmra.mrb[0].mxu0 %v837
        %v1167 = vpop.f32.mrb[0].mxu0
        %v1168 = vadd.f32 0.0, %v1167
        %v1169 = vpop.f32.mrb[0].mxu0
        %v1170 = vadd.f32 0.0, %v1169
        %1171 = vmatprep.mubr.f32.mxu0 %v842
        %1172 = vmatmul.mubr.f32.gmra.mrb[0].mxu0 %v841
        %v1173 = vpop.f32.mrb[0].mxu0
        %v1174 = vadd.f32 0.0, %v1173
        %v1175 = vpop.f32.mrb[0].mxu0
        %v1176 = vadd.f32 0.0, %v1175
        %1177 = vdwg.mxu0
        %1178 = vmatprep.subr.mxu0 %v974
        %1179 = vmatpush1.msra.mxu0 %v973
        %1180 = vmatprep.subr.mxu0 %v978
        %1181 = vmatpush1.msra.mxu0 %v977
        %1182 = vmatprep.subr.mxu0 %v982
        %1183 = vmatpush1.msra.mxu0 %v981
        %1184 = vmatprep.subr.mxu0 %v986
        %1185 = vmatpush1.msra.mxu0 %v985
        %1186 = vmatprep.subr.mxu0 %v990
        %1187 = vmatpush1.msra.mxu0 %v989
        %1188 = vmatprep.subr.mxu0 %v994
        %1189 = vmatpush1.msra.mxu0 %v993
        %1190 = vmatprep.subr.mxu0 %v998
        %1191 = vmatpush1.msra.mxu0 %v997
        %1192 = vmatprep.subr.mxu0 %v1002
        %1193 = vmatpush1.msra.mxu0 %v1001
        %1194 = vmatprep.subr.mxu0 %v1006
        %1195 = vmatpush1.msra.mxu0 %v1005
        %1196 = vmatprep.subr.mxu0 %v1010
        %1197 = vmatpush1.msra.mxu0 %v1009
        %1198 = vmatprep.subr.mxu0 %v1014
        %1199 = vmatpush1.msra.mxu0 %v1013
        %1200 = vmatprep.subr.mxu0 %v1018
        %1201 = vmatpush1.msra.mxu0 %v1017
        %1202 = vmatprep.subr.mxu0 %v1022
        %1203 = vmatpush1.msra.mxu0 %v1021
        %1204 = vmatprep.subr.mxu0 %v1026
        %1205 = vmatpush1.msra.mxu0 %v1025
        %1206 = vmatprep.subr.mxu0 %v1030
        %1207 = vmatpush1.msra.mxu0 %v1029
        %1208 = vmatprep.subr.mxu0 %v1034
        %1209 = vmatpush1.msra.mxu0 %v1033
        %1210 = vmatprep.subr.mxu0 %v1038
        %1211 = vmatpush1.msra.mxu0 %v1037
        %1212 = vmatprep.subr.mxu0 %v1042
        %1213 = vmatpush1.msra.mxu0 %v1041
        %1214 = vmatprep.subr.mxu0 %v1046
        %1215 = vmatpush1.msra.mxu0 %v1045
        %1216 = vmatprep.subr.mxu0 %v1050
        %1217 = vmatpush1.msra.mxu0 %v1049
        %1218 = vmatprep.subr.mxu0 %v1054
        %1219 = vmatpush1.msra.mxu0 %v1053
        %1220 = vmatprep.subr.mxu0 %v1058
        %1221 = vmatpush1.msra.mxu0 %v1057
        %1222 = vmatprep.subr.mxu0 %v1062
        %1223 = vmatpush1.msra.mxu0 %v1061
        %1224 = vmatprep.subr.mxu0 %v1066
        %1225 = vmatpush1.msra.mxu0 %v1065
        %1226 = vmatprep.subr.mxu0 %v1070
        %1227 = vmatpush1.msra.mxu0 %v1069
        %1228 = vmatprep.subr.mxu0 %v1074
        %1229 = vmatpush1.msra.mxu0 %v1073
        %1230 = vmatprep.subr.mxu0 %v1078
        %1231 = vmatpush1.msra.mxu0 %v1077
        %1232 = vmatprep.subr.mxu0 %v1082
        %1233 = vmatpush1.msra.mxu0 %v1081
        %1234 = vmatprep.subr.mxu0 %v1086
        %1235 = vmatpush1.msra.mxu0 %v1085
        %1236 = vmatprep.subr.mxu0 %v1090
        %1237 = vmatpush1.msra.mxu0 %v1089
        %1238 = vmatprep.subr.mxu0 %v1094
        %1239 = vmatpush1.msra.mxu0 %v1093
        %1240 = vmatprep.subr.mxu0 %v1098
        %1241 = vmatpush1.msra.mxu0 %v1097
        %1242 = vmatprep.mubr.f32.mxu0 %v840
        %1243 = vmatmul.mubr.f32.gmra.mrb[0].mxu0 %v839
        %v1244 = vpop.f32.mrb[0].mxu0
        %v1245 = vadd.f32 %v1168, %v1244
        %v1246 = vpop.f32.mrb[0].mxu0
        %v1247 = vadd.f32 %v1170, %v1246
        %1248 = vmatprep.mubr.f32.mxu0 %v844
        %1249 = vmatmul.mubr.f32.gmra.mrb[0].mxu0 %v843
        %v1250 = vpop.f32.mrb[0].mxu0
        %v1251 = vadd.f32 %v1174, %v1250
        %v1252 = vpop.f32.mrb[0].mxu0
        %v1253 = vadd.f32 %v1176, %v1252
        %1254 = vdwg.mxu0
        %1255 = vmatprep.subr.mxu0 %v848
        %1256 = vmatpush1.msra.mxu0 %v847
        %1257 = vmatprep.subr.mxu0 %v852
        %1258 = vmatpush1.msra.mxu0 %v851
        %1259 = vmatprep.subr.mxu0 %v856
        %1260 = vmatpush1.msra.mxu0 %v855
        %1261 = vmatprep.subr.mxu0 %v860
        %1262 = vmatpush1.msra.mxu0 %v859
        %1263 = vmatprep.subr.mxu0 %v864
        %1264 = vmatpush1.msra.mxu0 %v863
        %1265 = vmatprep.subr.mxu0 %v868
        %1266 = vmatpush1.msra.mxu0 %v867
        %1267 = vmatprep.subr.mxu0 %v872
        %1268 = vmatpush1.msra.mxu0 %v871
        %1269 = vmatprep.subr.mxu0 %v876
        %1270 = vmatpush1.msra.mxu0 %v875
        %1271 = vmatprep.subr.mxu0 %v880
        %1272 = vmatpush1.msra.mxu0 %v879
        %1273 = vmatprep.subr.mxu0 %v884
        %1274 = vmatpush1.msra.mxu0 %v883
        %1275 = vmatprep.subr.mxu0 %v888
        %1276 = vmatpush1.msra.mxu0 %v887
        %1277 = vmatprep.subr.mxu0 %v892
        %1278 = vmatpush1.msra.mxu0 %v891
        %1279 = vmatprep.subr.mxu0 %v896
        %1280 = vmatpush1.msra.mxu0 %v895
        %1281 = vmatprep.subr.mxu0 %v900
        %1282 = vmatpush1.msra.mxu0 %v899
        %1283 = vmatprep.subr.mxu0 %v904
        %1284 = vmatpush1.msra.mxu0 %v903
        %1285 = vmatprep.subr.mxu0 %v908
        %1286 = vmatpush1.msra.mxu0 %v907
        %1287 = vmatprep.subr.mxu0 %v912
        %1288 = vmatpush1.msra.mxu0 %v911
        %1289 = vmatprep.subr.mxu0 %v916
        %1290 = vmatpush1.msra.mxu0 %v915
        %1291 = vmatprep.subr.mxu0 %v920
        %1292 = vmatpush1.msra.mxu0 %v919
        %1293 = vmatprep.subr.mxu0 %v924
        %1294 = vmatpush1.msra.mxu0 %v923
        %1295 = vmatprep.subr.mxu0 %v928
        %1296 = vmatpush1.msra.mxu0 %v927
        %1297 = vmatprep.subr.mxu0 %v932
        %1298 = vmatpush1.msra.mxu0 %v931
        %1299 = vmatprep.subr.mxu0 %v936
        %1300 = vmatpush1.msra.mxu0 %v935
        %1301 = vmatprep.subr.mxu0 %v940
        %1302 = vmatpush1.msra.mxu0 %v939
        %1303 = vmatprep.subr.mxu0 %v944
        %1304 = vmatpush1.msra.mxu0 %v943
        %1305 = vmatprep.subr.mxu0 %v948
        %1306 = vmatpush1.msra.mxu0 %v947
        %1307 = vmatprep.subr.mxu0 %v952
        %1308 = vmatpush1.msra.mxu0 %v951
        %1309 = vmatprep.subr.mxu0 %v956
        %1310 = vmatpush1.msra.mxu0 %v955
        %1311 = vmatprep.subr.mxu0 %v960
        %1312 = vmatpush1.msra.mxu0 %v959
        %1313 = vmatprep.subr.mxu0 %v964
        %1314 = vmatpush1.msra.mxu0 %v963
        %1315 = vmatprep.subr.mxu0 %v968
        %1316 = vmatpush1.msra.mxu0 %v967
        %1317 = vmatprep.subr.mxu0 %v972
        %1318 = vmatpush1.msra.mxu0 %v971
        %1319 = vmatprep.mubr.f32.mxu0 %v838
        %1320 = vmatmul.mubr.f32.gmra.mrb[0].mxu0 %v837
        %v1321 = vpop.f32.mrb[0].mxu0
        %v1322 = vadd.f32 0.0, %v1321
        %v1323 = vpop.f32.mrb[0].mxu0
        %v1324 = vadd.f32 0.0, %v1323
        %1325 = vmatprep.mubr.f32.mxu0 %v842
        %1326 = vmatmul.mubr.f32.gmra.mrb[0].mxu0 %v841
        %v1327 = vpop.f32.mrb[0].mxu0
        %v1328 = vadd.f32 0.0, %v1327
        %v1329 = vpop.f32.mrb[0].mxu0
        %v1330 = vadd.f32 0.0, %v1329
        %1331 = vdwg.mxu0
        %1332 = vmatprep.subr.mxu0 %v976
        %1333 = vmatpush1.msra.mxu0 %v975
        %1334 = vmatprep.subr.mxu0 %v980
        %1335 = vmatpush1.msra.mxu0 %v979
        %1336 = vmatprep.subr.mxu0 %v984
        %1337 = vmatpush1.msra.mxu0 %v983
        %1338 = vmatprep.subr.mxu0 %v988
        %1339 = vmatpush1.msra.mxu0 %v987
        %1340 = vmatprep.subr.mxu0 %v992
        %1341 = vmatpush1.msra.mxu0 %v991
        %1342 = vmatprep.subr.mxu0 %v996
        %1343 = vmatpush1.msra.mxu0 %v995
        %1344 = vmatprep.subr.mxu0 %v1000
        %1345 = vmatpush1.msra.mxu0 %v999
        %1346 = vmatprep.subr.mxu0 %v1004
        %1347 = vmatpush1.msra.mxu0 %v1003
        %1348 = vmatprep.subr.mxu0 %v1008
        %1349 = vmatpush1.msra.mxu0 %v1007
        %1350 = vmatprep.subr.mxu0 %v1012
        %1351 = vmatpush1.msra.mxu0 %v1011
        %1352 = vmatprep.subr.mxu0 %v1016
        %1353 = vmatpush1.msra.mxu0 %v1015
        %1354 = vmatprep.subr.mxu0 %v1020
        %1355 = vmatpush1.msra.mxu0 %v1019
        %1356 = vmatprep.subr.mxu0 %v1024
        %1357 = vmatpush1.msra.mxu0 %v1023
        %1358 = vmatprep.subr.mxu0 %v1028
        %1359 = vmatpush1.msra.mxu0 %v1027
        %1360 = vmatprep.subr.mxu0 %v1032
        %1361 = vmatpush1.msra.mxu0 %v1031
        %1362 = vmatprep.subr.mxu0 %v1036
        %1363 = vmatpush1.msra.mxu0 %v1035
        %1364 = vmatprep.subr.mxu0 %v1040
        %1365 = vmatpush1.msra.mxu0 %v1039
        %1366 = vmatprep.subr.mxu0 %v1044
        %1367 = vmatpush1.msra.mxu0 %v1043
        %1368 = vmatprep.subr.mxu0 %v1048
        %1369 = vmatpush1.msra.mxu0 %v1047
        %1370 = vmatprep.subr.mxu0 %v1052
        %1371 = vmatpush1.msra.mxu0 %v1051
        %1372 = vmatprep.subr.mxu0 %v1056
        %1373 = vmatpush1.msra.mxu0 %v1055
        %1374 = vmatprep.subr.mxu0 %v1060
        %1375 = vmatpush1.msra.mxu0 %v1059
        %1376 = vmatprep.subr.mxu0 %v1064
        %1377 = vmatpush1.msra.mxu0 %v1063
        %1378 = vmatprep.subr.mxu0 %v1068
        %1379 = vmatpush1.msra.mxu0 %v1067
        %1380 = vmatprep.subr.mxu0 %v1072
        %1381 = vmatpush1.msra.mxu0 %v1071
        %1382 = vmatprep.subr.mxu0 %v1076
        %1383 = vmatpush1.msra.mxu0 %v1075
        %1384 = vmatprep.subr.mxu0 %v1080
        %1385 = vmatpush1.msra.mxu0 %v1079
        %1386 = vmatprep.subr.mxu0 %v1084
        %1387 = vmatpush1.msra.mxu0 %v1083
        %1388 = vmatprep.subr.mxu0 %v1088
        %1389 = vmatpush1.msra.mxu0 %v1087
        %1390 = vmatprep.subr.mxu0 %v1092
        %1391 = vmatpush1.msra.mxu0 %v1091
        %1392 = vmatprep.subr.mxu0 %v1096
        %1393 = vmatpush1.msra.mxu0 %v1095
        %1394 = vmatprep.subr.mxu0 %v1100
        %1395 = vmatpush1.msra.mxu0 %v1099
        %1396 = vmatprep.mubr.f32.mxu0 %v840
        %1397 = vmatmul.mubr.f32.gmra.mrb[0].mxu0 %v839
        %v1398 = vpop.f32.mrb[0].mxu0
        %v1399 = vadd.f32 %v1322, %v1398
        %v1400 = vpop.f32.mrb[0].mxu0
        %v1401 = vadd.f32 %v1324, %v1400
        %1402 = vmatprep.mubr.f32.mxu0 %v844
        %1403 = vmatmul.mubr.f32.gmra.mrb[0].mxu0 %v843
        %v1404 = vpop.f32.mrb[0].mxu0
        %v1405 = vadd.f32 %v1328, %v1404
        %v1406 = vpop.f32.mrb[0].mxu0
        %v1407 = vadd.f32 %v1330, %v1406
        %1408 = vdwg.mxu0
        %v1409 = vsub.f32 %v837, %v1245
        %v1410 = vsub.f32 %v838, %v1247
        %v1411 = vsub.f32 %v839, %v1399
        %v1412 = vsub.f32 %v840, %v1401
        %v1413 = vsub.f32 %v841, %v1251
        %v1414 = vsub.f32 %v842, %v1253
        %v1415 = vsub.f32 %v843, %v1405
        %v1416 = vsub.f32 %v844, %v1407
        %v1417 = vmul.f32 %v1409, %v1409
        %v1418 = vmul.f32 %v1410, %v1410
        %v1419 = vmul.f32 %v1411, %v1411
        %v1420 = vmul.f32 %v1412, %v1412
        %v1421 = vmul.f32 %v1413, %v1413
        %v1422 = vmul.f32 %v1414, %v1414
        %v1423 = vmul.f32 %v1415, %v1415
        %v1424 = vmul.f32 %v1416, %v1416
        %1425 = vmatprep.subr.mxu0 %v846
        %1426 = vmatpush1.msra.mxu0 %v845
        %1427 = vmatprep.subr.mxu0 %v850
        %1428 = vmatpush1.msra.mxu0 %v849
        %1429 = vmatprep.subr.mxu0 %v854
        %1430 = vmatpush1.msra.mxu0 %v853
        %1431 = vmatprep.subr.mxu0 %v858
        %1432 = vmatpush1.msra.mxu0 %v857
        %1433 = vmatprep.subr.mxu0 %v862
        %1434 = vmatpush1.msra.mxu0 %v861
        %1435 = vmatprep.subr.mxu0 %v866
        %1436 = vmatpush1.msra.mxu0 %v865
        %1437 = vmatprep.subr.mxu0 %v870
        %1438 = vmatpush1.msra.mxu0 %v869
        %1439 = vmatprep.subr.mxu0 %v874
        %1440 = vmatpush1.msra.mxu0 %v873
        %1441 = vmatprep.subr.mxu0 %v878
        %1442 = vmatpush1.msra.mxu0 %v877
        %1443 = vmatprep.subr.mxu0 %v882
        %1444 = vmatpush1.msra.mxu0 %v881
        %1445 = vmatprep.subr.mxu0 %v886
        %1446 = vmatpush1.msra.mxu0 %v885
        %1447 = vmatprep.subr.mxu0 %v890
        %1448 = vmatpush1.msra.mxu0 %v889
        %1449 = vmatprep.subr.mxu0 %v894
        %1450 = vmatpush1.msra.mxu0 %v893
        %1451 = vmatprep.subr.mxu0 %v898
        %1452 = vmatpush1.msra.mxu0 %v897
        %1453 = vmatprep.subr.mxu0 %v902
        %1454 = vmatpush1.msra.mxu0 %v901
        %1455 = vmatprep.subr.mxu0 %v906
        %1456 = vmatpush1.msra.mxu0 %v905
        %1457 = vmatprep.subr.mxu0 %v910
        %1458 = vmatpush1.msra.mxu0 %v909
        %1459 = vmatprep.subr.mxu0 %v914
        %1460 = vmatpush1.msra.mxu0 %v913
        %1461 = vmatprep.subr.mxu0 %v918
        %1462 = vmatpush1.msra.mxu0 %v917
        %1463 = vmatprep.subr.mxu0 %v922
        %1464 = vmatpush1.msra.mxu0 %v921
        %1465 = vmatprep.subr.mxu0 %v926
        %1466 = vmatpush1.msra.mxu0 %v925
        %1467 = vmatprep.subr.mxu0 %v930
        %1468 = vmatpush1.msra.mxu0 %v929
        %1469 = vmatprep.subr.mxu0 %v934
        %1470 = vmatpush1.msra.mxu0 %v933
        %1471 = vmatprep.subr.mxu0 %v938
        %1472 = vmatpush1.msra.mxu0 %v937
        %1473 = vmatprep.subr.mxu0 %v942
        %1474 = vmatpush1.msra.mxu0 %v941
        %1475 = vmatprep.subr.mxu0 %v946
        %1476 = vmatpush1.msra.mxu0 %v945
        %1477 = vmatprep.subr.mxu0 %v950
        %1478 = vmatpush1.msra.mxu0 %v949
        %1479 = vmatprep.subr.mxu0 %v954
        %1480 = vmatpush1.msra.mxu0 %v953
        %1481 = vmatprep.subr.mxu0 %v958
        %1482 = vmatpush1.msra.mxu0 %v957
        %1483 = vmatprep.subr.mxu0 %v962
        %1484 = vmatpush1.msra.mxu0 %v961
        %1485 = vmatprep.subr.mxu0 %v966
        %1486 = vmatpush1.msra.mxu0 %v965
        %1487 = vmatprep.subr.mxu0 %v970
        %1488 = vmatpush1.msra.mxu0 %v969
        %1489 = vmatprep.mubr.f32.mxu0 %v1418
        %1490 = vmatmul.mubr.f32.gmra.mrb[0].mxu0 %v1417
        %v1491 = vpop.f32.mrb[0].mxu0
        %v1492 = vadd.f32 1e-05, %v1491
        %v1493 = vpop.f32.mrb[0].mxu0
        %v1494 = vadd.f32 1e-05, %v1493
        %1495 = vmatprep.mubr.f32.mxu0 %v1422
        %1496 = vmatmul.mubr.f32.gmra.mrb[0].mxu0 %v1421
        %v1497 = vpop.f32.mrb[0].mxu0
        %v1498 = vadd.f32 1e-05, %v1497
        %v1499 = vpop.f32.mrb[0].mxu0
        %v1500 = vadd.f32 1e-05, %v1499
        %1501 = vdwg.mxu0
        %1502 = vmatprep.subr.mxu0 %v974
        %1503 = vmatpush1.msra.mxu0 %v973
        %1504 = vmatprep.subr.mxu0 %v978
        %1505 = vmatpush1.msra.mxu0 %v977
        %1506 = vmatprep.subr.mxu0 %v982
        %1507 = vmatpush1.msra.mxu0 %v981
        %1508 = vmatprep.subr.mxu0 %v986
        %1509 = vmatpush1.msra.mxu0 %v985
        %1510 = vmatprep.subr.mxu0 %v990
        %1511 = vmatpush1.msra.mxu0 %v989
        %1512 = vmatprep.subr.mxu0 %v994
        %1513 = vmatpush1.msra.mxu0 %v993
        %1514 = vmatprep.subr.mxu0 %v998
        %1515 = vmatpush1.msra.mxu0 %v997
        %1516 = vmatprep.subr.mxu0 %v1002
        %1517 = vmatpush1.msra.mxu0 %v1001
        %1518 = vmatprep.subr.mxu0 %v1006
        %1519 = vmatpush1.msra.mxu0 %v1005
        %1520 = vmatprep.subr.mxu0 %v1010
        %1521 = vmatpush1.msra.mxu0 %v1009
        %1522 = vmatprep.subr.mxu0 %v1014
        %1523 = vmatpush1.msra.mxu0 %v1013
        %1524 = vmatprep.subr.mxu0 %v1018
        %1525 = vmatpush1.msra.mxu0 %v1017
        %1526 = vmatprep.subr.mxu0 %v1022
        %1527 = vmatpush1.msra.mxu0 %v1021
        %1528 = vmatprep.subr.mxu0 %v1026
        %1529 = vmatpush1.msra.mxu0 %v1025
        %1530 = vmatprep.subr.mxu0 %v1030
        %1531 = vmatpush1.msra.mxu0 %v1029
        %1532 = vmatprep.subr.mxu0 %v1034
        %1533 = vmatpush1.msra.mxu0 %v1033
        %1534 = vmatprep.subr.mxu0 %v1038
        %1535 = vmatpush1.msra.mxu0 %v1037
        %1536 = vmatprep.subr.mxu0 %v1042
        %1537 = vmatpush1.msra.mxu0 %v1041
        %1538 = vmatprep.subr.mxu0 %v1046
        %1539 = vmatpush1.msra.mxu0 %v1045
        %1540 = vmatprep.subr.mxu0 %v1050
        %1541 = vmatpush1.msra.mxu0 %v1049
        %1542 = vmatprep.subr.mxu0 %v1054
        %1543 = vmatpush1.msra.mxu0 %v1053
        %1544 = vmatprep.subr.mxu0 %v1058
        %1545 = vmatpush1.msra.mxu0 %v1057
        %1546 = vmatprep.subr.mxu0 %v1062
        %1547 = vmatpush1.msra.mxu0 %v1061
        %1548 = vmatprep.subr.mxu0 %v1066
        %1549 = vmatpush1.msra.mxu0 %v1065
        %1550 = vmatprep.subr.mxu0 %v1070
        %1551 = vmatpush1.msra.mxu0 %v1069
        %1552 = vmatprep.subr.mxu0 %v1074
        %1553 = vmatpush1.msra.mxu0 %v1073
        %1554 = vmatprep.subr.mxu0 %v1078
        %1555 = vmatpush1.msra.mxu0 %v1077
        %1556 = vmatprep.subr.mxu0 %v1082
        %1557 = vmatpush1.msra.mxu0 %v1081
        %1558 = vmatprep.subr.mxu0 %v1086
        %1559 = vmatpush1.msra.mxu0 %v1085
        %1560 = vmatprep.subr.mxu0 %v1090
        %1561 = vmatpush1.msra.mxu0 %v1089
        %1562 = vmatprep.subr.mxu0 %v1094
        %1563 = vmatpush1.msra.mxu0 %v1093
        %1564 = vmatprep.subr.mxu0 %v1098
        %1565 = vmatpush1.msra.mxu0 %v1097
        %1566 = vmatprep.mubr.f32.mxu0 %v1420
        %1567 = vmatmul.mubr.f32.gmra.mrb[0].mxu0 %v1419
        %v1568 = vpop.f32.mrb[0].mxu0
        %v1569 = vadd.f32 %v1492, %v1568
        %v1570 = vpop.f32.mrb[0].mxu0
        %v1571 = vadd.f32 %v1494, %v1570
        %1572 = vmatprep.mubr.f32.mxu0 %v1424
        %1573 = vmatmul.mubr.f32.gmra.mrb[0].mxu0 %v1423
        %v1574 = vpop.f32.mrb[0].mxu0
        %v1575 = vadd.f32 %v1498, %v1574
        %v1576 = vpop.f32.mrb[0].mxu0
        %v1577 = vadd.f32 %v1500, %v1576
        %1578 = vdwg.mxu0
        %1579 = vmatprep.subr.mxu0 %v848
        %1580 = vmatpush1.msra.mxu0 %v847
        %1581 = vmatprep.subr.mxu0 %v852
        %1582 = vmatpush1.msra.mxu0 %v851
        %1583 = vmatprep.subr.mxu0 %v856
        %1584 = vmatpush1.msra.mxu0 %v855
        %1585 = vmatprep.subr.mxu0 %v860
        %1586 = vmatpush1.msra.mxu0 %v859
        %1587 = vmatprep.subr.mxu0 %v864
        %1588 = vmatpush1.msra.mxu0 %v863
        %1589 = vmatprep.subr.mxu0 %v868
        %1590 = vmatpush1.msra.mxu0 %v867
        %1591 = vmatprep.subr.mxu0 %v872
        %1592 = vmatpush1.msra.mxu0 %v871
        %1593 = vmatprep.subr.mxu0 %v876
        %1594 = vmatpush1.msra.mxu0 %v875
        %1595 = vmatprep.subr.mxu0 %v880
        %1596 = vmatpush1.msra.mxu0 %v879
        %1597 = vmatprep.subr.mxu0 %v884
        %1598 = vmatpush1.msra.mxu0 %v883
        %1599 = vmatprep.subr.mxu0 %v888
        %1600 = vmatpush1.msra.mxu0 %v887
        %1601 = vmatprep.subr.mxu0 %v892
        %1602 = vmatpush1.msra.mxu0 %v891
        %1603 = vmatprep.subr.mxu0 %v896
        %1604 = vmatpush1.msra.mxu0 %v895
        %1605 = vmatprep.subr.mxu0 %v900
        %1606 = vmatpush1.msra.mxu0 %v899
        %1607 = vmatprep.subr.mxu0 %v904
        %1608 = vmatpush1.msra.mxu0 %v903
        %1609 = vmatprep.subr.mxu0 %v908
        %1610 = vmatpush1.msra.mxu0 %v907
        %1611 = vmatprep.subr.mxu0 %v912
        %1612 = vmatpush1.msra.mxu0 %v911
        %1613 = vmatprep.subr.mxu0 %v916
        %1614 = vmatpush1.msra.mxu0 %v915
        %1615 = vmatprep.subr.mxu0 %v920
        %1616 = vmatpush1.msra.mxu0 %v919
        %1617 = vmatprep.subr.mxu0 %v924
        %1618 = vmatpush1.msra.mxu0 %v923
        %1619 = vmatprep.subr.mxu0 %v928
        %1620 = vmatpush1.msra.mxu0 %v927
        %1621 = vmatprep.subr.mxu0 %v932
        %1622 = vmatpush1.msra.mxu0 %v931
        %1623 = vmatprep.subr.mxu0 %v936
        %1624 = vmatpush1.msra.mxu0 %v935
        %1625 = vmatprep.subr.mxu0 %v940
        %1626 = vmatpush1.msra.mxu0 %v939
        %1627 = vmatprep.subr.mxu0 %v944
        %1628 = vmatpush1.msra.mxu0 %v943
        %1629 = vmatprep.subr.mxu0 %v948
        %1630 = vmatpush1.msra.mxu0 %v947
        %1631 = vmatprep.subr.mxu0 %v952
        %1632 = vmatpush1.msra.mxu0 %v951
        %1633 = vmatprep.subr.mxu0 %v956
        %1634 = vmatpush1.msra.mxu0 %v955
        %1635 = vmatprep.subr.mxu0 %v960
        %1636 = vmatpush1.msra.mxu0 %v959
        %1637 = vmatprep.subr.mxu0 %v964
        %1638 = vmatpush1.msra.mxu0 %v963
        %1639 = vmatprep.subr.mxu0 %v968
        %1640 = vmatpush1.msra.mxu0 %v967
        %1641 = vmatprep.subr.mxu0 %v972
        %1642 = vmatpush1.msra.mxu0 %v971
        %1643 = vmatprep.mubr.f32.mxu0 %v1418
        %1644 = vmatmul.mubr.f32.gmra.mrb[0].mxu0 %v1417
        %v1645 = vpop.f32.mrb[0].mxu0
        %v1646 = vadd.f32 1e-05, %v1645
        %v1647 = vpop.f32.mrb[0].mxu0
        %v1648 = vadd.f32 1e-05, %v1647
        %1649 = vmatprep.mubr.f32.mxu0 %v1422
        %1650 = vmatmul.mubr.f32.gmra.mrb[0].mxu0 %v1421
        %v1651 = vpop.f32.mrb[0].mxu0
        %v1652 = vadd.f32 1e-05, %v1651
        %v1653 = vpop.f32.mrb[0].mxu0
        %v1654 = vadd.f32 1e-05, %v1653
        %1655 = vdwg.mxu0
        %1656 = vmatprep.subr.mxu0 %v976
        %1657 = vmatpush1.msra.mxu0 %v975
        %1658 = vmatprep.subr.mxu0 %v980
        %1659 = vmatpush1.msra.mxu0 %v979
        %1660 = vmatprep.subr.mxu0 %v984
        %1661 = vmatpush1.msra.mxu0 %v983
        %1662 = vmatprep.subr.mxu0 %v988
        %1663 = vmatpush1.msra.mxu0 %v987
        %1664 = vmatprep.subr.mxu0 %v992
        %1665 = vmatpush1.msra.mxu0 %v991
        %1666 = vmatprep.subr.mxu0 %v996
        %1667 = vmatpush1.msra.mxu0 %v995
        %1668 = vmatprep.subr.mxu0 %v1000
        %1669 = vmatpush1.msra.mxu0 %v999
        %1670 = vmatprep.subr.mxu0 %v1004
        %1671 = vmatpush1.msra.mxu0 %v1003
        %1672 = vmatprep.subr.mxu0 %v1008
        %1673 = vmatpush1.msra.mxu0 %v1007
        %1674 = vmatprep.subr.mxu0 %v1012
        %1675 = vmatpush1.msra.mxu0 %v1011
        %1676 = vmatprep.subr.mxu0 %v1016
        %1677 = vmatpush1.msra.mxu0 %v1015
        %1678 = vmatprep.subr.mxu0 %v1020
        %1679 = vmatpush1.msra.mxu0 %v1019
        %1680 = vmatprep.subr.mxu0 %v1024
        %1681 = vmatpush1.msra.mxu0 %v1023
        %1682 = vmatprep.subr.mxu0 %v1028
        %1683 = vmatpush1.msra.mxu0 %v1027
        %1684 = vmatprep.subr.mxu0 %v1032
        %1685 = vmatpush1.msra.mxu0 %v1031
        %1686 = vmatprep.subr.mxu0 %v1036
        %1687 = vmatpush1.msra.mxu0 %v1035
        %1688 = vmatprep.subr.mxu0 %v1040
        %1689 = vmatpush1.msra.mxu0 %v1039
        %1690 = vmatprep.subr.mxu0 %v1044
        %1691 = vmatpush1.msra.mxu0 %v1043
        %1692 = vmatprep.subr.mxu0 %v1048
        %1693 = vmatpush1.msra.mxu0 %v1047
        %1694 = vmatprep.subr.mxu0 %v1052
        %1695 = vmatpush1.msra.mxu0 %v1051
        %1696 = vmatprep.subr.mxu0 %v1056
        %1697 = vmatpush1.msra.mxu0 %v1055
        %1698 = vmatprep.subr.mxu0 %v1060
        %1699 = vmatpush1.msra.mxu0 %v1059
        %1700 = vmatprep.subr.mxu0 %v1064
        %1701 = vmatpush1.msra.mxu0 %v1063
        %1702 = vmatprep.subr.mxu0 %v1068
        %1703 = vmatpush1.msra.mxu0 %v1067
        %1704 = vmatprep.subr.mxu0 %v1072
        %1705 = vmatpush1.msra.mxu0 %v1071
        %1706 = vmatprep.subr.mxu0 %v1076
        %1707 = vmatpush1.msra.mxu0 %v1075
        %1708 = vmatprep.subr.mxu0 %v1080
        %1709 = vmatpush1.msra.mxu0 %v1079
        %1710 = vmatprep.subr.mxu0 %v1084
        %1711 = vmatpush1.msra.mxu0 %v1083
        %1712 = vmatprep.subr.mxu0 %v1088
        %1713 = vmatpush1.msra.mxu0 %v1087
        %1714 = vmatprep.subr.mxu0 %v1092
        %1715 = vmatpush1.msra.mxu0 %v1091
        %1716 = vmatprep.subr.mxu0 %v1096
        %1717 = vmatpush1.msra.mxu0 %v1095
        %1718 = vmatprep.subr.mxu0 %v1100
        %1719 = vmatpush1.msra.mxu0 %v1099
        %1720 = vmatprep.mubr.f32.mxu0 %v1420
        %1721 = vmatmul.mubr.f32.gmra.mrb[0].mxu0 %v1419
        %v1722 = vpop.f32.mrb[0].mxu0
        %v1723 = vadd.f32 %v1646, %v1722
        %v1724 = vpop.f32.mrb[0].mxu0
        %v1725 = vadd.f32 %v1648, %v1724
        %1726 = vmatprep.mubr.f32.mxu0 %v1424
        %1727 = vmatmul.mubr.f32.gmra.mrb[0].mxu0 %v1423
        %v1728 = vpop.f32.mrb[0].mxu0
        %v1729 = vadd.f32 %v1652, %v1728
        %v1730 = vpop.f32.mrb[0].mxu0
        %v1731 = vadd.f32 %v1654, %v1730
        %1732 = vdwg.mxu0
        %v1733 = vrsqrt.pop %v1569
        %v1734 = vrsqrt.pop %v1571
        %v1735 = vrsqrt.pop %v1723
        %v1736 = vrsqrt.pop %v1725
        %v1737 = vrsqrt.pop %v1575
        %v1738 = vrsqrt.pop %v1577
        %v1739 = vrsqrt.pop %v1729
        %v1740 = vrsqrt.pop %v1731
        %v1741 = vmul.f32 %v1409, %v1733
        %v1742 = vmul.f32 %v1410, %v1734
        %v1743 = vmul.f32 %v1411, %v1735
        %v1744 = vmul.f32 %v1412, %v1736
        %v1745 = vmul.f32 %v1413, %v1737
        %v1746 = vmul.f32 %v1414, %v1738
        %v1747 = vmul.f32 %v1415, %v1739
        %v1748 = vmul.f32 %v1416, %v1740
        %v1749 = vld [vmem:[#allocation11] sm:$0xf]
        %v1751 = vlaneseq
        %v1752 = vshrl.u32 %v1751, 7
        %v1753 = vsub.s32 0, %v1752
        %v1754 = vrot.slane %v1749, %v1753
        %v1755 = vlaneseq
        %v1756 = vshrl.u32 %v1755, 7
        %v1757 = vsub.s32 1, %v1756
        %v1758 = vrot.slane %v1749, %v1757
        %v1759 = vlaneseq
        %v1760 = vshrl.u32 %v1759, 7
        %v1761 = vsub.s32 2, %v1760
        %v1762 = vrot.slane %v1749, %v1761
        %v1763 = vlaneseq
        %v1764 = vshrl.u32 %v1763, 7
        %v1765 = vsub.s32 3, %v1764
        %v1766 = vrot.slane %v1749, %v1765
        %v1771 = vmul.f32 %v1741, %v1754
        %v1772 = vmul.f32 %v1742, %v1758
        %v1773 = vmul.f32 %v1743, %v1762
        %v1774 = vmul.f32 %v1744, %v1766
        %v1775 = vmul.f32 %v1745, %v1754
        %v1776 = vmul.f32 %v1746, %v1758
        %v1777 = vmul.f32 %v1747, %v1762
        %v1778 = vmul.f32 %v1748, %v1766
        %v1779 = vld [vmem:[#allocation13] sm:$0xf]
        %v1781 = vlaneseq
        %v1782 = vshrl.u32 %v1781, 7
        %v1783 = vsub.s32 0, %v1782
        %v1784 = vrot.slane %v1779, %v1783
        %v1785 = vlaneseq
        %v1786 = vshrl.u32 %v1785, 7
        %v1787 = vsub.s32 1, %v1786
        %v1788 = vrot.slane %v1779, %v1787
        %v1789 = vlaneseq
        %v1790 = vshrl.u32 %v1789, 7
        %v1791 = vsub.s32 2, %v1790
        %v1792 = vrot.slane %v1779, %v1791
        %v1793 = vlaneseq
        %v1794 = vshrl.u32 %v1793, 7
        %v1795 = vsub.s32 3, %v1794
        %v1796 = vrot.slane %v1779, %v1795
        %v1801 = vadd.f32 %v1771, %v1784
        %v1802 = vadd.f32 %v1772, %v1788
        %v1803 = vadd.f32 %v1773, %v1792
        %v1804 = vadd.f32 %v1774, %v1796
        %v1805 = vadd.f32 %v1775, %v1784
        %v1806 = vadd.f32 %v1776, %v1788
        %v1807 = vadd.f32 %v1777, %v1792
        %v1808 = vadd.f32 %v1778, %v1796
        %vm1817 = vcmask 1040384
        %v1818 = vrot.slane %v1801, 7
        %v1819 = vrot.slane %v1802, 7
        %v1820 = vrot.slane %v1803, 7
        %v1821 = vrot.slane %v1804, 7
        %v1822 = vrot.slane %v1805, 7
        %v1823 = vsel %vm1817, %v1818, %v1822
        %v1824 = vrot.slane %v1806, 7
        %v1825 = vsel %vm1817, %v1819, %v1824
        %v1826 = vrot.slane %v1807, 7
        %v1827 = vsel %vm1817, %v1820, %v1826
        %v1828 = vrot.slane %v1808, 7
        %v1829 = vsel %vm1817, %v1821, %v1828
        %v1838 = vsel %vm1817, 0.0, %v1818
        %v1839 = vsel %vm1817, 0.0, %v1819
        %v1840 = vsel %vm1817, 0.0, %v1820
        %v1841 = vsel %vm1817, 0.0, %v1821
        %v1842 = vpack.c.bf16 %v1823, %v1838
        %v1843 = vpack.c.bf16 %v1825, %v1839
        %v1844 = vpack.c.bf16 %v1827, %v1840
        %v1845 = vpack.c.bf16 %v1829, %v1841
        %v1846 = vld [vmem:[#allocation14] sm:$0xff]
        %v1847 = vld [vmem:[#allocation14 + $0x8] sm:$0xff]
        %v1848 = vld [vmem:[#allocation14 + $0x10] sm:$0xff]
        %v1849 = vld [vmem:[#allocation14 + $0x18] sm:$0xff]
        %v1850 = vld [vmem:[#allocation14 + $0x20] sm:$0xff]
        %v1851 = vld [vmem:[#allocation14 + $0x28] sm:$0xff]
        %v1852 = vld [vmem:[#allocation14 + $0x30] sm:$0xff]
        %v1853 = vld [vmem:[#allocation14 + $0x38] sm:$0xff]
        %v1854 = vld [vmem:[#allocation14 + $0x40] sm:$0xff]
        %v1855 = vld [vmem:[#allocation14 + $0x48] sm:$0xff]
        %v1856 = vld [vmem:[#allocation14 + $0x50] sm:$0xff]
        %v1857 = vld [vmem:[#allocation14 + $0x58] sm:$0xff]
        %v1858 = vld [vmem:[#allocation14 + $0x60] sm:$0xff]
        %v1859 = vld [vmem:[#allocation14 + $0x68] sm:$0xff]
        %v1860 = vld [vmem:[#allocation14 + $0x70] sm:$0xff]
        %v1861 = vld [vmem:[#allocation14 + $0x78] sm:$0xff]
        %v1862 = vld [vmem:[#allocation14 + $0x80] sm:$0xff]
        %v1863 = vld [vmem:[#allocation14 + $0x88] sm:$0xff]
        %v1864 = vld [vmem:[#allocation14 + $0x90] sm:$0xff]
        %v1865 = vld [vmem:[#allocation14 + $0x98] sm:$0xff]
        %v1866 = vld [vmem:[#allocation14 + $0xa0] sm:$0xff]
        %v1867 = vld [vmem:[#allocation14 + $0xa8] sm:$0xff]
        %v1868 = vld [vmem:[#allocation14 + $0xb0] sm:$0xff]
        %v1869 = vld [vmem:[#allocation14 + $0xb8] sm:$0xff]
        %v1870 = vld [vmem:[#allocation14 + $0xc0] sm:$0xff]
        %v1871 = vld [vmem:[#allocation14 + $0xc8] sm:$0xff]
        %v1872 = vld [vmem:[#allocation14 + $0xd0] sm:$0xff]
        %v1873 = vld [vmem:[#allocation14 + $0xd8] sm:$0xff]
        %v1874 = vld [vmem:[#allocation14 + $0xe0] sm:$0xff]
        %v1875 = vld [vmem:[#allocation14 + $0xe8] sm:$0xff]
        %v1876 = vld [vmem:[#allocation14 + $0xf0] sm:$0xff]
        %v1877 = vld [vmem:[#allocation14 + $0xf8] sm:$0xff]
        %v1878 = vld [vmem:[#allocation14 + $0x100] sm:$0xff]
        %v1879 = vld [vmem:[#allocation14 + $0x108] sm:$0xff]
        %v1880 = vld [vmem:[#allocation14 + $0x110] sm:$0xff]
        %v1881 = vld [vmem:[#allocation14 + $0x118] sm:$0xff]
        %v1882 = vld [vmem:[#allocation14 + $0x120] sm:$0xff]
        %v1883 = vld [vmem:[#allocation14 + $0x128] sm:$0xff]
        %v1884 = vld [vmem:[#allocation14 + $0x130] sm:$0xff]
        %v1885 = vld [vmem:[#allocation14 + $0x138] sm:$0xff]
        %v1886 = vld [vmem:[#allocation14 + $0x140] sm:$0xff]
        %v1887 = vld [vmem:[#allocation14 + $0x148] sm:$0xff]
        %v1888 = vld [vmem:[#allocation14 + $0x150] sm:$0xff]
        %v1889 = vld [vmem:[#allocation14 + $0x158] sm:$0xff]
        %v1890 = vld [vmem:[#allocation14 + $0x160] sm:$0xff]
        %v1891 = vld [vmem:[#allocation14 + $0x168] sm:$0xff]
        %v1892 = vld [vmem:[#allocation14 + $0x170] sm:$0xff]
        %v1893 = vld [vmem:[#allocation14 + $0x178] sm:$0xff]
        %v1894 = vld [vmem:[#allocation14 + $0x180] sm:$0xff]
        %v1895 = vld [vmem:[#allocation14 + $0x188] sm:$0xff]
        %v1896 = vld [vmem:[#allocation14 + $0x190] sm:$0xff]
        %v1897 = vld [vmem:[#allocation14 + $0x198] sm:$0xff]
        %v1898 = vld [vmem:[#allocation14 + $0x1a0] sm:$0xff]
        %v1899 = vld [vmem:[#allocation14 + $0x1a8] sm:$0xff]
        %v1900 = vld [vmem:[#allocation14 + $0x1b0] sm:$0xff]
        %v1901 = vld [vmem:[#allocation14 + $0x1b8] sm:$0xff]
        %v1902 = vld [vmem:[#allocation14 + $0x1c0] sm:$0xff]
        %v1903 = vld [vmem:[#allocation14 + $0x1c8] sm:$0xff]
        %v1904 = vld [vmem:[#allocation14 + $0x1d0] sm:$0xff]
        %v1905 = vld [vmem:[#allocation14 + $0x1d8] sm:$0xff]
        %v1906 = vld [vmem:[#allocation14 + $0x1e0] sm:$0xff]
        %v1907 = vld [vmem:[#allocation14 + $0x1e8] sm:$0xff]
        %v1908 = vld [vmem:[#allocation14 + $0x1f0] sm:$0xff]
        %v1909 = vld [vmem:[#allocation14 + $0x1f8] sm:$0xff]
        %v1910 = vld [vmem:[#allocation14 + $0x200] sm:$0xff]
        %v1911 = vld [vmem:[#allocation14 + $0x208] sm:$0xff]
        %v1912 = vld [vmem:[#allocation14 + $0x210] sm:$0xff]
        %v1913 = vld [vmem:[#allocation14 + $0x218] sm:$0xff]
        %v1914 = vld [vmem:[#allocation14 + $0x220] sm:$0xff]
        %v1915 = vld [vmem:[#allocation14 + $0x228] sm:$0xff]
        %v1916 = vld [vmem:[#allocation14 + $0x230] sm:$0xff]
        %v1917 = vld [vmem:[#allocation14 + $0x238] sm:$0xff]
        %v1918 = vld [vmem:[#allocation14 + $0x240] sm:$0xff]
        %v1919 = vld [vmem:[#allocation14 + $0x248] sm:$0xff]
        %v1920 = vld [vmem:[#allocation14 + $0x250] sm:$0xff]
        %v1921 = vld [vmem:[#allocation14 + $0x258] sm:$0xff]
        %v1922 = vld [vmem:[#allocation14 + $0x260] sm:$0xff]
        %v1923 = vld [vmem:[#allocation14 + $0x268] sm:$0xff]
        %v1924 = vld [vmem:[#allocation14 + $0x270] sm:$0xff]
        %v1925 = vld [vmem:[#allocation14 + $0x278] sm:$0xff]
        %v1926 = vld [vmem:[#allocation14 + $0x280] sm:$0xff]
        %v1927 = vld [vmem:[#allocation14 + $0x288] sm:$0xff]
        %v1928 = vld [vmem:[#allocation14 + $0x290] sm:$0xff]
        %v1929 = vld [vmem:[#allocation14 + $0x298] sm:$0xff]
        %v1930 = vld [vmem:[#allocation14 + $0x2a0] sm:$0xff]
        %v1931 = vld [vmem:[#allocation14 + $0x2a8] sm:$0xff]
        %v1932 = vld [vmem:[#allocation14 + $0x2b0] sm:$0xff]
        %v1933 = vld [vmem:[#allocation14 + $0x2b8] sm:$0xff]
        %v1934 = vld [vmem:[#allocation14 + $0x2c0] sm:$0xff]
        %v1935 = vld [vmem:[#allocation14 + $0x2c8] sm:$0xff]
        %v1936 = vld [vmem:[#allocation14 + $0x2d0] sm:$0xff]
        %v1937 = vld [vmem:[#allocation14 + $0x2d8] sm:$0xff]
        %v1938 = vld [vmem:[#allocation14 + $0x2e0] sm:$0xff]
        %v1939 = vld [vmem:[#allocation14 + $0x2e8] sm:$0xff]
        %v1940 = vld [vmem:[#allocation14 + $0x2f0] sm:$0xff]
        %v1941 = vld [vmem:[#allocation14 + $0x2f8] sm:$0xff]
        %v1942 = vld [vmem:[#allocation14 + $0x300] sm:$0xff]
        %v1943 = vld [vmem:[#allocation14 + $0x308] sm:$0xff]
        %v1944 = vld [vmem:[#allocation14 + $0x310] sm:$0xff]
        %v1945 = vld [vmem:[#allocation14 + $0x318] sm:$0xff]
        %v1946 = vld [vmem:[#allocation14 + $0x320] sm:$0xff]
        %v1947 = vld [vmem:[#allocation14 + $0x328] sm:$0xff]
        %v1948 = vld [vmem:[#allocation14 + $0x330] sm:$0xff]
        %v1949 = vld [vmem:[#allocation14 + $0x338] sm:$0xff]
        %v1950 = vld [vmem:[#allocation14 + $0x340] sm:$0xff]
        %v1951 = vld [vmem:[#allocation14 + $0x348] sm:$0xff]
        %v1952 = vld [vmem:[#allocation14 + $0x350] sm:$0xff]
        %v1953 = vld [vmem:[#allocation14 + $0x358] sm:$0xff]
        %v1954 = vld [vmem:[#allocation14 + $0x360] sm:$0xff]
        %v1955 = vld [vmem:[#allocation14 + $0x368] sm:$0xff]
        %v1956 = vld [vmem:[#allocation14 + $0x370] sm:$0xff]
        %v1957 = vld [vmem:[#allocation14 + $0x378] sm:$0xff]
        %v1958 = vld [vmem:[#allocation14 + $0x380] sm:$0xff]
        %v1959 = vld [vmem:[#allocation14 + $0x388] sm:$0xff]
        %v1960 = vld [vmem:[#allocation14 + $0x390] sm:$0xff]
        %v1961 = vld [vmem:[#allocation14 + $0x398] sm:$0xff]
        %v1962 = vld [vmem:[#allocation14 + $0x3a0] sm:$0xff]
        %v1963 = vld [vmem:[#allocation14 + $0x3a8] sm:$0xff]
        %v1964 = vld [vmem:[#allocation14 + $0x3b0] sm:$0xff]
        %v1965 = vld [vmem:[#allocation14 + $0x3b8] sm:$0xff]
        %v1966 = vld [vmem:[#allocation14 + $0x3c0] sm:$0xff]
        %v1967 = vld [vmem:[#allocation14 + $0x3c8] sm:$0xff]
        %v1968 = vld [vmem:[#allocation14 + $0x3d0] sm:$0xff]
        %v1969 = vld [vmem:[#allocation14 + $0x3d8] sm:$0xff]
        %v1970 = vld [vmem:[#allocation14 + $0x3e0] sm:$0xff]
        %v1971 = vld [vmem:[#allocation14 + $0x3e8] sm:$0xff]
        %v1972 = vld [vmem:[#allocation14 + $0x3f0] sm:$0xff]
        %v1973 = vld [vmem:[#allocation14 + $0x3f8] sm:$0xff]
        %v1974 = vpack.c.bf16 %v1805, %v1801
        %v1975 = vpack.c.bf16 %v1806, %v1802
        %v1976 = vpack.c.bf16 %v1807, %v1803
        %v1977 = vpack.c.bf16 %v1808, %v1804
        %s1978 = scalar_lea.vmem [#allocation14], 1024
        %v1979 = vld [vmem:[%s1978] sm:$0xff]
        %v1980 = vld [vmem:[%s1978 + $0x8] sm:$0xff]
        %v1981 = vld [vmem:[%s1978 + $0x10] sm:$0xff]
        %v1982 = vld [vmem:[%s1978 + $0x18] sm:$0xff]
        %v1983 = vld [vmem:[%s1978 + $0x20] sm:$0xff]
        %v1984 = vld [vmem:[%s1978 + $0x28] sm:$0xff]
        %v1985 = vld [vmem:[%s1978 + $0x30] sm:$0xff]
        %v1986 = vld [vmem:[%s1978 + $0x38] sm:$0xff]
        %v1987 = vld [vmem:[%s1978 + $0x40] sm:$0xff]
        %v1988 = vld [vmem:[%s1978 + $0x48] sm:$0xff]
        %v1989 = vld [vmem:[%s1978 + $0x50] sm:$0xff]
        %v1990 = vld [vmem:[%s1978 + $0x58] sm:$0xff]
        %v1991 = vld [vmem:[%s1978 + $0x60] sm:$0xff]
        %v1992 = vld [vmem:[%s1978 + $0x68] sm:$0xff]
        %v1993 = vld [vmem:[%s1978 + $0x70] sm:$0xff]
        %v1994 = vld [vmem:[%s1978 + $0x78] sm:$0xff]
        %v1995 = vld [vmem:[%s1978 + $0x80] sm:$0xff]
        %v1996 = vld [vmem:[%s1978 + $0x88] sm:$0xff]
        %v1997 = vld [vmem:[%s1978 + $0x90] sm:$0xff]
        %v1998 = vld [vmem:[%s1978 + $0x98] sm:$0xff]
        %v1999 = vld [vmem:[%s1978 + $0xa0] sm:$0xff]
        %v2000 = vld [vmem:[%s1978 + $0xa8] sm:$0xff]
        %v2001 = vld [vmem:[%s1978 + $0xb0] sm:$0xff]
        %v2002 = vld [vmem:[%s1978 + $0xb8] sm:$0xff]
        %v2003 = vld [vmem:[%s1978 + $0xc0] sm:$0xff]
        %v2004 = vld [vmem:[%s1978 + $0xc8] sm:$0xff]
        %v2005 = vld [vmem:[%s1978 + $0xd0] sm:$0xff]
        %v2006 = vld [vmem:[%s1978 + $0xd8] sm:$0xff]
        %v2007 = vld [vmem:[%s1978 + $0xe0] sm:$0xff]
        %v2008 = vld [vmem:[%s1978 + $0xe8] sm:$0xff]
        %v2009 = vld [vmem:[%s1978 + $0xf0] sm:$0xff]
        %v2010 = vld [vmem:[%s1978 + $0xf8] sm:$0xff]
        %v2011 = vld [vmem:[%s1978 + $0x100] sm:$0xff]
        %v2012 = vld [vmem:[%s1978 + $0x108] sm:$0xff]
        %v2013 = vld [vmem:[%s1978 + $0x110] sm:$0xff]
        %v2014 = vld [vmem:[%s1978 + $0x118] sm:$0xff]
        %v2015 = vld [vmem:[%s1978 + $0x120] sm:$0xff]
        %v2016 = vld [vmem:[%s1978 + $0x128] sm:$0xff]
        %v2017 = vld [vmem:[%s1978 + $0x130] sm:$0xff]
        %v2018 = vld [vmem:[%s1978 + $0x138] sm:$0xff]
        %v2019 = vld [vmem:[%s1978 + $0x140] sm:$0xff]
        %v2020 = vld [vmem:[%s1978 + $0x148] sm:$0xff]
        %v2021 = vld [vmem:[%s1978 + $0x150] sm:$0xff]
        %v2022 = vld [vmem:[%s1978 + $0x158] sm:$0xff]
        %v2023 = vld [vmem:[%s1978 + $0x160] sm:$0xff]
        %v2024 = vld [vmem:[%s1978 + $0x168] sm:$0xff]
        %v2025 = vld [vmem:[%s1978 + $0x170] sm:$0xff]
        %v2026 = vld [vmem:[%s1978 + $0x178] sm:$0xff]
        %v2027 = vld [vmem:[%s1978 + $0x180] sm:$0xff]
        %v2028 = vld [vmem:[%s1978 + $0x188] sm:$0xff]
        %v2029 = vld [vmem:[%s1978 + $0x190] sm:$0xff]
        %v2030 = vld [vmem:[%s1978 + $0x198] sm:$0xff]
        %v2031 = vld [vmem:[%s1978 + $0x1a0] sm:$0xff]
        %v2032 = vld [vmem:[%s1978 + $0x1a8] sm:$0xff]
        %v2033 = vld [vmem:[%s1978 + $0x1b0] sm:$0xff]
        %v2034 = vld [vmem:[%s1978 + $0x1b8] sm:$0xff]
        %v2035 = vld [vmem:[%s1978 + $0x1c0] sm:$0xff]
        %v2036 = vld [vmem:[%s1978 + $0x1c8] sm:$0xff]
        %v2037 = vld [vmem:[%s1978 + $0x1d0] sm:$0xff]
        %v2038 = vld [vmem:[%s1978 + $0x1d8] sm:$0xff]
        %v2039 = vld [vmem:[%s1978 + $0x1e0] sm:$0xff]
        %v2040 = vld [vmem:[%s1978 + $0x1e8] sm:$0xff]
        %v2041 = vld [vmem:[%s1978 + $0x1f0] sm:$0xff]
        %v2042 = vld [vmem:[%s1978 + $0x1f8] sm:$0xff]
        %v2043 = vld [vmem:[%s1978 + $0x200] sm:$0xff]
        %v2044 = vld [vmem:[%s1978 + $0x208] sm:$0xff]
        %v2045 = vld [vmem:[%s1978 + $0x210] sm:$0xff]
        %v2046 = vld [vmem:[%s1978 + $0x218] sm:$0xff]
        %v2047 = vld [vmem:[%s1978 + $0x220] sm:$0xff]
        %v2048 = vld [vmem:[%s1978 + $0x228] sm:$0xff]
        %v2049 = vld [vmem:[%s1978 + $0x230] sm:$0xff]
        %v2050 = vld [vmem:[%s1978 + $0x238] sm:$0xff]
        %v2051 = vld [vmem:[%s1978 + $0x240] sm:$0xff]
        %v2052 = vld [vmem:[%s1978 + $0x248] sm:$0xff]
        %v2053 = vld [vmem:[%s1978 + $0x250] sm:$0xff]
        %v2054 = vld [vmem:[%s1978 + $0x258] sm:$0xff]
        %v2055 = vld [vmem:[%s1978 + $0x260] sm:$0xff]
        %v2056 = vld [vmem:[%s1978 + $0x268] sm:$0xff]
        %v2057 = vld [vmem:[%s1978 + $0x270] sm:$0xff]
        %v2058 = vld [vmem:[%s1978 + $0x278] sm:$0xff]
        %v2059 = vld [vmem:[%s1978 + $0x280] sm:$0xff]
        %v2060 = vld [vmem:[%s1978 + $0x288] sm:$0xff]
        %v2061 = vld [vmem:[%s1978 + $0x290] sm:$0xff]
        %v2062 = vld [vmem:[%s1978 + $0x298] sm:$0xff]
        %v2063 = vld [vmem:[%s1978 + $0x2a0] sm:$0xff]
        %v2064 = vld [vmem:[%s1978 + $0x2a8] sm:$0xff]
        %v2065 = vld [vmem:[%s1978 + $0x2b0] sm:$0xff]
        %v2066 = vld [vmem:[%s1978 + $0x2b8] sm:$0xff]
        %v2067 = vld [vmem:[%s1978 + $0x2c0] sm:$0xff]
        %v2068 = vld [vmem:[%s1978 + $0x2c8] sm:$0xff]
        %v2069 = vld [vmem:[%s1978 + $0x2d0] sm:$0xff]
        %v2070 = vld [vmem:[%s1978 + $0x2d8] sm:$0xff]
        %v2071 = vld [vmem:[%s1978 + $0x2e0] sm:$0xff]
        %v2072 = vld [vmem:[%s1978 + $0x2e8] sm:$0xff]
        %v2073 = vld [vmem:[%s1978 + $0x2f0] sm:$0xff]
        %v2074 = vld [vmem:[%s1978 + $0x2f8] sm:$0xff]
        %v2075 = vld [vmem:[%s1978 + $0x300] sm:$0xff]
        %v2076 = vld [vmem:[%s1978 + $0x308] sm:$0xff]
        %v2077 = vld [vmem:[%s1978 + $0x310] sm:$0xff]
        %v2078 = vld [vmem:[%s1978 + $0x318] sm:$0xff]
        %v2079 = vld [vmem:[%s1978 + $0x320] sm:$0xff]
        %v2080 = vld [vmem:[%s1978 + $0x328] sm:$0xff]
        %v2081 = vld [vmem:[%s1978 + $0x330] sm:$0xff]
        %v2082 = vld [vmem:[%s1978 + $0x338] sm:$0xff]
        %v2083 = vld [vmem:[%s1978 + $0x340] sm:$0xff]
        %v2084 = vld [vmem:[%s1978 + $0x348] sm:$0xff]
        %v2085 = vld [vmem:[%s1978 + $0x350] sm:$0xff]
        %v2086 = vld [vmem:[%s1978 + $0x358] sm:$0xff]
        %v2087 = vld [vmem:[%s1978 + $0x360] sm:$0xff]
        %v2088 = vld [vmem:[%s1978 + $0x368] sm:$0xff]
        %v2089 = vld [vmem:[%s1978 + $0x370] sm:$0xff]
        %v2090 = vld [vmem:[%s1978 + $0x378] sm:$0xff]
        %v2091 = vld [vmem:[%s1978 + $0x380] sm:$0xff]
        %v2092 = vld [vmem:[%s1978 + $0x388] sm:$0xff]
        %v2093 = vld [vmem:[%s1978 + $0x390] sm:$0xff]
        %v2094 = vld [vmem:[%s1978 + $0x398] sm:$0xff]
        %v2095 = vld [vmem:[%s1978 + $0x3a0] sm:$0xff]
        %v2096 = vld [vmem:[%s1978 + $0x3a8] sm:$0xff]
        %v2097 = vld [vmem:[%s1978 + $0x3b0] sm:$0xff]
        %v2098 = vld [vmem:[%s1978 + $0x3b8] sm:$0xff]
        %v2099 = vld [vmem:[%s1978 + $0x3c0] sm:$0xff]
        %v2100 = vld [vmem:[%s1978 + $0x3c8] sm:$0xff]
        %v2101 = vld [vmem:[%s1978 + $0x3d0] sm:$0xff]
        %v2102 = vld [vmem:[%s1978 + $0x3d8] sm:$0xff]
        %v2103 = vld [vmem:[%s1978 + $0x3e0] sm:$0xff]
        %v2104 = vld [vmem:[%s1978 + $0x3e8] sm:$0xff]
        %v2105 = vld [vmem:[%s1978 + $0x3f0] sm:$0xff]
        %v2106 = vld [vmem:[%s1978 + $0x3f8] sm:$0xff]
        %v2235 = vunpack.c.l.b16 %v1979
        %v2236 = vunpack.c.h.b16 %v1979
        %v2237 = vunpack.c.l.b16 %v1980
        %v2238 = vunpack.c.h.b16 %v1980
        %v2239 = vunpack.c.l.b16 %v1981
        %v2240 = vunpack.c.h.b16 %v1981
        %v2241 = vunpack.c.l.b16 %v1982
        %v2242 = vunpack.c.h.b16 %v1982
        %v2243 = vunpack.c.l.b16 %v1983
        %v2244 = vunpack.c.h.b16 %v1983
        %v2245 = vunpack.c.l.b16 %v1984
        %v2246 = vunpack.c.h.b16 %v1984
        %v2247 = vunpack.c.l.b16 %v1985
        %v2248 = vunpack.c.h.b16 %v1985
        %v2249 = vunpack.c.l.b16 %v1986
        %v2250 = vunpack.c.h.b16 %v1986
        %v2251 = vunpack.c.l.b16 %v1987
        %v2252 = vunpack.c.h.b16 %v1987
        %v2253 = vunpack.c.l.b16 %v1988
        %v2254 = vunpack.c.h.b16 %v1988
        %v2255 = vunpack.c.l.b16 %v1989
        %v2256 = vunpack.c.h.b16 %v1989
        %v2257 = vunpack.c.l.b16 %v1990
        %v2258 = vunpack.c.h.b16 %v1990
        %v2259 = vunpack.c.l.b16 %v1991
        %v2260 = vunpack.c.h.b16 %v1991
        %v2261 = vunpack.c.l.b16 %v1992
        %v2262 = vunpack.c.h.b16 %v1992
        %v2263 = vunpack.c.l.b16 %v1993
        %v2264 = vunpack.c.h.b16 %v1993
        %v2265 = vunpack.c.l.b16 %v1994
        %v2266 = vunpack.c.h.b16 %v1994
        %v2267 = vunpack.c.l.b16 %v1995
        %v2268 = vunpack.c.h.b16 %v1995
        %v2269 = vunpack.c.l.b16 %v1996
        %v2270 = vunpack.c.h.b16 %v1996
        %v2271 = vunpack.c.l.b16 %v1997
        %v2272 = vunpack.c.h.b16 %v1997
        %v2273 = vunpack.c.l.b16 %v1998
        %v2274 = vunpack.c.h.b16 %v1998
        %v2275 = vunpack.c.l.b16 %v1999
        %v2276 = vunpack.c.h.b16 %v1999
        %v2277 = vunpack.c.l.b16 %v2000
        %v2278 = vunpack.c.h.b16 %v2000
        %v2279 = vunpack.c.l.b16 %v2001
        %v2280 = vunpack.c.h.b16 %v2001
        %v2281 = vunpack.c.l.b16 %v2002
        %v2282 = vunpack.c.h.b16 %v2002
        %v2283 = vunpack.c.l.b16 %v2003
        %v2284 = vunpack.c.h.b16 %v2003
        %v2285 = vunpack.c.l.b16 %v2004
        %v2286 = vunpack.c.h.b16 %v2004
        %v2287 = vunpack.c.l.b16 %v2005
        %v2288 = vunpack.c.h.b16 %v2005
        %v2289 = vunpack.c.l.b16 %v2006
        %v2290 = vunpack.c.h.b16 %v2006
        %v2291 = vunpack.c.l.b16 %v2007
        %v2292 = vunpack.c.h.b16 %v2007
        %v2293 = vunpack.c.l.b16 %v2008
        %v2294 = vunpack.c.h.b16 %v2008
        %v2295 = vunpack.c.l.b16 %v2009
        %v2296 = vunpack.c.h.b16 %v2009
        %v2297 = vunpack.c.l.b16 %v2010
        %v2298 = vunpack.c.h.b16 %v2010
        %v2299 = vunpack.c.l.b16 %v2011
        %v2300 = vunpack.c.h.b16 %v2011
        %v2301 = vunpack.c.l.b16 %v2012
        %v2302 = vunpack.c.h.b16 %v2012
        %v2303 = vunpack.c.l.b16 %v2013
        %v2304 = vunpack.c.h.b16 %v2013
        %v2305 = vunpack.c.l.b16 %v2014
        %v2306 = vunpack.c.h.b16 %v2014
        %v2307 = vunpack.c.l.b16 %v2015
        %v2308 = vunpack.c.h.b16 %v2015
        %v2309 = vunpack.c.l.b16 %v2016
        %v2310 = vunpack.c.h.b16 %v2016
        %v2311 = vunpack.c.l.b16 %v2017
        %v2312 = vunpack.c.h.b16 %v2017
        %v2313 = vunpack.c.l.b16 %v2018
        %v2314 = vunpack.c.h.b16 %v2018
        %v2315 = vunpack.c.l.b16 %v2019
        %v2316 = vunpack.c.h.b16 %v2019
        %v2317 = vunpack.c.l.b16 %v2020
        %v2318 = vunpack.c.h.b16 %v2020
        %v2319 = vunpack.c.l.b16 %v2021
        %v2320 = vunpack.c.h.b16 %v2021
        %v2321 = vunpack.c.l.b16 %v2022
        %v2322 = vunpack.c.h.b16 %v2022
        %v2323 = vunpack.c.l.b16 %v2023
        %v2324 = vunpack.c.h.b16 %v2023
        %v2325 = vunpack.c.l.b16 %v2024
        %v2326 = vunpack.c.h.b16 %v2024
        %v2327 = vunpack.c.l.b16 %v2025
        %v2328 = vunpack.c.h.b16 %v2025
        %v2329 = vunpack.c.l.b16 %v2026
        %v2330 = vunpack.c.h.b16 %v2026
        %v2331 = vunpack.c.l.b16 %v2027
        %v2332 = vunpack.c.h.b16 %v2027
        %v2333 = vunpack.c.l.b16 %v2028
        %v2334 = vunpack.c.h.b16 %v2028
        %v2335 = vunpack.c.l.b16 %v2029
        %v2336 = vunpack.c.h.b16 %v2029
        %v2337 = vunpack.c.l.b16 %v2030
        %v2338 = vunpack.c.h.b16 %v2030
        %v2339 = vunpack.c.l.b16 %v2031
        %v2340 = vunpack.c.h.b16 %v2031
        %v2341 = vunpack.c.l.b16 %v2032
        %v2342 = vunpack.c.h.b16 %v2032
        %v2343 = vunpack.c.l.b16 %v2033
        %v2344 = vunpack.c.h.b16 %v2033
        %v2345 = vunpack.c.l.b16 %v2034
        %v2346 = vunpack.c.h.b16 %v2034
        %v2347 = vunpack.c.l.b16 %v2035
        %v2348 = vunpack.c.h.b16 %v2035
        %v2349 = vunpack.c.l.b16 %v2036
        %v2350 = vunpack.c.h.b16 %v2036
        %v2351 = vunpack.c.l.b16 %v2037
        %v2352 = vunpack.c.h.b16 %v2037
        %v2353 = vunpack.c.l.b16 %v2038
        %v2354 = vunpack.c.h.b16 %v2038
        %v2355 = vunpack.c.l.b16 %v2039
        %v2356 = vunpack.c.h.b16 %v2039
        %v2357 = vunpack.c.l.b16 %v2040
        %v2358 = vunpack.c.h.b16 %v2040
        %v2359 = vunpack.c.l.b16 %v2041
        %v2360 = vunpack.c.h.b16 %v2041
        %v2361 = vunpack.c.l.b16 %v2042
        %v2362 = vunpack.c.h.b16 %v2042
        %v2363 = vunpack.c.l.b16 %v2043
        %v2364 = vunpack.c.h.b16 %v2043
        %v2365 = vunpack.c.l.b16 %v2044
        %v2366 = vunpack.c.h.b16 %v2044
        %v2367 = vunpack.c.l.b16 %v2045
        %v2368 = vunpack.c.h.b16 %v2045
        %v2369 = vunpack.c.l.b16 %v2046
        %v2370 = vunpack.c.h.b16 %v2046
        %v2371 = vunpack.c.l.b16 %v2047
        %v2372 = vunpack.c.h.b16 %v2047
        %v2373 = vunpack.c.l.b16 %v2048
        %v2374 = vunpack.c.h.b16 %v2048
        %v2375 = vunpack.c.l.b16 %v2049
        %v2376 = vunpack.c.h.b16 %v2049
        %v2377 = vunpack.c.l.b16 %v2050
        %v2378 = vunpack.c.h.b16 %v2050
        %v2379 = vunpack.c.l.b16 %v2051
        %v2380 = vunpack.c.h.b16 %v2051
        %v2381 = vunpack.c.l.b16 %v2052
        %v2382 = vunpack.c.h.b16 %v2052
        %v2383 = vunpack.c.l.b16 %v2053
        %v2384 = vunpack.c.h.b16 %v2053
        %v2385 = vunpack.c.l.b16 %v2054
        %v2386 = vunpack.c.h.b16 %v2054
        %v2387 = vunpack.c.l.b16 %v2055
        %v2388 = vunpack.c.h.b16 %v2055
        %v2389 = vunpack.c.l.b16 %v2056
        %v2390 = vunpack.c.h.b16 %v2056
        %v2391 = vunpack.c.l.b16 %v2057
        %v2392 = vunpack.c.h.b16 %v2057
        %v2393 = vunpack.c.l.b16 %v2058
        %v2394 = vunpack.c.h.b16 %v2058
        %v2395 = vunpack.c.l.b16 %v2059
        %v2396 = vunpack.c.h.b16 %v2059
        %v2397 = vunpack.c.l.b16 %v2060
        %v2398 = vunpack.c.h.b16 %v2060
        %v2399 = vunpack.c.l.b16 %v2061
        %v2400 = vunpack.c.h.b16 %v2061
        %v2401 = vunpack.c.l.b16 %v2062
        %v2402 = vunpack.c.h.b16 %v2062
        %v2403 = vunpack.c.l.b16 %v2063
        %v2404 = vunpack.c.h.b16 %v2063
        %v2405 = vunpack.c.l.b16 %v2064
        %v2406 = vunpack.c.h.b16 %v2064
        %v2407 = vunpack.c.l.b16 %v2065
        %v2408 = vunpack.c.h.b16 %v2065
        %v2409 = vunpack.c.l.b16 %v2066
        %v2410 = vunpack.c.h.b16 %v2066
        %v2411 = vunpack.c.l.b16 %v2067
        %v2412 = vunpack.c.h.b16 %v2067
        %v2413 = vunpack.c.l.b16 %v2068
        %v2414 = vunpack.c.h.b16 %v2068
        %v2415 = vunpack.c.l.b16 %v2069
        %v2416 = vunpack.c.h.b16 %v2069
        %v2417 = vunpack.c.l.b16 %v2070
        %v2418 = vunpack.c.h.b16 %v2070
        %v2419 = vunpack.c.l.b16 %v2071
        %v2420 = vunpack.c.h.b16 %v2071
        %v2421 = vunpack.c.l.b16 %v2072
        %v2422 = vunpack.c.h.b16 %v2072
        %v2423 = vunpack.c.l.b16 %v2073
        %v2424 = vunpack.c.h.b16 %v2073
        %v2425 = vunpack.c.l.b16 %v2074
        %v2426 = vunpack.c.h.b16 %v2074
        %v2427 = vunpack.c.l.b16 %v2075
        %v2428 = vunpack.c.h.b16 %v2075
        %v2429 = vunpack.c.l.b16 %v2076
        %v2430 = vunpack.c.h.b16 %v2076
        %v2431 = vunpack.c.l.b16 %v2077
        %v2432 = vunpack.c.h.b16 %v2077
        %v2433 = vunpack.c.l.b16 %v2078
        %v2434 = vunpack.c.h.b16 %v2078
        %v2435 = vunpack.c.l.b16 %v2079
        %v2436 = vunpack.c.h.b16 %v2079
        %v2437 = vunpack.c.l.b16 %v2080
        %v2438 = vunpack.c.h.b16 %v2080
        %v2439 = vunpack.c.l.b16 %v2081
        %v2440 = vunpack.c.h.b16 %v2081
        %v2441 = vunpack.c.l.b16 %v2082
        %v2442 = vunpack.c.h.b16 %v2082
        %v2443 = vunpack.c.l.b16 %v2083
        %v2444 = vunpack.c.h.b16 %v2083
        %v2445 = vunpack.c.l.b16 %v2084
        %v2446 = vunpack.c.h.b16 %v2084
        %v2447 = vunpack.c.l.b16 %v2085
        %v2448 = vunpack.c.h.b16 %v2085
        %v2449 = vunpack.c.l.b16 %v2086
        %v2450 = vunpack.c.h.b16 %v2086
        %v2451 = vunpack.c.l.b16 %v2087
        %v2452 = vunpack.c.h.b16 %v2087
        %v2453 = vunpack.c.l.b16 %v2088
        %v2454 = vunpack.c.h.b16 %v2088
        %v2455 = vunpack.c.l.b16 %v2089
        %v2456 = vunpack.c.h.b16 %v2089
        %v2457 = vunpack.c.l.b16 %v2090
        %v2458 = vunpack.c.h.b16 %v2090
        %v2459 = vunpack.c.l.b16 %v2091
        %v2460 = vunpack.c.h.b16 %v2091
        %v2461 = vunpack.c.l.b16 %v2092
        %v2462 = vunpack.c.h.b16 %v2092
        %v2463 = vunpack.c.l.b16 %v2093
        %v2464 = vunpack.c.h.b16 %v2093
        %v2465 = vunpack.c.l.b16 %v2094
        %v2466 = vunpack.c.h.b16 %v2094
        %v2467 = vunpack.c.l.b16 %v2095
        %v2468 = vunpack.c.h.b16 %v2095
        %v2469 = vunpack.c.l.b16 %v2096
        %v2470 = vunpack.c.h.b16 %v2096
        %v2471 = vunpack.c.l.b16 %v2097
        %v2472 = vunpack.c.h.b16 %v2097
        %v2473 = vunpack.c.l.b16 %v2098
        %v2474 = vunpack.c.h.b16 %v2098
        %v2475 = vunpack.c.l.b16 %v2099
        %v2476 = vunpack.c.h.b16 %v2099
        %v2477 = vunpack.c.l.b16 %v2100
        %v2478 = vunpack.c.h.b16 %v2100
        %v2479 = vunpack.c.l.b16 %v2101
        %v2480 = vunpack.c.h.b16 %v2101
        %v2481 = vunpack.c.l.b16 %v2102
        %v2482 = vunpack.c.h.b16 %v2102
        %v2483 = vunpack.c.l.b16 %v2103
        %v2484 = vunpack.c.h.b16 %v2103
        %v2485 = vunpack.c.l.b16 %v2104
        %v2486 = vunpack.c.h.b16 %v2104
        %v2487 = vunpack.c.l.b16 %v2105
        %v2488 = vunpack.c.h.b16 %v2105
        %v2489 = vunpack.c.l.b16 %v2106
        %v2490 = vunpack.c.h.b16 %v2106
        %v2491 = vpack.c.b16 %v2239, %v2235
        %v2492 = vpack.c.b16 %v2240, %v2236
        %v2493 = vpack.c.b16 %v2241, %v2237
        %v2494 = vpack.c.b16 %v2242, %v2238
        %v2495 = vpack.c.b16 %v2247, %v2243
        %v2496 = vpack.c.b16 %v2248, %v2244
        %v2497 = vpack.c.b16 %v2249, %v2245
        %v2498 = vpack.c.b16 %v2250, %v2246
        %v2499 = vpack.c.b16 %v2255, %v2251
        %v2500 = vpack.c.b16 %v2256, %v2252
        %v2501 = vpack.c.b16 %v2257, %v2253
        %v2502 = vpack.c.b16 %v2258, %v2254
        %v2503 = vpack.c.b16 %v2263, %v2259
        %v2504 = vpack.c.b16 %v2264, %v2260
        %v2505 = vpack.c.b16 %v2265, %v2261
        %v2506 = vpack.c.b16 %v2266, %v2262
        %v2507 = vpack.c.b16 %v2271, %v2267
        %v2508 = vpack.c.b16 %v2272, %v2268
        %v2509 = vpack.c.b16 %v2273, %v2269
        %v2510 = vpack.c.b16 %v2274, %v2270
        %v2511 = vpack.c.b16 %v2279, %v2275
        %v2512 = vpack.c.b16 %v2280, %v2276
        %v2513 = vpack.c.b16 %v2281, %v2277
        %v2514 = vpack.c.b16 %v2282, %v2278
        %v2515 = vpack.c.b16 %v2287, %v2283
        %v2516 = vpack.c.b16 %v2288, %v2284
        %v2517 = vpack.c.b16 %v2289, %v2285
        %v2518 = vpack.c.b16 %v2290, %v2286
        %v2519 = vpack.c.b16 %v2295, %v2291
        %v2520 = vpack.c.b16 %v2296, %v2292
        %v2521 = vpack.c.b16 %v2297, %v2293
        %v2522 = vpack.c.b16 %v2298, %v2294
        %v2523 = vpack.c.b16 %v2303, %v2299
        %v2524 = vpack.c.b16 %v2304, %v2300
        %v2525 = vpack.c.b16 %v2305, %v2301
        %v2526 = vpack.c.b16 %v2306, %v2302
        %v2527 = vpack.c.b16 %v2311, %v2307
        %v2528 = vpack.c.b16 %v2312, %v2308
        %v2529 = vpack.c.b16 %v2313, %v2309
        %v2530 = vpack.c.b16 %v2314, %v2310
        %v2531 = vpack.c.b16 %v2319, %v2315
        %v2532 = vpack.c.b16 %v2320, %v2316
        %v2533 = vpack.c.b16 %v2321, %v2317
        %v2534 = vpack.c.b16 %v2322, %v2318
        %v2535 = vpack.c.b16 %v2327, %v2323
        %v2536 = vpack.c.b16 %v2328, %v2324
        %v2537 = vpack.c.b16 %v2329, %v2325
        %v2538 = vpack.c.b16 %v2330, %v2326
        %v2539 = vpack.c.b16 %v2335, %v2331
        %v2540 = vpack.c.b16 %v2336, %v2332
        %v2541 = vpack.c.b16 %v2337, %v2333
        %v2542 = vpack.c.b16 %v2338, %v2334
        %v2543 = vpack.c.b16 %v2343, %v2339
        %v2544 = vpack.c.b16 %v2344, %v2340
        %v2545 = vpack.c.b16 %v2345, %v2341
        %v2546 = vpack.c.b16 %v2346, %v2342
        %v2547 = vpack.c.b16 %v2351, %v2347
        %v2548 = vpack.c.b16 %v2352, %v2348
        %v2549 = vpack.c.b16 %v2353, %v2349
        %v2550 = vpack.c.b16 %v2354, %v2350
        %v2551 = vpack.c.b16 %v2359, %v2355
        %v2552 = vpack.c.b16 %v2360, %v2356
        %v2553 = vpack.c.b16 %v2361, %v2357
        %v2554 = vpack.c.b16 %v2362, %v2358
        %v2555 = vpack.c.b16 %v2367, %v2363
        %v2556 = vpack.c.b16 %v2368, %v2364
        %v2557 = vpack.c.b16 %v2369, %v2365
        %v2558 = vpack.c.b16 %v2370, %v2366
        %v2559 = vpack.c.b16 %v2375, %v2371
        %v2560 = vpack.c.b16 %v2376, %v2372
        %v2561 = vpack.c.b16 %v2377, %v2373
        %v2562 = vpack.c.b16 %v2378, %v2374
        %v2563 = vpack.c.b16 %v2383, %v2379
        %v2564 = vpack.c.b16 %v2384, %v2380
        %v2565 = vpack.c.b16 %v2385, %v2381
        %v2566 = vpack.c.b16 %v2386, %v2382
        %v2567 = vpack.c.b16 %v2391, %v2387
        %v2568 = vpack.c.b16 %v2392, %v2388
        %v2569 = vpack.c.b16 %v2393, %v2389
        %v2570 = vpack.c.b16 %v2394, %v2390
        %v2571 = vpack.c.b16 %v2399, %v2395
        %v2572 = vpack.c.b16 %v2400, %v2396
        %v2573 = vpack.c.b16 %v2401, %v2397
        %v2574 = vpack.c.b16 %v2402, %v2398
        %v2575 = vpack.c.b16 %v2407, %v2403
        %v2576 = vpack.c.b16 %v2408, %v2404
        %v2577 = vpack.c.b16 %v2409, %v2405
        %v2578 = vpack.c.b16 %v2410, %v2406
        %v2579 = vpack.c.b16 %v2415, %v2411
        %v2580 = vpack.c.b16 %v2416, %v2412
        %v2581 = vpack.c.b16 %v2417, %v2413
        %v2582 = vpack.c.b16 %v2418, %v2414
        %v2583 = vpack.c.b16 %v2423, %v2419
        %v2584 = vpack.c.b16 %v2424, %v2420
        %v2585 = vpack.c.b16 %v2425, %v2421
        %v2586 = vpack.c.b16 %v2426, %v2422
        %v2587 = vpack.c.b16 %v2431, %v2427
        %v2588 = vpack.c.b16 %v2432, %v2428
        %v2589 = vpack.c.b16 %v2433, %v2429
        %v2590 = vpack.c.b16 %v2434, %v2430
        %v2591 = vpack.c.b16 %v2439, %v2435
        %v2592 = vpack.c.b16 %v2440, %v2436
        %v2593 = vpack.c.b16 %v2441, %v2437
        %v2594 = vpack.c.b16 %v2442, %v2438
        %v2595 = vpack.c.b16 %v2447, %v2443
        %v2596 = vpack.c.b16 %v2448, %v2444
        %v2597 = vpack.c.b16 %v2449, %v2445
        %v2598 = vpack.c.b16 %v2450, %v2446
        %v2599 = vpack.c.b16 %v2455, %v2451
        %v2600 = vpack.c.b16 %v2456, %v2452
        %v2601 = vpack.c.b16 %v2457, %v2453
        %v2602 = vpack.c.b16 %v2458, %v2454
        %v2603 = vpack.c.b16 %v2463, %v2459
        %v2604 = vpack.c.b16 %v2464, %v2460
        %v2605 = vpack.c.b16 %v2465, %v2461
        %v2606 = vpack.c.b16 %v2466, %v2462
        %v2607 = vpack.c.b16 %v2471, %v2467
        %v2608 = vpack.c.b16 %v2472, %v2468
        %v2609 = vpack.c.b16 %v2473, %v2469
        %v2610 = vpack.c.b16 %v2474, %v2470
        %v2611 = vpack.c.b16 %v2479, %v2475
        %v2612 = vpack.c.b16 %v2480, %v2476
        %v2613 = vpack.c.b16 %v2481, %v2477
        %v2614 = vpack.c.b16 %v2482, %v2478
        %v2615 = vpack.c.b16 %v2487, %v2483
        %v2616 = vpack.c.b16 %v2488, %v2484
        %v2617 = vpack.c.b16 %v2489, %v2485
        %v2618 = vpack.c.b16 %v2490, %v2486
        %2747 = vmatprep.subr.bf16.mxu0 %v2492
        %2748 = vmatpush1.bf16.msra.mxu0 %v2491
        %2749 = vmatprep.subr.bf16.mxu0 %v2496
        %2750 = vmatpush1.bf16.msra.mxu0 %v2495
        %2751 = vmatprep.subr.bf16.mxu0 %v2500
        %2752 = vmatpush1.bf16.msra.mxu0 %v2499
        %2753 = vmatprep.subr.bf16.mxu0 %v2504
        %2754 = vmatpush1.bf16.msra.mxu0 %v2503
        %2755 = vmatprep.subr.bf16.mxu0 %v2508
        %2756 = vmatpush1.bf16.msra.mxu0 %v2507
        %2757 = vmatprep.subr.bf16.mxu0 %v2512
        %2758 = vmatpush1.bf16.msra.mxu0 %v2511
        %2759 = vmatprep.subr.bf16.mxu0 %v2516
        %2760 = vmatpush1.bf16.msra.mxu0 %v2515
        %2761 = vmatprep.subr.bf16.mxu0 %v2520
        %2762 = vmatpush1.bf16.msra.mxu0 %v2519
        %2763 = vmatprep.subr.bf16.mxu0 %v2524
        %2764 = vmatpush1.bf16.msra.mxu0 %v2523
        %2765 = vmatprep.subr.bf16.mxu0 %v2528
        %2766 = vmatpush1.bf16.msra.mxu0 %v2527
        %2767 = vmatprep.subr.bf16.mxu0 %v2532
        %2768 = vmatpush1.bf16.msra.mxu0 %v2531
        %2769 = vmatprep.subr.bf16.mxu0 %v2536
        %2770 = vmatpush1.bf16.msra.mxu0 %v2535
        %2771 = vmatprep.subr.bf16.mxu0 %v2540
        %2772 = vmatpush1.bf16.msra.mxu0 %v2539
        %2773 = vmatprep.subr.bf16.mxu0 %v2544
        %2774 = vmatpush1.bf16.msra.mxu0 %v2543
        %2775 = vmatprep.subr.bf16.mxu0 %v2548
        %2776 = vmatpush1.bf16.msra.mxu0 %v2547
        %2777 = vmatprep.subr.bf16.mxu0 %v2552
        %2778 = vmatpush1.bf16.msra.mxu0 %v2551
        %2779 = vmatprep.mubr.bf16.mxu0 %v1975
        %2780 = vmatmul.mubr.bf16.gmra.mrb[0].mxu0 %v1974
        %v2781 = vpop.f32.mrb[0].mxu0
        %v2782 = vadd.f32 0.0, %v2781
        %v2783 = vpop.f32.mrb[0].mxu0
        %v2784 = vadd.f32 0.0, %v2783
        %v2785 = vpop.f32.mrb[0].mxu0
        %v2786 = vadd.f32 0.0, %v2785
        %v2787 = vpop.f32.mrb[0].mxu0
        %v2788 = vadd.f32 0.0, %v2787
        %2789 = vdwg.mxu0
        %2790 = vmatprep.subr.bf16.mxu0 %v2556
        %2791 = vmatpush1.bf16.msra.mxu0 %v2555
        %2792 = vmatprep.subr.bf16.mxu0 %v2560
        %2793 = vmatpush1.bf16.msra.mxu0 %v2559
        %2794 = vmatprep.subr.bf16.mxu0 %v2564
        %2795 = vmatpush1.bf16.msra.mxu0 %v2563
        %2796 = vmatprep.subr.bf16.mxu0 %v2568
        %2797 = vmatpush1.bf16.msra.mxu0 %v2567
        %2798 = vmatprep.subr.bf16.mxu0 %v2572
        %2799 = vmatpush1.bf16.msra.mxu0 %v2571
        %2800 = vmatprep.subr.bf16.mxu0 %v2576
        %2801 = vmatpush1.bf16.msra.mxu0 %v2575
        %2802 = vmatprep.subr.bf16.mxu0 %v2580
        %2803 = vmatpush1.bf16.msra.mxu0 %v2579
        %2804 = vmatprep.subr.bf16.mxu0 %v2584
        %2805 = vmatpush1.bf16.msra.mxu0 %v2583
        %2806 = vmatprep.subr.bf16.mxu0 %v2588
        %2807 = vmatpush1.bf16.msra.mxu0 %v2587
        %2808 = vmatprep.subr.bf16.mxu0 %v2592
        %2809 = vmatpush1.bf16.msra.mxu0 %v2591
        %2810 = vmatprep.subr.bf16.mxu0 %v2596
        %2811 = vmatpush1.bf16.msra.mxu0 %v2595
        %2812 = vmatprep.subr.bf16.mxu0 %v2600
        %2813 = vmatpush1.bf16.msra.mxu0 %v2599
        %2814 = vmatprep.subr.bf16.mxu0 %v2604
        %2815 = vmatpush1.bf16.msra.mxu0 %v2603
        %2816 = vmatprep.subr.bf16.mxu0 %v2608
        %2817 = vmatpush1.bf16.msra.mxu0 %v2607
        %2818 = vmatprep.subr.bf16.mxu0 %v2612
        %2819 = vmatpush1.bf16.msra.mxu0 %v2611
        %2820 = vmatprep.subr.bf16.mxu0 %v2616
        %2821 = vmatpush1.bf16.msra.mxu0 %v2615
        %2822 = vmatprep.mubr.bf16.mxu0 %v1977
        %2823 = vmatmul.mubr.bf16.gmra.mrb[0].mxu0 %v1976
        %v2824 = vpop.f32.mrb[0].mxu0
        %v2825 = vadd.f32 %v2782, %v2824
        %v2826 = vpop.f32.mrb[0].mxu0
        %v2827 = vadd.f32 %v2784, %v2826
        %v2828 = vpop.f32.mrb[0].mxu0
        %v2829 = vadd.f32 %v2786, %v2828
        %v2830 = vpop.f32.mrb[0].mxu0
        %v2831 = vadd.f32 %v2788, %v2830
        %2832 = vdwg.mxu0
        %2833 = vmatprep.subr.bf16.mxu0 %v2494
        %2834 = vmatpush1.bf16.msra.mxu0 %v2493
        %2835 = vmatprep.subr.bf16.mxu0 %v2498
        %2836 = vmatpush1.bf16.msra.mxu0 %v2497
        %2837 = vmatprep.subr.bf16.mxu0 %v2502
        %2838 = vmatpush1.bf16.msra.mxu0 %v2501
        %2839 = vmatprep.subr.bf16.mxu0 %v2506
        %2840 = vmatpush1.bf16.msra.mxu0 %v2505
        %2841 = vmatprep.subr.bf16.mxu0 %v2510
        %2842 = vmatpush1.bf16.msra.mxu0 %v2509
        %2843 = vmatprep.subr.bf16.mxu0 %v2514
        %2844 = vmatpush1.bf16.msra.mxu0 %v2513
        %2845 = vmatprep.subr.bf16.mxu0 %v2518
        %2846 = vmatpush1.bf16.msra.mxu0 %v2517
        %2847 = vmatprep.subr.bf16.mxu0 %v2522
        %2848 = vmatpush1.bf16.msra.mxu0 %v2521
        %2849 = vmatprep.subr.bf16.mxu0 %v2526
        %2850 = vmatpush1.bf16.msra.mxu0 %v2525
        %2851 = vmatprep.subr.bf16.mxu0 %v2530
        %2852 = vmatpush1.bf16.msra.mxu0 %v2529
        %2853 = vmatprep.subr.bf16.mxu0 %v2534
        %2854 = vmatpush1.bf16.msra.mxu0 %v2533
        %2855 = vmatprep.subr.bf16.mxu0 %v2538
        %2856 = vmatpush1.bf16.msra.mxu0 %v2537
        %2857 = vmatprep.subr.bf16.mxu0 %v2542
        %2858 = vmatpush1.bf16.msra.mxu0 %v2541
        %2859 = vmatprep.subr.bf16.mxu0 %v2546
        %2860 = vmatpush1.bf16.msra.mxu0 %v2545
        %2861 = vmatprep.subr.bf16.mxu0 %v2550
        %2862 = vmatpush1.bf16.msra.mxu0 %v2549
        %2863 = vmatprep.subr.bf16.mxu0 %v2554
        %2864 = vmatpush1.bf16.msra.mxu0 %v2553
        %2865 = vmatprep.mubr.bf16.mxu0 %v1975
        %2866 = vmatmul.mubr.bf16.gmra.mrb[0].mxu0 %v1974
        %v2867 = vpop.f32.mrb[0].mxu0
        %v2868 = vadd.f32 0.0, %v2867
        %v2869 = vpop.f32.mrb[0].mxu0
        %v2870 = vadd.f32 0.0, %v2869
        %v2871 = vpop.f32.mrb[0].mxu0
        %v2872 = vadd.f32 0.0, %v2871
        %v2873 = vpop.f32.mrb[0].mxu0
        %v2874 = vadd.f32 0.0, %v2873
        %2875 = vdwg.mxu0
        %2876 = vmatprep.subr.bf16.mxu0 %v2558
        %2877 = vmatpush1.bf16.msra.mxu0 %v2557
        %2878 = vmatprep.subr.bf16.mxu0 %v2562
        %2879 = vmatpush1.bf16.msra.mxu0 %v2561
        %2880 = vmatprep.subr.bf16.mxu0 %v2566
        %2881 = vmatpush1.bf16.msra.mxu0 %v2565
        %2882 = vmatprep.subr.bf16.mxu0 %v2570
        %2883 = vmatpush1.bf16.msra.mxu0 %v2569
        %2884 = vmatprep.subr.bf16.mxu0 %v2574
        %2885 = vmatpush1.bf16.msra.mxu0 %v2573
        %2886 = vmatprep.subr.bf16.mxu0 %v2578
        %2887 = vmatpush1.bf16.msra.mxu0 %v2577
        %2888 = vmatprep.subr.bf16.mxu0 %v2582
        %2889 = vmatpush1.bf16.msra.mxu0 %v2581
        %2890 = vmatprep.subr.bf16.mxu0 %v2586
        %2891 = vmatpush1.bf16.msra.mxu0 %v2585
        %2892 = vmatprep.subr.bf16.mxu0 %v2590
        %2893 = vmatpush1.bf16.msra.mxu0 %v2589
        %2894 = vmatprep.subr.bf16.mxu0 %v2594
        %2895 = vmatpush1.bf16.msra.mxu0 %v2593
        %2896 = vmatprep.subr.bf16.mxu0 %v2598
        %2897 = vmatpush1.bf16.msra.mxu0 %v2597
        %2898 = vmatprep.subr.bf16.mxu0 %v2602
        %2899 = vmatpush1.bf16.msra.mxu0 %v2601
        %2900 = vmatprep.subr.bf16.mxu0 %v2606
        %2901 = vmatpush1.bf16.msra.mxu0 %v2605
        %2902 = vmatprep.subr.bf16.mxu0 %v2610
        %2903 = vmatpush1.bf16.msra.mxu0 %v2609
        %2904 = vmatprep.subr.bf16.mxu0 %v2614
        %2905 = vmatpush1.bf16.msra.mxu0 %v2613
        %2906 = vmatprep.subr.bf16.mxu0 %v2618
        %2907 = vmatpush1.bf16.msra.mxu0 %v2617
        %2908 = vmatprep.mubr.bf16.mxu0 %v1977
        %2909 = vmatmul.mubr.bf16.gmra.mrb[0].mxu0 %v1976
        %v2910 = vpop.f32.mrb[0].mxu0
        %v2911 = vadd.f32 %v2868, %v2910
        %v2912 = vpop.f32.mrb[0].mxu0
        %v2913 = vadd.f32 %v2870, %v2912
        %v2914 = vpop.f32.mrb[0].mxu0
        %v2915 = vadd.f32 %v2872, %v2914
        %v2916 = vpop.f32.mrb[0].mxu0
        %v2917 = vadd.f32 %v2874, %v2916
        %2918 = vdwg.mxu0
        %v3047 = vunpack.c.l.b16 %v1846
        %v3048 = vunpack.c.h.b16 %v1846
        %v3049 = vunpack.c.l.b16 %v1847
        %v3050 = vunpack.c.h.b16 %v1847
        %v3051 = vunpack.c.l.b16 %v1848
        %v3052 = vunpack.c.h.b16 %v1848
        %v3053 = vunpack.c.l.b16 %v1849
        %v3054 = vunpack.c.h.b16 %v1849
        %v3055 = vunpack.c.l.b16 %v1850
        %v3056 = vunpack.c.h.b16 %v1850
        %v3057 = vunpack.c.l.b16 %v1851
        %v3058 = vunpack.c.h.b16 %v1851
        %v3059 = vunpack.c.l.b16 %v1852
        %v3060 = vunpack.c.h.b16 %v1852
        %v3061 = vunpack.c.l.b16 %v1853
        %v3062 = vunpack.c.h.b16 %v1853
        %v3063 = vunpack.c.l.b16 %v1854
        %v3064 = vunpack.c.h.b16 %v1854
        %v3065 = vunpack.c.l.b16 %v1855
        %v3066 = vunpack.c.h.b16 %v1855
        %v3067 = vunpack.c.l.b16 %v1856
        %v3068 = vunpack.c.h.b16 %v1856
        %v3069 = vunpack.c.l.b16 %v1857
        %v3070 = vunpack.c.h.b16 %v1857
        %v3071 = vunpack.c.l.b16 %v1858
        %v3072 = vunpack.c.h.b16 %v1858
        %v3073 = vunpack.c.l.b16 %v1859
        %v3074 = vunpack.c.h.b16 %v1859
        %v3075 = vunpack.c.l.b16 %v1860
        %v3076 = vunpack.c.h.b16 %v1860
        %v3077 = vunpack.c.l.b16 %v1861
        %v3078 = vunpack.c.h.b16 %v1861
        %v3079 = vunpack.c.l.b16 %v1862
        %v3080 = vunpack.c.h.b16 %v1862
        %v3081 = vunpack.c.l.b16 %v1863
        %v3082 = vunpack.c.h.b16 %v1863
        %v3083 = vunpack.c.l.b16 %v1864
        %v3084 = vunpack.c.h.b16 %v1864
        %v3085 = vunpack.c.l.b16 %v1865
        %v3086 = vunpack.c.h.b16 %v1865
        %v3087 = vunpack.c.l.b16 %v1866
        %v3088 = vunpack.c.h.b16 %v1866
        %v3089 = vunpack.c.l.b16 %v1867
        %v3090 = vunpack.c.h.b16 %v1867
        %v3091 = vunpack.c.l.b16 %v1868
        %v3092 = vunpack.c.h.b16 %v1868
        %v3093 = vunpack.c.l.b16 %v1869
        %v3094 = vunpack.c.h.b16 %v1869
        %v3095 = vunpack.c.l.b16 %v1870
        %v3096 = vunpack.c.h.b16 %v1870
        %v3097 = vunpack.c.l.b16 %v1871
        %v3098 = vunpack.c.h.b16 %v1871
        %v3099 = vunpack.c.l.b16 %v1872
        %v3100 = vunpack.c.h.b16 %v1872
        %v3101 = vunpack.c.l.b16 %v1873
        %v3102 = vunpack.c.h.b16 %v1873
        %v3103 = vunpack.c.l.b16 %v1874
        %v3104 = vunpack.c.h.b16 %v1874
        %v3105 = vunpack.c.l.b16 %v1875
        %v3106 = vunpack.c.h.b16 %v1875
        %v3107 = vunpack.c.l.b16 %v1876
        %v3108 = vunpack.c.h.b16 %v1876
        %v3109 = vunpack.c.l.b16 %v1877
        %v3110 = vunpack.c.h.b16 %v1877
        %v3111 = vunpack.c.l.b16 %v1878
        %v3112 = vunpack.c.h.b16 %v1878
        %v3113 = vunpack.c.l.b16 %v1879
        %v3114 = vunpack.c.h.b16 %v1879
        %v3115 = vunpack.c.l.b16 %v1880
        %v3116 = vunpack.c.h.b16 %v1880
        %v3117 = vunpack.c.l.b16 %v1881
        %v3118 = vunpack.c.h.b16 %v1881
        %v3119 = vunpack.c.l.b16 %v1882
        %v3120 = vunpack.c.h.b16 %v1882
        %v3121 = vunpack.c.l.b16 %v1883
        %v3122 = vunpack.c.h.b16 %v1883
        %v3123 = vunpack.c.l.b16 %v1884
        %v3124 = vunpack.c.h.b16 %v1884
        %v3125 = vunpack.c.l.b16 %v1885
        %v3126 = vunpack.c.h.b16 %v1885
        %v3127 = vunpack.c.l.b16 %v1886
        %v3128 = vunpack.c.h.b16 %v1886
        %v3129 = vunpack.c.l.b16 %v1887
        %v3130 = vunpack.c.h.b16 %v1887
        %v3131 = vunpack.c.l.b16 %v1888
        %v3132 = vunpack.c.h.b16 %v1888
        %v3133 = vunpack.c.l.b16 %v1889
        %v3134 = vunpack.c.h.b16 %v1889
        %v3135 = vunpack.c.l.b16 %v1890
        %v3136 = vunpack.c.h.b16 %v1890
        %v3137 = vunpack.c.l.b16 %v1891
        %v3138 = vunpack.c.h.b16 %v1891
        %v3139 = vunpack.c.l.b16 %v1892
        %v3140 = vunpack.c.h.b16 %v1892
        %v3141 = vunpack.c.l.b16 %v1893
        %v3142 = vunpack.c.h.b16 %v1893
        %v3143 = vunpack.c.l.b16 %v1894
        %v3144 = vunpack.c.h.b16 %v1894
        %v3145 = vunpack.c.l.b16 %v1895
        %v3146 = vunpack.c.h.b16 %v1895
        %v3147 = vunpack.c.l.b16 %v1896
        %v3148 = vunpack.c.h.b16 %v1896
        %v3149 = vunpack.c.l.b16 %v1897
        %v3150 = vunpack.c.h.b16 %v1897
        %v3151 = vunpack.c.l.b16 %v1898
        %v3152 = vunpack.c.h.b16 %v1898
        %v3153 = vunpack.c.l.b16 %v1899
        %v3154 = vunpack.c.h.b16 %v1899
        %v3155 = vunpack.c.l.b16 %v1900
        %v3156 = vunpack.c.h.b16 %v1900
        %v3157 = vunpack.c.l.b16 %v1901
        %v3158 = vunpack.c.h.b16 %v1901
        %v3159 = vunpack.c.l.b16 %v1902
        %v3160 = vunpack.c.h.b16 %v1902
        %v3161 = vunpack.c.l.b16 %v1903
        %v3162 = vunpack.c.h.b16 %v1903
        %v3163 = vunpack.c.l.b16 %v1904
        %v3164 = vunpack.c.h.b16 %v1904
        %v3165 = vunpack.c.l.b16 %v1905
        %v3166 = vunpack.c.h.b16 %v1905
        %v3167 = vunpack.c.l.b16 %v1906
        %v3168 = vunpack.c.h.b16 %v1906
        %v3169 = vunpack.c.l.b16 %v1907
        %v3170 = vunpack.c.h.b16 %v1907
        %v3171 = vunpack.c.l.b16 %v1908
        %v3172 = vunpack.c.h.b16 %v1908
        %v3173 = vunpack.c.l.b16 %v1909
        %v3174 = vunpack.c.h.b16 %v1909
        %v3175 = vunpack.c.l.b16 %v1910
        %v3176 = vunpack.c.h.b16 %v1910
        %v3177 = vunpack.c.l.b16 %v1911
        %v3178 = vunpack.c.h.b16 %v1911
        %v3179 = vunpack.c.l.b16 %v1912
        %v3180 = vunpack.c.h.b16 %v1912
        %v3181 = vunpack.c.l.b16 %v1913
        %v3182 = vunpack.c.h.b16 %v1913
        %v3183 = vunpack.c.l.b16 %v1914
        %v3184 = vunpack.c.h.b16 %v1914
        %v3185 = vunpack.c.l.b16 %v1915
        %v3186 = vunpack.c.h.b16 %v1915
        %v3187 = vunpack.c.l.b16 %v1916
        %v3188 = vunpack.c.h.b16 %v1916
        %v3189 = vunpack.c.l.b16 %v1917
        %v3190 = vunpack.c.h.b16 %v1917
        %v3191 = vunpack.c.l.b16 %v1918
        %v3192 = vunpack.c.h.b16 %v1918
        %v3193 = vunpack.c.l.b16 %v1919
        %v3194 = vunpack.c.h.b16 %v1919
        %v3195 = vunpack.c.l.b16 %v1920
        %v3196 = vunpack.c.h.b16 %v1920
        %v3197 = vunpack.c.l.b16 %v1921
        %v3198 = vunpack.c.h.b16 %v1921
        %v3199 = vunpack.c.l.b16 %v1922
        %v3200 = vunpack.c.h.b16 %v1922
        %v3201 = vunpack.c.l.b16 %v1923
        %v3202 = vunpack.c.h.b16 %v1923
        %v3203 = vunpack.c.l.b16 %v1924
        %v3204 = vunpack.c.h.b16 %v1924
        %v3205 = vunpack.c.l.b16 %v1925
        %v3206 = vunpack.c.h.b16 %v1925
        %v3207 = vunpack.c.l.b16 %v1926
        %v3208 = vunpack.c.h.b16 %v1926
        %v3209 = vunpack.c.l.b16 %v1927
        %v3210 = vunpack.c.h.b16 %v1927
        %v3211 = vunpack.c.l.b16 %v1928
        %v3212 = vunpack.c.h.b16 %v1928
        %v3213 = vunpack.c.l.b16 %v1929
        %v3214 = vunpack.c.h.b16 %v1929
        %v3215 = vunpack.c.l.b16 %v1930
        %v3216 = vunpack.c.h.b16 %v1930
        %v3217 = vunpack.c.l.b16 %v1931
        %v3218 = vunpack.c.h.b16 %v1931
        %v3219 = vunpack.c.l.b16 %v1932
        %v3220 = vunpack.c.h.b16 %v1932
        %v3221 = vunpack.c.l.b16 %v1933
        %v3222 = vunpack.c.h.b16 %v1933
        %v3223 = vunpack.c.l.b16 %v1934
        %v3224 = vunpack.c.h.b16 %v1934
        %v3225 = vunpack.c.l.b16 %v1935
        %v3226 = vunpack.c.h.b16 %v1935
        %v3227 = vunpack.c.l.b16 %v1936
        %v3228 = vunpack.c.h.b16 %v1936
        %v3229 = vunpack.c.l.b16 %v1937
        %v3230 = vunpack.c.h.b16 %v1937
        %v3231 = vunpack.c.l.b16 %v1938
        %v3232 = vunpack.c.h.b16 %v1938
        %v3233 = vunpack.c.l.b16 %v1939
        %v3234 = vunpack.c.h.b16 %v1939
        %v3235 = vunpack.c.l.b16 %v1940
        %v3236 = vunpack.c.h.b16 %v1940
        %v3237 = vunpack.c.l.b16 %v1941
        %v3238 = vunpack.c.h.b16 %v1941
        %v3239 = vunpack.c.l.b16 %v1942
        %v3240 = vunpack.c.h.b16 %v1942
        %v3241 = vunpack.c.l.b16 %v1943
        %v3242 = vunpack.c.h.b16 %v1943
        %v3243 = vunpack.c.l.b16 %v1944
        %v3244 = vunpack.c.h.b16 %v1944
        %v3245 = vunpack.c.l.b16 %v1945
        %v3246 = vunpack.c.h.b16 %v1945
        %v3247 = vunpack.c.l.b16 %v1946
        %v3248 = vunpack.c.h.b16 %v1946
        %v3249 = vunpack.c.l.b16 %v1947
        %v3250 = vunpack.c.h.b16 %v1947
        %v3251 = vunpack.c.l.b16 %v1948
        %v3252 = vunpack.c.h.b16 %v1948
        %v3253 = vunpack.c.l.b16 %v1949
        %v3254 = vunpack.c.h.b16 %v1949
        %v3255 = vunpack.c.l.b16 %v1950
        %v3256 = vunpack.c.h.b16 %v1950
        %v3257 = vunpack.c.l.b16 %v1951
        %v3258 = vunpack.c.h.b16 %v1951
        %v3259 = vunpack.c.l.b16 %v1952
        %v3260 = vunpack.c.h.b16 %v1952
        %v3261 = vunpack.c.l.b16 %v1953
        %v3262 = vunpack.c.h.b16 %v1953
        %v3263 = vunpack.c.l.b16 %v1954
        %v3264 = vunpack.c.h.b16 %v1954
        %v3265 = vunpack.c.l.b16 %v1955
        %v3266 = vunpack.c.h.b16 %v1955
        %v3267 = vunpack.c.l.b16 %v1956
        %v3268 = vunpack.c.h.b16 %v1956
        %v3269 = vunpack.c.l.b16 %v1957
        %v3270 = vunpack.c.h.b16 %v1957
        %v3271 = vunpack.c.l.b16 %v1958
        %v3272 = vunpack.c.h.b16 %v1958
        %v3273 = vunpack.c.l.b16 %v1959
        %v3274 = vunpack.c.h.b16 %v1959
        %v3275 = vunpack.c.l.b16 %v1960
        %v3276 = vunpack.c.h.b16 %v1960
        %v3277 = vunpack.c.l.b16 %v1961
        %v3278 = vunpack.c.h.b16 %v1961
        %v3279 = vunpack.c.l.b16 %v1962
        %v3280 = vunpack.c.h.b16 %v1962
        %v3281 = vunpack.c.l.b16 %v1963
        %v3282 = vunpack.c.h.b16 %v1963
        %v3283 = vunpack.c.l.b16 %v1964
        %v3284 = vunpack.c.h.b16 %v1964
        %v3285 = vunpack.c.l.b16 %v1965
        %v3286 = vunpack.c.h.b16 %v1965
        %v3287 = vunpack.c.l.b16 %v1966
        %v3288 = vunpack.c.h.b16 %v1966
        %v3289 = vunpack.c.l.b16 %v1967
        %v3290 = vunpack.c.h.b16 %v1967
        %v3291 = vunpack.c.l.b16 %v1968
        %v3292 = vunpack.c.h.b16 %v1968
        %v3293 = vunpack.c.l.b16 %v1969
        %v3294 = vunpack.c.h.b16 %v1969
        %v3295 = vunpack.c.l.b16 %v1970
        %v3296 = vunpack.c.h.b16 %v1970
        %v3297 = vunpack.c.l.b16 %v1971
        %v3298 = vunpack.c.h.b16 %v1971
        %v3299 = vunpack.c.l.b16 %v1972
        %v3300 = vunpack.c.h.b16 %v1972
        %v3301 = vunpack.c.l.b16 %v1973
        %v3302 = vunpack.c.h.b16 %v1973
        %v3303 = vpack.c.b16 %v3051, %v3047
        %v3304 = vpack.c.b16 %v3052, %v3048
        %v3305 = vpack.c.b16 %v3053, %v3049
        %v3306 = vpack.c.b16 %v3054, %v3050
        %v3307 = vpack.c.b16 %v3059, %v3055
        %v3308 = vpack.c.b16 %v3060, %v3056
        %v3309 = vpack.c.b16 %v3061, %v3057
        %v3310 = vpack.c.b16 %v3062, %v3058
        %v3311 = vpack.c.b16 %v3067, %v3063
        %v3312 = vpack.c.b16 %v3068, %v3064
        %v3313 = vpack.c.b16 %v3069, %v3065
        %v3314 = vpack.c.b16 %v3070, %v3066
        %v3315 = vpack.c.b16 %v3075, %v3071
        %v3316 = vpack.c.b16 %v3076, %v3072
        %v3317 = vpack.c.b16 %v3077, %v3073
        %v3318 = vpack.c.b16 %v3078, %v3074
        %v3319 = vpack.c.b16 %v3083, %v3079
        %v3320 = vpack.c.b16 %v3084, %v3080
        %v3321 = vpack.c.b16 %v3085, %v3081
        %v3322 = vpack.c.b16 %v3086, %v3082
        %v3323 = vpack.c.b16 %v3091, %v3087
        %v3324 = vpack.c.b16 %v3092, %v3088
        %v3325 = vpack.c.b16 %v3093, %v3089
        %v3326 = vpack.c.b16 %v3094, %v3090
        %v3327 = vpack.c.b16 %v3099, %v3095
        %v3328 = vpack.c.b16 %v3100, %v3096
        %v3329 = vpack.c.b16 %v3101, %v3097
        %v3330 = vpack.c.b16 %v3102, %v3098
        %v3331 = vpack.c.b16 %v3107, %v3103
        %v3332 = vpack.c.b16 %v3108, %v3104
        %v3333 = vpack.c.b16 %v3109, %v3105
        %v3334 = vpack.c.b16 %v3110, %v3106
        %v3335 = vpack.c.b16 %v3115, %v3111
        %v3336 = vpack.c.b16 %v3116, %v3112
        %v3337 = vpack.c.b16 %v3117, %v3113
        %v3338 = vpack.c.b16 %v3118, %v3114
        %v3339 = vpack.c.b16 %v3123, %v3119
        %v3340 = vpack.c.b16 %v3124, %v3120
        %v3341 = vpack.c.b16 %v3125, %v3121
        %v3342 = vpack.c.b16 %v3126, %v3122
        %v3343 = vpack.c.b16 %v3131, %v3127
        %v3344 = vpack.c.b16 %v3132, %v3128
        %v3345 = vpack.c.b16 %v3133, %v3129
        %v3346 = vpack.c.b16 %v3134, %v3130
        %v3347 = vpack.c.b16 %v3139, %v3135
        %v3348 = vpack.c.b16 %v3140, %v3136
        %v3349 = vpack.c.b16 %v3141, %v3137
        %v3350 = vpack.c.b16 %v3142, %v3138
        %v3351 = vpack.c.b16 %v3147, %v3143
        %v3352 = vpack.c.b16 %v3148, %v3144
        %v3353 = vpack.c.b16 %v3149, %v3145
        %v3354 = vpack.c.b16 %v3150, %v3146
        %v3355 = vpack.c.b16 %v3155, %v3151
        %v3356 = vpack.c.b16 %v3156, %v3152
        %v3357 = vpack.c.b16 %v3157, %v3153
        %v3358 = vpack.c.b16 %v3158, %v3154
        %v3359 = vpack.c.b16 %v3163, %v3159
        %v3360 = vpack.c.b16 %v3164, %v3160
        %v3361 = vpack.c.b16 %v3165, %v3161
        %v3362 = vpack.c.b16 %v3166, %v3162
        %v3363 = vpack.c.b16 %v3171, %v3167
        %v3364 = vpack.c.b16 %v3172, %v3168
        %v3365 = vpack.c.b16 %v3173, %v3169
        %v3366 = vpack.c.b16 %v3174, %v3170
        %v3367 = vpack.c.b16 %v3179, %v3175
        %v3368 = vpack.c.b16 %v3180, %v3176
        %v3369 = vpack.c.b16 %v3181, %v3177
        %v3370 = vpack.c.b16 %v3182, %v3178
        %v3371 = vpack.c.b16 %v3187, %v3183
        %v3372 = vpack.c.b16 %v3188, %v3184
        %v3373 = vpack.c.b16 %v3189, %v3185
        %v3374 = vpack.c.b16 %v3190, %v3186
        %v3375 = vpack.c.b16 %v3195, %v3191
        %v3376 = vpack.c.b16 %v3196, %v3192
        %v3377 = vpack.c.b16 %v3197, %v3193
        %v3378 = vpack.c.b16 %v3198, %v3194
        %v3379 = vpack.c.b16 %v3203, %v3199
        %v3380 = vpack.c.b16 %v3204, %v3200
        %v3381 = vpack.c.b16 %v3205, %v3201
        %v3382 = vpack.c.b16 %v3206, %v3202
        %v3383 = vpack.c.b16 %v3211, %v3207
        %v3384 = vpack.c.b16 %v3212, %v3208
        %v3385 = vpack.c.b16 %v3213, %v3209
        %v3386 = vpack.c.b16 %v3214, %v3210
        %v3387 = vpack.c.b16 %v3219, %v3215
        %v3388 = vpack.c.b16 %v3220, %v3216
        %v3389 = vpack.c.b16 %v3221, %v3217
        %v3390 = vpack.c.b16 %v3222, %v3218
        %v3391 = vpack.c.b16 %v3227, %v3223
        %v3392 = vpack.c.b16 %v3228, %v3224
        %v3393 = vpack.c.b16 %v3229, %v3225
        %v3394 = vpack.c.b16 %v3230, %v3226
        %v3395 = vpack.c.b16 %v3235, %v3231
        %v3396 = vpack.c.b16 %v3236, %v3232
        %v3397 = vpack.c.b16 %v3237, %v3233
        %v3398 = vpack.c.b16 %v3238, %v3234
        %v3399 = vpack.c.b16 %v3243, %v3239
        %v3400 = vpack.c.b16 %v3244, %v3240
        %v3401 = vpack.c.b16 %v3245, %v3241
        %v3402 = vpack.c.b16 %v3246, %v3242
        %v3403 = vpack.c.b16 %v3251, %v3247
        %v3404 = vpack.c.b16 %v3252, %v3248
        %v3405 = vpack.c.b16 %v3253, %v3249
        %v3406 = vpack.c.b16 %v3254, %v3250
        %v3407 = vpack.c.b16 %v3259, %v3255
        %v3408 = vpack.c.b16 %v3260, %v3256
        %v3409 = vpack.c.b16 %v3261, %v3257
        %v3410 = vpack.c.b16 %v3262, %v3258
        %v3411 = vpack.c.b16 %v3267, %v3263
        %v3412 = vpack.c.b16 %v3268, %v3264
        %v3413 = vpack.c.b16 %v3269, %v3265
        %v3414 = vpack.c.b16 %v3270, %v3266
        %v3415 = vpack.c.b16 %v3275, %v3271
        %v3416 = vpack.c.b16 %v3276, %v3272
        %v3417 = vpack.c.b16 %v3277, %v3273
        %v3418 = vpack.c.b16 %v3278, %v3274
        %v3419 = vpack.c.b16 %v3283, %v3279
        %v3420 = vpack.c.b16 %v3284, %v3280
        %v3421 = vpack.c.b16 %v3285, %v3281
        %v3422 = vpack.c.b16 %v3286, %v3282
        %v3423 = vpack.c.b16 %v3291, %v3287
        %v3424 = vpack.c.b16 %v3292, %v3288
        %v3425 = vpack.c.b16 %v3293, %v3289
        %v3426 = vpack.c.b16 %v3294, %v3290
        %v3427 = vpack.c.b16 %v3299, %v3295
        %v3428 = vpack.c.b16 %v3300, %v3296
        %v3429 = vpack.c.b16 %v3301, %v3297
        %v3430 = vpack.c.b16 %v3302, %v3298
        %3559 = vmatprep.subr.bf16.mxu0 %v3304
        %3560 = vmatpush1.bf16.msra.mxu0 %v3303
        %3561 = vmatprep.subr.bf16.mxu0 %v3308
        %3562 = vmatpush1.bf16.msra.mxu0 %v3307
        %3563 = vmatprep.subr.bf16.mxu0 %v3312
        %3564 = vmatpush1.bf16.msra.mxu0 %v3311
        %3565 = vmatprep.subr.bf16.mxu0 %v3316
        %3566 = vmatpush1.bf16.msra.mxu0 %v3315
        %3567 = vmatprep.subr.bf16.mxu0 %v3320
        %3568 = vmatpush1.bf16.msra.mxu0 %v3319
        %3569 = vmatprep.subr.bf16.mxu0 %v3324
        %3570 = vmatpush1.bf16.msra.mxu0 %v3323
        %3571 = vmatprep.subr.bf16.mxu0 %v3328
        %3572 = vmatpush1.bf16.msra.mxu0 %v3327
        %3573 = vmatprep.subr.bf16.mxu0 %v3332
        %3574 = vmatpush1.bf16.msra.mxu0 %v3331
        %3575 = vmatprep.subr.bf16.mxu0 %v3336
        %3576 = vmatpush1.bf16.msra.mxu0 %v3335
        %3577 = vmatprep.subr.bf16.mxu0 %v3340
        %3578 = vmatpush1.bf16.msra.mxu0 %v3339
        %3579 = vmatprep.subr.bf16.mxu0 %v3344
        %3580 = vmatpush1.bf16.msra.mxu0 %v3343
        %3581 = vmatprep.subr.bf16.mxu0 %v3348
        %3582 = vmatpush1.bf16.msra.mxu0 %v3347
        %3583 = vmatprep.subr.bf16.mxu0 %v3352
        %3584 = vmatpush1.bf16.msra.mxu0 %v3351
        %3585 = vmatprep.subr.bf16.mxu0 %v3356
        %3586 = vmatpush1.bf16.msra.mxu0 %v3355
        %3587 = vmatprep.subr.bf16.mxu0 %v3360
        %3588 = vmatpush1.bf16.msra.mxu0 %v3359
        %3589 = vmatprep.subr.bf16.mxu0 %v3364
        %3590 = vmatpush1.bf16.msra.mxu0 %v3363
        %3591 = vmatprep.mubr.bf16.mxu0 %v1843
        %3592 = vmatmul.mubr.bf16.gmra.mrb[0].mxu0 %v1842
        %v3593 = vpop.f32.mrb[0].mxu0
        %v3594 = vadd.f32 %v2825, %v3593
        %v3595 = vpop.f32.mrb[0].mxu0
        %v3596 = vadd.f32 %v2827, %v3595
        %v3597 = vpop.f32.mrb[0].mxu0
        %v3598 = vadd.f32 %v2829, %v3597
        %v3599 = vpop.f32.mrb[0].mxu0
        %v3600 = vadd.f32 %v2831, %v3599
        %3601 = vdwg.mxu0
        %3602 = vmatprep.subr.bf16.mxu0 %v3368
        %3603 = vmatpush1.bf16.msra.mxu0 %v3367
        %3604 = vmatprep.subr.bf16.mxu0 %v3372
        %3605 = vmatpush1.bf16.msra.mxu0 %v3371
        %3606 = vmatprep.subr.bf16.mxu0 %v3376
        %3607 = vmatpush1.bf16.msra.mxu0 %v3375
        %3608 = vmatprep.subr.bf16.mxu0 %v3380
        %3609 = vmatpush1.bf16.msra.mxu0 %v3379
        %3610 = vmatprep.subr.bf16.mxu0 %v3384
        %3611 = vmatpush1.bf16.msra.mxu0 %v3383
        %3612 = vmatprep.subr.bf16.mxu0 %v3388
        %3613 = vmatpush1.bf16.msra.mxu0 %v3387
        %3614 = vmatprep.subr.bf16.mxu0 %v3392
        %3615 = vmatpush1.bf16.msra.mxu0 %v3391
        %3616 = vmatprep.subr.bf16.mxu0 %v3396
        %3617 = vmatpush1.bf16.msra.mxu0 %v3395
        %3618 = vmatprep.subr.bf16.mxu0 %v3400
        %3619 = vmatpush1.bf16.msra.mxu0 %v3399
        %3620 = vmatprep.subr.bf16.mxu0 %v3404
        %3621 = vmatpush1.bf16.msra.mxu0 %v3403
        %3622 = vmatprep.subr.bf16.mxu0 %v3408
        %3623 = vmatpush1.bf16.msra.mxu0 %v3407
        %3624 = vmatprep.subr.bf16.mxu0 %v3412
        %3625 = vmatpush1.bf16.msra.mxu0 %v3411
        %3626 = vmatprep.subr.bf16.mxu0 %v3416
        %3627 = vmatpush1.bf16.msra.mxu0 %v3415
        %3628 = vmatprep.subr.bf16.mxu0 %v3420
        %3629 = vmatpush1.bf16.msra.mxu0 %v3419
        %3630 = vmatprep.subr.bf16.mxu0 %v3424
        %3631 = vmatpush1.bf16.msra.mxu0 %v3423
        %3632 = vmatprep.subr.bf16.mxu0 %v3428
        %3633 = vmatpush1.bf16.msra.mxu0 %v3427
        %3634 = vmatprep.mubr.bf16.mxu0 %v1845
        %3635 = vmatmul.mubr.bf16.gmra.mrb[0].mxu0 %v1844
        %v3636 = vpop.f32.mrb[0].mxu0
        %v3637 = vadd.f32 %v3594, %v3636
        %v3638 = vpop.f32.mrb[0].mxu0
        %v3639 = vadd.f32 %v3596, %v3638
        %v3640 = vpop.f32.mrb[0].mxu0
        %v3641 = vadd.f32 %v3598, %v3640
        %v3642 = vpop.f32.mrb[0].mxu0
        %v3643 = vadd.f32 %v3600, %v3642
        %3644 = vdwg.mxu0
        %3645 = vmatprep.subr.bf16.mxu0 %v3306
        %3646 = vmatpush1.bf16.msra.mxu0 %v3305
        %3647 = vmatprep.subr.bf16.mxu0 %v3310
        %3648 = vmatpush1.bf16.msra.mxu0 %v3309
        %3649 = vmatprep.subr.bf16.mxu0 %v3314
        %3650 = vmatpush1.bf16.msra.mxu0 %v3313
        %3651 = vmatprep.subr.bf16.mxu0 %v3318
        %3652 = vmatpush1.bf16.msra.mxu0 %v3317
        %3653 = vmatprep.subr.bf16.mxu0 %v3322
        %3654 = vmatpush1.bf16.msra.mxu0 %v3321
        %3655 = vmatprep.subr.bf16.mxu0 %v3326
        %3656 = vmatpush1.bf16.msra.mxu0 %v3325
        %3657 = vmatprep.subr.bf16.mxu0 %v3330
        %3658 = vmatpush1.bf16.msra.mxu0 %v3329
        %3659 = vmatprep.subr.bf16.mxu0 %v3334
        %3660 = vmatpush1.bf16.msra.mxu0 %v3333
        %3661 = vmatprep.subr.bf16.mxu0 %v3338
        %3662 = vmatpush1.bf16.msra.mxu0 %v3337
        %3663 = vmatprep.subr.bf16.mxu0 %v3342
        %3664 = vmatpush1.bf16.msra.mxu0 %v3341
        %3665 = vmatprep.subr.bf16.mxu0 %v3346
        %3666 = vmatpush1.bf16.msra.mxu0 %v3345
        %3667 = vmatprep.subr.bf16.mxu0 %v3350
        %3668 = vmatpush1.bf16.msra.mxu0 %v3349
        %3669 = vmatprep.subr.bf16.mxu0 %v3354
        %3670 = vmatpush1.bf16.msra.mxu0 %v3353
        %3671 = vmatprep.subr.bf16.mxu0 %v3358
        %3672 = vmatpush1.bf16.msra.mxu0 %v3357
        %3673 = vmatprep.subr.bf16.mxu0 %v3362
        %3674 = vmatpush1.bf16.msra.mxu0 %v3361
        %3675 = vmatprep.subr.bf16.mxu0 %v3366
        %3676 = vmatpush1.bf16.msra.mxu0 %v3365
        %3677 = vmatprep.mubr.bf16.mxu0 %v1843
        %3678 = vmatmul.mubr.bf16.gmra.mrb[0].mxu0 %v1842
        %v3679 = vpop.f32.mrb[0].mxu0
        %v3680 = vadd.f32 %v2911, %v3679
        %v3681 = vpop.f32.mrb[0].mxu0
        %v3682 = vadd.f32 %v2913, %v3681
        %v3683 = vpop.f32.mrb[0].mxu0
        %v3684 = vadd.f32 %v2915, %v3683
        %v3685 = vpop.f32.mrb[0].mxu0
        %v3686 = vadd.f32 %v2917, %v3685
        %3687 = vdwg.mxu0
        %3688 = vmatprep.subr.bf16.mxu0 %v3370
        %3689 = vmatpush1.bf16.msra.mxu0 %v3369
        %3690 = vmatprep.subr.bf16.mxu0 %v3374
        %3691 = vmatpush1.bf16.msra.mxu0 %v3373
        %3692 = vmatprep.subr.bf16.mxu0 %v3378
        %3693 = vmatpush1.bf16.msra.mxu0 %v3377
        %3694 = vmatprep.subr.bf16.mxu0 %v3382
        %3695 = vmatpush1.bf16.msra.mxu0 %v3381
        %3696 = vmatprep.subr.bf16.mxu0 %v3386
        %3697 = vmatpush1.bf16.msra.mxu0 %v3385
        %3698 = vmatprep.subr.bf16.mxu0 %v3390
        %3699 = vmatpush1.bf16.msra.mxu0 %v3389
        %3700 = vmatprep.subr.bf16.mxu0 %v3394
        %3701 = vmatpush1.bf16.msra.mxu0 %v3393
        %3702 = vmatprep.subr.bf16.mxu0 %v3398
        %3703 = vmatpush1.bf16.msra.mxu0 %v3397
        %3704 = vmatprep.subr.bf16.mxu0 %v3402
        %3705 = vmatpush1.bf16.msra.mxu0 %v3401
        %3706 = vmatprep.subr.bf16.mxu0 %v3406
        %3707 = vmatpush1.bf16.msra.mxu0 %v3405
        %3708 = vmatprep.subr.bf16.mxu0 %v3410
        %3709 = vmatpush1.bf16.msra.mxu0 %v3409
        %3710 = vmatprep.subr.bf16.mxu0 %v3414
        %3711 = vmatpush1.bf16.msra.mxu0 %v3413
        %3712 = vmatprep.subr.bf16.mxu0 %v3418
        %3713 = vmatpush1.bf16.msra.mxu0 %v3417
        %3714 = vmatprep.subr.bf16.mxu0 %v3422
        %3715 = vmatpush1.bf16.msra.mxu0 %v3421
        %3716 = vmatprep.subr.bf16.mxu0 %v3426
        %3717 = vmatpush1.bf16.msra.mxu0 %v3425
        %3718 = vmatprep.subr.bf16.mxu0 %v3430
        %3719 = vmatpush1.bf16.msra.mxu0 %v3429
        %3720 = vmatprep.mubr.bf16.mxu0 %v1845
        %3721 = vmatmul.mubr.bf16.gmra.mrb[0].mxu0 %v1844
        %v3722 = vpop.f32.mrb[0].mxu0
        %v3723 = vadd.f32 %v3680, %v3722
        %v3724 = vpop.f32.mrb[0].mxu0
        %v3725 = vadd.f32 %v3682, %v3724
        %v3726 = vpop.f32.mrb[0].mxu0
        %v3727 = vadd.f32 %v3684, %v3726
        %v3728 = vpop.f32.mrb[0].mxu0
        %v3729 = vadd.f32 %v3686, %v3728
        %3730 = vdwg.mxu0
        %vm3731 = vcmask 1046528
        %v3732 = vrot.slane %v1801, 1
        %v3733 = vrot.slane %v1805, 1
        %v3734 = vsel %vm3731, %v3732, %v3733
        %v3735 = vrot.slane %v1802, 1
        %v3736 = vrot.slane %v1806, 1
        %v3737 = vsel %vm3731, %v3735, %v3736
        %v3738 = vrot.slane %v1803, 1
        %v3739 = vrot.slane %v1807, 1
        %v3740 = vsel %vm3731, %v3738, %v3739
        %v3741 = vrot.slane %v1804, 1
        %v3742 = vrot.slane %v1808, 1
        %v3743 = vsel %vm3731, %v3741, %v3742
        %v3752 = vsel %vm3731, %v3733, 0.0
        %v3753 = vsel %vm3731, %v3736, 0.0
        %v3754 = vsel %vm3731, %v3739, 0.0
        %v3755 = vsel %vm3731, %v3742, 0.0
        %v3756 = vpack.c.bf16 %v3752, %v3734
        %v3757 = vpack.c.bf16 %v3753, %v3737
        %v3758 = vpack.c.bf16 %v3754, %v3740
        %v3759 = vpack.c.bf16 %v3755, %v3743
        %s3760 = scalar_lea.vmem [#allocation14], 2048
        %v3761 = vld [vmem:[%s3760] sm:$0xff]
        %v3762 = vld [vmem:[%s3760 + $0x8] sm:$0xff]
        %v3763 = vld [vmem:[%s3760 + $0x10] sm:$0xff]
        %v3764 = vld [vmem:[%s3760 + $0x18] sm:$0xff]
        %v3765 = vld [vmem:[%s3760 + $0x20] sm:$0xff]
        %v3766 = vld [vmem:[%s3760 + $0x28] sm:$0xff]
        %v3767 = vld [vmem:[%s3760 + $0x30] sm:$0xff]
        %v3768 = vld [vmem:[%s3760 + $0x38] sm:$0xff]
        %v3769 = vld [vmem:[%s3760 + $0x40] sm:$0xff]
        %v3770 = vld [vmem:[%s3760 + $0x48] sm:$0xff]
        %v3771 = vld [vmem:[%s3760 + $0x50] sm:$0xff]
        %v3772 = vld [vmem:[%s3760 + $0x58] sm:$0xff]
        %v3773 = vld [vmem:[%s3760 + $0x60] sm:$0xff]
        %v3774 = vld [vmem:[%s3760 + $0x68] sm:$0xff]
        %v3775 = vld [vmem:[%s3760 + $0x70] sm:$0xff]
        %v3776 = vld [vmem:[%s3760 + $0x78] sm:$0xff]
        %v3777 = vld [vmem:[%s3760 + $0x80] sm:$0xff]
        %v3778 = vld [vmem:[%s3760 + $0x88] sm:$0xff]
        %v3779 = vld [vmem:[%s3760 + $0x90] sm:$0xff]
        %v3780 = vld [vmem:[%s3760 + $0x98] sm:$0xff]
        %v3781 = vld [vmem:[%s3760 + $0xa0] sm:$0xff]
        %v3782 = vld [vmem:[%s3760 + $0xa8] sm:$0xff]
        %v3783 = vld [vmem:[%s3760 + $0xb0] sm:$0xff]
        %v3784 = vld [vmem:[%s3760 + $0xb8] sm:$0xff]
        %v3785 = vld [vmem:[%s3760 + $0xc0] sm:$0xff]
        %v3786 = vld [vmem:[%s3760 + $0xc8] sm:$0xff]
        %v3787 = vld [vmem:[%s3760 + $0xd0] sm:$0xff]
        %v3788 = vld [vmem:[%s3760 + $0xd8] sm:$0xff]
        %v3789 = vld [vmem:[%s3760 + $0xe0] sm:$0xff]
        %v3790 = vld [vmem:[%s3760 + $0xe8] sm:$0xff]
        %v3791 = vld [vmem:[%s3760 + $0xf0] sm:$0xff]
        %v3792 = vld [vmem:[%s3760 + $0xf8] sm:$0xff]
        %v3793 = vld [vmem:[%s3760 + $0x100] sm:$0xff]
        %v3794 = vld [vmem:[%s3760 + $0x108] sm:$0xff]
        %v3795 = vld [vmem:[%s3760 + $0x110] sm:$0xff]
        %v3796 = vld [vmem:[%s3760 + $0x118] sm:$0xff]
        %v3797 = vld [vmem:[%s3760 + $0x120] sm:$0xff]
        %v3798 = vld [vmem:[%s3760 + $0x128] sm:$0xff]
        %v3799 = vld [vmem:[%s3760 + $0x130] sm:$0xff]
        %v3800 = vld [vmem:[%s3760 + $0x138] sm:$0xff]
        %v3801 = vld [vmem:[%s3760 + $0x140] sm:$0xff]
        %v3802 = vld [vmem:[%s3760 + $0x148] sm:$0xff]
        %v3803 = vld [vmem:[%s3760 + $0x150] sm:$0xff]
        %v3804 = vld [vmem:[%s3760 + $0x158] sm:$0xff]
        %v3805 = vld [vmem:[%s3760 + $0x160] sm:$0xff]
        %v3806 = vld [vmem:[%s3760 + $0x168] sm:$0xff]
        %v3807 = vld [vmem:[%s3760 + $0x170] sm:$0xff]
        %v3808 = vld [vmem:[%s3760 + $0x178] sm:$0xff]
        %v3809 = vld [vmem:[%s3760 + $0x180] sm:$0xff]
        %v3810 = vld [vmem:[%s3760 + $0x188] sm:$0xff]
        %v3811 = vld [vmem:[%s3760 + $0x190] sm:$0xff]
        %v3812 = vld [vmem:[%s3760 + $0x198] sm:$0xff]
        %v3813 = vld [vmem:[%s3760 + $0x1a0] sm:$0xff]
        %v3814 = vld [vmem:[%s3760 + $0x1a8] sm:$0xff]
        %v3815 = vld [vmem:[%s3760 + $0x1b0] sm:$0xff]
        %v3816 = vld [vmem:[%s3760 + $0x1b8] sm:$0xff]
        %v3817 = vld [vmem:[%s3760 + $0x1c0] sm:$0xff]
        %v3818 = vld [vmem:[%s3760 + $0x1c8] sm:$0xff]
        %v3819 = vld [vmem:[%s3760 + $0x1d0] sm:$0xff]
        %v3820 = vld [vmem:[%s3760 + $0x1d8] sm:$0xff]
        %v3821 = vld [vmem:[%s3760 + $0x1e0] sm:$0xff]
        %v3822 = vld [vmem:[%s3760 + $0x1e8] sm:$0xff]
        %v3823 = vld [vmem:[%s3760 + $0x1f0] sm:$0xff]
        %v3824 = vld [vmem:[%s3760 + $0x1f8] sm:$0xff]
        %v3825 = vld [vmem:[%s3760 + $0x200] sm:$0xff]
        %v3826 = vld [vmem:[%s3760 + $0x208] sm:$0xff]
        %v3827 = vld [vmem:[%s3760 + $0x210] sm:$0xff]
        %v3828 = vld [vmem:[%s3760 + $0x218] sm:$0xff]
        %v3829 = vld [vmem:[%s3760 + $0x220] sm:$0xff]
        %v3830 = vld [vmem:[%s3760 + $0x228] sm:$0xff]
        %v3831 = vld [vmem:[%s3760 + $0x230] sm:$0xff]
        %v3832 = vld [vmem:[%s3760 + $0x238] sm:$0xff]
        %v3833 = vld [vmem:[%s3760 + $0x240] sm:$0xff]
        %v3834 = vld [vmem:[%s3760 + $0x248] sm:$0xff]
        %v3835 = vld [vmem:[%s3760 + $0x250] sm:$0xff]
        %v3836 = vld [vmem:[%s3760 + $0x258] sm:$0xff]
        %v3837 = vld [vmem:[%s3760 + $0x260] sm:$0xff]
        %v3838 = vld [vmem:[%s3760 + $0x268] sm:$0xff]
        %v3839 = vld [vmem:[%s3760 + $0x270] sm:$0xff]
        %v3840 = vld [vmem:[%s3760 + $0x278] sm:$0xff]
        %v3841 = vld [vmem:[%s3760 + $0x280] sm:$0xff]
        %v3842 = vld [vmem:[%s3760 + $0x288] sm:$0xff]
        %v3843 = vld [vmem:[%s3760 + $0x290] sm:$0xff]
        %v3844 = vld [vmem:[%s3760 + $0x298] sm:$0xff]
        %v3845 = vld [vmem:[%s3760 + $0x2a0] sm:$0xff]
        %v3846 = vld [vmem:[%s3760 + $0x2a8] sm:$0xff]
        %v3847 = vld [vmem:[%s3760 + $0x2b0] sm:$0xff]
        %v3848 = vld [vmem:[%s3760 + $0x2b8] sm:$0xff]
        %v3849 = vld [vmem:[%s3760 + $0x2c0] sm:$0xff]
        %v3850 = vld [vmem:[%s3760 + $0x2c8] sm:$0xff]
        %v3851 = vld [vmem:[%s3760 + $0x2d0] sm:$0xff]
        %v3852 = vld [vmem:[%s3760 + $0x2d8] sm:$0xff]
        %v3853 = vld [vmem:[%s3760 + $0x2e0] sm:$0xff]
        %v3854 = vld [vmem:[%s3760 + $0x2e8] sm:$0xff]
        %v3855 = vld [vmem:[%s3760 + $0x2f0] sm:$0xff]
        %v3856 = vld [vmem:[%s3760 + $0x2f8] sm:$0xff]
        %v3857 = vld [vmem:[%s3760 + $0x300] sm:$0xff]
        %v3858 = vld [vmem:[%s3760 + $0x308] sm:$0xff]
        %v3859 = vld [vmem:[%s3760 + $0x310] sm:$0xff]
        %v3860 = vld [vmem:[%s3760 + $0x318] sm:$0xff]
        %v3861 = vld [vmem:[%s3760 + $0x320] sm:$0xff]
        %v3862 = vld [vmem:[%s3760 + $0x328] sm:$0xff]
        %v3863 = vld [vmem:[%s3760 + $0x330] sm:$0xff]
        %v3864 = vld [vmem:[%s3760 + $0x338] sm:$0xff]
        %v3865 = vld [vmem:[%s3760 + $0x340] sm:$0xff]
        %v3866 = vld [vmem:[%s3760 + $0x348] sm:$0xff]
        %v3867 = vld [vmem:[%s3760 + $0x350] sm:$0xff]
        %v3868 = vld [vmem:[%s3760 + $0x358] sm:$0xff]
        %v3869 = vld [vmem:[%s3760 + $0x360] sm:$0xff]
        %v3870 = vld [vmem:[%s3760 + $0x368] sm:$0xff]
        %v3871 = vld [vmem:[%s3760 + $0x370] sm:$0xff]
        %v3872 = vld [vmem:[%s3760 + $0x378] sm:$0xff]
        %v3873 = vld [vmem:[%s3760 + $0x380] sm:$0xff]
        %v3874 = vld [vmem:[%s3760 + $0x388] sm:$0xff]
        %v3875 = vld [vmem:[%s3760 + $0x390] sm:$0xff]
        %v3876 = vld [vmem:[%s3760 + $0x398] sm:$0xff]
        %v3877 = vld [vmem:[%s3760 + $0x3a0] sm:$0xff]
        %v3878 = vld [vmem:[%s3760 + $0x3a8] sm:$0xff]
        %v3879 = vld [vmem:[%s3760 + $0x3b0] sm:$0xff]
        %v3880 = vld [vmem:[%s3760 + $0x3b8] sm:$0xff]
        %v3881 = vld [vmem:[%s3760 + $0x3c0] sm:$0xff]
        %v3882 = vld [vmem:[%s3760 + $0x3c8] sm:$0xff]
        %v3883 = vld [vmem:[%s3760 + $0x3d0] sm:$0xff]
        %v3884 = vld [vmem:[%s3760 + $0x3d8] sm:$0xff]
        %v3885 = vld [vmem:[%s3760 + $0x3e0] sm:$0xff]
        %v3886 = vld [vmem:[%s3760 + $0x3e8] sm:$0xff]
        %v3887 = vld [vmem:[%s3760 + $0x3f0] sm:$0xff]
        %v3888 = vld [vmem:[%s3760 + $0x3f8] sm:$0xff]
        %v4017 = vunpack.c.l.b16 %v3761
        %v4018 = vunpack.c.h.b16 %v3761
        %v4019 = vunpack.c.l.b16 %v3762
        %v4020 = vunpack.c.h.b16 %v3762
        %v4021 = vunpack.c.l.b16 %v3763
        %v4022 = vunpack.c.h.b16 %v3763
        %v4023 = vunpack.c.l.b16 %v3764
        %v4024 = vunpack.c.h.b16 %v3764
        %v4025 = vunpack.c.l.b16 %v3765
        %v4026 = vunpack.c.h.b16 %v3765
        %v4027 = vunpack.c.l.b16 %v3766
        %v4028 = vunpack.c.h.b16 %v3766
        %v4029 = vunpack.c.l.b16 %v3767
        %v4030 = vunpack.c.h.b16 %v3767
        %v4031 = vunpack.c.l.b16 %v3768
        %v4032 = vunpack.c.h.b16 %v3768
        %v4033 = vunpack.c.l.b16 %v3769
        %v4034 = vunpack.c.h.b16 %v3769
        %v4035 = vunpack.c.l.b16 %v3770
        %v4036 = vunpack.c.h.b16 %v3770
        %v4037 = vunpack.c.l.b16 %v3771
        %v4038 = vunpack.c.h.b16 %v3771
        %v4039 = vunpack.c.l.b16 %v3772
        %v4040 = vunpack.c.h.b16 %v3772
        %v4041 = vunpack.c.l.b16 %v3773
        %v4042 = vunpack.c.h.b16 %v3773
        %v4043 = vunpack.c.l.b16 %v3774
        %v4044 = vunpack.c.h.b16 %v3774
        %v4045 = vunpack.c.l.b16 %v3775
        %v4046 = vunpack.c.h.b16 %v3775
        %v4047 = vunpack.c.l.b16 %v3776
        %v4048 = vunpack.c.h.b16 %v3776
        %v4049 = vunpack.c.l.b16 %v3777
        %v4050 = vunpack.c.h.b16 %v3777
        %v4051 = vunpack.c.l.b16 %v3778
        %v4052 = vunpack.c.h.b16 %v3778
        %v4053 = vunpack.c.l.b16 %v3779
        %v4054 = vunpack.c.h.b16 %v3779
        %v4055 = vunpack.c.l.b16 %v3780
        %v4056 = vunpack.c.h.b16 %v3780
        %v4057 = vunpack.c.l.b16 %v3781
        %v4058 = vunpack.c.h.b16 %v3781
        %v4059 = vunpack.c.l.b16 %v3782
        %v4060 = vunpack.c.h.b16 %v3782
        %v4061 = vunpack.c.l.b16 %v3783
        %v4062 = vunpack.c.h.b16 %v3783
        %v4063 = vunpack.c.l.b16 %v3784
        %v4064 = vunpack.c.h.b16 %v3784
        %v4065 = vunpack.c.l.b16 %v3785
        %v4066 = vunpack.c.h.b16 %v3785
        %v4067 = vunpack.c.l.b16 %v3786
        %v4068 = vunpack.c.h.b16 %v3786
        %v4069 = vunpack.c.l.b16 %v3787
        %v4070 = vunpack.c.h.b16 %v3787
        %v4071 = vunpack.c.l.b16 %v3788
        %v4072 = vunpack.c.h.b16 %v3788
        %v4073 = vunpack.c.l.b16 %v3789
        %v4074 = vunpack.c.h.b16 %v3789
        %v4075 = vunpack.c.l.b16 %v3790
        %v4076 = vunpack.c.h.b16 %v3790
        %v4077 = vunpack.c.l.b16 %v3791
        %v4078 = vunpack.c.h.b16 %v3791
        %v4079 = vunpack.c.l.b16 %v3792
        %v4080 = vunpack.c.h.b16 %v3792
        %v4081 = vunpack.c.l.b16 %v3793
        %v4082 = vunpack.c.h.b16 %v3793
        %v4083 = vunpack.c.l.b16 %v3794
        %v4084 = vunpack.c.h.b16 %v3794
        %v4085 = vunpack.c.l.b16 %v3795
        %v4086 = vunpack.c.h.b16 %v3795
        %v4087 = vunpack.c.l.b16 %v3796
        %v4088 = vunpack.c.h.b16 %v3796
        %v4089 = vunpack.c.l.b16 %v3797
        %v4090 = vunpack.c.h.b16 %v3797
        %v4091 = vunpack.c.l.b16 %v3798
        %v4092 = vunpack.c.h.b16 %v3798
        %v4093 = vunpack.c.l.b16 %v3799
        %v4094 = vunpack.c.h.b16 %v3799
        %v4095 = vunpack.c.l.b16 %v3800
        %v4096 = vunpack.c.h.b16 %v3800
        %v4097 = vunpack.c.l.b16 %v3801
        %v4098 = vunpack.c.h.b16 %v3801
        %v4099 = vunpack.c.l.b16 %v3802
        %v4100 = vunpack.c.h.b16 %v3802
        %v4101 = vunpack.c.l.b16 %v3803
        %v4102 = vunpack.c.h.b16 %v3803
        %v4103 = vunpack.c.l.b16 %v3804
        %v4104 = vunpack.c.h.b16 %v3804
        %v4105 = vunpack.c.l.b16 %v3805
        %v4106 = vunpack.c.h.b16 %v3805
        %v4107 = vunpack.c.l.b16 %v3806
        %v4108 = vunpack.c.h.b16 %v3806
        %v4109 = vunpack.c.l.b16 %v3807
        %v4110 = vunpack.c.h.b16 %v3807
        %v4111 = vunpack.c.l.b16 %v3808
        %v4112 = vunpack.c.h.b16 %v3808
        %v4113 = vunpack.c.l.b16 %v3809
        %v4114 = vunpack.c.h.b16 %v3809
        %v4115 = vunpack.c.l.b16 %v3810
        %v4116 = vunpack.c.h.b16 %v3810
        %v4117 = vunpack.c.l.b16 %v3811
        %v4118 = vunpack.c.h.b16 %v3811
        %v4119 = vunpack.c.l.b16 %v3812
        %v4120 = vunpack.c.h.b16 %v3812
        %v4121 = vunpack.c.l.b16 %v3813
        %v4122 = vunpack.c.h.b16 %v3813
        %v4123 = vunpack.c.l.b16 %v3814
        %v4124 = vunpack.c.h.b16 %v3814
        %v4125 = vunpack.c.l.b16 %v3815
        %v4126 = vunpack.c.h.b16 %v3815
        %v4127 = vunpack.c.l.b16 %v3816
        %v4128 = vunpack.c.h.b16 %v3816
        %v4129 = vunpack.c.l.b16 %v3817
        %v4130 = vunpack.c.h.b16 %v3817
        %v4131 = vunpack.c.l.b16 %v3818
        %v4132 = vunpack.c.h.b16 %v3818
        %v4133 = vunpack.c.l.b16 %v3819
        %v4134 = vunpack.c.h.b16 %v3819
        %v4135 = vunpack.c.l.b16 %v3820
        %v4136 = vunpack.c.h.b16 %v3820
        %v4137 = vunpack.c.l.b16 %v3821
        %v4138 = vunpack.c.h.b16 %v3821
        %v4139 = vunpack.c.l.b16 %v3822
        %v4140 = vunpack.c.h.b16 %v3822
        %v4141 = vunpack.c.l.b16 %v3823
        %v4142 = vunpack.c.h.b16 %v3823
        %v4143 = vunpack.c.l.b16 %v3824
        %v4144 = vunpack.c.h.b16 %v3824
        %v4145 = vunpack.c.l.b16 %v3825
        %v4146 = vunpack.c.h.b16 %v3825
        %v4147 = vunpack.c.l.b16 %v3826
        %v4148 = vunpack.c.h.b16 %v3826
        %v4149 = vunpack.c.l.b16 %v3827
        %v4150 = vunpack.c.h.b16 %v3827
        %v4151 = vunpack.c.l.b16 %v3828
        %v4152 = vunpack.c.h.b16 %v3828
        %v4153 = vunpack.c.l.b16 %v3829
        %v4154 = vunpack.c.h.b16 %v3829
        %v4155 = vunpack.c.l.b16 %v3830
        %v4156 = vunpack.c.h.b16 %v3830
        %v4157 = vunpack.c.l.b16 %v3831
        %v4158 = vunpack.c.h.b16 %v3831
        %v4159 = vunpack.c.l.b16 %v3832
        %v4160 = vunpack.c.h.b16 %v3832
        %v4161 = vunpack.c.l.b16 %v3833
        %v4162 = vunpack.c.h.b16 %v3833
        %v4163 = vunpack.c.l.b16 %v3834
        %v4164 = vunpack.c.h.b16 %v3834
        %v4165 = vunpack.c.l.b16 %v3835
        %v4166 = vunpack.c.h.b16 %v3835
        %v4167 = vunpack.c.l.b16 %v3836
        %v4168 = vunpack.c.h.b16 %v3836
        %v4169 = vunpack.c.l.b16 %v3837
        %v4170 = vunpack.c.h.b16 %v3837
        %v4171 = vunpack.c.l.b16 %v3838
        %v4172 = vunpack.c.h.b16 %v3838
        %v4173 = vunpack.c.l.b16 %v3839
        %v4174 = vunpack.c.h.b16 %v3839
        %v4175 = vunpack.c.l.b16 %v3840
        %v4176 = vunpack.c.h.b16 %v3840
        %v4177 = vunpack.c.l.b16 %v3841
        %v4178 = vunpack.c.h.b16 %v3841
        %v4179 = vunpack.c.l.b16 %v3842
        %v4180 = vunpack.c.h.b16 %v3842
        %v4181 = vunpack.c.l.b16 %v3843
        %v4182 = vunpack.c.h.b16 %v3843
        %v4183 = vunpack.c.l.b16 %v3844
        %v4184 = vunpack.c.h.b16 %v3844
        %v4185 = vunpack.c.l.b16 %v3845
        %v4186 = vunpack.c.h.b16 %v3845
        %v4187 = vunpack.c.l.b16 %v3846
        %v4188 = vunpack.c.h.b16 %v3846
        %v4189 = vunpack.c.l.b16 %v3847
        %v4190 = vunpack.c.h.b16 %v3847
        %v4191 = vunpack.c.l.b16 %v3848
        %v4192 = vunpack.c.h.b16 %v3848
        %v4193 = vunpack.c.l.b16 %v3849
        %v4194 = vunpack.c.h.b16 %v3849
        %v4195 = vunpack.c.l.b16 %v3850
        %v4196 = vunpack.c.h.b16 %v3850
        %v4197 = vunpack.c.l.b16 %v3851
        %v4198 = vunpack.c.h.b16 %v3851
        %v4199 = vunpack.c.l.b16 %v3852
        %v4200 = vunpack.c.h.b16 %v3852
        %v4201 = vunpack.c.l.b16 %v3853
        %v4202 = vunpack.c.h.b16 %v3853
        %v4203 = vunpack.c.l.b16 %v3854
        %v4204 = vunpack.c.h.b16 %v3854
        %v4205 = vunpack.c.l.b16 %v3855
        %v4206 = vunpack.c.h.b16 %v3855
        %v4207 = vunpack.c.l.b16 %v3856
        %v4208 = vunpack.c.h.b16 %v3856
        %v4209 = vunpack.c.l.b16 %v3857
        %v4210 = vunpack.c.h.b16 %v3857
        %v4211 = vunpack.c.l.b16 %v3858
        %v4212 = vunpack.c.h.b16 %v3858
        %v4213 = vunpack.c.l.b16 %v3859
        %v4214 = vunpack.c.h.b16 %v3859
        %v4215 = vunpack.c.l.b16 %v3860
        %v4216 = vunpack.c.h.b16 %v3860
        %v4217 = vunpack.c.l.b16 %v3861
        %v4218 = vunpack.c.h.b16 %v3861
        %v4219 = vunpack.c.l.b16 %v3862
        %v4220 = vunpack.c.h.b16 %v3862
        %v4221 = vunpack.c.l.b16 %v3863
        %v4222 = vunpack.c.h.b16 %v3863
        %v4223 = vunpack.c.l.b16 %v3864
        %v4224 = vunpack.c.h.b16 %v3864
        %v4225 = vunpack.c.l.b16 %v3865
        %v4226 = vunpack.c.h.b16 %v3865
        %v4227 = vunpack.c.l.b16 %v3866
        %v4228 = vunpack.c.h.b16 %v3866
        %v4229 = vunpack.c.l.b16 %v3867
        %v4230 = vunpack.c.h.b16 %v3867
        %v4231 = vunpack.c.l.b16 %v3868
        %v4232 = vunpack.c.h.b16 %v3868
        %v4233 = vunpack.c.l.b16 %v3869
        %v4234 = vunpack.c.h.b16 %v3869
        %v4235 = vunpack.c.l.b16 %v3870
        %v4236 = vunpack.c.h.b16 %v3870
        %v4237 = vunpack.c.l.b16 %v3871
        %v4238 = vunpack.c.h.b16 %v3871
        %v4239 = vunpack.c.l.b16 %v3872
        %v4240 = vunpack.c.h.b16 %v3872
        %v4241 = vunpack.c.l.b16 %v3873
        %v4242 = vunpack.c.h.b16 %v3873
        %v4243 = vunpack.c.l.b16 %v3874
        %v4244 = vunpack.c.h.b16 %v3874
        %v4245 = vunpack.c.l.b16 %v3875
        %v4246 = vunpack.c.h.b16 %v3875
        %v4247 = vunpack.c.l.b16 %v3876
        %v4248 = vunpack.c.h.b16 %v3876
        %v4249 = vunpack.c.l.b16 %v3877
        %v4250 = vunpack.c.h.b16 %v3877
        %v4251 = vunpack.c.l.b16 %v3878
        %v4252 = vunpack.c.h.b16 %v3878
        %v4253 = vunpack.c.l.b16 %v3879
        %v4254 = vunpack.c.h.b16 %v3879
        %v4255 = vunpack.c.l.b16 %v3880
        %v4256 = vunpack.c.h.b16 %v3880
        %v4257 = vunpack.c.l.b16 %v3881
        %v4258 = vunpack.c.h.b16 %v3881
        %v4259 = vunpack.c.l.b16 %v3882
        %v4260 = vunpack.c.h.b16 %v3882
        %v4261 = vunpack.c.l.b16 %v3883
        %v4262 = vunpack.c.h.b16 %v3883
        %v4263 = vunpack.c.l.b16 %v3884
        %v4264 = vunpack.c.h.b16 %v3884
        %v4265 = vunpack.c.l.b16 %v3885
        %v4266 = vunpack.c.h.b16 %v3885
        %v4267 = vunpack.c.l.b16 %v3886
        %v4268 = vunpack.c.h.b16 %v3886
        %v4269 = vunpack.c.l.b16 %v3887
        %v4270 = vunpack.c.h.b16 %v3887
        %v4271 = vunpack.c.l.b16 %v3888
        %v4272 = vunpack.c.h.b16 %v3888
        %v4273 = vpack.c.b16 %v4021, %v4017
        %v4274 = vpack.c.b16 %v4022, %v4018
        %v4275 = vpack.c.b16 %v4023, %v4019
        %v4276 = vpack.c.b16 %v4024, %v4020
        %v4277 = vpack.c.b16 %v4029, %v4025
        %v4278 = vpack.c.b16 %v4030, %v4026
        %v4279 = vpack.c.b16 %v4031, %v4027
        %v4280 = vpack.c.b16 %v4032, %v4028
        %v4281 = vpack.c.b16 %v4037, %v4033
        %v4282 = vpack.c.b16 %v4038, %v4034
        %v4283 = vpack.c.b16 %v4039, %v4035
        %v4284 = vpack.c.b16 %v4040, %v4036
        %v4285 = vpack.c.b16 %v4045, %v4041
        %v4286 = vpack.c.b16 %v4046, %v4042
        %v4287 = vpack.c.b16 %v4047, %v4043
        %v4288 = vpack.c.b16 %v4048, %v4044
        %v4289 = vpack.c.b16 %v4053, %v4049
        %v4290 = vpack.c.b16 %v4054, %v4050
        %v4291 = vpack.c.b16 %v4055, %v4051
        %v4292 = vpack.c.b16 %v4056, %v4052
        %v4293 = vpack.c.b16 %v4061, %v4057
        %v4294 = vpack.c.b16 %v4062, %v4058
        %v4295 = vpack.c.b16 %v4063, %v4059
        %v4296 = vpack.c.b16 %v4064, %v4060
        %v4297 = vpack.c.b16 %v4069, %v4065
        %v4298 = vpack.c.b16 %v4070, %v4066
        %v4299 = vpack.c.b16 %v4071, %v4067
        %v4300 = vpack.c.b16 %v4072, %v4068
        %v4301 = vpack.c.b16 %v4077, %v4073
        %v4302 = vpack.c.b16 %v4078, %v4074
        %v4303 = vpack.c.b16 %v4079, %v4075
        %v4304 = vpack.c.b16 %v4080, %v4076
        %v4305 = vpack.c.b16 %v4085, %v4081
        %v4306 = vpack.c.b16 %v4086, %v4082
        %v4307 = vpack.c.b16 %v4087, %v4083
        %v4308 = vpack.c.b16 %v4088, %v4084
        %v4309 = vpack.c.b16 %v4093, %v4089
        %v4310 = vpack.c.b16 %v4094, %v4090
        %v4311 = vpack.c.b16 %v4095, %v4091
        %v4312 = vpack.c.b16 %v4096, %v4092
        %v4313 = vpack.c.b16 %v4101, %v4097
        %v4314 = vpack.c.b16 %v4102, %v4098
        %v4315 = vpack.c.b16 %v4103, %v4099
        %v4316 = vpack.c.b16 %v4104, %v4100
        %v4317 = vpack.c.b16 %v4109, %v4105
        %v4318 = vpack.c.b16 %v4110, %v4106
        %v4319 = vpack.c.b16 %v4111, %v4107
        %v4320 = vpack.c.b16 %v4112, %v4108
        %v4321 = vpack.c.b16 %v4117, %v4113
        %v4322 = vpack.c.b16 %v4118, %v4114
        %v4323 = vpack.c.b16 %v4119, %v4115
        %v4324 = vpack.c.b16 %v4120, %v4116
        %v4325 = vpack.c.b16 %v4125, %v4121
        %v4326 = vpack.c.b16 %v4126, %v4122
        %v4327 = vpack.c.b16 %v4127, %v4123
        %v4328 = vpack.c.b16 %v4128, %v4124
        %v4329 = vpack.c.b16 %v4133, %v4129
        %v4330 = vpack.c.b16 %v4134, %v4130
        %v4331 = vpack.c.b16 %v4135, %v4131
        %v4332 = vpack.c.b16 %v4136, %v4132
        %v4333 = vpack.c.b16 %v4141, %v4137
        %v4334 = vpack.c.b16 %v4142, %v4138
        %v4335 = vpack.c.b16 %v4143, %v4139
        %v4336 = vpack.c.b16 %v4144, %v4140
        %v4337 = vpack.c.b16 %v4149, %v4145
        %v4338 = vpack.c.b16 %v4150, %v4146
        %v4339 = vpack.c.b16 %v4151, %v4147
        %v4340 = vpack.c.b16 %v4152, %v4148
        %v4341 = vpack.c.b16 %v4157, %v4153
        %v4342 = vpack.c.b16 %v4158, %v4154
        %v4343 = vpack.c.b16 %v4159, %v4155
        %v4344 = vpack.c.b16 %v4160, %v4156
        %v4345 = vpack.c.b16 %v4165, %v4161
        %v4346 = vpack.c.b16 %v4166, %v4162
        %v4347 = vpack.c.b16 %v4167, %v4163
        %v4348 = vpack.c.b16 %v4168, %v4164
        %v4349 = vpack.c.b16 %v4173, %v4169
        %v4350 = vpack.c.b16 %v4174, %v4170
        %v4351 = vpack.c.b16 %v4175, %v4171
        %v4352 = vpack.c.b16 %v4176, %v4172
        %v4353 = vpack.c.b16 %v4181, %v4177
        %v4354 = vpack.c.b16 %v4182, %v4178
        %v4355 = vpack.c.b16 %v4183, %v4179
        %v4356 = vpack.c.b16 %v4184, %v4180
        %v4357 = vpack.c.b16 %v4189, %v4185
        %v4358 = vpack.c.b16 %v4190, %v4186
        %v4359 = vpack.c.b16 %v4191, %v4187
        %v4360 = vpack.c.b16 %v4192, %v4188
        %v4361 = vpack.c.b16 %v4197, %v4193
        %v4362 = vpack.c.b16 %v4198, %v4194
        %v4363 = vpack.c.b16 %v4199, %v4195
        %v4364 = vpack.c.b16 %v4200, %v4196
        %v4365 = vpack.c.b16 %v4205, %v4201
        %v4366 = vpack.c.b16 %v4206, %v4202
        %v4367 = vpack.c.b16 %v4207, %v4203
        %v4368 = vpack.c.b16 %v4208, %v4204
        %v4369 = vpack.c.b16 %v4213, %v4209
        %v4370 = vpack.c.b16 %v4214, %v4210
        %v4371 = vpack.c.b16 %v4215, %v4211
        %v4372 = vpack.c.b16 %v4216, %v4212
        %v4373 = vpack.c.b16 %v4221, %v4217
        %v4374 = vpack.c.b16 %v4222, %v4218
        %v4375 = vpack.c.b16 %v4223, %v4219
        %v4376 = vpack.c.b16 %v4224, %v4220
        %v4377 = vpack.c.b16 %v4229, %v4225
        %v4378 = vpack.c.b16 %v4230, %v4226
        %v4379 = vpack.c.b16 %v4231, %v4227
        %v4380 = vpack.c.b16 %v4232, %v4228
        %v4381 = vpack.c.b16 %v4237, %v4233
        %v4382 = vpack.c.b16 %v4238, %v4234
        %v4383 = vpack.c.b16 %v4239, %v4235
        %v4384 = vpack.c.b16 %v4240, %v4236
        %v4385 = vpack.c.b16 %v4245, %v4241
        %v4386 = vpack.c.b16 %v4246, %v4242
        %v4387 = vpack.c.b16 %v4247, %v4243
        %v4388 = vpack.c.b16 %v4248, %v4244
        %v4389 = vpack.c.b16 %v4253, %v4249
        %v4390 = vpack.c.b16 %v4254, %v4250
        %v4391 = vpack.c.b16 %v4255, %v4251
        %v4392 = vpack.c.b16 %v4256, %v4252
        %v4393 = vpack.c.b16 %v4261, %v4257
        %v4394 = vpack.c.b16 %v4262, %v4258
        %v4395 = vpack.c.b16 %v4263, %v4259
        %v4396 = vpack.c.b16 %v4264, %v4260
        %v4397 = vpack.c.b16 %v4269, %v4265
        %v4398 = vpack.c.b16 %v4270, %v4266
        %v4399 = vpack.c.b16 %v4271, %v4267
        %v4400 = vpack.c.b16 %v4272, %v4268
        %4529 = vmatprep.subr.bf16.mxu0 %v4274
        %4530 = vmatpush1.bf16.msra.mxu0 %v4273
        %4531 = vmatprep.subr.bf16.mxu0 %v4278
        %4532 = vmatpush1.bf16.msra.mxu0 %v4277
        %4533 = vmatprep.subr.bf16.mxu0 %v4282
        %4534 = vmatpush1.bf16.msra.mxu0 %v4281
        %4535 = vmatprep.subr.bf16.mxu0 %v4286
        %4536 = vmatpush1.bf16.msra.mxu0 %v4285
        %4537 = vmatprep.subr.bf16.mxu0 %v4290
        %4538 = vmatpush1.bf16.msra.mxu0 %v4289
        %4539 = vmatprep.subr.bf16.mxu0 %v4294
        %4540 = vmatpush1.bf16.msra.mxu0 %v4293
        %4541 = vmatprep.subr.bf16.mxu0 %v4298
        %4542 = vmatpush1.bf16.msra.mxu0 %v4297
        %4543 = vmatprep.subr.bf16.mxu0 %v4302
        %4544 = vmatpush1.bf16.msra.mxu0 %v4301
        %4545 = vmatprep.subr.bf16.mxu0 %v4306
        %4546 = vmatpush1.bf16.msra.mxu0 %v4305
        %4547 = vmatprep.subr.bf16.mxu0 %v4310
        %4548 = vmatpush1.bf16.msra.mxu0 %v4309
        %4549 = vmatprep.subr.bf16.mxu0 %v4314
        %4550 = vmatpush1.bf16.msra.mxu0 %v4313
        %4551 = vmatprep.subr.bf16.mxu0 %v4318
        %4552 = vmatpush1.bf16.msra.mxu0 %v4317
        %4553 = vmatprep.subr.bf16.mxu0 %v4322
        %4554 = vmatpush1.bf16.msra.mxu0 %v4321
        %4555 = vmatprep.subr.bf16.mxu0 %v4326
        %4556 = vmatpush1.bf16.msra.mxu0 %v4325
        %4557 = vmatprep.subr.bf16.mxu0 %v4330
        %4558 = vmatpush1.bf16.msra.mxu0 %v4329
        %4559 = vmatprep.subr.bf16.mxu0 %v4334
        %4560 = vmatpush1.bf16.msra.mxu0 %v4333
        %4561 = vmatprep.mubr.bf16.mxu0 %v3757
        %4562 = vmatmul.mubr.bf16.gmra.mrb[0].mxu0 %v3756
        %v4563 = vpop.f32.mrb[0].mxu0
        %v4564 = vadd.f32 0.0, %v4563
        %v4565 = vpop.f32.mrb[0].mxu0
        %v4566 = vadd.f32 0.0, %v4565
        %v4567 = vpop.f32.mrb[0].mxu0
        %v4568 = vadd.f32 0.0, %v4567
        %v4569 = vpop.f32.mrb[0].mxu0
        %v4570 = vadd.f32 0.0, %v4569
        %4571 = vdwg.mxu0
        %4572 = vmatprep.subr.bf16.mxu0 %v4338
        %4573 = vmatpush1.bf16.msra.mxu0 %v4337
        %4574 = vmatprep.subr.bf16.mxu0 %v4342
        %4575 = vmatpush1.bf16.msra.mxu0 %v4341
        %4576 = vmatprep.subr.bf16.mxu0 %v4346
        %4577 = vmatpush1.bf16.msra.mxu0 %v4345
        %4578 = vmatprep.subr.bf16.mxu0 %v4350
        %4579 = vmatpush1.bf16.msra.mxu0 %v4349
        %4580 = vmatprep.subr.bf16.mxu0 %v4354
        %4581 = vmatpush1.bf16.msra.mxu0 %v4353
        %4582 = vmatprep.subr.bf16.mxu0 %v4358
        %4583 = vmatpush1.bf16.msra.mxu0 %v4357
        %4584 = vmatprep.subr.bf16.mxu0 %v4362
        %4585 = vmatpush1.bf16.msra.mxu0 %v4361
        %4586 = vmatprep.subr.bf16.mxu0 %v4366
        %4587 = vmatpush1.bf16.msra.mxu0 %v4365
        %4588 = vmatprep.subr.bf16.mxu0 %v4370
        %4589 = vmatpush1.bf16.msra.mxu0 %v4369
        %4590 = vmatprep.subr.bf16.mxu0 %v4374
        %4591 = vmatpush1.bf16.msra.mxu0 %v4373
        %4592 = vmatprep.subr.bf16.mxu0 %v4378
        %4593 = vmatpush1.bf16.msra.mxu0 %v4377
        %4594 = vmatprep.subr.bf16.mxu0 %v4382
        %4595 = vmatpush1.bf16.msra.mxu0 %v4381
        %4596 = vmatprep.subr.bf16.mxu0 %v4386
        %4597 = vmatpush1.bf16.msra.mxu0 %v4385
        %4598 = vmatprep.subr.bf16.mxu0 %v4390
        %4599 = vmatpush1.bf16.msra.mxu0 %v4389
        %4600 = vmatprep.subr.bf16.mxu0 %v4394
        %4601 = vmatpush1.bf16.msra.mxu0 %v4393
        %4602 = vmatprep.subr.bf16.mxu0 %v4398
        %4603 = vmatpush1.bf16.msra.mxu0 %v4397
        %4604 = vmatprep.mubr.bf16.mxu0 %v3759
        %4605 = vmatmul.mubr.bf16.gmra.mrb[0].mxu0 %v3758
        %v4606 = vpop.f32.mrb[0].mxu0
        %v4607 = vadd.f32 %v4564, %v4606
        %v4608 = vpop.f32.mrb[0].mxu0
        %v4609 = vadd.f32 %v4566, %v4608
        %v4610 = vpop.f32.mrb[0].mxu0
        %v4611 = vadd.f32 %v4568, %v4610
        %v4612 = vpop.f32.mrb[0].mxu0
        %v4613 = vadd.f32 %v4570, %v4612
        %4614 = vdwg.mxu0
        %4615 = vmatprep.subr.bf16.mxu0 %v4276
        %4616 = vmatpush1.bf16.msra.mxu0 %v4275
        %4617 = vmatprep.subr.bf16.mxu0 %v4280
        %4618 = vmatpush1.bf16.msra.mxu0 %v4279
        %4619 = vmatprep.subr.bf16.mxu0 %v4284
        %4620 = vmatpush1.bf16.msra.mxu0 %v4283
        %4621 = vmatprep.subr.bf16.mxu0 %v4288
        %4622 = vmatpush1.bf16.msra.mxu0 %v4287
        %4623 = vmatprep.subr.bf16.mxu0 %v4292
        %4624 = vmatpush1.bf16.msra.mxu0 %v4291
        %4625 = vmatprep.subr.bf16.mxu0 %v4296
        %4626 = vmatpush1.bf16.msra.mxu0 %v4295
        %4627 = vmatprep.subr.bf16.mxu0 %v4300
        %4628 = vmatpush1.bf16.msra.mxu0 %v4299
        %4629 = vmatprep.subr.bf16.mxu0 %v4304
        %4630 = vmatpush1.bf16.msra.mxu0 %v4303
        %4631 = vmatprep.subr.bf16.mxu0 %v4308
        %4632 = vmatpush1.bf16.msra.mxu0 %v4307
        %4633 = vmatprep.subr.bf16.mxu0 %v4312
        %4634 = vmatpush1.bf16.msra.mxu0 %v4311
        %4635 = vmatprep.subr.bf16.mxu0 %v4316
        %4636 = vmatpush1.bf16.msra.mxu0 %v4315
        %4637 = vmatprep.subr.bf16.mxu0 %v4320
        %4638 = vmatpush1.bf16.msra.mxu0 %v4319
        %4639 = vmatprep.subr.bf16.mxu0 %v4324
        %4640 = vmatpush1.bf16.msra.mxu0 %v4323
        %4641 = vmatprep.subr.bf16.mxu0 %v4328
        %4642 = vmatpush1.bf16.msra.mxu0 %v4327
        %4643 = vmatprep.subr.bf16.mxu0 %v4332
        %4644 = vmatpush1.bf16.msra.mxu0 %v4331
        %4645 = vmatprep.subr.bf16.mxu0 %v4336
        %4646 = vmatpush1.bf16.msra.mxu0 %v4335
        %4647 = vmatprep.mubr.bf16.mxu0 %v3757
        %4648 = vmatmul.mubr.bf16.gmra.mrb[0].mxu0 %v3756
        %v4649 = vpop.f32.mrb[0].mxu0
        %v4650 = vadd.f32 0.0, %v4649
        %v4651 = vpop.f32.mrb[0].mxu0
        %v4652 = vadd.f32 0.0, %v4651
        %v4653 = vpop.f32.mrb[0].mxu0
        %v4654 = vadd.f32 0.0, %v4653
        %v4655 = vpop.f32.mrb[0].mxu0
        %v4656 = vadd.f32 0.0, %v4655
        %4657 = vdwg.mxu0
        %4658 = vmatprep.subr.bf16.mxu0 %v4340
        %4659 = vmatpush1.bf16.msra.mxu0 %v4339
        %4660 = vmatprep.subr.bf16.mxu0 %v4344
        %4661 = vmatpush1.bf16.msra.mxu0 %v4343
        %4662 = vmatprep.subr.bf16.mxu0 %v4348
        %4663 = vmatpush1.bf16.msra.mxu0 %v4347
        %4664 = vmatprep.subr.bf16.mxu0 %v4352
        %4665 = vmatpush1.bf16.msra.mxu0 %v4351
        %4666 = vmatprep.subr.bf16.mxu0 %v4356
        %4667 = vmatpush1.bf16.msra.mxu0 %v4355
        %4668 = vmatprep.subr.bf16.mxu0 %v4360
        %4669 = vmatpush1.bf16.msra.mxu0 %v4359
        %4670 = vmatprep.subr.bf16.mxu0 %v4364
        %4671 = vmatpush1.bf16.msra.mxu0 %v4363
        %4672 = vmatprep.subr.bf16.mxu0 %v4368
        %4673 = vmatpush1.bf16.msra.mxu0 %v4367
        %4674 = vmatprep.subr.bf16.mxu0 %v4372
        %4675 = vmatpush1.bf16.msra.mxu0 %v4371
        %4676 = vmatprep.subr.bf16.mxu0 %v4376
        %4677 = vmatpush1.bf16.msra.mxu0 %v4375
        %4678 = vmatprep.subr.bf16.mxu0 %v4380
        %4679 = vmatpush1.bf16.msra.mxu0 %v4379
        %4680 = vmatprep.subr.bf16.mxu0 %v4384
        %4681 = vmatpush1.bf16.msra.mxu0 %v4383
        %4682 = vmatprep.subr.bf16.mxu0 %v4388
        %4683 = vmatpush1.bf16.msra.mxu0 %v4387
        %4684 = vmatprep.subr.bf16.mxu0 %v4392
        %4685 = vmatpush1.bf16.msra.mxu0 %v4391
        %4686 = vmatprep.subr.bf16.mxu0 %v4396
        %4687 = vmatpush1.bf16.msra.mxu0 %v4395
        %4688 = vmatprep.subr.bf16.mxu0 %v4400
        %4689 = vmatpush1.bf16.msra.mxu0 %v4399
        %4690 = vmatprep.mubr.bf16.mxu0 %v3759
        %4691 = vmatmul.mubr.bf16.gmra.mrb[0].mxu0 %v3758
        %v4692 = vpop.f32.mrb[0].mxu0
        %v4693 = vadd.f32 %v4650, %v4692
        %v4694 = vpop.f32.mrb[0].mxu0
        %v4695 = vadd.f32 %v4652, %v4694
        %v4696 = vpop.f32.mrb[0].mxu0
        %v4697 = vadd.f32 %v4654, %v4696
        %v4698 = vpop.f32.mrb[0].mxu0
        %v4699 = vadd.f32 %v4656, %v4698
        %4700 = vdwg.mxu0
        %v4701 = vadd.f32 %v3637, %v4607
        %v4702 = vadd.f32 %v3639, %v4609
        %v4703 = vadd.f32 %v3723, %v4693
        %v4704 = vadd.f32 %v3725, %v4695
        %v4705 = vadd.f32 %v3641, %v4611
        %v4706 = vadd.f32 %v3643, %v4613
        %v4707 = vadd.f32 %v3727, %v4697
        %v4708 = vadd.f32 %v3729, %v4699
        %s4709 = sld [smem:[#allocation2]]
        %v4710 = vstv %s4709
        %v4711 = vadd.f32 %v4701, %v4710
        %v4712 = vadd.f32 %v4702, %v4710
        %v4713 = vadd.f32 %v4703, %v4710
        %v4714 = vadd.f32 %v4704, %v4710
        %v4715 = vadd.f32 %v4705, %v4710
        %v4716 = vadd.f32 %v4706, %v4710
        %v4717 = vadd.f32 %v4707, %v4710
        %v4718 = vadd.f32 %v4708, %v4710
        %v4719 = vld [vmem:[#allocation16] sm:$0xff]
        %v4720 = vld [vmem:[#allocation16 + $0x8] sm:$0xff]
        %v4721 = vld [vmem:[#allocation16 + $0x10] sm:$0xff]
        %v4722 = vld [vmem:[#allocation16 + $0x18] sm:$0xff]
        %v4723 = vld [vmem:[#allocation16 + $0x20] sm:$0xff]
        %v4724 = vld [vmem:[#allocation16 + $0x28] sm:$0xff]
        %v4725 = vld [vmem:[#allocation16 + $0x30] sm:$0xff]
        %v4726 = vld [vmem:[#allocation16 + $0x38] sm:$0xff]
        %v4727 = vld [vmem:[#allocation16 + $0x40] sm:$0xff]
        %v4728 = vld [vmem:[#allocation16 + $0x48] sm:$0xff]
        %v4729 = vld [vmem:[#allocation16 + $0x50] sm:$0xff]
        %v4730 = vld [vmem:[#allocation16 + $0x58] sm:$0xff]
        %v4731 = vld [vmem:[#allocation16 + $0x60] sm:$0xff]
        %v4732 = vld [vmem:[#allocation16 + $0x68] sm:$0xff]
        %v4733 = vld [vmem:[#allocation16 + $0x70] sm:$0xff]
        %v4734 = vld [vmem:[#allocation16 + $0x78] sm:$0xff]
        %v4735 = vld [vmem:[#allocation16 + $0x80] sm:$0xff]
        %v4736 = vld [vmem:[#allocation16 + $0x88] sm:$0xff]
        %v4737 = vld [vmem:[#allocation16 + $0x90] sm:$0xff]
        %v4738 = vld [vmem:[#allocation16 + $0x98] sm:$0xff]
        %v4739 = vld [vmem:[#allocation16 + $0xa0] sm:$0xff]
        %v4740 = vld [vmem:[#allocation16 + $0xa8] sm:$0xff]
        %v4741 = vld [vmem:[#allocation16 + $0xb0] sm:$0xff]
        %v4742 = vld [vmem:[#allocation16 + $0xb8] sm:$0xff]
        %v4743 = vld [vmem:[#allocation16 + $0xc0] sm:$0xff]
        %v4744 = vld [vmem:[#allocation16 + $0xc8] sm:$0xff]
        %v4745 = vld [vmem:[#allocation16 + $0xd0] sm:$0xff]
        %v4746 = vld [vmem:[#allocation16 + $0xd8] sm:$0xff]
        %v4747 = vld [vmem:[#allocation16 + $0xe0] sm:$0xff]
        %v4748 = vld [vmem:[#allocation16 + $0xe8] sm:$0xff]
        %v4749 = vld [vmem:[#allocation16 + $0xf0] sm:$0xff]
        %v4750 = vld [vmem:[#allocation16 + $0xf8] sm:$0xff]
        %v4751 = vld [vmem:[#allocation16 + $0x100] sm:$0xff]
        %v4752 = vld [vmem:[#allocation16 + $0x108] sm:$0xff]
        %v4753 = vld [vmem:[#allocation16 + $0x110] sm:$0xff]
        %v4754 = vld [vmem:[#allocation16 + $0x118] sm:$0xff]
        %v4755 = vld [vmem:[#allocation16 + $0x120] sm:$0xff]
        %v4756 = vld [vmem:[#allocation16 + $0x128] sm:$0xff]
        %v4757 = vld [vmem:[#allocation16 + $0x130] sm:$0xff]
        %v4758 = vld [vmem:[#allocation16 + $0x138] sm:$0xff]
        %v4759 = vld [vmem:[#allocation16 + $0x140] sm:$0xff]
        %v4760 = vld [vmem:[#allocation16 + $0x148] sm:$0xff]
        %v4761 = vld [vmem:[#allocation16 + $0x150] sm:$0xff]
        %v4762 = vld [vmem:[#allocation16 + $0x158] sm:$0xff]
        %v4763 = vld [vmem:[#allocation16 + $0x160] sm:$0xff]
        %v4764 = vld [vmem:[#allocation16 + $0x168] sm:$0xff]
        %v4765 = vld [vmem:[#allocation16 + $0x170] sm:$0xff]
        %v4766 = vld [vmem:[#allocation16 + $0x178] sm:$0xff]
        %v4767 = vld [vmem:[#allocation16 + $0x180] sm:$0xff]
        %v4768 = vld [vmem:[#allocation16 + $0x188] sm:$0xff]
        %v4769 = vld [vmem:[#allocation16 + $0x190] sm:$0xff]
        %v4770 = vld [vmem:[#allocation16 + $0x198] sm:$0xff]
        %v4771 = vld [vmem:[#allocation16 + $0x1a0] sm:$0xff]
        %v4772 = vld [vmem:[#allocation16 + $0x1a8] sm:$0xff]
        %v4773 = vld [vmem:[#allocation16 + $0x1b0] sm:$0xff]
        %v4774 = vld [vmem:[#allocation16 + $0x1b8] sm:$0xff]
        %v4775 = vld [vmem:[#allocation16 + $0x1c0] sm:$0xff]
        %v4776 = vld [vmem:[#allocation16 + $0x1c8] sm:$0xff]
        %v4777 = vld [vmem:[#allocation16 + $0x1d0] sm:$0xff]
        %v4778 = vld [vmem:[#allocation16 + $0x1d8] sm:$0xff]
        %v4779 = vld [vmem:[#allocation16 + $0x1e0] sm:$0xff]
        %v4780 = vld [vmem:[#allocation16 + $0x1e8] sm:$0xff]
        %v4781 = vld [vmem:[#allocation16 + $0x1f0] sm:$0xff]
        %v4782 = vld [vmem:[#allocation16 + $0x1f8] sm:$0xff]
        %v4783 = vld [vmem:[#allocation16 + $0x200] sm:$0xff]
        %v4784 = vld [vmem:[#allocation16 + $0x208] sm:$0xff]
        %v4785 = vld [vmem:[#allocation16 + $0x210] sm:$0xff]
        %v4786 = vld [vmem:[#allocation16 + $0x218] sm:$0xff]
        %v4787 = vld [vmem:[#allocation16 + $0x220] sm:$0xff]
        %v4788 = vld [vmem:[#allocation16 + $0x228] sm:$0xff]
        %v4789 = vld [vmem:[#allocation16 + $0x230] sm:$0xff]
        %v4790 = vld [vmem:[#allocation16 + $0x238] sm:$0xff]
        %v4791 = vld [vmem:[#allocation16 + $0x240] sm:$0xff]
        %v4792 = vld [vmem:[#allocation16 + $0x248] sm:$0xff]
        %v4793 = vld [vmem:[#allocation16 + $0x250] sm:$0xff]
        %v4794 = vld [vmem:[#allocation16 + $0x258] sm:$0xff]
        %v4795 = vld [vmem:[#allocation16 + $0x260] sm:$0xff]
        %v4796 = vld [vmem:[#allocation16 + $0x268] sm:$0xff]
        %v4797 = vld [vmem:[#allocation16 + $0x270] sm:$0xff]
        %v4798 = vld [vmem:[#allocation16 + $0x278] sm:$0xff]
        %v4799 = vld [vmem:[#allocation16 + $0x280] sm:$0xff]
        %v4800 = vld [vmem:[#allocation16 + $0x288] sm:$0xff]
        %v4801 = vld [vmem:[#allocation16 + $0x290] sm:$0xff]
        %v4802 = vld [vmem:[#allocation16 + $0x298] sm:$0xff]
        %v4803 = vld [vmem:[#allocation16 + $0x2a0] sm:$0xff]
        %v4804 = vld [vmem:[#allocation16 + $0x2a8] sm:$0xff]
        %v4805 = vld [vmem:[#allocation16 + $0x2b0] sm:$0xff]
        %v4806 = vld [vmem:[#allocation16 + $0x2b8] sm:$0xff]
        %v4807 = vld [vmem:[#allocation16 + $0x2c0] sm:$0xff]
        %v4808 = vld [vmem:[#allocation16 + $0x2c8] sm:$0xff]
        %v4809 = vld [vmem:[#allocation16 + $0x2d0] sm:$0xff]
        %v4810 = vld [vmem:[#allocation16 + $0x2d8] sm:$0xff]
        %v4811 = vld [vmem:[#allocation16 + $0x2e0] sm:$0xff]
        %v4812 = vld [vmem:[#allocation16 + $0x2e8] sm:$0xff]
        %v4813 = vld [vmem:[#allocation16 + $0x2f0] sm:$0xff]
        %v4814 = vld [vmem:[#allocation16 + $0x2f8] sm:$0xff]
        %v4815 = vld [vmem:[#allocation16 + $0x300] sm:$0xff]
        %v4816 = vld [vmem:[#allocation16 + $0x308] sm:$0xff]
        %v4817 = vld [vmem:[#allocation16 + $0x310] sm:$0xff]
        %v4818 = vld [vmem:[#allocation16 + $0x318] sm:$0xff]
        %v4819 = vld [vmem:[#allocation16 + $0x320] sm:$0xff]
        %v4820 = vld [vmem:[#allocation16 + $0x328] sm:$0xff]
        %v4821 = vld [vmem:[#allocation16 + $0x330] sm:$0xff]
        %v4822 = vld [vmem:[#allocation16 + $0x338] sm:$0xff]
        %v4823 = vld [vmem:[#allocation16 + $0x340] sm:$0xff]
        %v4824 = vld [vmem:[#allocation16 + $0x348] sm:$0xff]
        %v4825 = vld [vmem:[#allocation16 + $0x350] sm:$0xff]
        %v4826 = vld [vmem:[#allocation16 + $0x358] sm:$0xff]
        %v4827 = vld [vmem:[#allocation16 + $0x360] sm:$0xff]
        %v4828 = vld [vmem:[#allocation16 + $0x368] sm:$0xff]
        %v4829 = vld [vmem:[#allocation16 + $0x370] sm:$0xff]
        %v4830 = vld [vmem:[#allocation16 + $0x378] sm:$0xff]
        %v4831 = vld [vmem:[#allocation16 + $0x380] sm:$0xff]
        %v4832 = vld [vmem:[#allocation16 + $0x388] sm:$0xff]
        %v4833 = vld [vmem:[#allocation16 + $0x390] sm:$0xff]
        %v4834 = vld [vmem:[#allocation16 + $0x398] sm:$0xff]
        %v4835 = vld [vmem:[#allocation16 + $0x3a0] sm:$0xff]
        %v4836 = vld [vmem:[#allocation16 + $0x3a8] sm:$0xff]
        %v4837 = vld [vmem:[#allocation16 + $0x3b0] sm:$0xff]
        %v4838 = vld [vmem:[#allocation16 + $0x3b8] sm:$0xff]
        %v4839 = vld [vmem:[#allocation16 + $0x3c0] sm:$0xff]
        %v4840 = vld [vmem:[#allocation16 + $0x3c8] sm:$0xff]
        %v4841 = vld [vmem:[#allocation16 + $0x3d0] sm:$0xff]
        %v4842 = vld [vmem:[#allocation16 + $0x3d8] sm:$0xff]
        %v4843 = vld [vmem:[#allocation16 + $0x3e0] sm:$0xff]
        %v4844 = vld [vmem:[#allocation16 + $0x3e8] sm:$0xff]
        %v4845 = vld [vmem:[#allocation16 + $0x3f0] sm:$0xff]
        %v4846 = vld [vmem:[#allocation16 + $0x3f8] sm:$0xff]
        %s4847 = sld [smem:[#allocation3]]
        %v4848 = vstv %s4847
        %v4977 = vunpack.c.l.b16 %v4719
        %v4978 = vunpack.c.h.b16 %v4719
        %v4979 = vunpack.c.l.b16 %v4720
        %v4980 = vunpack.c.h.b16 %v4720
        %v4981 = vunpack.c.l.b16 %v4721
        %v4982 = vunpack.c.h.b16 %v4721
        %v4983 = vunpack.c.l.b16 %v4722
        %v4984 = vunpack.c.h.b16 %v4722
        %v4985 = vunpack.c.l.b16 %v4723
        %v4986 = vunpack.c.h.b16 %v4723
        %v4987 = vunpack.c.l.b16 %v4724
        %v4988 = vunpack.c.h.b16 %v4724
        %v4989 = vunpack.c.l.b16 %v4725
        %v4990 = vunpack.c.h.b16 %v4725
        %v4991 = vunpack.c.l.b16 %v4726
        %v4992 = vunpack.c.h.b16 %v4726
        %v4993 = vunpack.c.l.b16 %v4727
        %v4994 = vunpack.c.h.b16 %v4727
        %v4995 = vunpack.c.l.b16 %v4728
        %v4996 = vunpack.c.h.b16 %v4728
        %v4997 = vunpack.c.l.b16 %v4729
        %v4998 = vunpack.c.h.b16 %v4729
        %v4999 = vunpack.c.l.b16 %v4730
        %v5000 = vunpack.c.h.b16 %v4730
        %v5001 = vunpack.c.l.b16 %v4731
        %v5002 = vunpack.c.h.b16 %v4731
        %v5003 = vunpack.c.l.b16 %v4732
        %v5004 = vunpack.c.h.b16 %v4732
        %v5005 = vunpack.c.l.b16 %v4733
        %v5006 = vunpack.c.h.b16 %v4733
        %v5007 = vunpack.c.l.b16 %v4734
        %v5008 = vunpack.c.h.b16 %v4734
        %v5009 = vunpack.c.l.b16 %v4735
        %v5010 = vunpack.c.h.b16 %v4735
        %v5011 = vunpack.c.l.b16 %v4736
        %v5012 = vunpack.c.h.b16 %v4736
        %v5013 = vunpack.c.l.b16 %v4737
        %v5014 = vunpack.c.h.b16 %v4737
        %v5015 = vunpack.c.l.b16 %v4738
        %v5016 = vunpack.c.h.b16 %v4738
        %v5017 = vunpack.c.l.b16 %v4739
        %v5018 = vunpack.c.h.b16 %v4739
        %v5019 = vunpack.c.l.b16 %v4740
        %v5020 = vunpack.c.h.b16 %v4740
        %v5021 = vunpack.c.l.b16 %v4741
        %v5022 = vunpack.c.h.b16 %v4741
        %v5023 = vunpack.c.l.b16 %v4742
        %v5024 = vunpack.c.h.b16 %v4742
        %v5025 = vunpack.c.l.b16 %v4743
        %v5026 = vunpack.c.h.b16 %v4743
        %v5027 = vunpack.c.l.b16 %v4744
        %v5028 = vunpack.c.h.b16 %v4744
        %v5029 = vunpack.c.l.b16 %v4745
        %v5030 = vunpack.c.h.b16 %v4745
        %v5031 = vunpack.c.l.b16 %v4746
        %v5032 = vunpack.c.h.b16 %v4746
        %v5033 = vunpack.c.l.b16 %v4747
        %v5034 = vunpack.c.h.b16 %v4747
        %v5035 = vunpack.c.l.b16 %v4748
        %v5036 = vunpack.c.h.b16 %v4748
        %v5037 = vunpack.c.l.b16 %v4749
        %v5038 = vunpack.c.h.b16 %v4749
        %v5039 = vunpack.c.l.b16 %v4750
        %v5040 = vunpack.c.h.b16 %v4750
        %v5041 = vunpack.c.l.b16 %v4751
        %v5042 = vunpack.c.h.b16 %v4751
        %v5043 = vunpack.c.l.b16 %v4752
        %v5044 = vunpack.c.h.b16 %v4752
        %v5045 = vunpack.c.l.b16 %v4753
        %v5046 = vunpack.c.h.b16 %v4753
        %v5047 = vunpack.c.l.b16 %v4754
        %v5048 = vunpack.c.h.b16 %v4754
        %v5049 = vunpack.c.l.b16 %v4755
        %v5050 = vunpack.c.h.b16 %v4755
        %v5051 = vunpack.c.l.b16 %v4756
        %v5052 = vunpack.c.h.b16 %v4756
        %v5053 = vunpack.c.l.b16 %v4757
        %v5054 = vunpack.c.h.b16 %v4757
        %v5055 = vunpack.c.l.b16 %v4758
        %v5056 = vunpack.c.h.b16 %v4758
        %v5057 = vunpack.c.l.b16 %v4759
        %v5058 = vunpack.c.h.b16 %v4759
        %v5059 = vunpack.c.l.b16 %v4760
        %v5060 = vunpack.c.h.b16 %v4760
        %v5061 = vunpack.c.l.b16 %v4761
        %v5062 = vunpack.c.h.b16 %v4761
        %v5063 = vunpack.c.l.b16 %v4762
        %v5064 = vunpack.c.h.b16 %v4762
        %v5065 = vunpack.c.l.b16 %v4763
        %v5066 = vunpack.c.h.b16 %v4763
        %v5067 = vunpack.c.l.b16 %v4764
        %v5068 = vunpack.c.h.b16 %v4764
        %v5069 = vunpack.c.l.b16 %v4765
        %v5070 = vunpack.c.h.b16 %v4765
        %v5071 = vunpack.c.l.b16 %v4766
        %v5072 = vunpack.c.h.b16 %v4766
        %v5073 = vunpack.c.l.b16 %v4767
        %v5074 = vunpack.c.h.b16 %v4767
        %v5075 = vunpack.c.l.b16 %v4768
        %v5076 = vunpack.c.h.b16 %v4768
        %v5077 = vunpack.c.l.b16 %v4769
        %v5078 = vunpack.c.h.b16 %v4769
        %v5079 = vunpack.c.l.b16 %v4770
        %v5080 = vunpack.c.h.b16 %v4770
        %v5081 = vunpack.c.l.b16 %v4771
        %v5082 = vunpack.c.h.b16 %v4771
        %v5083 = vunpack.c.l.b16 %v4772
        %v5084 = vunpack.c.h.b16 %v4772
        %v5085 = vunpack.c.l.b16 %v4773
        %v5086 = vunpack.c.h.b16 %v4773
        %v5087 = vunpack.c.l.b16 %v4774
        %v5088 = vunpack.c.h.b16 %v4774
        %v5089 = vunpack.c.l.b16 %v4775
        %v5090 = vunpack.c.h.b16 %v4775
        %v5091 = vunpack.c.l.b16 %v4776
        %v5092 = vunpack.c.h.b16 %v4776
        %v5093 = vunpack.c.l.b16 %v4777
        %v5094 = vunpack.c.h.b16 %v4777
        %v5095 = vunpack.c.l.b16 %v4778
        %v5096 = vunpack.c.h.b16 %v4778
        %v5097 = vunpack.c.l.b16 %v4779
        %v5098 = vunpack.c.h.b16 %v4779
        %v5099 = vunpack.c.l.b16 %v4780
        %v5100 = vunpack.c.h.b16 %v4780
        %v5101 = vunpack.c.l.b16 %v4781
        %v5102 = vunpack.c.h.b16 %v4781
        %v5103 = vunpack.c.l.b16 %v4782
        %v5104 = vunpack.c.h.b16 %v4782
        %v5105 = vunpack.c.l.b16 %v4783
        %v5106 = vunpack.c.h.b16 %v4783
        %v5107 = vunpack.c.l.b16 %v4784
        %v5108 = vunpack.c.h.b16 %v4784
        %v5109 = vunpack.c.l.b16 %v4785
        %v5110 = vunpack.c.h.b16 %v4785
        %v5111 = vunpack.c.l.b16 %v4786
        %v5112 = vunpack.c.h.b16 %v4786
        %v5113 = vunpack.c.l.b16 %v4787
        %v5114 = vunpack.c.h.b16 %v4787
        %v5115 = vunpack.c.l.b16 %v4788
        %v5116 = vunpack.c.h.b16 %v4788
        %v5117 = vunpack.c.l.b16 %v4789
        %v5118 = vunpack.c.h.b16 %v4789
        %v5119 = vunpack.c.l.b16 %v4790
        %v5120 = vunpack.c.h.b16 %v4790
        %v5121 = vunpack.c.l.b16 %v4791
        %v5122 = vunpack.c.h.b16 %v4791
        %v5123 = vunpack.c.l.b16 %v4792
        %v5124 = vunpack.c.h.b16 %v4792
        %v5125 = vunpack.c.l.b16 %v4793
        %v5126 = vunpack.c.h.b16 %v4793
        %v5127 = vunpack.c.l.b16 %v4794
        %v5128 = vunpack.c.h.b16 %v4794
        %v5129 = vunpack.c.l.b16 %v4795
        %v5130 = vunpack.c.h.b16 %v4795
        %v5131 = vunpack.c.l.b16 %v4796
        %v5132 = vunpack.c.h.b16 %v4796
        %v5133 = vunpack.c.l.b16 %v4797
        %v5134 = vunpack.c.h.b16 %v4797
        %v5135 = vunpack.c.l.b16 %v4798
        %v5136 = vunpack.c.h.b16 %v4798
        %v5137 = vunpack.c.l.b16 %v4799
        %v5138 = vunpack.c.h.b16 %v4799
        %v5139 = vunpack.c.l.b16 %v4800
        %v5140 = vunpack.c.h.b16 %v4800
        %v5141 = vunpack.c.l.b16 %v4801
        %v5142 = vunpack.c.h.b16 %v4801
        %v5143 = vunpack.c.l.b16 %v4802
        %v5144 = vunpack.c.h.b16 %v4802
        %v5145 = vunpack.c.l.b16 %v4803
        %v5146 = vunpack.c.h.b16 %v4803
        %v5147 = vunpack.c.l.b16 %v4804
        %v5148 = vunpack.c.h.b16 %v4804
        %v5149 = vunpack.c.l.b16 %v4805
        %v5150 = vunpack.c.h.b16 %v4805
        %v5151 = vunpack.c.l.b16 %v4806
        %v5152 = vunpack.c.h.b16 %v4806
        %v5153 = vunpack.c.l.b16 %v4807
        %v5154 = vunpack.c.h.b16 %v4807
        %v5155 = vunpack.c.l.b16 %v4808
        %v5156 = vunpack.c.h.b16 %v4808
        %v5157 = vunpack.c.l.b16 %v4809
        %v5158 = vunpack.c.h.b16 %v4809
        %v5159 = vunpack.c.l.b16 %v4810
        %v5160 = vunpack.c.h.b16 %v4810
        %v5161 = vunpack.c.l.b16 %v4811
        %v5162 = vunpack.c.h.b16 %v4811
        %v5163 = vunpack.c.l.b16 %v4812
        %v5164 = vunpack.c.h.b16 %v4812
        %v5165 = vunpack.c.l.b16 %v4813
        %v5166 = vunpack.c.h.b16 %v4813
        %v5167 = vunpack.c.l.b16 %v4814
        %v5168 = vunpack.c.h.b16 %v4814
        %v5169 = vunpack.c.l.b16 %v4815
        %v5170 = vunpack.c.h.b16 %v4815
        %v5171 = vunpack.c.l.b16 %v4816
        %v5172 = vunpack.c.h.b16 %v4816
        %v5173 = vunpack.c.l.b16 %v4817
        %v5174 = vunpack.c.h.b16 %v4817
        %v5175 = vunpack.c.l.b16 %v4818
        %v5176 = vunpack.c.h.b16 %v4818
        %v5177 = vunpack.c.l.b16 %v4819
        %v5178 = vunpack.c.h.b16 %v4819
        %v5179 = vunpack.c.l.b16 %v4820
        %v5180 = vunpack.c.h.b16 %v4820
        %v5181 = vunpack.c.l.b16 %v4821
        %v5182 = vunpack.c.h.b16 %v4821
        %v5183 = vunpack.c.l.b16 %v4822
        %v5184 = vunpack.c.h.b16 %v4822
        %v5185 = vunpack.c.l.b16 %v4823
        %v5186 = vunpack.c.h.b16 %v4823
        %v5187 = vunpack.c.l.b16 %v4824
        %v5188 = vunpack.c.h.b16 %v4824
        %v5189 = vunpack.c.l.b16 %v4825
        %v5190 = vunpack.c.h.b16 %v4825
        %v5191 = vunpack.c.l.b16 %v4826
        %v5192 = vunpack.c.h.b16 %v4826
        %v5193 = vunpack.c.l.b16 %v4827
        %v5194 = vunpack.c.h.b16 %v4827
        %v5195 = vunpack.c.l.b16 %v4828
        %v5196 = vunpack.c.h.b16 %v4828
        %v5197 = vunpack.c.l.b16 %v4829
        %v5198 = vunpack.c.h.b16 %v4829
        %v5199 = vunpack.c.l.b16 %v4830
        %v5200 = vunpack.c.h.b16 %v4830
        %v5201 = vunpack.c.l.b16 %v4831
        %v5202 = vunpack.c.h.b16 %v4831
        %v5203 = vunpack.c.l.b16 %v4832
        %v5204 = vunpack.c.h.b16 %v4832
        %v5205 = vunpack.c.l.b16 %v4833
        %v5206 = vunpack.c.h.b16 %v4833
        %v5207 = vunpack.c.l.b16 %v4834
        %v5208 = vunpack.c.h.b16 %v4834
        %v5209 = vunpack.c.l.b16 %v4835
        %v5210 = vunpack.c.h.b16 %v4835
        %v5211 = vunpack.c.l.b16 %v4836
        %v5212 = vunpack.c.h.b16 %v4836
        %v5213 = vunpack.c.l.b16 %v4837
        %v5214 = vunpack.c.h.b16 %v4837
        %v5215 = vunpack.c.l.b16 %v4838
        %v5216 = vunpack.c.h.b16 %v4838
        %v5217 = vunpack.c.l.b16 %v4839
        %v5218 = vunpack.c.h.b16 %v4839
        %v5219 = vunpack.c.l.b16 %v4840
        %v5220 = vunpack.c.h.b16 %v4840
        %v5221 = vunpack.c.l.b16 %v4841
        %v5222 = vunpack.c.h.b16 %v4841
        %v5223 = vunpack.c.l.b16 %v4842
        %v5224 = vunpack.c.h.b16 %v4842
        %v5225 = vunpack.c.l.b16 %v4843
        %v5226 = vunpack.c.h.b16 %v4843
        %v5227 = vunpack.c.l.b16 %v4844
        %v5228 = vunpack.c.h.b16 %v4844
        %v5229 = vunpack.c.l.b16 %v4845
        %v5230 = vunpack.c.h.b16 %v4845
        %v5231 = vunpack.c.l.b16 %v4846
        %v5232 = vunpack.c.h.b16 %v4846
        %v5233 = vpack.c.b16 %v4981, %v4977
        %v5234 = vpack.c.b16 %v4982, %v4978
        %v5235 = vpack.c.b16 %v4983, %v4979
        %v5236 = vpack.c.b16 %v4984, %v4980
        %v5237 = vpack.c.b16 %v4989, %v4985
        %v5238 = vpack.c.b16 %v4990, %v4986
        %v5239 = vpack.c.b16 %v4991, %v4987
        %v5240 = vpack.c.b16 %v4992, %v4988
        %v5241 = vpack.c.b16 %v4997, %v4993
        %v5242 = vpack.c.b16 %v4998, %v4994
        %v5243 = vpack.c.b16 %v4999, %v4995
        %v5244 = vpack.c.b16 %v5000, %v4996
        %v5245 = vpack.c.b16 %v5005, %v5001
        %v5246 = vpack.c.b16 %v5006, %v5002
        %v5247 = vpack.c.b16 %v5007, %v5003
        %v5248 = vpack.c.b16 %v5008, %v5004
        %v5249 = vpack.c.b16 %v5013, %v5009
        %v5250 = vpack.c.b16 %v5014, %v5010
        %v5251 = vpack.c.b16 %v5015, %v5011
        %v5252 = vpack.c.b16 %v5016, %v5012
        %v5253 = vpack.c.b16 %v5021, %v5017
        %v5254 = vpack.c.b16 %v5022, %v5018
        %v5255 = vpack.c.b16 %v5023, %v5019
        %v5256 = vpack.c.b16 %v5024, %v5020
        %v5257 = vpack.c.b16 %v5029, %v5025
        %v5258 = vpack.c.b16 %v5030, %v5026
        %v5259 = vpack.c.b16 %v5031, %v5027
        %v5260 = vpack.c.b16 %v5032, %v5028
        %v5261 = vpack.c.b16 %v5037, %v5033
        %v5262 = vpack.c.b16 %v5038, %v5034
        %v5263 = vpack.c.b16 %v5039, %v5035
        %v5264 = vpack.c.b16 %v5040, %v5036
        %v5265 = vpack.c.b16 %v5045, %v5041
        %v5266 = vpack.c.b16 %v5046, %v5042
        %v5267 = vpack.c.b16 %v5047, %v5043
        %v5268 = vpack.c.b16 %v5048, %v5044
        %v5269 = vpack.c.b16 %v5053, %v5049
        %v5270 = vpack.c.b16 %v5054, %v5050
        %v5271 = vpack.c.b16 %v5055, %v5051
        %v5272 = vpack.c.b16 %v5056, %v5052
        %v5273 = vpack.c.b16 %v5061, %v5057
        %v5274 = vpack.c.b16 %v5062, %v5058
        %v5275 = vpack.c.b16 %v5063, %v5059
        %v5276 = vpack.c.b16 %v5064, %v5060
        %v5277 = vpack.c.b16 %v5069, %v5065
        %v5278 = vpack.c.b16 %v5070, %v5066
        %v5279 = vpack.c.b16 %v5071, %v5067
        %v5280 = vpack.c.b16 %v5072, %v5068
        %v5281 = vpack.c.b16 %v5077, %v5073
        %v5282 = vpack.c.b16 %v5078, %v5074
        %v5283 = vpack.c.b16 %v5079, %v5075
        %v5284 = vpack.c.b16 %v5080, %v5076
        %v5285 = vpack.c.b16 %v5085, %v5081
        %v5286 = vpack.c.b16 %v5086, %v5082
        %v5287 = vpack.c.b16 %v5087, %v5083
        %v5288 = vpack.c.b16 %v5088, %v5084
        %v5289 = vpack.c.b16 %v5093, %v5089
        %v5290 = vpack.c.b16 %v5094, %v5090
        %v5291 = vpack.c.b16 %v5095, %v5091
        %v5292 = vpack.c.b16 %v5096, %v5092
        %v5293 = vpack.c.b16 %v5101, %v5097
        %v5294 = vpack.c.b16 %v5102, %v5098
        %v5295 = vpack.c.b16 %v5103, %v5099
        %v5296 = vpack.c.b16 %v5104, %v5100
        %v5297 = vpack.c.b16 %v5109, %v5105
        %v5298 = vpack.c.b16 %v5110, %v5106
        %v5299 = vpack.c.b16 %v5111, %v5107
        %v5300 = vpack.c.b16 %v5112, %v5108
        %v5301 = vpack.c.b16 %v5117, %v5113
        %v5302 = vpack.c.b16 %v5118, %v5114
        %v5303 = vpack.c.b16 %v5119, %v5115
        %v5304 = vpack.c.b16 %v5120, %v5116
        %v5305 = vpack.c.b16 %v5125, %v5121
        %v5306 = vpack.c.b16 %v5126, %v5122
        %v5307 = vpack.c.b16 %v5127, %v5123
        %v5308 = vpack.c.b16 %v5128, %v5124
        %v5309 = vpack.c.b16 %v5133, %v5129
        %v5310 = vpack.c.b16 %v5134, %v5130
        %v5311 = vpack.c.b16 %v5135, %v5131
        %v5312 = vpack.c.b16 %v5136, %v5132
        %v5313 = vpack.c.b16 %v5141, %v5137
        %v5314 = vpack.c.b16 %v5142, %v5138
        %v5315 = vpack.c.b16 %v5143, %v5139
        %v5316 = vpack.c.b16 %v5144, %v5140
        %v5317 = vpack.c.b16 %v5149, %v5145
        %v5318 = vpack.c.b16 %v5150, %v5146
        %v5319 = vpack.c.b16 %v5151, %v5147
        %v5320 = vpack.c.b16 %v5152, %v5148
        %v5321 = vpack.c.b16 %v5157, %v5153
        %v5322 = vpack.c.b16 %v5158, %v5154
        %v5323 = vpack.c.b16 %v5159, %v5155
        %v5324 = vpack.c.b16 %v5160, %v5156
        %v5325 = vpack.c.b16 %v5165, %v5161
        %v5326 = vpack.c.b16 %v5166, %v5162
        %v5327 = vpack.c.b16 %v5167, %v5163
        %v5328 = vpack.c.b16 %v5168, %v5164
        %v5329 = vpack.c.b16 %v5173, %v5169
        %v5330 = vpack.c.b16 %v5174, %v5170
        %v5331 = vpack.c.b16 %v5175, %v5171
        %v5332 = vpack.c.b16 %v5176, %v5172
        %v5333 = vpack.c.b16 %v5181, %v5177
        %v5334 = vpack.c.b16 %v5182, %v5178
        %v5335 = vpack.c.b16 %v5183, %v5179
        %v5336 = vpack.c.b16 %v5184, %v5180
        %v5337 = vpack.c.b16 %v5189, %v5185
        %v5338 = vpack.c.b16 %v5190, %v5186
        %v5339 = vpack.c.b16 %v5191, %v5187
        %v5340 = vpack.c.b16 %v5192, %v5188
        %v5341 = vpack.c.b16 %v5197, %v5193
        %v5342 = vpack.c.b16 %v5198, %v5194
        %v5343 = vpack.c.b16 %v5199, %v5195
        %v5344 = vpack.c.b16 %v5200, %v5196
        %v5345 = vpack.c.b16 %v5205, %v5201
        %v5346 = vpack.c.b16 %v5206, %v5202
        %v5347 = vpack.c.b16 %v5207, %v5203
        %v5348 = vpack.c.b16 %v5208, %v5204
        %v5349 = vpack.c.b16 %v5213, %v5209
        %v5350 = vpack.c.b16 %v5214, %v5210
        %v5351 = vpack.c.b16 %v5215, %v5211
        %v5352 = vpack.c.b16 %v5216, %v5212
        %v5353 = vpack.c.b16 %v5221, %v5217
        %v5354 = vpack.c.b16 %v5222, %v5218
        %v5355 = vpack.c.b16 %v5223, %v5219
        %v5356 = vpack.c.b16 %v5224, %v5220
        %v5357 = vpack.c.b16 %v5229, %v5225
        %v5358 = vpack.c.b16 %v5230, %v5226
        %v5359 = vpack.c.b16 %v5231, %v5227
        %v5360 = vpack.c.b16 %v5232, %v5228
        %5489 = vmatprep.subr.bf16.mxu0 %v5234
        %5490 = vmatpush1.bf16.msra.mxu0 %v5233
        %5491 = vmatprep.subr.bf16.mxu0 %v5238
        %5492 = vmatpush1.bf16.msra.mxu0 %v5237
        %5493 = vmatprep.subr.bf16.mxu0 %v5242
        %5494 = vmatpush1.bf16.msra.mxu0 %v5241
        %5495 = vmatprep.subr.bf16.mxu0 %v5246
        %5496 = vmatpush1.bf16.msra.mxu0 %v5245
        %5497 = vmatprep.subr.bf16.mxu0 %v5250
        %5498 = vmatpush1.bf16.msra.mxu0 %v5249
        %5499 = vmatprep.subr.bf16.mxu0 %v5254
        %5500 = vmatpush1.bf16.msra.mxu0 %v5253
        %5501 = vmatprep.subr.bf16.mxu0 %v5258
        %5502 = vmatpush1.bf16.msra.mxu0 %v5257
        %5503 = vmatprep.subr.bf16.mxu0 %v5262
        %5504 = vmatpush1.bf16.msra.mxu0 %v5261
        %5505 = vmatprep.subr.bf16.mxu0 %v5266
        %5506 = vmatpush1.bf16.msra.mxu0 %v5265
        %5507 = vmatprep.subr.bf16.mxu0 %v5270
        %5508 = vmatpush1.bf16.msra.mxu0 %v5269
        %5509 = vmatprep.subr.bf16.mxu0 %v5274
        %5510 = vmatpush1.bf16.msra.mxu0 %v5273
        %5511 = vmatprep.subr.bf16.mxu0 %v5278
        %5512 = vmatpush1.bf16.msra.mxu0 %v5277
        %5513 = vmatprep.subr.bf16.mxu0 %v5282
        %5514 = vmatpush1.bf16.msra.mxu0 %v5281
        %5515 = vmatprep.subr.bf16.mxu0 %v5286
        %5516 = vmatpush1.bf16.msra.mxu0 %v5285
        %5517 = vmatprep.subr.bf16.mxu0 %v5290
        %5518 = vmatpush1.bf16.msra.mxu0 %v5289
        %5519 = vmatprep.subr.bf16.mxu0 %v5294
        %5520 = vmatpush1.bf16.msra.mxu0 %v5293
        %5521 = vmatprep.mubr.bf16.mxu0 %v1975
        %5522 = vmatmul.mubr.bf16.gmra.mrb[0].mxu0 %v1974
        %v5523 = vpop.f32.mrb[0].mxu0
        %v5524 = vadd.f32 %v4848, %v5523
        %v5525 = vpop.f32.mrb[0].mxu0
        %v5526 = vadd.f32 %v4848, %v5525
        %v5527 = vpop.f32.mrb[0].mxu0
        %v5528 = vadd.f32 %v4848, %v5527
        %v5529 = vpop.f32.mrb[0].mxu0
        %v5530 = vadd.f32 %v4848, %v5529
        %5531 = vdwg.mxu0
        %5532 = vmatprep.subr.bf16.mxu0 %v5298
        %5533 = vmatpush1.bf16.msra.mxu0 %v5297
        %5534 = vmatprep.subr.bf16.mxu0 %v5302
        %5535 = vmatpush1.bf16.msra.mxu0 %v5301
        %5536 = vmatprep.subr.bf16.mxu0 %v5306
        %5537 = vmatpush1.bf16.msra.mxu0 %v5305
        %5538 = vmatprep.subr.bf16.mxu0 %v5310
        %5539 = vmatpush1.bf16.msra.mxu0 %v5309
        %5540 = vmatprep.subr.bf16.mxu0 %v5314
        %5541 = vmatpush1.bf16.msra.mxu0 %v5313
        %5542 = vmatprep.subr.bf16.mxu0 %v5318
        %5543 = vmatpush1.bf16.msra.mxu0 %v5317
        %5544 = vmatprep.subr.bf16.mxu0 %v5322
        %5545 = vmatpush1.bf16.msra.mxu0 %v5321
        %5546 = vmatprep.subr.bf16.mxu0 %v5326
        %5547 = vmatpush1.bf16.msra.mxu0 %v5325
        %5548 = vmatprep.subr.bf16.mxu0 %v5330
        %5549 = vmatpush1.bf16.msra.mxu0 %v5329
        %5550 = vmatprep.subr.bf16.mxu0 %v5334
        %5551 = vmatpush1.bf16.msra.mxu0 %v5333
        %5552 = vmatprep.subr.bf16.mxu0 %v5338
        %5553 = vmatpush1.bf16.msra.mxu0 %v5337
        %5554 = vmatprep.subr.bf16.mxu0 %v5342
        %5555 = vmatpush1.bf16.msra.mxu0 %v5341
        %5556 = vmatprep.subr.bf16.mxu0 %v5346
        %5557 = vmatpush1.bf16.msra.mxu0 %v5345
        %5558 = vmatprep.subr.bf16.mxu0 %v5350
        %5559 = vmatpush1.bf16.msra.mxu0 %v5349
        %5560 = vmatprep.subr.bf16.mxu0 %v5354
        %5561 = vmatpush1.bf16.msra.mxu0 %v5353
        %5562 = vmatprep.subr.bf16.mxu0 %v5358
        %5563 = vmatpush1.bf16.msra.mxu0 %v5357
        %5564 = vmatprep.mubr.bf16.mxu0 %v1977
        %5565 = vmatmul.mubr.bf16.gmra.mrb[0].mxu0 %v1976
        %v5566 = vpop.f32.mrb[0].mxu0
        %v5567 = vadd.f32 %v5524, %v5566
        %v5568 = vpop.f32.mrb[0].mxu0
        %v5569 = vadd.f32 %v5526, %v5568
        %v5570 = vpop.f32.mrb[0].mxu0
        %v5571 = vadd.f32 %v5528, %v5570
        %v5572 = vpop.f32.mrb[0].mxu0
        %v5573 = vadd.f32 %v5530, %v5572
        %5574 = vdwg.mxu0
        %5575 = vmatprep.subr.bf16.mxu0 %v5236
        %5576 = vmatpush1.bf16.msra.mxu0 %v5235
        %5577 = vmatprep.subr.bf16.mxu0 %v5240
        %5578 = vmatpush1.bf16.msra.mxu0 %v5239
        %5579 = vmatprep.subr.bf16.mxu0 %v5244
        %5580 = vmatpush1.bf16.msra.mxu0 %v5243
        %5581 = vmatprep.subr.bf16.mxu0 %v5248
        %5582 = vmatpush1.bf16.msra.mxu0 %v5247
        %5583 = vmatprep.subr.bf16.mxu0 %v5252
        %5584 = vmatpush1.bf16.msra.mxu0 %v5251
        %5585 = vmatprep.subr.bf16.mxu0 %v5256
        %5586 = vmatpush1.bf16.msra.mxu0 %v5255
        %5587 = vmatprep.subr.bf16.mxu0 %v5260
        %5588 = vmatpush1.bf16.msra.mxu0 %v5259
        %5589 = vmatprep.subr.bf16.mxu0 %v5264
        %5590 = vmatpush1.bf16.msra.mxu0 %v5263
        %5591 = vmatprep.subr.bf16.mxu0 %v5268
        %5592 = vmatpush1.bf16.msra.mxu0 %v5267
        %5593 = vmatprep.subr.bf16.mxu0 %v5272
        %5594 = vmatpush1.bf16.msra.mxu0 %v5271
        %5595 = vmatprep.subr.bf16.mxu0 %v5276
        %5596 = vmatpush1.bf16.msra.mxu0 %v5275
        %5597 = vmatprep.subr.bf16.mxu0 %v5280
        %5598 = vmatpush1.bf16.msra.mxu0 %v5279
        %5599 = vmatprep.subr.bf16.mxu0 %v5284
        %5600 = vmatpush1.bf16.msra.mxu0 %v5283
        %5601 = vmatprep.subr.bf16.mxu0 %v5288
        %5602 = vmatpush1.bf16.msra.mxu0 %v5287
        %5603 = vmatprep.subr.bf16.mxu0 %v5292
        %5604 = vmatpush1.bf16.msra.mxu0 %v5291
        %5605 = vmatprep.subr.bf16.mxu0 %v5296
        %5606 = vmatpush1.bf16.msra.mxu0 %v5295
        %5607 = vmatprep.mubr.bf16.mxu0 %v1975
        %5608 = vmatmul.mubr.bf16.gmra.mrb[0].mxu0 %v1974
        %v5609 = vpop.f32.mrb[0].mxu0
        %v5610 = vadd.f32 %v4848, %v5609
        %v5611 = vpop.f32.mrb[0].mxu0
        %v5612 = vadd.f32 %v4848, %v5611
        %v5613 = vpop.f32.mrb[0].mxu0
        %v5614 = vadd.f32 %v4848, %v5613
        %v5615 = vpop.f32.mrb[0].mxu0
        %v5616 = vadd.f32 %v4848, %v5615
        %5617 = vdwg.mxu0
        %5618 = vmatprep.subr.bf16.mxu0 %v5300
        %5619 = vmatpush1.bf16.msra.mxu0 %v5299
        %5620 = vmatprep.subr.bf16.mxu0 %v5304
        %5621 = vmatpush1.bf16.msra.mxu0 %v5303
        %5622 = vmatprep.subr.bf16.mxu0 %v5308
        %5623 = vmatpush1.bf16.msra.mxu0 %v5307
        %5624 = vmatprep.subr.bf16.mxu0 %v5312
        %5625 = vmatpush1.bf16.msra.mxu0 %v5311
        %5626 = vmatprep.subr.bf16.mxu0 %v5316
        %5627 = vmatpush1.bf16.msra.mxu0 %v5315
        %5628 = vmatprep.subr.bf16.mxu0 %v5320
        %5629 = vmatpush1.bf16.msra.mxu0 %v5319
        %5630 = vmatprep.subr.bf16.mxu0 %v5324
        %5631 = vmatpush1.bf16.msra.mxu0 %v5323
        %5632 = vmatprep.subr.bf16.mxu0 %v5328
        %5633 = vmatpush1.bf16.msra.mxu0 %v5327
        %5634 = vmatprep.subr.bf16.mxu0 %v5332
        %5635 = vmatpush1.bf16.msra.mxu0 %v5331
        %5636 = vmatprep.subr.bf16.mxu0 %v5336
        %5637 = vmatpush1.bf16.msra.mxu0 %v5335
        %5638 = vmatprep.subr.bf16.mxu0 %v5340
        %5639 = vmatpush1.bf16.msra.mxu0 %v5339
        %5640 = vmatprep.subr.bf16.mxu0 %v5344
        %5641 = vmatpush1.bf16.msra.mxu0 %v5343
        %5642 = vmatprep.subr.bf16.mxu0 %v5348
        %5643 = vmatpush1.bf16.msra.mxu0 %v5347
        %5644 = vmatprep.subr.bf16.mxu0 %v5352
        %5645 = vmatpush1.bf16.msra.mxu0 %v5351
        %5646 = vmatprep.subr.bf16.mxu0 %v5356
        %5647 = vmatpush1.bf16.msra.mxu0 %v5355
        %5648 = vmatprep.subr.bf16.mxu0 %v5360
        %5649 = vmatpush1.bf16.msra.mxu0 %v5359
        %5650 = vmatprep.mubr.bf16.mxu0 %v1977
        %5651 = vmatmul.mubr.bf16.gmra.mrb[0].mxu0 %v1976
        %v5652 = vpop.f32.mrb[0].mxu0
        %v5653 = vadd.f32 %v5610, %v5652
        %v5654 = vpop.f32.mrb[0].mxu0
        %v5655 = vadd.f32 %v5612, %v5654
        %v5656 = vpop.f32.mrb[0].mxu0
        %v5657 = vadd.f32 %v5614, %v5656
        %v5658 = vpop.f32.mrb[0].mxu0
        %v5659 = vadd.f32 %v5616, %v5658
        %5660 = vdwg.mxu0
        %v5661 = vmul.f32 %v4711, %v5567
        %v5662 = vmul.f32 %v4712, %v5569
        %v5663 = vmul.f32 %v4713, %v5653
        %v5664 = vmul.f32 %v4714, %v5655
        %v5665 = vmul.f32 %v4715, %v5571
        %v5666 = vmul.f32 %v4716, %v5573
        %v5667 = vmul.f32 %v4717, %v5657
        %v5668 = vmul.f32 %v4718, %v5659
        %v5669 = vadd.f32 %v1801, %v5661
        %v5670 = vadd.f32 %v1802, %v5662
        %v5671 = vadd.f32 %v1803, %v5663
        %v5672 = vadd.f32 %v1804, %v5664
        %v5673 = vadd.f32 %v1805, %v5665
        %v5674 = vadd.f32 %v1806, %v5666
        %v5675 = vadd.f32 %v1807, %v5667
        %v5676 = vadd.f32 %v1808, %v5668
        %v5685 = vrot.slane %v5669, 7
        %v5686 = vrot.slane %v5670, 7
        %v5687 = vrot.slane %v5671, 7
        %v5688 = vrot.slane %v5672, 7
        %v5689 = vrot.slane %v5673, 7
        %v5690 = vsel %vm1817, %v5685, %v5689
        %v5691 = vrot.slane %v5674, 7
        %v5692 = vsel %vm1817, %v5686, %v5691
        %v5693 = vrot.slane %v5675, 7
        %v5694 = vsel %vm1817, %v5687, %v5693
        %v5695 = vrot.slane %v5676, 7
        %v5696 = vsel %vm1817, %v5688, %v5695
        %v5705 = vsel %vm1817, 0.0, %v5685
        %v5706 = vsel %vm1817, 0.0, %v5686
        %v5707 = vsel %vm1817, 0.0, %v5687
        %v5708 = vsel %vm1817, 0.0, %v5688
        %v5709 = vpack.c.bf16 %v5690, %v5705
        %v5710 = vpack.c.bf16 %v5692, %v5706
        %v5711 = vpack.c.bf16 %v5694, %v5707
        %v5712 = vpack.c.bf16 %v5696, %v5708
        %v5713 = vld [vmem:[#allocation17] sm:$0xff]
        %v5714 = vld [vmem:[#allocation17 + $0x8] sm:$0xff]
        %v5715 = vld [vmem:[#allocation17 + $0x10] sm:$0xff]
        %v5716 = vld [vmem:[#allocation17 + $0x18] sm:$0xff]
        %v5717 = vld [vmem:[#allocation17 + $0x20] sm:$0xff]
        %v5718 = vld [vmem:[#allocation17 + $0x28] sm:$0xff]
        %v5719 = vld [vmem:[#allocation17 + $0x30] sm:$0xff]
        %v5720 = vld [vmem:[#allocation17 + $0x38] sm:$0xff]
        %v5721 = vld [vmem:[#allocation17 + $0x40] sm:$0xff]
        %v5722 = vld [vmem:[#allocation17 + $0x48] sm:$0xff]
        %v5723 = vld [vmem:[#allocation17 + $0x50] sm:$0xff]
        %v5724 = vld [vmem:[#allocation17 + $0x58] sm:$0xff]
        %v5725 = vld [vmem:[#allocation17 + $0x60] sm:$0xff]
        %v5726 = vld [vmem:[#allocation17 + $0x68] sm:$0xff]
        %v5727 = vld [vmem:[#allocation17 + $0x70] sm:$0xff]
        %v5728 = vld [vmem:[#allocation17 + $0x78] sm:$0xff]
        %v5729 = vld [vmem:[#allocation17 + $0x80] sm:$0xff]
        %v5730 = vld [vmem:[#allocation17 + $0x88] sm:$0xff]
        %v5731 = vld [vmem:[#allocation17 + $0x90] sm:$0xff]
        %v5732 = vld [vmem:[#allocation17 + $0x98] sm:$0xff]
        %v5733 = vld [vmem:[#allocation17 + $0xa0] sm:$0xff]
        %v5734 = vld [vmem:[#allocation17 + $0xa8] sm:$0xff]
        %v5735 = vld [vmem:[#allocation17 + $0xb0] sm:$0xff]
        %v5736 = vld [vmem:[#allocation17 + $0xb8] sm:$0xff]
        %v5737 = vld [vmem:[#allocation17 + $0xc0] sm:$0xff]
        %v5738 = vld [vmem:[#allocation17 + $0xc8] sm:$0xff]
        %v5739 = vld [vmem:[#allocation17 + $0xd0] sm:$0xff]
        %v5740 = vld [vmem:[#allocation17 + $0xd8] sm:$0xff]
        %v5741 = vld [vmem:[#allocation17 + $0xe0] sm:$0xff]
        %v5742 = vld [vmem:[#allocation17 + $0xe8] sm:$0xff]
        %v5743 = vld [vmem:[#allocation17 + $0xf0] sm:$0xff]
        %v5744 = vld [vmem:[#allocation17 + $0xf8] sm:$0xff]
        %v5745 = vld [vmem:[#allocation17 + $0x100] sm:$0xff]
        %v5746 = vld [vmem:[#allocation17 + $0x108] sm:$0xff]
        %v5747 = vld [vmem:[#allocation17 + $0x110] sm:$0xff]
        %v5748 = vld [vmem:[#allocation17 + $0x118] sm:$0xff]
        %v5749 = vld [vmem:[#allocation17 + $0x120] sm:$0xff]
        %v5750 = vld [vmem:[#allocation17 + $0x128] sm:$0xff]
        %v5751 = vld [vmem:[#allocation17 + $0x130] sm:$0xff]
        %v5752 = vld [vmem:[#allocation17 + $0x138] sm:$0xff]
        %v5753 = vld [vmem:[#allocation17 + $0x140] sm:$0xff]
        %v5754 = vld [vmem:[#allocation17 + $0x148] sm:$0xff]
        %v5755 = vld [vmem:[#allocation17 + $0x150] sm:$0xff]
        %v5756 = vld [vmem:[#allocation17 + $0x158] sm:$0xff]
        %v5757 = vld [vmem:[#allocation17 + $0x160] sm:$0xff]
        %v5758 = vld [vmem:[#allocation17 + $0x168] sm:$0xff]
        %v5759 = vld [vmem:[#allocation17 + $0x170] sm:$0xff]
        %v5760 = vld [vmem:[#allocation17 + $0x178] sm:$0xff]
        %v5761 = vld [vmem:[#allocation17 + $0x180] sm:$0xff]
        %v5762 = vld [vmem:[#allocation17 + $0x188] sm:$0xff]
        %v5763 = vld [vmem:[#allocation17 + $0x190] sm:$0xff]
        %v5764 = vld [vmem:[#allocation17 + $0x198] sm:$0xff]
        %v5765 = vld [vmem:[#allocation17 + $0x1a0] sm:$0xff]
        %v5766 = vld [vmem:[#allocation17 + $0x1a8] sm:$0xff]
        %v5767 = vld [vmem:[#allocation17 + $0x1b0] sm:$0xff]
        %v5768 = vld [vmem:[#allocation17 + $0x1b8] sm:$0xff]
        %v5769 = vld [vmem:[#allocation17 + $0x1c0] sm:$0xff]
        %v5770 = vld [vmem:[#allocation17 + $0x1c8] sm:$0xff]
        %v5771 = vld [vmem:[#allocation17 + $0x1d0] sm:$0xff]
        %v5772 = vld [vmem:[#allocation17 + $0x1d8] sm:$0xff]
        %v5773 = vld [vmem:[#allocation17 + $0x1e0] sm:$0xff]
        %v5774 = vld [vmem:[#allocation17 + $0x1e8] sm:$0xff]
        %v5775 = vld [vmem:[#allocation17 + $0x1f0] sm:$0xff]
        %v5776 = vld [vmem:[#allocation17 + $0x1f8] sm:$0xff]
        %v5777 = vld [vmem:[#allocation17 + $0x200] sm:$0xff]
        %v5778 = vld [vmem:[#allocation17 + $0x208] sm:$0xff]
        %v5779 = vld [vmem:[#allocation17 + $0x210] sm:$0xff]
        %v5780 = vld [vmem:[#allocation17 + $0x218] sm:$0xff]
        %v5781 = vld [vmem:[#allocation17 + $0x220] sm:$0xff]
        %v5782 = vld [vmem:[#allocation17 + $0x228] sm:$0xff]
        %v5783 = vld [vmem:[#allocation17 + $0x230] sm:$0xff]
        %v5784 = vld [vmem:[#allocation17 + $0x238] sm:$0xff]
        %v5785 = vld [vmem:[#allocation17 + $0x240] sm:$0xff]
        %v5786 = vld [vmem:[#allocation17 + $0x248] sm:$0xff]
        %v5787 = vld [vmem:[#allocation17 + $0x250] sm:$0xff]
        %v5788 = vld [vmem:[#allocation17 + $0x258] sm:$0xff]
        %v5789 = vld [vmem:[#allocation17 + $0x260] sm:$0xff]
        %v5790 = vld [vmem:[#allocation17 + $0x268] sm:$0xff]
        %v5791 = vld [vmem:[#allocation17 + $0x270] sm:$0xff]
        %v5792 = vld [vmem:[#allocation17 + $0x278] sm:$0xff]
        %v5793 = vld [vmem:[#allocation17 + $0x280] sm:$0xff]
        %v5794 = vld [vmem:[#allocation17 + $0x288] sm:$0xff]
        %v5795 = vld [vmem:[#allocation17 + $0x290] sm:$0xff]
        %v5796 = vld [vmem:[#allocation17 + $0x298] sm:$0xff]
        %v5797 = vld [vmem:[#allocation17 + $0x2a0] sm:$0xff]
        %v5798 = vld [vmem:[#allocation17 + $0x2a8] sm:$0xff]
        %v5799 = vld [vmem:[#allocation17 + $0x2b0] sm:$0xff]
        %v5800 = vld [vmem:[#allocation17 + $0x2b8] sm:$0xff]
        %v5801 = vld [vmem:[#allocation17 + $0x2c0] sm:$0xff]
        %v5802 = vld [vmem:[#allocation17 + $0x2c8] sm:$0xff]
        %v5803 = vld [vmem:[#allocation17 + $0x2d0] sm:$0xff]
        %v5804 = vld [vmem:[#allocation17 + $0x2d8] sm:$0xff]
        %v5805 = vld [vmem:[#allocation17 + $0x2e0] sm:$0xff]
        %v5806 = vld [vmem:[#allocation17 + $0x2e8] sm:$0xff]
        %v5807 = vld [vmem:[#allocation17 + $0x2f0] sm:$0xff]
        %v5808 = vld [vmem:[#allocation17 + $0x2f8] sm:$0xff]
        %v5809 = vld [vmem:[#allocation17 + $0x300] sm:$0xff]
        %v5810 = vld [vmem:[#allocation17 + $0x308] sm:$0xff]
        %v5811 = vld [vmem:[#allocation17 + $0x310] sm:$0xff]
        %v5812 = vld [vmem:[#allocation17 + $0x318] sm:$0xff]
        %v5813 = vld [vmem:[#allocation17 + $0x320] sm:$0xff]
        %v5814 = vld [vmem:[#allocation17 + $0x328] sm:$0xff]
        %v5815 = vld [vmem:[#allocation17 + $0x330] sm:$0xff]
        %v5816 = vld [vmem:[#allocation17 + $0x338] sm:$0xff]
        %v5817 = vld [vmem:[#allocation17 + $0x340] sm:$0xff]
        %v5818 = vld [vmem:[#allocation17 + $0x348] sm:$0xff]
        %v5819 = vld [vmem:[#allocation17 + $0x350] sm:$0xff]
        %v5820 = vld [vmem:[#allocation17 + $0x358] sm:$0xff]
        %v5821 = vld [vmem:[#allocation17 + $0x360] sm:$0xff]
        %v5822 = vld [vmem:[#allocation17 + $0x368] sm:$0xff]
        %v5823 = vld [vmem:[#allocation17 + $0x370] sm:$0xff]
        %v5824 = vld [vmem:[#allocation17 + $0x378] sm:$0xff]
        %v5825 = vld [vmem:[#allocation17 + $0x380] sm:$0xff]
        %v5826 = vld [vmem:[#allocation17 + $0x388] sm:$0xff]
        %v5827 = vld [vmem:[#allocation17 + $0x390] sm:$0xff]
        %v5828 = vld [vmem:[#allocation17 + $0x398] sm:$0xff]
        %v5829 = vld [vmem:[#allocation17 + $0x3a0] sm:$0xff]
        %v5830 = vld [vmem:[#allocation17 + $0x3a8] sm:$0xff]
        %v5831 = vld [vmem:[#allocation17 + $0x3b0] sm:$0xff]
        %v5832 = vld [vmem:[#allocation17 + $0x3b8] sm:$0xff]
        %v5833 = vld [vmem:[#allocation17 + $0x3c0] sm:$0xff]
        %v5834 = vld [vmem:[#allocation17 + $0x3c8] sm:$0xff]
        %v5835 = vld [vmem:[#allocation17 + $0x3d0] sm:$0xff]
        %v5836 = vld [vmem:[#allocation17 + $0x3d8] sm:$0xff]
        %v5837 = vld [vmem:[#allocation17 + $0x3e0] sm:$0xff]
        %v5838 = vld [vmem:[#allocation17 + $0x3e8] sm:$0xff]
        %v5839 = vld [vmem:[#allocation17 + $0x3f0] sm:$0xff]
        %v5840 = vld [vmem:[#allocation17 + $0x3f8] sm:$0xff]
        %v5841 = vpack.c.bf16 %v5673, %v5669
        %v5842 = vpack.c.bf16 %v5674, %v5670
        %v5843 = vpack.c.bf16 %v5675, %v5671
        %v5844 = vpack.c.bf16 %v5676, %v5672
        %s5845 = scalar_lea.vmem [#allocation17], 1024
        %v5846 = vld [vmem:[%s5845] sm:$0xff]
        %v5847 = vld [vmem:[%s5845 + $0x8] sm:$0xff]
        %v5848 = vld [vmem:[%s5845 + $0x10] sm:$0xff]
        %v5849 = vld [vmem:[%s5845 + $0x18] sm:$0xff]
        %v5850 = vld [vmem:[%s5845 + $0x20] sm:$0xff]
        %v5851 = vld [vmem:[%s5845 + $0x28] sm:$0xff]
        %v5852 = vld [vmem:[%s5845 + $0x30] sm:$0xff]
        %v5853 = vld [vmem:[%s5845 + $0x38] sm:$0xff]
        %v5854 = vld [vmem:[%s5845 + $0x40] sm:$0xff]
        %v5855 = vld [vmem:[%s5845 + $0x48] sm:$0xff]
        %v5856 = vld [vmem:[%s5845 + $0x50] sm:$0xff]
        %v5857 = vld [vmem:[%s5845 + $0x58] sm:$0xff]
        %v5858 = vld [vmem:[%s5845 + $0x60] sm:$0xff]
        %v5859 = vld [vmem:[%s5845 + $0x68] sm:$0xff]
        %v5860 = vld [vmem:[%s5845 + $0x70] sm:$0xff]
        %v5861 = vld [vmem:[%s5845 + $0x78] sm:$0xff]
        %v5862 = vld [vmem:[%s5845 + $0x80] sm:$0xff]
        %v5863 = vld [vmem:[%s5845 + $0x88] sm:$0xff]
        %v5864 = vld [vmem:[%s5845 + $0x90] sm:$0xff]
        %v5865 = vld [vmem:[%s5845 + $0x98] sm:$0xff]
        %v5866 = vld [vmem:[%s5845 + $0xa0] sm:$0xff]
        %v5867 = vld [vmem:[%s5845 + $0xa8] sm:$0xff]
        %v5868 = vld [vmem:[%s5845 + $0xb0] sm:$0xff]
        %v5869 = vld [vmem:[%s5845 + $0xb8] sm:$0xff]
        %v5870 = vld [vmem:[%s5845 + $0xc0] sm:$0xff]
        %v5871 = vld [vmem:[%s5845 + $0xc8] sm:$0xff]
        %v5872 = vld [vmem:[%s5845 + $0xd0] sm:$0xff]
        %v5873 = vld [vmem:[%s5845 + $0xd8] sm:$0xff]
        %v5874 = vld [vmem:[%s5845 + $0xe0] sm:$0xff]
        %v5875 = vld [vmem:[%s5845 + $0xe8] sm:$0xff]
        %v5876 = vld [vmem:[%s5845 + $0xf0] sm:$0xff]
        %v5877 = vld [vmem:[%s5845 + $0xf8] sm:$0xff]
        %v5878 = vld [vmem:[%s5845 + $0x100] sm:$0xff]
        %v5879 = vld [vmem:[%s5845 + $0x108] sm:$0xff]
        %v5880 = vld [vmem:[%s5845 + $0x110] sm:$0xff]
        %v5881 = vld [vmem:[%s5845 + $0x118] sm:$0xff]
        %v5882 = vld [vmem:[%s5845 + $0x120] sm:$0xff]
        %v5883 = vld [vmem:[%s5845 + $0x128] sm:$0xff]
        %v5884 = vld [vmem:[%s5845 + $0x130] sm:$0xff]
        %v5885 = vld [vmem:[%s5845 + $0x138] sm:$0xff]
        %v5886 = vld [vmem:[%s5845 + $0x140] sm:$0xff]
        %v5887 = vld [vmem:[%s5845 + $0x148] sm:$0xff]
        %v5888 = vld [vmem:[%s5845 + $0x150] sm:$0xff]
        %v5889 = vld [vmem:[%s5845 + $0x158] sm:$0xff]
        %v5890 = vld [vmem:[%s5845 + $0x160] sm:$0xff]
        %v5891 = vld [vmem:[%s5845 + $0x168] sm:$0xff]
        %v5892 = vld [vmem:[%s5845 + $0x170] sm:$0xff]
        %v5893 = vld [vmem:[%s5845 + $0x178] sm:$0xff]
        %v5894 = vld [vmem:[%s5845 + $0x180] sm:$0xff]
        %v5895 = vld [vmem:[%s5845 + $0x188] sm:$0xff]
        %v5896 = vld [vmem:[%s5845 + $0x190] sm:$0xff]
        %v5897 = vld [vmem:[%s5845 + $0x198] sm:$0xff]
        %v5898 = vld [vmem:[%s5845 + $0x1a0] sm:$0xff]
        %v5899 = vld [vmem:[%s5845 + $0x1a8] sm:$0xff]
        %v5900 = vld [vmem:[%s5845 + $0x1b0] sm:$0xff]
        %v5901 = vld [vmem:[%s5845 + $0x1b8] sm:$0xff]
        %v5902 = vld [vmem:[%s5845 + $0x1c0] sm:$0xff]
        %v5903 = vld [vmem:[%s5845 + $0x1c8] sm:$0xff]
        %v5904 = vld [vmem:[%s5845 + $0x1d0] sm:$0xff]
        %v5905 = vld [vmem:[%s5845 + $0x1d8] sm:$0xff]
        %v5906 = vld [vmem:[%s5845 + $0x1e0] sm:$0xff]
        %v5907 = vld [vmem:[%s5845 + $0x1e8] sm:$0xff]
        %v5908 = vld [vmem:[%s5845 + $0x1f0] sm:$0xff]
        %v5909 = vld [vmem:[%s5845 + $0x1f8] sm:$0xff]
        %v5910 = vld [vmem:[%s5845 + $0x200] sm:$0xff]
        %v5911 = vld [vmem:[%s5845 + $0x208] sm:$0xff]
        %v5912 = vld [vmem:[%s5845 + $0x210] sm:$0xff]
        %v5913 = vld [vmem:[%s5845 + $0x218] sm:$0xff]
        %v5914 = vld [vmem:[%s5845 + $0x220] sm:$0xff]
        %v5915 = vld [vmem:[%s5845 + $0x228] sm:$0xff]
        %v5916 = vld [vmem:[%s5845 + $0x230] sm:$0xff]
        %v5917 = vld [vmem:[%s5845 + $0x238] sm:$0xff]
        %v5918 = vld [vmem:[%s5845 + $0x240] sm:$0xff]
        %v5919 = vld [vmem:[%s5845 + $0x248] sm:$0xff]
        %v5920 = vld [vmem:[%s5845 + $0x250] sm:$0xff]
        %v5921 = vld [vmem:[%s5845 + $0x258] sm:$0xff]
        %v5922 = vld [vmem:[%s5845 + $0x260] sm:$0xff]
        %v5923 = vld [vmem:[%s5845 + $0x268] sm:$0xff]
        %v5924 = vld [vmem:[%s5845 + $0x270] sm:$0xff]
        %v5925 = vld [vmem:[%s5845 + $0x278] sm:$0xff]
        %v5926 = vld [vmem:[%s5845 + $0x280] sm:$0xff]
        %v5927 = vld [vmem:[%s5845 + $0x288] sm:$0xff]
        %v5928 = vld [vmem:[%s5845 + $0x290] sm:$0xff]
        %v5929 = vld [vmem:[%s5845 + $0x298] sm:$0xff]
        %v5930 = vld [vmem:[%s5845 + $0x2a0] sm:$0xff]
        %v5931 = vld [vmem:[%s5845 + $0x2a8] sm:$0xff]
        %v5932 = vld [vmem:[%s5845 + $0x2b0] sm:$0xff]
        %v5933 = vld [vmem:[%s5845 + $0x2b8] sm:$0xff]
        %v5934 = vld [vmem:[%s5845 + $0x2c0] sm:$0xff]
        %v5935 = vld [vmem:[%s5845 + $0x2c8] sm:$0xff]
        %v5936 = vld [vmem:[%s5845 + $0x2d0] sm:$0xff]
        %v5937 = vld [vmem:[%s5845 + $0x2d8] sm:$0xff]
        %v5938 = vld [vmem:[%s5845 + $0x2e0] sm:$0xff]
        %v5939 = vld [vmem:[%s5845 + $0x2e8] sm:$0xff]
        %v5940 = vld [vmem:[%s5845 + $0x2f0] sm:$0xff]
        %v5941 = vld [vmem:[%s5845 + $0x2f8] sm:$0xff]
        %v5942 = vld [vmem:[%s5845 + $0x300] sm:$0xff]
        %v5943 = vld [vmem:[%s5845 + $0x308] sm:$0xff]
        %v5944 = vld [vmem:[%s5845 + $0x310] sm:$0xff]
        %v5945 = vld [vmem:[%s5845 + $0x318] sm:$0xff]
        %v5946 = vld [vmem:[%s5845 + $0x320] sm:$0xff]
        %v5947 = vld [vmem:[%s5845 + $0x328] sm:$0xff]
        %v5948 = vld [vmem:[%s5845 + $0x330] sm:$0xff]
        %v5949 = vld [vmem:[%s5845 + $0x338] sm:$0xff]
        %v5950 = vld [vmem:[%s5845 + $0x340] sm:$0xff]
        %v5951 = vld [vmem:[%s5845 + $0x348] sm:$0xff]
        %v5952 = vld [vmem:[%s5845 + $0x350] sm:$0xff]
        %v5953 = vld [vmem:[%s5845 + $0x358] sm:$0xff]
        %v5954 = vld [vmem:[%s5845 + $0x360] sm:$0xff]
        %v5955 = vld [vmem:[%s5845 + $0x368] sm:$0xff]
        %v5956 = vld [vmem:[%s5845 + $0x370] sm:$0xff]
        %v5957 = vld [vmem:[%s5845 + $0x378] sm:$0xff]
        %v5958 = vld [vmem:[%s5845 + $0x380] sm:$0xff]
        %v5959 = vld [vmem:[%s5845 + $0x388] sm:$0xff]
        %v5960 = vld [vmem:[%s5845 + $0x390] sm:$0xff]
        %v5961 = vld [vmem:[%s5845 + $0x398] sm:$0xff]
        %v5962 = vld [vmem:[%s5845 + $0x3a0] sm:$0xff]
        %v5963 = vld [vmem:[%s5845 + $0x3a8] sm:$0xff]
        %v5964 = vld [vmem:[%s5845 + $0x3b0] sm:$0xff]
        %v5965 = vld [vmem:[%s5845 + $0x3b8] sm:$0xff]
        %v5966 = vld [vmem:[%s5845 + $0x3c0] sm:$0xff]
        %v5967 = vld [vmem:[%s5845 + $0x3c8] sm:$0xff]
        %v5968 = vld [vmem:[%s5845 + $0x3d0] sm:$0xff]
        %v5969 = vld [vmem:[%s5845 + $0x3d8] sm:$0xff]
        %v5970 = vld [vmem:[%s5845 + $0x3e0] sm:$0xff]
        %v5971 = vld [vmem:[%s5845 + $0x3e8] sm:$0xff]
        %v5972 = vld [vmem:[%s5845 + $0x3f0] sm:$0xff]
        %v5973 = vld [vmem:[%s5845 + $0x3f8] sm:$0xff]
        %v6102 = vunpack.c.l.b16 %v5846
        %v6103 = vunpack.c.h.b16 %v5846
        %v6104 = vunpack.c.l.b16 %v5847
        %v6105 = vunpack.c.h.b16 %v5847
        %v6106 = vunpack.c.l.b16 %v5848
        %v6107 = vunpack.c.h.b16 %v5848
        %v6108 = vunpack.c.l.b16 %v5849
        %v6109 = vunpack.c.h.b16 %v5849
        %v6110 = vunpack.c.l.b16 %v5850
        %v6111 = vunpack.c.h.b16 %v5850
        %v6112 = vunpack.c.l.b16 %v5851
        %v6113 = vunpack.c.h.b16 %v5851
        %v6114 = vunpack.c.l.b16 %v5852
        %v6115 = vunpack.c.h.b16 %v5852
        %v6116 = vunpack.c.l.b16 %v5853
        %v6117 = vunpack.c.h.b16 %v5853
        %v6118 = vunpack.c.l.b16 %v5854
        %v6119 = vunpack.c.h.b16 %v5854
        %v6120 = vunpack.c.l.b16 %v5855
        %v6121 = vunpack.c.h.b16 %v5855
        %v6122 = vunpack.c.l.b16 %v5856
        %v6123 = vunpack.c.h.b16 %v5856
        %v6124 = vunpack.c.l.b16 %v5857
        %v6125 = vunpack.c.h.b16 %v5857
        %v6126 = vunpack.c.l.b16 %v5858
        %v6127 = vunpack.c.h.b16 %v5858
        %v6128 = vunpack.c.l.b16 %v5859
        %v6129 = vunpack.c.h.b16 %v5859
        %v6130 = vunpack.c.l.b16 %v5860
        %v6131 = vunpack.c.h.b16 %v5860
        %v6132 = vunpack.c.l.b16 %v5861
        %v6133 = vunpack.c.h.b16 %v5861
        %v6134 = vunpack.c.l.b16 %v5862
        %v6135 = vunpack.c.h.b16 %v5862
        %v6136 = vunpack.c.l.b16 %v5863
        %v6137 = vunpack.c.h.b16 %v5863
        %v6138 = vunpack.c.l.b16 %v5864
        %v6139 = vunpack.c.h.b16 %v5864
        %v6140 = vunpack.c.l.b16 %v5865
        %v6141 = vunpack.c.h.b16 %v5865
        %v6142 = vunpack.c.l.b16 %v5866
        %v6143 = vunpack.c.h.b16 %v5866
        %v6144 = vunpack.c.l.b16 %v5867
        %v6145 = vunpack.c.h.b16 %v5867
        %v6146 = vunpack.c.l.b16 %v5868
        %v6147 = vunpack.c.h.b16 %v5868
        %v6148 = vunpack.c.l.b16 %v5869
        %v6149 = vunpack.c.h.b16 %v5869
        %v6150 = vunpack.c.l.b16 %v5870
        %v6151 = vunpack.c.h.b16 %v5870
        %v6152 = vunpack.c.l.b16 %v5871
        %v6153 = vunpack.c.h.b16 %v5871
        %v6154 = vunpack.c.l.b16 %v5872
        %v6155 = vunpack.c.h.b16 %v5872
        %v6156 = vunpack.c.l.b16 %v5873
        %v6157 = vunpack.c.h.b16 %v5873
        %v6158 = vunpack.c.l.b16 %v5874
        %v6159 = vunpack.c.h.b16 %v5874
        %v6160 = vunpack.c.l.b16 %v5875
        %v6161 = vunpack.c.h.b16 %v5875
        %v6162 = vunpack.c.l.b16 %v5876
        %v6163 = vunpack.c.h.b16 %v5876
        %v6164 = vunpack.c.l.b16 %v5877
        %v6165 = vunpack.c.h.b16 %v5877
        %v6166 = vunpack.c.l.b16 %v5878
        %v6167 = vunpack.c.h.b16 %v5878
        %v6168 = vunpack.c.l.b16 %v5879
        %v6169 = vunpack.c.h.b16 %v5879
        %v6170 = vunpack.c.l.b16 %v5880
        %v6171 = vunpack.c.h.b16 %v5880
        %v6172 = vunpack.c.l.b16 %v5881
        %v6173 = vunpack.c.h.b16 %v5881
        %v6174 = vunpack.c.l.b16 %v5882
        %v6175 = vunpack.c.h.b16 %v5882
        %v6176 = vunpack.c.l.b16 %v5883
        %v6177 = vunpack.c.h.b16 %v5883
        %v6178 = vunpack.c.l.b16 %v5884
        %v6179 = vunpack.c.h.b16 %v5884
        %v6180 = vunpack.c.l.b16 %v5885
        %v6181 = vunpack.c.h.b16 %v5885
        %v6182 = vunpack.c.l.b16 %v5886
        %v6183 = vunpack.c.h.b16 %v5886
        %v6184 = vunpack.c.l.b16 %v5887
        %v6185 = vunpack.c.h.b16 %v5887
        %v6186 = vunpack.c.l.b16 %v5888
        %v6187 = vunpack.c.h.b16 %v5888
        %v6188 = vunpack.c.l.b16 %v5889
        %v6189 = vunpack.c.h.b16 %v5889
        %v6190 = vunpack.c.l.b16 %v5890
        %v6191 = vunpack.c.h.b16 %v5890
        %v6192 = vunpack.c.l.b16 %v5891
        %v6193 = vunpack.c.h.b16 %v5891
        %v6194 = vunpack.c.l.b16 %v5892
        %v6195 = vunpack.c.h.b16 %v5892
        %v6196 = vunpack.c.l.b16 %v5893
        %v6197 = vunpack.c.h.b16 %v5893
        %v6198 = vunpack.c.l.b16 %v5894
        %v6199 = vunpack.c.h.b16 %v5894
        %v6200 = vunpack.c.l.b16 %v5895
        %v6201 = vunpack.c.h.b16 %v5895
        %v6202 = vunpack.c.l.b16 %v5896
        %v6203 = vunpack.c.h.b16 %v5896
        %v6204 = vunpack.c.l.b16 %v5897
        %v6205 = vunpack.c.h.b16 %v5897
        %v6206 = vunpack.c.l.b16 %v5898
        %v6207 = vunpack.c.h.b16 %v5898
        %v6208 = vunpack.c.l.b16 %v5899
        %v6209 = vunpack.c.h.b16 %v5899
        %v6210 = vunpack.c.l.b16 %v5900
        %v6211 = vunpack.c.h.b16 %v5900
        %v6212 = vunpack.c.l.b16 %v5901
        %v6213 = vunpack.c.h.b16 %v5901
        %v6214 = vunpack.c.l.b16 %v5902
        %v6215 = vunpack.c.h.b16 %v5902
        %v6216 = vunpack.c.l.b16 %v5903
        %v6217 = vunpack.c.h.b16 %v5903
        %v6218 = vunpack.c.l.b16 %v5904
        %v6219 = vunpack.c.h.b16 %v5904
        %v6220 = vunpack.c.l.b16 %v5905
        %v6221 = vunpack.c.h.b16 %v5905
        %v6222 = vunpack.c.l.b16 %v5906
        %v6223 = vunpack.c.h.b16 %v5906
        %v6224 = vunpack.c.l.b16 %v5907
        %v6225 = vunpack.c.h.b16 %v5907
        %v6226 = vunpack.c.l.b16 %v5908
        %v6227 = vunpack.c.h.b16 %v5908
        %v6228 = vunpack.c.l.b16 %v5909
        %v6229 = vunpack.c.h.b16 %v5909
        %v6230 = vunpack.c.l.b16 %v5910
        %v6231 = vunpack.c.h.b16 %v5910
        %v6232 = vunpack.c.l.b16 %v5911
        %v6233 = vunpack.c.h.b16 %v5911
        %v6234 = vunpack.c.l.b16 %v5912
        %v6235 = vunpack.c.h.b16 %v5912
        %v6236 = vunpack.c.l.b16 %v5913
        %v6237 = vunpack.c.h.b16 %v5913
        %v6238 = vunpack.c.l.b16 %v5914
        %v6239 = vunpack.c.h.b16 %v5914
        %v6240 = vunpack.c.l.b16 %v5915
        %v6241 = vunpack.c.h.b16 %v5915
        %v6242 = vunpack.c.l.b16 %v5916
        %v6243 = vunpack.c.h.b16 %v5916
        %v6244 = vunpack.c.l.b16 %v5917
        %v6245 = vunpack.c.h.b16 %v5917
        %v6246 = vunpack.c.l.b16 %v5918
        %v6247 = vunpack.c.h.b16 %v5918
        %v6248 = vunpack.c.l.b16 %v5919
        %v6249 = vunpack.c.h.b16 %v5919
        %v6250 = vunpack.c.l.b16 %v5920
        %v6251 = vunpack.c.h.b16 %v5920
        %v6252 = vunpack.c.l.b16 %v5921
        %v6253 = vunpack.c.h.b16 %v5921
        %v6254 = vunpack.c.l.b16 %v5922
        %v6255 = vunpack.c.h.b16 %v5922
        %v6256 = vunpack.c.l.b16 %v5923
        %v6257 = vunpack.c.h.b16 %v5923
        %v6258 = vunpack.c.l.b16 %v5924
        %v6259 = vunpack.c.h.b16 %v5924
        %v6260 = vunpack.c.l.b16 %v5925
        %v6261 = vunpack.c.h.b16 %v5925
        %v6262 = vunpack.c.l.b16 %v5926
        %v6263 = vunpack.c.h.b16 %v5926
        %v6264 = vunpack.c.l.b16 %v5927
        %v6265 = vunpack.c.h.b16 %v5927
        %v6266 = vunpack.c.l.b16 %v5928
        %v6267 = vunpack.c.h.b16 %v5928
        %v6268 = vunpack.c.l.b16 %v5929
        %v6269 = vunpack.c.h.b16 %v5929
        %v6270 = vunpack.c.l.b16 %v5930
        %v6271 = vunpack.c.h.b16 %v5930
        %v6272 = vunpack.c.l.b16 %v5931
        %v6273 = vunpack.c.h.b16 %v5931
        %v6274 = vunpack.c.l.b16 %v5932
        %v6275 = vunpack.c.h.b16 %v5932
        %v6276 = vunpack.c.l.b16 %v5933
        %v6277 = vunpack.c.h.b16 %v5933
        %v6278 = vunpack.c.l.b16 %v5934
        %v6279 = vunpack.c.h.b16 %v5934
        %v6280 = vunpack.c.l.b16 %v5935
        %v6281 = vunpack.c.h.b16 %v5935
        %v6282 = vunpack.c.l.b16 %v5936
        %v6283 = vunpack.c.h.b16 %v5936
        %v6284 = vunpack.c.l.b16 %v5937
        %v6285 = vunpack.c.h.b16 %v5937
        %v6286 = vunpack.c.l.b16 %v5938
        %v6287 = vunpack.c.h.b16 %v5938
        %v6288 = vunpack.c.l.b16 %v5939
        %v6289 = vunpack.c.h.b16 %v5939
        %v6290 = vunpack.c.l.b16 %v5940
        %v6291 = vunpack.c.h.b16 %v5940
        %v6292 = vunpack.c.l.b16 %v5941
        %v6293 = vunpack.c.h.b16 %v5941
        %v6294 = vunpack.c.l.b16 %v5942
        %v6295 = vunpack.c.h.b16 %v5942
        %v6296 = vunpack.c.l.b16 %v5943
        %v6297 = vunpack.c.h.b16 %v5943
        %v6298 = vunpack.c.l.b16 %v5944
        %v6299 = vunpack.c.h.b16 %v5944
        %v6300 = vunpack.c.l.b16 %v5945
        %v6301 = vunpack.c.h.b16 %v5945
        %v6302 = vunpack.c.l.b16 %v5946
        %v6303 = vunpack.c.h.b16 %v5946
        %v6304 = vunpack.c.l.b16 %v5947
        %v6305 = vunpack.c.h.b16 %v5947
        %v6306 = vunpack.c.l.b16 %v5948
        %v6307 = vunpack.c.h.b16 %v5948
        %v6308 = vunpack.c.l.b16 %v5949
        %v6309 = vunpack.c.h.b16 %v5949
        %v6310 = vunpack.c.l.b16 %v5950
        %v6311 = vunpack.c.h.b16 %v5950
        %v6312 = vunpack.c.l.b16 %v5951
        %v6313 = vunpack.c.h.b16 %v5951
        %v6314 = vunpack.c.l.b16 %v5952
        %v6315 = vunpack.c.h.b16 %v5952
        %v6316 = vunpack.c.l.b16 %v5953
        %v6317 = vunpack.c.h.b16 %v5953
        %v6318 = vunpack.c.l.b16 %v5954
        %v6319 = vunpack.c.h.b16 %v5954
        %v6320 = vunpack.c.l.b16 %v5955
        %v6321 = vunpack.c.h.b16 %v5955
        %v6322 = vunpack.c.l.b16 %v5956
        %v6323 = vunpack.c.h.b16 %v5956
        %v6324 = vunpack.c.l.b16 %v5957
        %v6325 = vunpack.c.h.b16 %v5957
        %v6326 = vunpack.c.l.b16 %v5958
        %v6327 = vunpack.c.h.b16 %v5958
        %v6328 = vunpack.c.l.b16 %v5959
        %v6329 = vunpack.c.h.b16 %v5959
        %v6330 = vunpack.c.l.b16 %v5960
        %v6331 = vunpack.c.h.b16 %v5960
        %v6332 = vunpack.c.l.b16 %v5961
        %v6333 = vunpack.c.h.b16 %v5961
        %v6334 = vunpack.c.l.b16 %v5962
        %v6335 = vunpack.c.h.b16 %v5962
        %v6336 = vunpack.c.l.b16 %v5963
        %v6337 = vunpack.c.h.b16 %v5963
        %v6338 = vunpack.c.l.b16 %v5964
        %v6339 = vunpack.c.h.b16 %v5964
        %v6340 = vunpack.c.l.b16 %v5965
        %v6341 = vunpack.c.h.b16 %v5965
        %v6342 = vunpack.c.l.b16 %v5966
        %v6343 = vunpack.c.h.b16 %v5966
        %v6344 = vunpack.c.l.b16 %v5967
        %v6345 = vunpack.c.h.b16 %v5967
        %v6346 = vunpack.c.l.b16 %v5968
        %v6347 = vunpack.c.h.b16 %v5968
        %v6348 = vunpack.c.l.b16 %v5969
        %v6349 = vunpack.c.h.b16 %v5969
        %v6350 = vunpack.c.l.b16 %v5970
        %v6351 = vunpack.c.h.b16 %v5970
        %v6352 = vunpack.c.l.b16 %v5971
        %v6353 = vunpack.c.h.b16 %v5971
        %v6354 = vunpack.c.l.b16 %v5972
        %v6355 = vunpack.c.h.b16 %v5972
        %v6356 = vunpack.c.l.b16 %v5973
        %v6357 = vunpack.c.h.b16 %v5973
        %v6358 = vpack.c.b16 %v6106, %v6102
        %v6359 = vpack.c.b16 %v6107, %v6103
        %v6360 = vpack.c.b16 %v6108, %v6104
        %v6361 = vpack.c.b16 %v6109, %v6105
        %v6362 = vpack.c.b16 %v6114, %v6110
        %v6363 = vpack.c.b16 %v6115, %v6111
        %v6364 = vpack.c.b16 %v6116, %v6112
        %v6365 = vpack.c.b16 %v6117, %v6113
        %v6366 = vpack.c.b16 %v6122, %v6118
        %v6367 = vpack.c.b16 %v6123, %v6119
        %v6368 = vpack.c.b16 %v6124, %v6120
        %v6369 = vpack.c.b16 %v6125, %v6121
        %v6370 = vpack.c.b16 %v6130, %v6126
        %v6371 = vpack.c.b16 %v6131, %v6127
        %v6372 = vpack.c.b16 %v6132, %v6128
        %v6373 = vpack.c.b16 %v6133, %v6129
        %v6374 = vpack.c.b16 %v6138, %v6134
        %v6375 = vpack.c.b16 %v6139, %v6135
        %v6376 = vpack.c.b16 %v6140, %v6136
        %v6377 = vpack.c.b16 %v6141, %v6137
        %v6378 = vpack.c.b16 %v6146, %v6142
        %v6379 = vpack.c.b16 %v6147, %v6143
        %v6380 = vpack.c.b16 %v6148, %v6144
        %v6381 = vpack.c.b16 %v6149, %v6145
        %v6382 = vpack.c.b16 %v6154, %v6150
        %v6383 = vpack.c.b16 %v6155, %v6151
        %v6384 = vpack.c.b16 %v6156, %v6152
        %v6385 = vpack.c.b16 %v6157, %v6153
        %v6386 = vpack.c.b16 %v6162, %v6158
        %v6387 = vpack.c.b16 %v6163, %v6159
        %v6388 = vpack.c.b16 %v6164, %v6160
        %v6389 = vpack.c.b16 %v6165, %v6161
        %v6390 = vpack.c.b16 %v6170, %v6166
        %v6391 = vpack.c.b16 %v6171, %v6167
        %v6392 = vpack.c.b16 %v6172, %v6168
        %v6393 = vpack.c.b16 %v6173, %v6169
        %v6394 = vpack.c.b16 %v6178, %v6174
        %v6395 = vpack.c.b16 %v6179, %v6175
        %v6396 = vpack.c.b16 %v6180, %v6176
        %v6397 = vpack.c.b16 %v6181, %v6177
        %v6398 = vpack.c.b16 %v6186, %v6182
        %v6399 = vpack.c.b16 %v6187, %v6183
        %v6400 = vpack.c.b16 %v6188, %v6184
        %v6401 = vpack.c.b16 %v6189, %v6185
        %v6402 = vpack.c.b16 %v6194, %v6190
        %v6403 = vpack.c.b16 %v6195, %v6191
        %v6404 = vpack.c.b16 %v6196, %v6192
        %v6405 = vpack.c.b16 %v6197, %v6193
        %v6406 = vpack.c.b16 %v6202, %v6198
        %v6407 = vpack.c.b16 %v6203, %v6199
        %v6408 = vpack.c.b16 %v6204, %v6200
        %v6409 = vpack.c.b16 %v6205, %v6201
        %v6410 = vpack.c.b16 %v6210, %v6206
        %v6411 = vpack.c.b16 %v6211, %v6207
        %v6412 = vpack.c.b16 %v6212, %v6208
        %v6413 = vpack.c.b16 %v6213, %v6209
        %v6414 = vpack.c.b16 %v6218, %v6214
        %v6415 = vpack.c.b16 %v6219, %v6215
        %v6416 = vpack.c.b16 %v6220, %v6216
        %v6417 = vpack.c.b16 %v6221, %v6217
        %v6418 = vpack.c.b16 %v6226, %v6222
        %v6419 = vpack.c.b16 %v6227, %v6223
        %v6420 = vpack.c.b16 %v6228, %v6224
        %v6421 = vpack.c.b16 %v6229, %v6225
        %v6422 = vpack.c.b16 %v6234, %v6230
        %v6423 = vpack.c.b16 %v6235, %v6231
        %v6424 = vpack.c.b16 %v6236, %v6232
        %v6425 = vpack.c.b16 %v6237, %v6233
        %v6426 = vpack.c.b16 %v6242, %v6238
        %v6427 = vpack.c.b16 %v6243, %v6239
        %v6428 = vpack.c.b16 %v6244, %v6240
        %v6429 = vpack.c.b16 %v6245, %v6241
        %v6430 = vpack.c.b16 %v6250, %v6246
        %v6431 = vpack.c.b16 %v6251, %v6247
        %v6432 = vpack.c.b16 %v6252, %v6248
        %v6433 = vpack.c.b16 %v6253, %v6249
        %v6434 = vpack.c.b16 %v6258, %v6254
        %v6435 = vpack.c.b16 %v6259, %v6255
        %v6436 = vpack.c.b16 %v6260, %v6256
        %v6437 = vpack.c.b16 %v6261, %v6257
        %v6438 = vpack.c.b16 %v6266, %v6262
        %v6439 = vpack.c.b16 %v6267, %v6263
        %v6440 = vpack.c.b16 %v6268, %v6264
        %v6441 = vpack.c.b16 %v6269, %v6265
        %v6442 = vpack.c.b16 %v6274, %v6270
        %v6443 = vpack.c.b16 %v6275, %v6271
        %v6444 = vpack.c.b16 %v6276, %v6272
        %v6445 = vpack.c.b16 %v6277, %v6273
        %v6446 = vpack.c.b16 %v6282, %v6278
        %v6447 = vpack.c.b16 %v6283, %v6279
        %v6448 = vpack.c.b16 %v6284, %v6280
        %v6449 = vpack.c.b16 %v6285, %v6281
        %v6450 = vpack.c.b16 %v6290, %v6286
        %v6451 = vpack.c.b16 %v6291, %v6287
        %v6452 = vpack.c.b16 %v6292, %v6288
        %v6453 = vpack.c.b16 %v6293, %v6289
        %v6454 = vpack.c.b16 %v6298, %v6294
        %v6455 = vpack.c.b16 %v6299, %v6295
        %v6456 = vpack.c.b16 %v6300, %v6296
        %v6457 = vpack.c.b16 %v6301, %v6297
        %v6458 = vpack.c.b16 %v6306, %v6302
        %v6459 = vpack.c.b16 %v6307, %v6303
        %v6460 = vpack.c.b16 %v6308, %v6304
        %v6461 = vpack.c.b16 %v6309, %v6305
        %v6462 = vpack.c.b16 %v6314, %v6310
        %v6463 = vpack.c.b16 %v6315, %v6311
        %v6464 = vpack.c.b16 %v6316, %v6312
        %v6465 = vpack.c.b16 %v6317, %v6313
        %v6466 = vpack.c.b16 %v6322, %v6318
        %v6467 = vpack.c.b16 %v6323, %v6319
        %v6468 = vpack.c.b16 %v6324, %v6320
        %v6469 = vpack.c.b16 %v6325, %v6321
        %v6470 = vpack.c.b16 %v6330, %v6326
        %v6471 = vpack.c.b16 %v6331, %v6327
        %v6472 = vpack.c.b16 %v6332, %v6328
        %v6473 = vpack.c.b16 %v6333, %v6329
        %v6474 = vpack.c.b16 %v6338, %v6334
        %v6475 = vpack.c.b16 %v6339, %v6335
        %v6476 = vpack.c.b16 %v6340, %v6336
        %v6477 = vpack.c.b16 %v6341, %v6337
        %v6478 = vpack.c.b16 %v6346, %v6342
        %v6479 = vpack.c.b16 %v6347, %v6343
        %v6480 = vpack.c.b16 %v6348, %v6344
        %v6481 = vpack.c.b16 %v6349, %v6345
        %v6482 = vpack.c.b16 %v6354, %v6350
        %v6483 = vpack.c.b16 %v6355, %v6351
        %v6484 = vpack.c.b16 %v6356, %v6352
        %v6485 = vpack.c.b16 %v6357, %v6353
        %6614 = vmatprep.subr.bf16.mxu0 %v6359
        %6615 = vmatpush1.bf16.msra.mxu0 %v6358
        %6616 = vmatprep.subr.bf16.mxu0 %v6363
        %6617 = vmatpush1.bf16.msra.mxu0 %v6362
        %6618 = vmatprep.subr.bf16.mxu0 %v6367
        %6619 = vmatpush1.bf16.msra.mxu0 %v6366
        %6620 = vmatprep.subr.bf16.mxu0 %v6371
        %6621 = vmatpush1.bf16.msra.mxu0 %v6370
        %6622 = vmatprep.subr.bf16.mxu0 %v6375
        %6623 = vmatpush1.bf16.msra.mxu0 %v6374
        %6624 = vmatprep.subr.bf16.mxu0 %v6379
        %6625 = vmatpush1.bf16.msra.mxu0 %v6378
        %6626 = vmatprep.subr.bf16.mxu0 %v6383
        %6627 = vmatpush1.bf16.msra.mxu0 %v6382
        %6628 = vmatprep.subr.bf16.mxu0 %v6387
        %6629 = vmatpush1.bf16.msra.mxu0 %v6386
        %6630 = vmatprep.subr.bf16.mxu0 %v6391
        %6631 = vmatpush1.bf16.msra.mxu0 %v6390
        %6632 = vmatprep.subr.bf16.mxu0 %v6395
        %6633 = vmatpush1.bf16.msra.mxu0 %v6394
        %6634 = vmatprep.subr.bf16.mxu0 %v6399
        %6635 = vmatpush1.bf16.msra.mxu0 %v6398
        %6636 = vmatprep.subr.bf16.mxu0 %v6403
        %6637 = vmatpush1.bf16.msra.mxu0 %v6402
        %6638 = vmatprep.subr.bf16.mxu0 %v6407
        %6639 = vmatpush1.bf16.msra.mxu0 %v6406
        %6640 = vmatprep.subr.bf16.mxu0 %v6411
        %6641 = vmatpush1.bf16.msra.mxu0 %v6410
        %6642 = vmatprep.subr.bf16.mxu0 %v6415
        %6643 = vmatpush1.bf16.msra.mxu0 %v6414
        %6644 = vmatprep.subr.bf16.mxu0 %v6419
        %6645 = vmatpush1.bf16.msra.mxu0 %v6418
        %6646 = vmatprep.mubr.bf16.mxu0 %v5842
        %6647 = vmatmul.mubr.bf16.gmra.mrb[0].mxu0 %v5841
        %v6648 = vpop.f32.mrb[0].mxu0
        %v6649 = vadd.f32 0.0, %v6648
        %v6650 = vpop.f32.mrb[0].mxu0
        %v6651 = vadd.f32 0.0, %v6650
        %v6652 = vpop.f32.mrb[0].mxu0
        %v6653 = vadd.f32 0.0, %v6652
        %v6654 = vpop.f32.mrb[0].mxu0
        %v6655 = vadd.f32 0.0, %v6654
        %6656 = vdwg.mxu0
        %6657 = vmatprep.subr.bf16.mxu0 %v6423
        %6658 = vmatpush1.bf16.msra.mxu0 %v6422
        %6659 = vmatprep.subr.bf16.mxu0 %v6427
        %6660 = vmatpush1.bf16.msra.mxu0 %v6426
        %6661 = vmatprep.subr.bf16.mxu0 %v6431
        %6662 = vmatpush1.bf16.msra.mxu0 %v6430
        %6663 = vmatprep.subr.bf16.mxu0 %v6435
        %6664 = vmatpush1.bf16.msra.mxu0 %v6434
        %6665 = vmatprep.subr.bf16.mxu0 %v6439
        %6666 = vmatpush1.bf16.msra.mxu0 %v6438
        %6667 = vmatprep.subr.bf16.mxu0 %v6443
        %6668 = vmatpush1.bf16.msra.mxu0 %v6442
        %6669 = vmatprep.subr.bf16.mxu0 %v6447
        %6670 = vmatpush1.bf16.msra.mxu0 %v6446
        %6671 = vmatprep.subr.bf16.mxu0 %v6451
        %6672 = vmatpush1.bf16.msra.mxu0 %v6450
        %6673 = vmatprep.subr.bf16.mxu0 %v6455
        %6674 = vmatpush1.bf16.msra.mxu0 %v6454
        %6675 = vmatprep.subr.bf16.mxu0 %v6459
        %6676 = vmatpush1.bf16.msra.mxu0 %v6458
        %6677 = vmatprep.subr.bf16.mxu0 %v6463
        %6678 = vmatpush1.bf16.msra.mxu0 %v6462
        %6679 = vmatprep.subr.bf16.mxu0 %v6467
        %6680 = vmatpush1.bf16.msra.mxu0 %v6466
        %6681 = vmatprep.subr.bf16.mxu0 %v6471
        %6682 = vmatpush1.bf16.msra.mxu0 %v6470
        %6683 = vmatprep.subr.bf16.mxu0 %v6475
        %6684 = vmatpush1.bf16.msra.mxu0 %v6474
        %6685 = vmatprep.subr.bf16.mxu0 %v6479
        %6686 = vmatpush1.bf16.msra.mxu0 %v6478
        %6687 = vmatprep.subr.bf16.mxu0 %v6483
        %6688 = vmatpush1.bf16.msra.mxu0 %v6482
        %6689 = vmatprep.mubr.bf16.mxu0 %v5844
        %6690 = vmatmul.mubr.bf16.gmra.mrb[0].mxu0 %v5843
        %v6691 = vpop.f32.mrb[0].mxu0
        %v6692 = vadd.f32 %v6649, %v6691
        %v6693 = vpop.f32.mrb[0].mxu0
        %v6694 = vadd.f32 %v6651, %v6693
        %v6695 = vpop.f32.mrb[0].mxu0
        %v6696 = vadd.f32 %v6653, %v6695
        %v6697 = vpop.f32.mrb[0].mxu0
        %v6698 = vadd.f32 %v6655, %v6697
        %6699 = vdwg.mxu0
        %6700 = vmatprep.subr.bf16.mxu0 %v6361
        %6701 = vmatpush1.bf16.msra.mxu0 %v6360
        %6702 = vmatprep.subr.bf16.mxu0 %v6365
        %6703 = vmatpush1.bf16.msra.mxu0 %v6364
        %6704 = vmatprep.subr.bf16.mxu0 %v6369
        %6705 = vmatpush1.bf16.msra.mxu0 %v6368
        %6706 = vmatprep.subr.bf16.mxu0 %v6373
        %6707 = vmatpush1.bf16.msra.mxu0 %v6372
        %6708 = vmatprep.subr.bf16.mxu0 %v6377
        %6709 = vmatpush1.bf16.msra.mxu0 %v6376
        %6710 = vmatprep.subr.bf16.mxu0 %v6381
        %6711 = vmatpush1.bf16.msra.mxu0 %v6380
        %6712 = vmatprep.subr.bf16.mxu0 %v6385
        %6713 = vmatpush1.bf16.msra.mxu0 %v6384
        %6714 = vmatprep.subr.bf16.mxu0 %v6389
        %6715 = vmatpush1.bf16.msra.mxu0 %v6388
        %6716 = vmatprep.subr.bf16.mxu0 %v6393
        %6717 = vmatpush1.bf16.msra.mxu0 %v6392
        %6718 = vmatprep.subr.bf16.mxu0 %v6397
        %6719 = vmatpush1.bf16.msra.mxu0 %v6396
        %6720 = vmatprep.subr.bf16.mxu0 %v6401
        %6721 = vmatpush1.bf16.msra.mxu0 %v6400
        %6722 = vmatprep.subr.bf16.mxu0 %v6405
        %6723 = vmatpush1.bf16.msra.mxu0 %v6404
        %6724 = vmatprep.subr.bf16.mxu0 %v6409
        %6725 = vmatpush1.bf16.msra.mxu0 %v6408
        %6726 = vmatprep.subr.bf16.mxu0 %v6413
        %6727 = vmatpush1.bf16.msra.mxu0 %v6412
        %6728 = vmatprep.subr.bf16.mxu0 %v6417
        %6729 = vmatpush1.bf16.msra.mxu0 %v6416
        %6730 = vmatprep.subr.bf16.mxu0 %v6421
        %6731 = vmatpush1.bf16.msra.mxu0 %v6420
        %6732 = vmatprep.mubr.bf16.mxu0 %v5842
        %6733 = vmatmul.mubr.bf16.gmra.mrb[0].mxu0 %v5841
        %v6734 = vpop.f32.mrb[0].mxu0
        %v6735 = vadd.f32 0.0, %v6734
        %v6736 = vpop.f32.mrb[0].mxu0
        %v6737 = vadd.f32 0.0, %v6736
        %v6738 = vpop.f32.mrb[0].mxu0
        %v6739 = vadd.f32 0.0, %v6738
        %v6740 = vpop.f32.mrb[0].mxu0
        %v6741 = vadd.f32 0.0, %v6740
        %6742 = vdwg.mxu0
        %6743 = vmatprep.subr.bf16.mxu0 %v6425
        %6744 = vmatpush1.bf16.msra.mxu0 %v6424
        %6745 = vmatprep.subr.bf16.mxu0 %v6429
        %6746 = vmatpush1.bf16.msra.mxu0 %v6428
        %6747 = vmatprep.subr.bf16.mxu0 %v6433
        %6748 = vmatpush1.bf16.msra.mxu0 %v6432
        %6749 = vmatprep.subr.bf16.mxu0 %v6437
        %6750 = vmatpush1.bf16.msra.mxu0 %v6436
        %6751 = vmatprep.subr.bf16.mxu0 %v6441
        %6752 = vmatpush1.bf16.msra.mxu0 %v6440
        %6753 = vmatprep.subr.bf16.mxu0 %v6445
        %6754 = vmatpush1.bf16.msra.mxu0 %v6444
        %6755 = vmatprep.subr.bf16.mxu0 %v6449
        %6756 = vmatpush1.bf16.msra.mxu0 %v6448
        %6757 = vmatprep.subr.bf16.mxu0 %v6453
        %6758 = vmatpush1.bf16.msra.mxu0 %v6452
        %6759 = vmatprep.subr.bf16.mxu0 %v6457
        %6760 = vmatpush1.bf16.msra.mxu0 %v6456
        %6761 = vmatprep.subr.bf16.mxu0 %v6461
        %6762 = vmatpush1.bf16.msra.mxu0 %v6460
        %6763 = vmatprep.subr.bf16.mxu0 %v6465
        %6764 = vmatpush1.bf16.msra.mxu0 %v6464
        %6765 = vmatprep.subr.bf16.mxu0 %v6469
        %6766 = vmatpush1.bf16.msra.mxu0 %v6468
        %6767 = vmatprep.subr.bf16.mxu0 %v6473
        %6768 = vmatpush1.bf16.msra.mxu0 %v6472
        %6769 = vmatprep.subr.bf16.mxu0 %v6477
        %6770 = vmatpush1.bf16.msra.mxu0 %v6476
        %6771 = vmatprep.subr.bf16.mxu0 %v6481
        %6772 = vmatpush1.bf16.msra.mxu0 %v6480
        %6773 = vmatprep.subr.bf16.mxu0 %v6485
        %6774 = vmatpush1.bf16.msra.mxu0 %v6484
        %6775 = vmatprep.mubr.bf16.mxu0 %v5844
        %6776 = vmatmul.mubr.bf16.gmra.mrb[0].mxu0 %v5843
        %v6777 = vpop.f32.mrb[0].mxu0
        %v6778 = vadd.f32 %v6735, %v6777
        %v6779 = vpop.f32.mrb[0].mxu0
        %v6780 = vadd.f32 %v6737, %v6779
        %v6781 = vpop.f32.mrb[0].mxu0
        %v6782 = vadd.f32 %v6739, %v6781
        %v6783 = vpop.f32.mrb[0].mxu0
        %v6784 = vadd.f32 %v6741, %v6783
        %6785 = vdwg.mxu0
        %v6914 = vunpack.c.l.b16 %v5713
        %v6915 = vunpack.c.h.b16 %v5713
        %v6916 = vunpack.c.l.b16 %v5714
        %v6917 = vunpack.c.h.b16 %v5714
        %v6918 = vunpack.c.l.b16 %v5715
        %v6919 = vunpack.c.h.b16 %v5715
        %v6920 = vunpack.c.l.b16 %v5716
        %v6921 = vunpack.c.h.b16 %v5716
        %v6922 = vunpack.c.l.b16 %v5717
        %v6923 = vunpack.c.h.b16 %v5717
        %v6924 = vunpack.c.l.b16 %v5718
        %v6925 = vunpack.c.h.b16 %v5718
        %v6926 = vunpack.c.l.b16 %v5719
        %v6927 = vunpack.c.h.b16 %v5719
        %v6928 = vunpack.c.l.b16 %v5720
        %v6929 = vunpack.c.h.b16 %v5720
        %v6930 = vunpack.c.l.b16 %v5721
        %v6931 = vunpack.c.h.b16 %v5721
        %v6932 = vunpack.c.l.b16 %v5722
        %v6933 = vunpack.c.h.b16 %v5722
        %v6934 = vunpack.c.l.b16 %v5723
        %v6935 = vunpack.c.h.b16 %v5723
        %v6936 = vunpack.c.l.b16 %v5724
        %v6937 = vunpack.c.h.b16 %v5724
        %v6938 = vunpack.c.l.b16 %v5725
        %v6939 = vunpack.c.h.b16 %v5725
        %v6940 = vunpack.c.l.b16 %v5726
        %v6941 = vunpack.c.h.b16 %v5726
        %v6942 = vunpack.c.l.b16 %v5727
        %v6943 = vunpack.c.h.b16 %v5727
        %v6944 = vunpack.c.l.b16 %v5728
        %v6945 = vunpack.c.h.b16 %v5728
        %v6946 = vunpack.c.l.b16 %v5729
        %v6947 = vunpack.c.h.b16 %v5729
        %v6948 = vunpack.c.l.b16 %v5730
        %v6949 = vunpack.c.h.b16 %v5730
        %v6950 = vunpack.c.l.b16 %v5731
        %v6951 = vunpack.c.h.b16 %v5731
        %v6952 = vunpack.c.l.b16 %v5732
        %v6953 = vunpack.c.h.b16 %v5732
        %v6954 = vunpack.c.l.b16 %v5733
        %v6955 = vunpack.c.h.b16 %v5733
        %v6956 = vunpack.c.l.b16 %v5734
        %v6957 = vunpack.c.h.b16 %v5734
        %v6958 = vunpack.c.l.b16 %v5735
        %v6959 = vunpack.c.h.b16 %v5735
        %v6960 = vunpack.c.l.b16 %v5736
        %v6961 = vunpack.c.h.b16 %v5736
        %v6962 = vunpack.c.l.b16 %v5737
        %v6963 = vunpack.c.h.b16 %v5737
        %v6964 = vunpack.c.l.b16 %v5738
        %v6965 = vunpack.c.h.b16 %v5738
        %v6966 = vunpack.c.l.b16 %v5739
        %v6967 = vunpack.c.h.b16 %v5739
        %v6968 = vunpack.c.l.b16 %v5740
        %v6969 = vunpack.c.h.b16 %v5740
        %v6970 = vunpack.c.l.b16 %v5741
        %v6971 = vunpack.c.h.b16 %v5741
        %v6972 = vunpack.c.l.b16 %v5742
        %v6973 = vunpack.c.h.b16 %v5742
        %v6974 = vunpack.c.l.b16 %v5743
        %v6975 = vunpack.c.h.b16 %v5743
        %v6976 = vunpack.c.l.b16 %v5744
        %v6977 = vunpack.c.h.b16 %v5744
        %v6978 = vunpack.c.l.b16 %v5745
        %v6979 = vunpack.c.h.b16 %v5745
        %v6980 = vunpack.c.l.b16 %v5746
        %v6981 = vunpack.c.h.b16 %v5746
        %v6982 = vunpack.c.l.b16 %v5747
        %v6983 = vunpack.c.h.b16 %v5747
        %v6984 = vunpack.c.l.b16 %v5748
        %v6985 = vunpack.c.h.b16 %v5748
        %v6986 = vunpack.c.l.b16 %v5749
        %v6987 = vunpack.c.h.b16 %v5749
        %v6988 = vunpack.c.l.b16 %v5750
        %v6989 = vunpack.c.h.b16 %v5750
        %v6990 = vunpack.c.l.b16 %v5751
        %v6991 = vunpack.c.h.b16 %v5751
        %v6992 = vunpack.c.l.b16 %v5752
        %v6993 = vunpack.c.h.b16 %v5752
        %v6994 = vunpack.c.l.b16 %v5753
        %v6995 = vunpack.c.h.b16 %v5753
        %v6996 = vunpack.c.l.b16 %v5754
        %v6997 = vunpack.c.h.b16 %v5754
        %v6998 = vunpack.c.l.b16 %v5755
        %v6999 = vunpack.c.h.b16 %v5755
        %v7000 = vunpack.c.l.b16 %v5756
        %v7001 = vunpack.c.h.b16 %v5756
        %v7002 = vunpack.c.l.b16 %v5757
        %v7003 = vunpack.c.h.b16 %v5757
        %v7004 = vunpack.c.l.b16 %v5758
        %v7005 = vunpack.c.h.b16 %v5758
        %v7006 = vunpack.c.l.b16 %v5759
        %v7007 = vunpack.c.h.b16 %v5759
        %v7008 = vunpack.c.l.b16 %v5760
        %v7009 = vunpack.c.h.b16 %v5760
        %v7010 = vunpack.c.l.b16 %v5761
        %v7011 = vunpack.c.h.b16 %v5761
        %v7012 = vunpack.c.l.b16 %v5762
        %v7013 = vunpack.c.h.b16 %v5762
        %v7014 = vunpack.c.l.b16 %v5763
        %v7015 = vunpack.c.h.b16 %v5763
        %v7016 = vunpack.c.l.b16 %v5764
        %v7017 = vunpack.c.h.b16 %v5764
        %v7018 = vunpack.c.l.b16 %v5765
        %v7019 = vunpack.c.h.b16 %v5765
        %v7020 = vunpack.c.l.b16 %v5766
        %v7021 = vunpack.c.h.b16 %v5766
        %v7022 = vunpack.c.l.b16 %v5767
        %v7023 = vunpack.c.h.b16 %v5767
        %v7024 = vunpack.c.l.b16 %v5768
        %v7025 = vunpack.c.h.b16 %v5768
        %v7026 = vunpack.c.l.b16 %v5769
        %v7027 = vunpack.c.h.b16 %v5769
        %v7028 = vunpack.c.l.b16 %v5770
        %v7029 = vunpack.c.h.b16 %v5770
        %v7030 = vunpack.c.l.b16 %v5771
        %v7031 = vunpack.c.h.b16 %v5771
        %v7032 = vunpack.c.l.b16 %v5772
        %v7033 = vunpack.c.h.b16 %v5772
        %v7034 = vunpack.c.l.b16 %v5773
        %v7035 = vunpack.c.h.b16 %v5773
        %v7036 = vunpack.c.l.b16 %v5774
        %v7037 = vunpack.c.h.b16 %v5774
        %v7038 = vunpack.c.l.b16 %v5775
        %v7039 = vunpack.c.h.b16 %v5775
        %v7040 = vunpack.c.l.b16 %v5776
        %v7041 = vunpack.c.h.b16 %v5776
        %v7042 = vunpack.c.l.b16 %v5777
        %v7043 = vunpack.c.h.b16 %v5777
        %v7044 = vunpack.c.l.b16 %v5778
        %v7045 = vunpack.c.h.b16 %v5778
        %v7046 = vunpack.c.l.b16 %v5779
        %v7047 = vunpack.c.h.b16 %v5779
        %v7048 = vunpack.c.l.b16 %v5780
        %v7049 = vunpack.c.h.b16 %v5780
        %v7050 = vunpack.c.l.b16 %v5781
        %v7051 = vunpack.c.h.b16 %v5781
        %v7052 = vunpack.c.l.b16 %v5782
        %v7053 = vunpack.c.h.b16 %v5782
        %v7054 = vunpack.c.l.b16 %v5783
        %v7055 = vunpack.c.h.b16 %v5783
        %v7056 = vunpack.c.l.b16 %v5784
        %v7057 = vunpack.c.h.b16 %v5784
        %v7058 = vunpack.c.l.b16 %v5785
        %v7059 = vunpack.c.h.b16 %v5785
        %v7060 = vunpack.c.l.b16 %v5786
        %v7061 = vunpack.c.h.b16 %v5786
        %v7062 = vunpack.c.l.b16 %v5787
        %v7063 = vunpack.c.h.b16 %v5787
        %v7064 = vunpack.c.l.b16 %v5788
        %v7065 = vunpack.c.h.b16 %v5788
        %v7066 = vunpack.c.l.b16 %v5789
        %v7067 = vunpack.c.h.b16 %v5789
        %v7068 = vunpack.c.l.b16 %v5790
        %v7069 = vunpack.c.h.b16 %v5790
        %v7070 = vunpack.c.l.b16 %v5791
        %v7071 = vunpack.c.h.b16 %v5791
        %v7072 = vunpack.c.l.b16 %v5792
        %v7073 = vunpack.c.h.b16 %v5792
        %v7074 = vunpack.c.l.b16 %v5793
        %v7075 = vunpack.c.h.b16 %v5793
        %v7076 = vunpack.c.l.b16 %v5794
        %v7077 = vunpack.c.h.b16 %v5794
        %v7078 = vunpack.c.l.b16 %v5795
        %v7079 = vunpack.c.h.b16 %v5795
        %v7080 = vunpack.c.l.b16 %v5796
        %v7081 = vunpack.c.h.b16 %v5796
        %v7082 = vunpack.c.l.b16 %v5797
        %v7083 = vunpack.c.h.b16 %v5797
        %v7084 = vunpack.c.l.b16 %v5798
        %v7085 = vunpack.c.h.b16 %v5798
        %v7086 = vunpack.c.l.b16 %v5799
        %v7087 = vunpack.c.h.b16 %v5799
        %v7088 = vunpack.c.l.b16 %v5800
        %v7089 = vunpack.c.h.b16 %v5800
        %v7090 = vunpack.c.l.b16 %v5801
        %v7091 = vunpack.c.h.b16 %v5801
        %v7092 = vunpack.c.l.b16 %v5802
        %v7093 = vunpack.c.h.b16 %v5802
        %v7094 = vunpack.c.l.b16 %v5803
        %v7095 = vunpack.c.h.b16 %v5803
        %v7096 = vunpack.c.l.b16 %v5804
        %v7097 = vunpack.c.h.b16 %v5804
        %v7098 = vunpack.c.l.b16 %v5805
        %v7099 = vunpack.c.h.b16 %v5805
        %v7100 = vunpack.c.l.b16 %v5806
        %v7101 = vunpack.c.h.b16 %v5806
        %v7102 = vunpack.c.l.b16 %v5807
        %v7103 = vunpack.c.h.b16 %v5807
        %v7104 = vunpack.c.l.b16 %v5808
        %v7105 = vunpack.c.h.b16 %v5808
        %v7106 = vunpack.c.l.b16 %v5809
        %v7107 = vunpack.c.h.b16 %v5809
        %v7108 = vunpack.c.l.b16 %v5810
        %v7109 = vunpack.c.h.b16 %v5810
        %v7110 = vunpack.c.l.b16 %v5811
        %v7111 = vunpack.c.h.b16 %v5811
        %v7112 = vunpack.c.l.b16 %v5812
        %v7113 = vunpack.c.h.b16 %v5812
        %v7114 = vunpack.c.l.b16 %v5813
        %v7115 = vunpack.c.h.b16 %v5813
        %v7116 = vunpack.c.l.b16 %v5814
        %v7117 = vunpack.c.h.b16 %v5814
        %v7118 = vunpack.c.l.b16 %v5815
        %v7119 = vunpack.c.h.b16 %v5815
        %v7120 = vunpack.c.l.b16 %v5816
        %v7121 = vunpack.c.h.b16 %v5816
        %v7122 = vunpack.c.l.b16 %v5817
        %v7123 = vunpack.c.h.b16 %v5817
        %v7124 = vunpack.c.l.b16 %v5818
        %v7125 = vunpack.c.h.b16 %v5818
        %v7126 = vunpack.c.l.b16 %v5819
        %v7127 = vunpack.c.h.b16 %v5819
        %v7128 = vunpack.c.l.b16 %v5820
        %v7129 = vunpack.c.h.b16 %v5820
        %v7130 = vunpack.c.l.b16 %v5821
        %v7131 = vunpack.c.h.b16 %v5821
        %v7132 = vunpack.c.l.b16 %v5822
        %v7133 = vunpack.c.h.b16 %v5822
        %v7134 = vunpack.c.l.b16 %v5823
        %v7135 = vunpack.c.h.b16 %v5823
        %v7136 = vunpack.c.l.b16 %v5824
        %v7137 = vunpack.c.h.b16 %v5824
        %v7138 = vunpack.c.l.b16 %v5825
        %v7139 = vunpack.c.h.b16 %v5825
        %v7140 = vunpack.c.l.b16 %v5826
        %v7141 = vunpack.c.h.b16 %v5826
        %v7142 = vunpack.c.l.b16 %v5827
        %v7143 = vunpack.c.h.b16 %v5827
        %v7144 = vunpack.c.l.b16 %v5828
        %v7145 = vunpack.c.h.b16 %v5828
        %v7146 = vunpack.c.l.b16 %v5829
        %v7147 = vunpack.c.h.b16 %v5829
        %v7148 = vunpack.c.l.b16 %v5830
        %v7149 = vunpack.c.h.b16 %v5830
        %v7150 = vunpack.c.l.b16 %v5831
        %v7151 = vunpack.c.h.b16 %v5831
        %v7152 = vunpack.c.l.b16 %v5832
        %v7153 = vunpack.c.h.b16 %v5832
        %v7154 = vunpack.c.l.b16 %v5833
        %v7155 = vunpack.c.h.b16 %v5833
        %v7156 = vunpack.c.l.b16 %v5834
        %v7157 = vunpack.c.h.b16 %v5834
        %v7158 = vunpack.c.l.b16 %v5835
        %v7159 = vunpack.c.h.b16 %v5835
        %v7160 = vunpack.c.l.b16 %v5836
        %v7161 = vunpack.c.h.b16 %v5836
        %v7162 = vunpack.c.l.b16 %v5837
        %v7163 = vunpack.c.h.b16 %v5837
        %v7164 = vunpack.c.l.b16 %v5838
        %v7165 = vunpack.c.h.b16 %v5838
        %v7166 = vunpack.c.l.b16 %v5839
        %v7167 = vunpack.c.h.b16 %v5839
        %v7168 = vunpack.c.l.b16 %v5840
        %v7169 = vunpack.c.h.b16 %v5840
        %v7170 = vpack.c.b16 %v6918, %v6914
        %v7171 = vpack.c.b16 %v6919, %v6915
        %v7172 = vpack.c.b16 %v6920, %v6916
        %v7173 = vpack.c.b16 %v6921, %v6917
        %v7174 = vpack.c.b16 %v6926, %v6922
        %v7175 = vpack.c.b16 %v6927, %v6923
        %v7176 = vpack.c.b16 %v6928, %v6924
        %v7177 = vpack.c.b16 %v6929, %v6925
        %v7178 = vpack.c.b16 %v6934, %v6930
        %v7179 = vpack.c.b16 %v6935, %v6931
        %v7180 = vpack.c.b16 %v6936, %v6932
        %v7181 = vpack.c.b16 %v6937, %v6933
        %v7182 = vpack.c.b16 %v6942, %v6938
        %v7183 = vpack.c.b16 %v6943, %v6939
        %v7184 = vpack.c.b16 %v6944, %v6940
        %v7185 = vpack.c.b16 %v6945, %v6941
        %v7186 = vpack.c.b16 %v6950, %v6946
        %v7187 = vpack.c.b16 %v6951, %v6947
        %v7188 = vpack.c.b16 %v6952, %v6948
        %v7189 = vpack.c.b16 %v6953, %v6949
        %v7190 = vpack.c.b16 %v6958, %v6954
        %v7191 = vpack.c.b16 %v6959, %v6955
        %v7192 = vpack.c.b16 %v6960, %v6956
        %v7193 = vpack.c.b16 %v6961, %v6957
        %v7194 = vpack.c.b16 %v6966, %v6962
        %v7195 = vpack.c.b16 %v6967, %v6963
        %v7196 = vpack.c.b16 %v6968, %v6964
        %v7197 = vpack.c.b16 %v6969, %v6965
        %v7198 = vpack.c.b16 %v6974, %v6970
        %v7199 = vpack.c.b16 %v6975, %v6971
        %v7200 = vpack.c.b16 %v6976, %v6972
        %v7201 = vpack.c.b16 %v6977, %v6973
        %v7202 = vpack.c.b16 %v6982, %v6978
        %v7203 = vpack.c.b16 %v6983, %v6979
        %v7204 = vpack.c.b16 %v6984, %v6980
        %v7205 = vpack.c.b16 %v6985, %v6981
        %v7206 = vpack.c.b16 %v6990, %v6986
        %v7207 = vpack.c.b16 %v6991, %v6987
        %v7208 = vpack.c.b16 %v6992, %v6988
        %v7209 = vpack.c.b16 %v6993, %v6989
        %v7210 = vpack.c.b16 %v6998, %v6994
        %v7211 = vpack.c.b16 %v6999, %v6995
        %v7212 = vpack.c.b16 %v7000, %v6996
        %v7213 = vpack.c.b16 %v7001, %v6997
        %v7214 = vpack.c.b16 %v7006, %v7002
        %v7215 = vpack.c.b16 %v7007, %v7003
        %v7216 = vpack.c.b16 %v7008, %v7004
        %v7217 = vpack.c.b16 %v7009, %v7005
        %v7218 = vpack.c.b16 %v7014, %v7010
        %v7219 = vpack.c.b16 %v7015, %v7011
        %v7220 = vpack.c.b16 %v7016, %v7012
        %v7221 = vpack.c.b16 %v7017, %v7013
        %v7222 = vpack.c.b16 %v7022, %v7018
        %v7223 = vpack.c.b16 %v7023, %v7019
        %v7224 = vpack.c.b16 %v7024, %v7020
        %v7225 = vpack.c.b16 %v7025, %v7021
        %v7226 = vpack.c.b16 %v7030, %v7026
        %v7227 = vpack.c.b16 %v7031, %v7027
        %v7228 = vpack.c.b16 %v7032, %v7028
        %v7229 = vpack.c.b16 %v7033, %v7029
        %v7230 = vpack.c.b16 %v7038, %v7034
        %v7231 = vpack.c.b16 %v7039, %v7035
        %v7232 = vpack.c.b16 %v7040, %v7036
        %v7233 = vpack.c.b16 %v7041, %v7037
        %v7234 = vpack.c.b16 %v7046, %v7042
        %v7235 = vpack.c.b16 %v7047, %v7043
        %v7236 = vpack.c.b16 %v7048, %v7044
        %v7237 = vpack.c.b16 %v7049, %v7045
        %v7238 = vpack.c.b16 %v7054, %v7050
        %v7239 = vpack.c.b16 %v7055, %v7051
        %v7240 = vpack.c.b16 %v7056, %v7052
        %v7241 = vpack.c.b16 %v7057, %v7053
        %v7242 = vpack.c.b16 %v7062, %v7058
        %v7243 = vpack.c.b16 %v7063, %v7059
        %v7244 = vpack.c.b16 %v7064, %v7060
        %v7245 = vpack.c.b16 %v7065, %v7061
        %v7246 = vpack.c.b16 %v7070, %v7066
        %v7247 = vpack.c.b16 %v7071, %v7067
        %v7248 = vpack.c.b16 %v7072, %v7068
        %v7249 = vpack.c.b16 %v7073, %v7069
        %v7250 = vpack.c.b16 %v7078, %v7074
        %v7251 = vpack.c.b16 %v7079, %v7075
        %v7252 = vpack.c.b16 %v7080, %v7076
        %v7253 = vpack.c.b16 %v7081, %v7077
        %v7254 = vpack.c.b16 %v7086, %v7082
        %v7255 = vpack.c.b16 %v7087, %v7083
        %v7256 = vpack.c.b16 %v7088, %v7084
        %v7257 = vpack.c.b16 %v7089, %v7085
        %v7258 = vpack.c.b16 %v7094, %v7090
        %v7259 = vpack.c.b16 %v7095, %v7091
        %v7260 = vpack.c.b16 %v7096, %v7092
        %v7261 = vpack.c.b16 %v7097, %v7093
        %v7262 = vpack.c.b16 %v7102, %v7098
        %v7263 = vpack.c.b16 %v7103, %v7099
        %v7264 = vpack.c.b16 %v7104, %v7100
        %v7265 = vpack.c.b16 %v7105, %v7101
        %v7266 = vpack.c.b16 %v7110, %v7106
        %v7267 = vpack.c.b16 %v7111, %v7107
        %v7268 = vpack.c.b16 %v7112, %v7108
        %v7269 = vpack.c.b16 %v7113, %v7109
        %v7270 = vpack.c.b16 %v7118, %v7114
        %v7271 = vpack.c.b16 %v7119, %v7115
        %v7272 = vpack.c.b16 %v7120, %v7116
        %v7273 = vpack.c.b16 %v7121, %v7117
        %v7274 = vpack.c.b16 %v7126, %v7122
        %v7275 = vpack.c.b16 %v7127, %v7123
        %v7276 = vpack.c.b16 %v7128, %v7124
        %v7277 = vpack.c.b16 %v7129, %v7125
        %v7278 = vpack.c.b16 %v7134, %v7130
        %v7279 = vpack.c.b16 %v7135, %v7131
        %v7280 = vpack.c.b16 %v7136, %v7132
        %v7281 = vpack.c.b16 %v7137, %v7133
        %v7282 = vpack.c.b16 %v7142, %v7138
        %v7283 = vpack.c.b16 %v7143, %v7139
        %v7284 = vpack.c.b16 %v7144, %v7140
        %v7285 = vpack.c.b16 %v7145, %v7141
        %v7286 = vpack.c.b16 %v7150, %v7146
        %v7287 = vpack.c.b16 %v7151, %v7147
        %v7288 = vpack.c.b16 %v7152, %v7148
        %v7289 = vpack.c.b16 %v7153, %v7149
        %v7290 = vpack.c.b16 %v7158, %v7154
        %v7291 = vpack.c.b16 %v7159, %v7155
        %v7292 = vpack.c.b16 %v7160, %v7156
        %v7293 = vpack.c.b16 %v7161, %v7157
        %v7294 = vpack.c.b16 %v7166, %v7162
        %v7295 = vpack.c.b16 %v7167, %v7163
        %v7296 = vpack.c.b16 %v7168, %v7164
        %v7297 = vpack.c.b16 %v7169, %v7165
        %7426 = vmatprep.subr.bf16.mxu0 %v7171
        %7427 = vmatpush1.bf16.msra.mxu0 %v7170
        %7428 = vmatprep.subr.bf16.mxu0 %v7175
        %7429 = vmatpush1.bf16.msra.mxu0 %v7174
        %7430 = vmatprep.subr.bf16.mxu0 %v7179
        %7431 = vmatpush1.bf16.msra.mxu0 %v7178
        %7432 = vmatprep.subr.bf16.mxu0 %v7183
        %7433 = vmatpush1.bf16.msra.mxu0 %v7182
        %7434 = vmatprep.subr.bf16.mxu0 %v7187
        %7435 = vmatpush1.bf16.msra.mxu0 %v7186
        %7436 = vmatprep.subr.bf16.mxu0 %v7191
        %7437 = vmatpush1.bf16.msra.mxu0 %v7190
        %7438 = vmatprep.subr.bf16.mxu0 %v7195
        %7439 = vmatpush1.bf16.msra.mxu0 %v7194
        %7440 = vmatprep.subr.bf16.mxu0 %v7199
        %7441 = vmatpush1.bf16.msra.mxu0 %v7198
        %7442 = vmatprep.subr.bf16.mxu0 %v7203
        %7443 = vmatpush1.bf16.msra.mxu0 %v7202
        %7444 = vmatprep.subr.bf16.mxu0 %v7207
        %7445 = vmatpush1.bf16.msra.mxu0 %v7206
        %7446 = vmatprep.subr.bf16.mxu0 %v7211
        %7447 = vmatpush1.bf16.msra.mxu0 %v7210
        %7448 = vmatprep.subr.bf16.mxu0 %v7215
        %7449 = vmatpush1.bf16.msra.mxu0 %v7214
        %7450 = vmatprep.subr.bf16.mxu0 %v7219
        %7451 = vmatpush1.bf16.msra.mxu0 %v7218
        %7452 = vmatprep.subr.bf16.mxu0 %v7223
        %7453 = vmatpush1.bf16.msra.mxu0 %v7222
        %7454 = vmatprep.subr.bf16.mxu0 %v7227
        %7455 = vmatpush1.bf16.msra.mxu0 %v7226
        %7456 = vmatprep.subr.bf16.mxu0 %v7231
        %7457 = vmatpush1.bf16.msra.mxu0 %v7230
        %7458 = vmatprep.mubr.bf16.mxu0 %v5710
        %7459 = vmatmul.mubr.bf16.gmra.mrb[0].mxu0 %v5709
        %v7460 = vpop.f32.mrb[0].mxu0
        %v7461 = vadd.f32 %v6692, %v7460
        %v7462 = vpop.f32.mrb[0].mxu0
        %v7463 = vadd.f32 %v6694, %v7462
        %v7464 = vpop.f32.mrb[0].mxu0
        %v7465 = vadd.f32 %v6696, %v7464
        %v7466 = vpop.f32.mrb[0].mxu0
        %v7467 = vadd.f32 %v6698, %v7466
        %7468 = vdwg.mxu0
        %7469 = vmatprep.subr.bf16.mxu0 %v7235
        %7470 = vmatpush1.bf16.msra.mxu0 %v7234
        %7471 = vmatprep.subr.bf16.mxu0 %v7239
        %7472 = vmatpush1.bf16.msra.mxu0 %v7238
        %7473 = vmatprep.subr.bf16.mxu0 %v7243
        %7474 = vmatpush1.bf16.msra.mxu0 %v7242
        %7475 = vmatprep.subr.bf16.mxu0 %v7247
        %7476 = vmatpush1.bf16.msra.mxu0 %v7246
        %7477 = vmatprep.subr.bf16.mxu0 %v7251
        %7478 = vmatpush1.bf16.msra.mxu0 %v7250
        %7479 = vmatprep.subr.bf16.mxu0 %v7255
        %7480 = vmatpush1.bf16.msra.mxu0 %v7254
        %7481 = vmatprep.subr.bf16.mxu0 %v7259
        %7482 = vmatpush1.bf16.msra.mxu0 %v7258
        %7483 = vmatprep.subr.bf16.mxu0 %v7263
        %7484 = vmatpush1.bf16.msra.mxu0 %v7262
        %7485 = vmatprep.subr.bf16.mxu0 %v7267
        %7486 = vmatpush1.bf16.msra.mxu0 %v7266
        %7487 = vmatprep.subr.bf16.mxu0 %v7271
        %7488 = vmatpush1.bf16.msra.mxu0 %v7270
        %7489 = vmatprep.subr.bf16.mxu0 %v7275
        %7490 = vmatpush1.bf16.msra.mxu0 %v7274
        %7491 = vmatprep.subr.bf16.mxu0 %v7279
        %7492 = vmatpush1.bf16.msra.mxu0 %v7278
        %7493 = vmatprep.subr.bf16.mxu0 %v7283
        %7494 = vmatpush1.bf16.msra.mxu0 %v7282
        %7495 = vmatprep.subr.bf16.mxu0 %v7287
        %7496 = vmatpush1.bf16.msra.mxu0 %v7286
        %7497 = vmatprep.subr.bf16.mxu0 %v7291
        %7498 = vmatpush1.bf16.msra.mxu0 %v7290
        %7499 = vmatprep.subr.bf16.mxu0 %v7295
        %7500 = vmatpush1.bf16.msra.mxu0 %v7294
        %7501 = vmatprep.mubr.bf16.mxu0 %v5712
        %7502 = vmatmul.mubr.bf16.gmra.mrb[0].mxu0 %v5711
        %v7503 = vpop.f32.mrb[0].mxu0
        %v7504 = vadd.f32 %v7461, %v7503
        %v7505 = vpop.f32.mrb[0].mxu0
        %v7506 = vadd.f32 %v7463, %v7505
        %v7507 = vpop.f32.mrb[0].mxu0
        %v7508 = vadd.f32 %v7465, %v7507
        %v7509 = vpop.f32.mrb[0].mxu0
        %v7510 = vadd.f32 %v7467, %v7509
        %7511 = vdwg.mxu0
        %7512 = vmatprep.subr.bf16.mxu0 %v7173
        %7513 = vmatpush1.bf16.msra.mxu0 %v7172
        %7514 = vmatprep.subr.bf16.mxu0 %v7177
        %7515 = vmatpush1.bf16.msra.mxu0 %v7176
        %7516 = vmatprep.subr.bf16.mxu0 %v7181
        %7517 = vmatpush1.bf16.msra.mxu0 %v7180
        %7518 = vmatprep.subr.bf16.mxu0 %v7185
        %7519 = vmatpush1.bf16.msra.mxu0 %v7184
        %7520 = vmatprep.subr.bf16.mxu0 %v7189
        %7521 = vmatpush1.bf16.msra.mxu0 %v7188
        %7522 = vmatprep.subr.bf16.mxu0 %v7193
        %7523 = vmatpush1.bf16.msra.mxu0 %v7192
        %7524 = vmatprep.subr.bf16.mxu0 %v7197
        %7525 = vmatpush1.bf16.msra.mxu0 %v7196
        %7526 = vmatprep.subr.bf16.mxu0 %v7201
        %7527 = vmatpush1.bf16.msra.mxu0 %v7200
        %7528 = vmatprep.subr.bf16.mxu0 %v7205
        %7529 = vmatpush1.bf16.msra.mxu0 %v7204
        %7530 = vmatprep.subr.bf16.mxu0 %v7209
        %7531 = vmatpush1.bf16.msra.mxu0 %v7208
        %7532 = vmatprep.subr.bf16.mxu0 %v7213
        %7533 = vmatpush1.bf16.msra.mxu0 %v7212
        %7534 = vmatprep.subr.bf16.mxu0 %v7217
        %7535 = vmatpush1.bf16.msra.mxu0 %v7216
        %7536 = vmatprep.subr.bf16.mxu0 %v7221
        %7537 = vmatpush1.bf16.msra.mxu0 %v7220
        %7538 = vmatprep.subr.bf16.mxu0 %v7225
        %7539 = vmatpush1.bf16.msra.mxu0 %v7224
        %7540 = vmatprep.subr.bf16.mxu0 %v7229
        %7541 = vmatpush1.bf16.msra.mxu0 %v7228
        %7542 = vmatprep.subr.bf16.mxu0 %v7233
        %7543 = vmatpush1.bf16.msra.mxu0 %v7232
        %7544 = vmatprep.mubr.bf16.mxu0 %v5710
        %7545 = vmatmul.mubr.bf16.gmra.mrb[0].mxu0 %v5709
        %v7546 = vpop.f32.mrb[0].mxu0
        %v7547 = vadd.f32 %v6778, %v7546
        %v7548 = vpop.f32.mrb[0].mxu0
        %v7549 = vadd.f32 %v6780, %v7548
        %v7550 = vpop.f32.mrb[0].mxu0
        %v7551 = vadd.f32 %v6782, %v7550
        %v7552 = vpop.f32.mrb[0].mxu0
        %v7553 = vadd.f32 %v6784, %v7552
        %7554 = vdwg.mxu0
        %7555 = vmatprep.subr.bf16.mxu0 %v7237
        %7556 = vmatpush1.bf16.msra.mxu0 %v7236
        %7557 = vmatprep.subr.bf16.mxu0 %v7241
        %7558 = vmatpush1.bf16.msra.mxu0 %v7240
        %7559 = vmatprep.subr.bf16.mxu0 %v7245
        %7560 = vmatpush1.bf16.msra.mxu0 %v7244
        %7561 = vmatprep.subr.bf16.mxu0 %v7249
        %7562 = vmatpush1.bf16.msra.mxu0 %v7248
        %7563 = vmatprep.subr.bf16.mxu0 %v7253
        %7564 = vmatpush1.bf16.msra.mxu0 %v7252
        %7565 = vmatprep.subr.bf16.mxu0 %v7257
        %7566 = vmatpush1.bf16.msra.mxu0 %v7256
        %7567 = vmatprep.subr.bf16.mxu0 %v7261
        %7568 = vmatpush1.bf16.msra.mxu0 %v7260
        %7569 = vmatprep.subr.bf16.mxu0 %v7265
        %7570 = vmatpush1.bf16.msra.mxu0 %v7264
        %7571 = vmatprep.subr.bf16.mxu0 %v7269
        %7572 = vmatpush1.bf16.msra.mxu0 %v7268
        %7573 = vmatprep.subr.bf16.mxu0 %v7273
        %7574 = vmatpush1.bf16.msra.mxu0 %v7272
        %7575 = vmatprep.subr.bf16.mxu0 %v7277
        %7576 = vmatpush1.bf16.msra.mxu0 %v7276
        %7577 = vmatprep.subr.bf16.mxu0 %v7281
        %7578 = vmatpush1.bf16.msra.mxu0 %v7280
        %7579 = vmatprep.subr.bf16.mxu0 %v7285
        %7580 = vmatpush1.bf16.msra.mxu0 %v7284
        %7581 = vmatprep.subr.bf16.mxu0 %v7289
        %7582 = vmatpush1.bf16.msra.mxu0 %v7288
        %7583 = vmatprep.subr.bf16.mxu0 %v7293
        %7584 = vmatpush1.bf16.msra.mxu0 %v7292
        %7585 = vmatprep.subr.bf16.mxu0 %v7297
        %7586 = vmatpush1.bf16.msra.mxu0 %v7296
        %7587 = vmatprep.mubr.bf16.mxu0 %v5712
        %7588 = vmatmul.mubr.bf16.gmra.mrb[0].mxu0 %v5711
        %v7589 = vpop.f32.mrb[0].mxu0
        %v7590 = vadd.f32 %v7547, %v7589
        %v7591 = vpop.f32.mrb[0].mxu0
        %v7592 = vadd.f32 %v7549, %v7591
        %v7593 = vpop.f32.mrb[0].mxu0
        %v7594 = vadd.f32 %v7551, %v7593
        %v7595 = vpop.f32.mrb[0].mxu0
        %v7596 = vadd.f32 %v7553, %v7595
        %7597 = vdwg.mxu0
        %v7598 = vrot.slane %v5669, 1
        %v7599 = vrot.slane %v5673, 1
        %v7600 = vsel %vm3731, %v7598, %v7599
        %v7601 = vrot.slane %v5670, 1
        %v7602 = vrot.slane %v5674, 1
        %v7603 = vsel %vm3731, %v7601, %v7602
        %v7604 = vrot.slane %v5671, 1
        %v7605 = vrot.slane %v5675, 1
        %v7606 = vsel %vm3731, %v7604, %v7605
        %v7607 = vrot.slane %v5672, 1
        %v7608 = vrot.slane %v5676, 1
        %v7609 = vsel %vm3731, %v7607, %v7608
        %v7618 = vsel %vm3731, %v7599, 0.0
        %v7619 = vsel %vm3731, %v7602, 0.0
        %v7620 = vsel %vm3731, %v7605, 0.0
        %v7621 = vsel %vm3731, %v7608, 0.0
        %v7622 = vpack.c.bf16 %v7618, %v7600
        %v7623 = vpack.c.bf16 %v7619, %v7603
        %v7624 = vpack.c.bf16 %v7620, %v7606
        %v7625 = vpack.c.bf16 %v7621, %v7609
        %s7626 = scalar_lea.vmem [#allocation17], 2048
        %v7627 = vld [vmem:[%s7626] sm:$0xff]
        %v7628 = vld [vmem:[%s7626 + $0x8] sm:$0xff]
        %v7629 = vld [vmem:[%s7626 + $0x10] sm:$0xff]
        %v7630 = vld [vmem:[%s7626 + $0x18] sm:$0xff]
        %v7631 = vld [vmem:[%s7626 + $0x20] sm:$0xff]
        %v7632 = vld [vmem:[%s7626 + $0x28] sm:$0xff]
        %v7633 = vld [vmem:[%s7626 + $0x30] sm:$0xff]
        %v7634 = vld [vmem:[%s7626 + $0x38] sm:$0xff]
        %v7635 = vld [vmem:[%s7626 + $0x40] sm:$0xff]
        %v7636 = vld [vmem:[%s7626 + $0x48] sm:$0xff]
        %v7637 = vld [vmem:[%s7626 + $0x50] sm:$0xff]
        %v7638 = vld [vmem:[%s7626 + $0x58] sm:$0xff]
        %v7639 = vld [vmem:[%s7626 + $0x60] sm:$0xff]
        %v7640 = vld [vmem:[%s7626 + $0x68] sm:$0xff]
        %v7641 = vld [vmem:[%s7626 + $0x70] sm:$0xff]
        %v7642 = vld [vmem:[%s7626 + $0x78] sm:$0xff]
        %v7643 = vld [vmem:[%s7626 + $0x80] sm:$0xff]
        %v7644 = vld [vmem:[%s7626 + $0x88] sm:$0xff]
        %v7645 = vld [vmem:[%s7626 + $0x90] sm:$0xff]
        %v7646 = vld [vmem:[%s7626 + $0x98] sm:$0xff]
        %v7647 = vld [vmem:[%s7626 + $0xa0] sm:$0xff]
        %v7648 = vld [vmem:[%s7626 + $0xa8] sm:$0xff]
        %v7649 = vld [vmem:[%s7626 + $0xb0] sm:$0xff]
        %v7650 = vld [vmem:[%s7626 + $0xb8] sm:$0xff]
        %v7651 = vld [vmem:[%s7626 + $0xc0] sm:$0xff]
        %v7652 = vld [vmem:[%s7626 + $0xc8] sm:$0xff]
        %v7653 = vld [vmem:[%s7626 + $0xd0] sm:$0xff]
        %v7654 = vld [vmem:[%s7626 + $0xd8] sm:$0xff]
        %v7655 = vld [vmem:[%s7626 + $0xe0] sm:$0xff]
        %v7656 = vld [vmem:[%s7626 + $0xe8] sm:$0xff]
        %v7657 = vld [vmem:[%s7626 + $0xf0] sm:$0xff]
        %v7658 = vld [vmem:[%s7626 + $0xf8] sm:$0xff]
        %v7659 = vld [vmem:[%s7626 + $0x100] sm:$0xff]
        %v7660 = vld [vmem:[%s7626 + $0x108] sm:$0xff]
        %v7661 = vld [vmem:[%s7626 + $0x110] sm:$0xff]
        %v7662 = vld [vmem:[%s7626 + $0x118] sm:$0xff]
        %v7663 = vld [vmem:[%s7626 + $0x120] sm:$0xff]
        %v7664 = vld [vmem:[%s7626 + $0x128] sm:$0xff]
        %v7665 = vld [vmem:[%s7626 + $0x130] sm:$0xff]
        %v7666 = vld [vmem:[%s7626 + $0x138] sm:$0xff]
        %v7667 = vld [vmem:[%s7626 + $0x140] sm:$0xff]
        %v7668 = vld [vmem:[%s7626 + $0x148] sm:$0xff]
        %v7669 = vld [vmem:[%s7626 + $0x150] sm:$0xff]
        %v7670 = vld [vmem:[%s7626 + $0x158] sm:$0xff]
        %v7671 = vld [vmem:[%s7626 + $0x160] sm:$0xff]
        %v7672 = vld [vmem:[%s7626 + $0x168] sm:$0xff]
        %v7673 = vld [vmem:[%s7626 + $0x170] sm:$0xff]
        %v7674 = vld [vmem:[%s7626 + $0x178] sm:$0xff]
        %v7675 = vld [vmem:[%s7626 + $0x180] sm:$0xff]
        %v7676 = vld [vmem:[%s7626 + $0x188] sm:$0xff]
        %v7677 = vld [vmem:[%s7626 + $0x190] sm:$0xff]
        %v7678 = vld [vmem:[%s7626 + $0x198] sm:$0xff]
        %v7679 = vld [vmem:[%s7626 + $0x1a0] sm:$0xff]
        %v7680 = vld [vmem:[%s7626 + $0x1a8] sm:$0xff]
        %v7681 = vld [vmem:[%s7626 + $0x1b0] sm:$0xff]
        %v7682 = vld [vmem:[%s7626 + $0x1b8] sm:$0xff]
        %v7683 = vld [vmem:[%s7626 + $0x1c0] sm:$0xff]
        %v7684 = vld [vmem:[%s7626 + $0x1c8] sm:$0xff]
        %v7685 = vld [vmem:[%s7626 + $0x1d0] sm:$0xff]
        %v7686 = vld [vmem:[%s7626 + $0x1d8] sm:$0xff]
        %v7687 = vld [vmem:[%s7626 + $0x1e0] sm:$0xff]
        %v7688 = vld [vmem:[%s7626 + $0x1e8] sm:$0xff]
        %v7689 = vld [vmem:[%s7626 + $0x1f0] sm:$0xff]
        %v7690 = vld [vmem:[%s7626 + $0x1f8] sm:$0xff]
        %v7691 = vld [vmem:[%s7626 + $0x200] sm:$0xff]
        %v7692 = vld [vmem:[%s7626 + $0x208] sm:$0xff]
        %v7693 = vld [vmem:[%s7626 + $0x210] sm:$0xff]
        %v7694 = vld [vmem:[%s7626 + $0x218] sm:$0xff]
        %v7695 = vld [vmem:[%s7626 + $0x220] sm:$0xff]
        %v7696 = vld [vmem:[%s7626 + $0x228] sm:$0xff]
        %v7697 = vld [vmem:[%s7626 + $0x230] sm:$0xff]
        %v7698 = vld [vmem:[%s7626 + $0x238] sm:$0xff]
        %v7699 = vld [vmem:[%s7626 + $0x240] sm:$0xff]
        %v7700 = vld [vmem:[%s7626 + $0x248] sm:$0xff]
        %v7701 = vld [vmem:[%s7626 + $0x250] sm:$0xff]
        %v7702 = vld [vmem:[%s7626 + $0x258] sm:$0xff]
        %v7703 = vld [vmem:[%s7626 + $0x260] sm:$0xff]
        %v7704 = vld [vmem:[%s7626 + $0x268] sm:$0xff]
        %v7705 = vld [vmem:[%s7626 + $0x270] sm:$0xff]
        %v7706 = vld [vmem:[%s7626 + $0x278] sm:$0xff]
        %v7707 = vld [vmem:[%s7626 + $0x280] sm:$0xff]
        %v7708 = vld [vmem:[%s7626 + $0x288] sm:$0xff]
        %v7709 = vld [vmem:[%s7626 + $0x290] sm:$0xff]
        %v7710 = vld [vmem:[%s7626 + $0x298] sm:$0xff]
        %v7711 = vld [vmem:[%s7626 + $0x2a0] sm:$0xff]
        %v7712 = vld [vmem:[%s7626 + $0x2a8] sm:$0xff]
        %v7713 = vld [vmem:[%s7626 + $0x2b0] sm:$0xff]
        %v7714 = vld [vmem:[%s7626 + $0x2b8] sm:$0xff]
        %v7715 = vld [vmem:[%s7626 + $0x2c0] sm:$0xff]
        %v7716 = vld [vmem:[%s7626 + $0x2c8] sm:$0xff]
        %v7717 = vld [vmem:[%s7626 + $0x2d0] sm:$0xff]
        %v7718 = vld [vmem:[%s7626 + $0x2d8] sm:$0xff]
        %v7719 = vld [vmem:[%s7626 + $0x2e0] sm:$0xff]
        %v7720 = vld [vmem:[%s7626 + $0x2e8] sm:$0xff]
        %v7721 = vld [vmem:[%s7626 + $0x2f0] sm:$0xff]
        %v7722 = vld [vmem:[%s7626 + $0x2f8] sm:$0xff]
        %v7723 = vld [vmem:[%s7626 + $0x300] sm:$0xff]
        %v7724 = vld [vmem:[%s7626 + $0x308] sm:$0xff]
        %v7725 = vld [vmem:[%s7626 + $0x310] sm:$0xff]
        %v7726 = vld [vmem:[%s7626 + $0x318] sm:$0xff]
        %v7727 = vld [vmem:[%s7626 + $0x320] sm:$0xff]
        %v7728 = vld [vmem:[%s7626 + $0x328] sm:$0xff]
        %v7729 = vld [vmem:[%s7626 + $0x330] sm:$0xff]
        %v7730 = vld [vmem:[%s7626 + $0x338] sm:$0xff]
        %v7731 = vld [vmem:[%s7626 + $0x340] sm:$0xff]
        %v7732 = vld [vmem:[%s7626 + $0x348] sm:$0xff]
        %v7733 = vld [vmem:[%s7626 + $0x350] sm:$0xff]
        %v7734 = vld [vmem:[%s7626 + $0x358] sm:$0xff]
        %v7735 = vld [vmem:[%s7626 + $0x360] sm:$0xff]
        %v7736 = vld [vmem:[%s7626 + $0x368] sm:$0xff]
        %v7737 = vld [vmem:[%s7626 + $0x370] sm:$0xff]
        %v7738 = vld [vmem:[%s7626 + $0x378] sm:$0xff]
        %v7739 = vld [vmem:[%s7626 + $0x380] sm:$0xff]
        %v7740 = vld [vmem:[%s7626 + $0x388] sm:$0xff]
        %v7741 = vld [vmem:[%s7626 + $0x390] sm:$0xff]
        %v7742 = vld [vmem:[%s7626 + $0x398] sm:$0xff]
        %v7743 = vld [vmem:[%s7626 + $0x3a0] sm:$0xff]
        %v7744 = vld [vmem:[%s7626 + $0x3a8] sm:$0xff]
        %v7745 = vld [vmem:[%s7626 + $0x3b0] sm:$0xff]
        %v7746 = vld [vmem:[%s7626 + $0x3b8] sm:$0xff]
        %v7747 = vld [vmem:[%s7626 + $0x3c0] sm:$0xff]
        %v7748 = vld [vmem:[%s7626 + $0x3c8] sm:$0xff]
        %v7749 = vld [vmem:[%s7626 + $0x3d0] sm:$0xff]
        %v7750 = vld [vmem:[%s7626 + $0x3d8] sm:$0xff]
        %v7751 = vld [vmem:[%s7626 + $0x3e0] sm:$0xff]
        %v7752 = vld [vmem:[%s7626 + $0x3e8] sm:$0xff]
        %v7753 = vld [vmem:[%s7626 + $0x3f0] sm:$0xff]
        %v7754 = vld [vmem:[%s7626 + $0x3f8] sm:$0xff]
        %v7883 = vunpack.c.l.b16 %v7627
        %v7884 = vunpack.c.h.b16 %v7627
        %v7885 = vunpack.c.l.b16 %v7628
        %v7886 = vunpack.c.h.b16 %v7628
        %v7887 = vunpack.c.l.b16 %v7629
        %v7888 = vunpack.c.h.b16 %v7629
        %v7889 = vunpack.c.l.b16 %v7630
        %v7890 = vunpack.c.h.b16 %v7630
        %v7891 = vunpack.c.l.b16 %v7631
        %v7892 = vunpack.c.h.b16 %v7631
        %v7893 = vunpack.c.l.b16 %v7632
        %v7894 = vunpack.c.h.b16 %v7632
        %v7895 = vunpack.c.l.b16 %v7633
        %v7896 = vunpack.c.h.b16 %v7633
        %v7897 = vunpack.c.l.b16 %v7634
        %v7898 = vunpack.c.h.b16 %v7634
        %v7899 = vunpack.c.l.b16 %v7635
        %v7900 = vunpack.c.h.b16 %v7635
        %v7901 = vunpack.c.l.b16 %v7636
        %v7902 = vunpack.c.h.b16 %v7636
        %v7903 = vunpack.c.l.b16 %v7637
        %v7904 = vunpack.c.h.b16 %v7637
        %v7905 = vunpack.c.l.b16 %v7638
        %v7906 = vunpack.c.h.b16 %v7638
        %v7907 = vunpack.c.l.b16 %v7639
        %v7908 = vunpack.c.h.b16 %v7639
        %v7909 = vunpack.c.l.b16 %v7640
        %v7910 = vunpack.c.h.b16 %v7640
        %v7911 = vunpack.c.l.b16 %v7641
        %v7912 = vunpack.c.h.b16 %v7641
        %v7913 = vunpack.c.l.b16 %v7642
        %v7914 = vunpack.c.h.b16 %v7642
        %v7915 = vunpack.c.l.b16 %v7643
        %v7916 = vunpack.c.h.b16 %v7643
        %v7917 = vunpack.c.l.b16 %v7644
        %v7918 = vunpack.c.h.b16 %v7644
        %v7919 = vunpack.c.l.b16 %v7645
        %v7920 = vunpack.c.h.b16 %v7645
        %v7921 = vunpack.c.l.b16 %v7646
        %v7922 = vunpack.c.h.b16 %v7646
        %v7923 = vunpack.c.l.b16 %v7647
        %v7924 = vunpack.c.h.b16 %v7647
        %v7925 = vunpack.c.l.b16 %v7648
        %v7926 = vunpack.c.h.b16 %v7648
        %v7927 = vunpack.c.l.b16 %v7649
        %v7928 = vunpack.c.h.b16 %v7649
        %v7929 = vunpack.c.l.b16 %v7650
        %v7930 = vunpack.c.h.b16 %v7650
        %v7931 = vunpack.c.l.b16 %v7651
        %v7932 = vunpack.c.h.b16 %v7651
        %v7933 = vunpack.c.l.b16 %v7652
        %v7934 = vunpack.c.h.b16 %v7652
        %v7935 = vunpack.c.l.b16 %v7653
        %v7936 = vunpack.c.h.b16 %v7653
        %v7937 = vunpack.c.l.b16 %v7654
        %v7938 = vunpack.c.h.b16 %v7654
        %v7939 = vunpack.c.l.b16 %v7655
        %v7940 = vunpack.c.h.b16 %v7655
        %v7941 = vunpack.c.l.b16 %v7656
        %v7942 = vunpack.c.h.b16 %v7656
        %v7943 = vunpack.c.l.b16 %v7657
        %v7944 = vunpack.c.h.b16 %v7657
        %v7945 = vunpack.c.l.b16 %v7658
        %v7946 = vunpack.c.h.b16 %v7658
        %v7947 = vunpack.c.l.b16 %v7659
        %v7948 = vunpack.c.h.b16 %v7659
        %v7949 = vunpack.c.l.b16 %v7660
        %v7950 = vunpack.c.h.b16 %v7660
        %v7951 = vunpack.c.l.b16 %v7661
        %v7952 = vunpack.c.h.b16 %v7661
        %v7953 = vunpack.c.l.b16 %v7662
        %v7954 = vunpack.c.h.b16 %v7662
        %v7955 = vunpack.c.l.b16 %v7663
        %v7956 = vunpack.c.h.b16 %v7663
        %v7957 = vunpack.c.l.b16 %v7664
        %v7958 = vunpack.c.h.b16 %v7664
        %v7959 = vunpack.c.l.b16 %v7665
        %v7960 = vunpack.c.h.b16 %v7665
        %v7961 = vunpack.c.l.b16 %v7666
        %v7962 = vunpack.c.h.b16 %v7666
        %v7963 = vunpack.c.l.b16 %v7667
        %v7964 = vunpack.c.h.b16 %v7667
        %v7965 = vunpack.c.l.b16 %v7668
        %v7966 = vunpack.c.h.b16 %v7668
        %v7967 = vunpack.c.l.b16 %v7669
        %v7968 = vunpack.c.h.b16 %v7669
        %v7969 = vunpack.c.l.b16 %v7670
        %v7970 = vunpack.c.h.b16 %v7670
        %v7971 = vunpack.c.l.b16 %v7671
        %v7972 = vunpack.c.h.b16 %v7671
        %v7973 = vunpack.c.l.b16 %v7672
        %v7974 = vunpack.c.h.b16 %v7672
        %v7975 = vunpack.c.l.b16 %v7673
        %v7976 = vunpack.c.h.b16 %v7673
        %v7977 = vunpack.c.l.b16 %v7674
        %v7978 = vunpack.c.h.b16 %v7674
        %v7979 = vunpack.c.l.b16 %v7675
        %v7980 = vunpack.c.h.b16 %v7675
        %v7981 = vunpack.c.l.b16 %v7676
        %v7982 = vunpack.c.h.b16 %v7676
        %v7983 = vunpack.c.l.b16 %v7677
        %v7984 = vunpack.c.h.b16 %v7677
        %v7985 = vunpack.c.l.b16 %v7678
        %v7986 = vunpack.c.h.b16 %v7678
        %v7987 = vunpack.c.l.b16 %v7679
        %v7988 = vunpack.c.h.b16 %v7679
        %v7989 = vunpack.c.l.b16 %v7680
        %v7990 = vunpack.c.h.b16 %v7680
        %v7991 = vunpack.c.l.b16 %v7681
        %v7992 = vunpack.c.h.b16 %v7681
        %v7993 = vunpack.c.l.b16 %v7682
        %v7994 = vunpack.c.h.b16 %v7682
        %v7995 = vunpack.c.l.b16 %v7683
        %v7996 = vunpack.c.h.b16 %v7683
        %v7997 = vunpack.c.l.b16 %v7684
        %v7998 = vunpack.c.h.b16 %v7684
        %v7999 = vunpack.c.l.b16 %v7685
        %v8000 = vunpack.c.h.b16 %v7685
        %v8001 = vunpack.c.l.b16 %v7686
        %v8002 = vunpack.c.h.b16 %v7686
        %v8003 = vunpack.c.l.b16 %v7687
        %v8004 = vunpack.c.h.b16 %v7687
        %v8005 = vunpack.c.l.b16 %v7688
        %v8006 = vunpack.c.h.b16 %v7688
        %v8007 = vunpack.c.l.b16 %v7689
        %v8008 = vunpack.c.h.b16 %v7689
        %v8009 = vunpack.c.l.b16 %v7690
        %v8010 = vunpack.c.h.b16 %v7690
        %v8011 = vunpack.c.l.b16 %v7691
        %v8012 = vunpack.c.h.b16 %v7691
        %v8013 = vunpack.c.l.b16 %v7692
        %v8014 = vunpack.c.h.b16 %v7692
        %v8015 = vunpack.c.l.b16 %v7693
        %v8016 = vunpack.c.h.b16 %v7693
        %v8017 = vunpack.c.l.b16 %v7694
        %v8018 = vunpack.c.h.b16 %v7694
        %v8019 = vunpack.c.l.b16 %v7695
        %v8020 = vunpack.c.h.b16 %v7695
        %v8021 = vunpack.c.l.b16 %v7696
        %v8022 = vunpack.c.h.b16 %v7696
        %v8023 = vunpack.c.l.b16 %v7697
        %v8024 = vunpack.c.h.b16 %v7697
        %v8025 = vunpack.c.l.b16 %v7698
        %v8026 = vunpack.c.h.b16 %v7698
        %v8027 = vunpack.c.l.b16 %v7699
        %v8028 = vunpack.c.h.b16 %v7699
        %v8029 = vunpack.c.l.b16 %v7700
        %v8030 = vunpack.c.h.b16 %v7700
        %v8031 = vunpack.c.l.b16 %v7701
        %v8032 = vunpack.c.h.b16 %v7701
        %v8033 = vunpack.c.l.b16 %v7702
        %v8034 = vunpack.c.h.b16 %v7702
        %v8035 = vunpack.c.l.b16 %v7703
        %v8036 = vunpack.c.h.b16 %v7703
        %v8037 = vunpack.c.l.b16 %v7704
        %v8038 = vunpack.c.h.b16 %v7704
        %v8039 = vunpack.c.l.b16 %v7705
        %v8040 = vunpack.c.h.b16 %v7705
        %v8041 = vunpack.c.l.b16 %v7706
        %v8042 = vunpack.c.h.b16 %v7706
        %v8043 = vunpack.c.l.b16 %v7707
        %v8044 = vunpack.c.h.b16 %v7707
        %v8045 = vunpack.c.l.b16 %v7708
        %v8046 = vunpack.c.h.b16 %v7708
        %v8047 = vunpack.c.l.b16 %v7709
        %v8048 = vunpack.c.h.b16 %v7709
        %v8049 = vunpack.c.l.b16 %v7710
        %v8050 = vunpack.c.h.b16 %v7710
        %v8051 = vunpack.c.l.b16 %v7711
        %v8052 = vunpack.c.h.b16 %v7711
        %v8053 = vunpack.c.l.b16 %v7712
        %v8054 = vunpack.c.h.b16 %v7712
        %v8055 = vunpack.c.l.b16 %v7713
        %v8056 = vunpack.c.h.b16 %v7713
        %v8057 = vunpack.c.l.b16 %v7714
        %v8058 = vunpack.c.h.b16 %v7714
        %v8059 = vunpack.c.l.b16 %v7715
        %v8060 = vunpack.c.h.b16 %v7715
        %v8061 = vunpack.c.l.b16 %v7716
        %v8062 = vunpack.c.h.b16 %v7716
        %v8063 = vunpack.c.l.b16 %v7717
        %v8064 = vunpack.c.h.b16 %v7717
        %v8065 = vunpack.c.l.b16 %v7718
        %v8066 = vunpack.c.h.b16 %v7718
        %v8067 = vunpack.c.l.b16 %v7719
        %v8068 = vunpack.c.h.b16 %v7719
        %v8069 = vunpack.c.l.b16 %v7720
        %v8070 = vunpack.c.h.b16 %v7720
        %v8071 = vunpack.c.l.b16 %v7721
        %v8072 = vunpack.c.h.b16 %v7721
        %v8073 = vunpack.c.l.b16 %v7722
        %v8074 = vunpack.c.h.b16 %v7722
        %v8075 = vunpack.c.l.b16 %v7723
        %v8076 = vunpack.c.h.b16 %v7723
        %v8077 = vunpack.c.l.b16 %v7724
        %v8078 = vunpack.c.h.b16 %v7724
        %v8079 = vunpack.c.l.b16 %v7725
        %v8080 = vunpack.c.h.b16 %v7725
        %v8081 = vunpack.c.l.b16 %v7726
        %v8082 = vunpack.c.h.b16 %v7726
        %v8083 = vunpack.c.l.b16 %v7727
        %v8084 = vunpack.c.h.b16 %v7727
        %v8085 = vunpack.c.l.b16 %v7728
        %v8086 = vunpack.c.h.b16 %v7728
        %v8087 = vunpack.c.l.b16 %v7729
        %v8088 = vunpack.c.h.b16 %v7729
        %v8089 = vunpack.c.l.b16 %v7730
        %v8090 = vunpack.c.h.b16 %v7730
        %v8091 = vunpack.c.l.b16 %v7731
        %v8092 = vunpack.c.h.b16 %v7731
        %v8093 = vunpack.c.l.b16 %v7732
        %v8094 = vunpack.c.h.b16 %v7732
        %v8095 = vunpack.c.l.b16 %v7733
        %v8096 = vunpack.c.h.b16 %v7733
        %v8097 = vunpack.c.l.b16 %v7734
        %v8098 = vunpack.c.h.b16 %v7734
        %v8099 = vunpack.c.l.b16 %v7735
        %v8100 = vunpack.c.h.b16 %v7735
        %v8101 = vunpack.c.l.b16 %v7736
        %v8102 = vunpack.c.h.b16 %v7736
        %v8103 = vunpack.c.l.b16 %v7737
        %v8104 = vunpack.c.h.b16 %v7737
        %v8105 = vunpack.c.l.b16 %v7738
        %v8106 = vunpack.c.h.b16 %v7738
        %v8107 = vunpack.c.l.b16 %v7739
        %v8108 = vunpack.c.h.b16 %v7739
        %v8109 = vunpack.c.l.b16 %v7740
        %v8110 = vunpack.c.h.b16 %v7740
        %v8111 = vunpack.c.l.b16 %v7741
        %v8112 = vunpack.c.h.b16 %v7741
        %v8113 = vunpack.c.l.b16 %v7742
        %v8114 = vunpack.c.h.b16 %v7742
        %v8115 = vunpack.c.l.b16 %v7743
        %v8116 = vunpack.c.h.b16 %v7743
        %v8117 = vunpack.c.l.b16 %v7744
        %v8118 = vunpack.c.h.b16 %v7744
        %v8119 = vunpack.c.l.b16 %v7745
        %v8120 = vunpack.c.h.b16 %v7745
        %v8121 = vunpack.c.l.b16 %v7746
        %v8122 = vunpack.c.h.b16 %v7746
        %v8123 = vunpack.c.l.b16 %v7747
        %v8124 = vunpack.c.h.b16 %v7747
        %v8125 = vunpack.c.l.b16 %v7748
        %v8126 = vunpack.c.h.b16 %v7748
        %v8127 = vunpack.c.l.b16 %v7749
        %v8128 = vunpack.c.h.b16 %v7749
        %v8129 = vunpack.c.l.b16 %v7750
        %v8130 = vunpack.c.h.b16 %v7750
        %v8131 = vunpack.c.l.b16 %v7751
        %v8132 = vunpack.c.h.b16 %v7751
        %v8133 = vunpack.c.l.b16 %v7752
        %v8134 = vunpack.c.h.b16 %v7752
        %v8135 = vunpack.c.l.b16 %v7753
        %v8136 = vunpack.c.h.b16 %v7753
        %v8137 = vunpack.c.l.b16 %v7754
        %v8138 = vunpack.c.h.b16 %v7754
        %v8139 = vpack.c.b16 %v7887, %v7883
        %v8140 = vpack.c.b16 %v7888, %v7884
        %v8141 = vpack.c.b16 %v7889, %v7885
        %v8142 = vpack.c.b16 %v7890, %v7886
        %v8143 = vpack.c.b16 %v7895, %v7891
        %v8144 = vpack.c.b16 %v7896, %v7892
        %v8145 = vpack.c.b16 %v7897, %v7893
        %v8146 = vpack.c.b16 %v7898, %v7894
        %v8147 = vpack.c.b16 %v7903, %v7899
        %v8148 = vpack.c.b16 %v7904, %v7900
        %v8149 = vpack.c.b16 %v7905, %v7901
        %v8150 = vpack.c.b16 %v7906, %v7902
        %v8151 = vpack.c.b16 %v7911, %v7907
        %v8152 = vpack.c.b16 %v7912, %v7908
        %v8153 = vpack.c.b16 %v7913, %v7909
        %v8154 = vpack.c.b16 %v7914, %v7910
        %v8155 = vpack.c.b16 %v7919, %v7915
        %v8156 = vpack.c.b16 %v7920, %v7916
        %v8157 = vpack.c.b16 %v7921, %v7917
        %v8158 = vpack.c.b16 %v7922, %v7918
        %v8159 = vpack.c.b16 %v7927, %v7923
        %v8160 = vpack.c.b16 %v7928, %v7924
        %v8161 = vpack.c.b16 %v7929, %v7925
        %v8162 = vpack.c.b16 %v7930, %v7926
        %v8163 = vpack.c.b16 %v7935, %v7931
        %v8164 = vpack.c.b16 %v7936, %v7932
        %v8165 = vpack.c.b16 %v7937, %v7933
        %v8166 = vpack.c.b16 %v7938, %v7934
        %v8167 = vpack.c.b16 %v7943, %v7939
        %v8168 = vpack.c.b16 %v7944, %v7940
        %v8169 = vpack.c.b16 %v7945, %v7941
        %v8170 = vpack.c.b16 %v7946, %v7942
        %v8171 = vpack.c.b16 %v7951, %v7947
        %v8172 = vpack.c.b16 %v7952, %v7948
        %v8173 = vpack.c.b16 %v7953, %v7949
        %v8174 = vpack.c.b16 %v7954, %v7950
        %v8175 = vpack.c.b16 %v7959, %v7955
        %v8176 = vpack.c.b16 %v7960, %v7956
        %v8177 = vpack.c.b16 %v7961, %v7957
        %v8178 = vpack.c.b16 %v7962, %v7958
        %v8179 = vpack.c.b16 %v7967, %v7963
        %v8180 = vpack.c.b16 %v7968, %v7964
        %v8181 = vpack.c.b16 %v7969, %v7965
        %v8182 = vpack.c.b16 %v7970, %v7966
        %v8183 = vpack.c.b16 %v7975, %v7971
        %v8184 = vpack.c.b16 %v7976, %v7972
        %v8185 = vpack.c.b16 %v7977, %v7973
        %v8186 = vpack.c.b16 %v7978, %v7974
        %v8187 = vpack.c.b16 %v7983, %v7979
        %v8188 = vpack.c.b16 %v7984, %v7980
        %v8189 = vpack.c.b16 %v7985, %v7981
        %v8190 = vpack.c.b16 %v7986, %v7982
        %v8191 = vpack.c.b16 %v7991, %v7987
        %v8192 = vpack.c.b16 %v7992, %v7988
        %v8193 = vpack.c.b16 %v7993, %v7989
        %v8194 = vpack.c.b16 %v7994, %v7990
        %v8195 = vpack.c.b16 %v7999, %v7995
        %v8196 = vpack.c.b16 %v8000, %v7996
        %v8197 = vpack.c.b16 %v8001, %v7997
        %v8198 = vpack.c.b16 %v8002, %v7998
        %v8199 = vpack.c.b16 %v8007, %v8003
        %v8200 = vpack.c.b16 %v8008, %v8004
        %v8201 = vpack.c.b16 %v8009, %v8005
        %v8202 = vpack.c.b16 %v8010, %v8006
        %v8203 = vpack.c.b16 %v8015, %v8011
        %v8204 = vpack.c.b16 %v8016, %v8012
        %v8205 = vpack.c.b16 %v8017, %v8013
        %v8206 = vpack.c.b16 %v8018, %v8014
        %v8207 = vpack.c.b16 %v8023, %v8019
        %v8208 = vpack.c.b16 %v8024, %v8020
        %v8209 = vpack.c.b16 %v8025, %v8021
        %v8210 = vpack.c.b16 %v8026, %v8022
        %v8211 = vpack.c.b16 %v8031, %v8027
        %v8212 = vpack.c.b16 %v8032, %v8028
        %v8213 = vpack.c.b16 %v8033, %v8029
        %v8214 = vpack.c.b16 %v8034, %v8030
        %v8215 = vpack.c.b16 %v8039, %v8035
        %v8216 = vpack.c.b16 %v8040, %v8036
        %v8217 = vpack.c.b16 %v8041, %v8037
        %v8218 = vpack.c.b16 %v8042, %v8038
        %v8219 = vpack.c.b16 %v8047, %v8043
        %v8220 = vpack.c.b16 %v8048, %v8044
        %v8221 = vpack.c.b16 %v8049, %v8045
        %v8222 = vpack.c.b16 %v8050, %v8046
        %v8223 = vpack.c.b16 %v8055, %v8051
        %v8224 = vpack.c.b16 %v8056, %v8052
        %v8225 = vpack.c.b16 %v8057, %v8053
        %v8226 = vpack.c.b16 %v8058, %v8054
        %v8227 = vpack.c.b16 %v8063, %v8059
        %v8228 = vpack.c.b16 %v8064, %v8060
        %v8229 = vpack.c.b16 %v8065, %v8061
        %v8230 = vpack.c.b16 %v8066, %v8062
        %v8231 = vpack.c.b16 %v8071, %v8067
        %v8232 = vpack.c.b16 %v8072, %v8068
        %v8233 = vpack.c.b16 %v8073, %v8069
        %v8234 = vpack.c.b16 %v8074, %v8070
        %v8235 = vpack.c.b16 %v8079, %v8075
        %v8236 = vpack.c.b16 %v8080, %v8076
        %v8237 = vpack.c.b16 %v8081, %v8077
        %v8238 = vpack.c.b16 %v8082, %v8078
        %v8239 = vpack.c.b16 %v8087, %v8083
        %v8240 = vpack.c.b16 %v8088, %v8084
        %v8241 = vpack.c.b16 %v8089, %v8085
        %v8242 = vpack.c.b16 %v8090, %v8086
        %v8243 = vpack.c.b16 %v8095, %v8091
        %v8244 = vpack.c.b16 %v8096, %v8092
        %v8245 = vpack.c.b16 %v8097, %v8093
        %v8246 = vpack.c.b16 %v8098, %v8094
        %v8247 = vpack.c.b16 %v8103, %v8099
        %v8248 = vpack.c.b16 %v8104, %v8100
        %v8249 = vpack.c.b16 %v8105, %v8101
        %v8250 = vpack.c.b16 %v8106, %v8102
        %v8251 = vpack.c.b16 %v8111, %v8107
        %v8252 = vpack.c.b16 %v8112, %v8108
        %v8253 = vpack.c.b16 %v8113, %v8109
        %v8254 = vpack.c.b16 %v8114, %v8110
        %v8255 = vpack.c.b16 %v8119, %v8115
        %v8256 = vpack.c.b16 %v8120, %v8116
        %v8257 = vpack.c.b16 %v8121, %v8117
        %v8258 = vpack.c.b16 %v8122, %v8118
        %v8259 = vpack.c.b16 %v8127, %v8123
        %v8260 = vpack.c.b16 %v8128, %v8124
        %v8261 = vpack.c.b16 %v8129, %v8125
        %v8262 = vpack.c.b16 %v8130, %v8126
        %v8263 = vpack.c.b16 %v8135, %v8131
        %v8264 = vpack.c.b16 %v8136, %v8132
        %v8265 = vpack.c.b16 %v8137, %v8133
        %v8266 = vpack.c.b16 %v8138, %v8134
        %8395 = vmatprep.subr.bf16.mxu0 %v8140
        %8396 = vmatpush1.bf16.msra.mxu0 %v8139
        %8397 = vmatprep.subr.bf16.mxu0 %v8144
        %8398 = vmatpush1.bf16.msra.mxu0 %v8143
        %8399 = vmatprep.subr.bf16.mxu0 %v8148
        %8400 = vmatpush1.bf16.msra.mxu0 %v8147
        %8401 = vmatprep.subr.bf16.mxu0 %v8152
        %8402 = vmatpush1.bf16.msra.mxu0 %v8151
        %8403 = vmatprep.subr.bf16.mxu0 %v8156
        %8404 = vmatpush1.bf16.msra.mxu0 %v8155
        %8405 = vmatprep.subr.bf16.mxu0 %v8160
        %8406 = vmatpush1.bf16.msra.mxu0 %v8159
        %8407 = vmatprep.subr.bf16.mxu0 %v8164
        %8408 = vmatpush1.bf16.msra.mxu0 %v8163
        %8409 = vmatprep.subr.bf16.mxu0 %v8168
        %8410 = vmatpush1.bf16.msra.mxu0 %v8167
        %8411 = vmatprep.subr.bf16.mxu0 %v8172
        %8412 = vmatpush1.bf16.msra.mxu0 %v8171
        %8413 = vmatprep.subr.bf16.mxu0 %v8176
        %8414 = vmatpush1.bf16.msra.mxu0 %v8175
        %8415 = vmatprep.subr.bf16.mxu0 %v8180
        %8416 = vmatpush1.bf16.msra.mxu0 %v8179
        %8417 = vmatprep.subr.bf16.mxu0 %v8184
        %8418 = vmatpush1.bf16.msra.mxu0 %v8183
        %8419 = vmatprep.subr.bf16.mxu0 %v8188
        %8420 = vmatpush1.bf16.msra.mxu0 %v8187
        %8421 = vmatprep.subr.bf16.mxu0 %v8192
        %8422 = vmatpush1.bf16.msra.mxu0 %v8191
        %8423 = vmatprep.subr.bf16.mxu0 %v8196
        %8424 = vmatpush1.bf16.msra.mxu0 %v8195
        %8425 = vmatprep.subr.bf16.mxu0 %v8200
        %8426 = vmatpush1.bf16.msra.mxu0 %v8199
        %8427 = vmatprep.mubr.bf16.mxu0 %v7623
        %8428 = vmatmul.mubr.bf16.gmra.mrb[0].mxu0 %v7622
        %v8429 = vpop.f32.mrb[0].mxu0
        %v8430 = vadd.f32 0.0, %v8429
        %v8431 = vpop.f32.mrb[0].mxu0
        %v8432 = vadd.f32 0.0, %v8431
        %v8433 = vpop.f32.mrb[0].mxu0
        %v8434 = vadd.f32 0.0, %v8433
        %v8435 = vpop.f32.mrb[0].mxu0
        %v8436 = vadd.f32 0.0, %v8435
        %8437 = vdwg.mxu0
        %8438 = vmatprep.subr.bf16.mxu0 %v8204
        %8439 = vmatpush1.bf16.msra.mxu0 %v8203
        %8440 = vmatprep.subr.bf16.mxu0 %v8208
        %8441 = vmatpush1.bf16.msra.mxu0 %v8207
        %8442 = vmatprep.subr.bf16.mxu0 %v8212
        %8443 = vmatpush1.bf16.msra.mxu0 %v8211
        %8444 = vmatprep.subr.bf16.mxu0 %v8216
        %8445 = vmatpush1.bf16.msra.mxu0 %v8215
        %8446 = vmatprep.subr.bf16.mxu0 %v8220
        %8447 = vmatpush1.bf16.msra.mxu0 %v8219
        %8448 = vmatprep.subr.bf16.mxu0 %v8224
        %8449 = vmatpush1.bf16.msra.mxu0 %v8223
        %8450 = vmatprep.subr.bf16.mxu0 %v8228
        %8451 = vmatpush1.bf16.msra.mxu0 %v8227
        %8452 = vmatprep.subr.bf16.mxu0 %v8232
        %8453 = vmatpush1.bf16.msra.mxu0 %v8231
        %8454 = vmatprep.subr.bf16.mxu0 %v8236
        %8455 = vmatpush1.bf16.msra.mxu0 %v8235
        %8456 = vmatprep.subr.bf16.mxu0 %v8240
        %8457 = vmatpush1.bf16.msra.mxu0 %v8239
        %8458 = vmatprep.subr.bf16.mxu0 %v8244
        %8459 = vmatpush1.bf16.msra.mxu0 %v8243
        %8460 = vmatprep.subr.bf16.mxu0 %v8248
        %8461 = vmatpush1.bf16.msra.mxu0 %v8247
        %8462 = vmatprep.subr.bf16.mxu0 %v8252
        %8463 = vmatpush1.bf16.msra.mxu0 %v8251
        %8464 = vmatprep.subr.bf16.mxu0 %v8256
        %8465 = vmatpush1.bf16.msra.mxu0 %v8255
        %8466 = vmatprep.subr.bf16.mxu0 %v8260
        %8467 = vmatpush1.bf16.msra.mxu0 %v8259
        %8468 = vmatprep.subr.bf16.mxu0 %v8264
        %8469 = vmatpush1.bf16.msra.mxu0 %v8263
        %8470 = vmatprep.mubr.bf16.mxu0 %v7625
        %8471 = vmatmul.mubr.bf16.gmra.mrb[0].mxu0 %v7624
        %v8472 = vpop.f32.mrb[0].mxu0
        %v8473 = vadd.f32 %v8430, %v8472
        %v8474 = vpop.f32.mrb[0].mxu0
        %v8475 = vadd.f32 %v8432, %v8474
        %v8476 = vpop.f32.mrb[0].mxu0
        %v8477 = vadd.f32 %v8434, %v8476
        %v8478 = vpop.f32.mrb[0].mxu0
        %v8479 = vadd.f32 %v8436, %v8478
        %8480 = vdwg.mxu0
        %8481 = vmatprep.subr.bf16.mxu0 %v8142
        %8482 = vmatpush1.bf16.msra.mxu0 %v8141
        %8483 = vmatprep.subr.bf16.mxu0 %v8146
        %8484 = vmatpush1.bf16.msra.mxu0 %v8145
        %8485 = vmatprep.subr.bf16.mxu0 %v8150
        %8486 = vmatpush1.bf16.msra.mxu0 %v8149
        %8487 = vmatprep.subr.bf16.mxu0 %v8154
        %8488 = vmatpush1.bf16.msra.mxu0 %v8153
        %8489 = vmatprep.subr.bf16.mxu0 %v8158
        %8490 = vmatpush1.bf16.msra.mxu0 %v8157
        %8491 = vmatprep.subr.bf16.mxu0 %v8162
        %8492 = vmatpush1.bf16.msra.mxu0 %v8161
        %8493 = vmatprep.subr.bf16.mxu0 %v8166
        %8494 = vmatpush1.bf16.msra.mxu0 %v8165
        %8495 = vmatprep.subr.bf16.mxu0 %v8170
        %8496 = vmatpush1.bf16.msra.mxu0 %v8169
        %8497 = vmatprep.subr.bf16.mxu0 %v8174
        %8498 = vmatpush1.bf16.msra.mxu0 %v8173
        %8499 = vmatprep.subr.bf16.mxu0 %v8178
        %8500 = vmatpush1.bf16.msra.mxu0 %v8177
        %8501 = vmatprep.subr.bf16.mxu0 %v8182
        %8502 = vmatpush1.bf16.msra.mxu0 %v8181
        %8503 = vmatprep.subr.bf16.mxu0 %v8186
        %8504 = vmatpush1.bf16.msra.mxu0 %v8185
        %8505 = vmatprep.subr.bf16.mxu0 %v8190
        %8506 = vmatpush1.bf16.msra.mxu0 %v8189
        %8507 = vmatprep.subr.bf16.mxu0 %v8194
        %8508 = vmatpush1.bf16.msra.mxu0 %v8193
        %8509 = vmatprep.subr.bf16.mxu0 %v8198
        %8510 = vmatpush1.bf16.msra.mxu0 %v8197
        %8511 = vmatprep.subr.bf16.mxu0 %v8202
        %8512 = vmatpush1.bf16.msra.mxu0 %v8201
        %8513 = vmatprep.mubr.bf16.mxu0 %v7623
        %8514 = vmatmul.mubr.bf16.gmra.mrb[0].mxu0 %v7622
        %v8515 = vpop.f32.mrb[0].mxu0
        %v8516 = vadd.f32 0.0, %v8515
        %v8517 = vpop.f32.mrb[0].mxu0
        %v8518 = vadd.f32 0.0, %v8517
        %v8519 = vpop.f32.mrb[0].mxu0
        %v8520 = vadd.f32 0.0, %v8519
        %v8521 = vpop.f32.mrb[0].mxu0
        %v8522 = vadd.f32 0.0, %v8521
        %8523 = vdwg.mxu0
        %8524 = vmatprep.subr.bf16.mxu0 %v8206
        %8525 = vmatpush1.bf16.msra.mxu0 %v8205
        %8526 = vmatprep.subr.bf16.mxu0 %v8210
        %8527 = vmatpush1.bf16.msra.mxu0 %v8209
        %8528 = vmatprep.subr.bf16.mxu0 %v8214
        %8529 = vmatpush1.bf16.msra.mxu0 %v8213
        %8530 = vmatprep.subr.bf16.mxu0 %v8218
        %8531 = vmatpush1.bf16.msra.mxu0 %v8217
        %8532 = vmatprep.subr.bf16.mxu0 %v8222
        %8533 = vmatpush1.bf16.msra.mxu0 %v8221
        %8534 = vmatprep.subr.bf16.mxu0 %v8226
        %8535 = vmatpush1.bf16.msra.mxu0 %v8225
        %8536 = vmatprep.subr.bf16.mxu0 %v8230
        %8537 = vmatpush1.bf16.msra.mxu0 %v8229
        %8538 = vmatprep.subr.bf16.mxu0 %v8234
        %8539 = vmatpush1.bf16.msra.mxu0 %v8233
        %8540 = vmatprep.subr.bf16.mxu0 %v8238
        %8541 = vmatpush1.bf16.msra.mxu0 %v8237
        %8542 = vmatprep.subr.bf16.mxu0 %v8242
        %8543 = vmatpush1.bf16.msra.mxu0 %v8241
        %8544 = vmatprep.subr.bf16.mxu0 %v8246
        %8545 = vmatpush1.bf16.msra.mxu0 %v8245
        %8546 = vmatprep.subr.bf16.mxu0 %v8250
        %8547 = vmatpush1.bf16.msra.mxu0 %v8249
        %8548 = vmatprep.subr.bf16.mxu0 %v8254
        %8549 = vmatpush1.bf16.msra.mxu0 %v8253
        %8550 = vmatprep.subr.bf16.mxu0 %v8258
        %8551 = vmatpush1.bf16.msra.mxu0 %v8257
        %8552 = vmatprep.subr.bf16.mxu0 %v8262
        %8553 = vmatpush1.bf16.msra.mxu0 %v8261
        %8554 = vmatprep.subr.bf16.mxu0 %v8266
        %8555 = vmatpush1.bf16.msra.mxu0 %v8265
        %8556 = vmatprep.mubr.bf16.mxu0 %v7625
        %8557 = vmatmul.mubr.bf16.gmra.mrb[0].mxu0 %v7624
        %v8558 = vpop.f32.mrb[0].mxu0
        %v8559 = vadd.f32 %v8516, %v8558
        %v8560 = vpop.f32.mrb[0].mxu0
        %v8561 = vadd.f32 %v8518, %v8560
        %v8562 = vpop.f32.mrb[0].mxu0
        %v8563 = vadd.f32 %v8520, %v8562
        %v8564 = vpop.f32.mrb[0].mxu0
        %v8565 = vadd.f32 %v8522, %v8564
        %8566 = vdwg.mxu0
        %v8567 = vadd.f32 %v7504, %v8473
        %v8568 = vadd.f32 %v7506, %v8475
        %v8569 = vadd.f32 %v7590, %v8559
        %v8570 = vadd.f32 %v7592, %v8561
        %v8571 = vadd.f32 %v7508, %v8477
        %v8572 = vadd.f32 %v7510, %v8479
        %v8573 = vadd.f32 %v7594, %v8563
        %v8574 = vadd.f32 %v7596, %v8565
        %v8575 = vld [vmem:[#allocation19] sm:$0xf]
        %v8577 = vlaneseq
        %v8578 = vshrl.u32 %v8577, 7
        %v8579 = vsub.s32 0, %v8578
        %v8580 = vrot.slane %v8575, %v8579
        %v8581 = vlaneseq
        %v8582 = vshrl.u32 %v8581, 7
        %v8583 = vsub.s32 1, %v8582
        %v8584 = vrot.slane %v8575, %v8583
        %v8585 = vlaneseq
        %v8586 = vshrl.u32 %v8585, 7
        %v8587 = vsub.s32 2, %v8586
        %v8588 = vrot.slane %v8575, %v8587
        %v8589 = vlaneseq
        %v8590 = vshrl.u32 %v8589, 7
        %v8591 = vsub.s32 3, %v8590
        %v8592 = vrot.slane %v8575, %v8591
        %v8597 = vmul.f32 %v8580, %v8567
        %v8598 = vmul.f32 %v8584, %v8568
        %v8599 = vmul.f32 %v8588, %v8569
        %v8600 = vmul.f32 %v8592, %v8570
        %v8601 = vmul.f32 %v8580, %v8571
        %v8602 = vmul.f32 %v8584, %v8572
        %v8603 = vmul.f32 %v8588, %v8573
        %v8604 = vmul.f32 %v8592, %v8574
        %v8605 = vsub.f32 1.0, %v8575
        %v8607 = vlaneseq
        %v8608 = vshrl.u32 %v8607, 7
        %v8609 = vsub.s32 0, %v8608
        %v8610 = vrot.slane %v8605, %v8609
        %v8611 = vlaneseq
        %v8612 = vshrl.u32 %v8611, 7
        %v8613 = vsub.s32 1, %v8612
        %v8614 = vrot.slane %v8605, %v8613
        %v8615 = vlaneseq
        %v8616 = vshrl.u32 %v8615, 7
        %v8617 = vsub.s32 2, %v8616
        %v8618 = vrot.slane %v8605, %v8617
        %v8619 = vlaneseq
        %v8620 = vshrl.u32 %v8619, 7
        %v8621 = vsub.s32 3, %v8620
        %v8622 = vrot.slane %v8605, %v8621
        %v8627 = vmul.f32 %v8610, %v5669
        %v8628 = vmul.f32 %v8614, %v5670
        %v8629 = vmul.f32 %v8618, %v5671
        %v8630 = vmul.f32 %v8622, %v5672
        %v8631 = vmul.f32 %v8610, %v5673
        %v8632 = vmul.f32 %v8614, %v5674
        %v8633 = vmul.f32 %v8618, %v5675
        %v8634 = vmul.f32 %v8622, %v5676
        %v8635 = vadd.f32 %v8597, %v8627
        %v8636 = vadd.f32 %v8598, %v8628
        %v8637 = vadd.f32 %v8599, %v8629
        %v8638 = vadd.f32 %v8600, %v8630
        %v8639 = vadd.f32 %v8601, %v8631
        %v8640 = vadd.f32 %v8602, %v8632
        %v8641 = vadd.f32 %v8603, %v8633
        %v8642 = vadd.f32 %v8604, %v8634
        %v8643 = vpack.c.bf16 %v8639, %v8635
        %v8644 = vpack.c.bf16 %v8640, %v8636
        %v8645 = vpack.c.bf16 %v8641, %v8637
        %v8646 = vpack.c.bf16 %v8642, %v8638
        %v8647 = vld [vmem:[#allocation20] sm:$0xff]
        %v8648 = vld [vmem:[#allocation20 + $0x8] sm:$0xff]
        %v8649 = vld [vmem:[#allocation20 + $0x10] sm:$0xff]
        %v8650 = vld [vmem:[#allocation20 + $0x18] sm:$0xff]
        %v8651 = vld [vmem:[#allocation20 + $0x20] sm:$0xff]
        %v8652 = vld [vmem:[#allocation20 + $0x28] sm:$0xff]
        %v8653 = vld [vmem:[#allocation20 + $0x30] sm:$0xff]
        %v8654 = vld [vmem:[#allocation20 + $0x38] sm:$0xff]
        %v8655 = vld [vmem:[#allocation20 + $0x40] sm:$0xff]
        %v8656 = vld [vmem:[#allocation20 + $0x48] sm:$0xff]
        %v8657 = vld [vmem:[#allocation20 + $0x50] sm:$0xff]
        %v8658 = vld [vmem:[#allocation20 + $0x58] sm:$0xff]
        %v8659 = vld [vmem:[#allocation20 + $0x60] sm:$0xff]
        %v8660 = vld [vmem:[#allocation20 + $0x68] sm:$0xff]
        %v8661 = vld [vmem:[#allocation20 + $0x70] sm:$0xff]
        %v8662 = vld [vmem:[#allocation20 + $0x78] sm:$0xff]
        %v8663 = vld [vmem:[#allocation20 + $0x80] sm:$0xff]
        %v8664 = vld [vmem:[#allocation20 + $0x88] sm:$0xff]
        %v8665 = vld [vmem:[#allocation20 + $0x90] sm:$0xff]
        %v8666 = vld [vmem:[#allocation20 + $0x98] sm:$0xff]
        %v8667 = vld [vmem:[#allocation20 + $0xa0] sm:$0xff]
        %v8668 = vld [vmem:[#allocation20 + $0xa8] sm:$0xff]
        %v8669 = vld [vmem:[#allocation20 + $0xb0] sm:$0xff]
        %v8670 = vld [vmem:[#allocation20 + $0xb8] sm:$0xff]
        %v8671 = vld [vmem:[#allocation20 + $0xc0] sm:$0xff]
        %v8672 = vld [vmem:[#allocation20 + $0xc8] sm:$0xff]
        %v8673 = vld [vmem:[#allocation20 + $0xd0] sm:$0xff]
        %v8674 = vld [vmem:[#allocation20 + $0xd8] sm:$0xff]
        %v8675 = vld [vmem:[#allocation20 + $0xe0] sm:$0xff]
        %v8676 = vld [vmem:[#allocation20 + $0xe8] sm:$0xff]
        %v8677 = vld [vmem:[#allocation20 + $0xf0] sm:$0xff]
        %v8678 = vld [vmem:[#allocation20 + $0xf8] sm:$0xff]
        %v8679 = vld [vmem:[#allocation20 + $0x100] sm:$0xff]
        %v8680 = vld [vmem:[#allocation20 + $0x108] sm:$0xff]
        %v8681 = vld [vmem:[#allocation20 + $0x110] sm:$0xff]
        %v8682 = vld [vmem:[#allocation20 + $0x118] sm:$0xff]
        %v8683 = vld [vmem:[#allocation20 + $0x120] sm:$0xff]
        %v8684 = vld [vmem:[#allocation20 + $0x128] sm:$0xff]
        %v8685 = vld [vmem:[#allocation20 + $0x130] sm:$0xff]
        %v8686 = vld [vmem:[#allocation20 + $0x138] sm:$0xff]
        %v8687 = vld [vmem:[#allocation20 + $0x140] sm:$0xff]
        %v8688 = vld [vmem:[#allocation20 + $0x148] sm:$0xff]
        %v8689 = vld [vmem:[#allocation20 + $0x150] sm:$0xff]
        %v8690 = vld [vmem:[#allocation20 + $0x158] sm:$0xff]
        %v8691 = vld [vmem:[#allocation20 + $0x160] sm:$0xff]
        %v8692 = vld [vmem:[#allocation20 + $0x168] sm:$0xff]
        %v8693 = vld [vmem:[#allocation20 + $0x170] sm:$0xff]
        %v8694 = vld [vmem:[#allocation20 + $0x178] sm:$0xff]
        %v8695 = vld [vmem:[#allocation20 + $0x180] sm:$0xff]
        %v8696 = vld [vmem:[#allocation20 + $0x188] sm:$0xff]
        %v8697 = vld [vmem:[#allocation20 + $0x190] sm:$0xff]
        %v8698 = vld [vmem:[#allocation20 + $0x198] sm:$0xff]
        %v8699 = vld [vmem:[#allocation20 + $0x1a0] sm:$0xff]
        %v8700 = vld [vmem:[#allocation20 + $0x1a8] sm:$0xff]
        %v8701 = vld [vmem:[#allocation20 + $0x1b0] sm:$0xff]
        %v8702 = vld [vmem:[#allocation20 + $0x1b8] sm:$0xff]
        %v8703 = vld [vmem:[#allocation20 + $0x1c0] sm:$0xff]
        %v8704 = vld [vmem:[#allocation20 + $0x1c8] sm:$0xff]
        %v8705 = vld [vmem:[#allocation20 + $0x1d0] sm:$0xff]
        %v8706 = vld [vmem:[#allocation20 + $0x1d8] sm:$0xff]
        %v8707 = vld [vmem:[#allocation20 + $0x1e0] sm:$0xff]
        %v8708 = vld [vmem:[#allocation20 + $0x1e8] sm:$0xff]
        %v8709 = vld [vmem:[#allocation20 + $0x1f0] sm:$0xff]
        %v8710 = vld [vmem:[#allocation20 + $0x1f8] sm:$0xff]
        %v8711 = vld [vmem:[#allocation20 + $0x200] sm:$0xff]
        %v8712 = vld [vmem:[#allocation20 + $0x208] sm:$0xff]
        %v8713 = vld [vmem:[#allocation20 + $0x210] sm:$0xff]
        %v8714 = vld [vmem:[#allocation20 + $0x218] sm:$0xff]
        %v8715 = vld [vmem:[#allocation20 + $0x220] sm:$0xff]
        %v8716 = vld [vmem:[#allocation20 + $0x228] sm:$0xff]
        %v8717 = vld [vmem:[#allocation20 + $0x230] sm:$0xff]
        %v8718 = vld [vmem:[#allocation20 + $0x238] sm:$0xff]
        %v8719 = vld [vmem:[#allocation20 + $0x240] sm:$0xff]
        %v8720 = vld [vmem:[#allocation20 + $0x248] sm:$0xff]
        %v8721 = vld [vmem:[#allocation20 + $0x250] sm:$0xff]
        %v8722 = vld [vmem:[#allocation20 + $0x258] sm:$0xff]
        %v8723 = vld [vmem:[#allocation20 + $0x260] sm:$0xff]
        %v8724 = vld [vmem:[#allocation20 + $0x268] sm:$0xff]
        %v8725 = vld [vmem:[#allocation20 + $0x270] sm:$0xff]
        %v8726 = vld [vmem:[#allocation20 + $0x278] sm:$0xff]
        %v8727 = vld [vmem:[#allocation20 + $0x280] sm:$0xff]
        %v8728 = vld [vmem:[#allocation20 + $0x288] sm:$0xff]
        %v8729 = vld [vmem:[#allocation20 + $0x290] sm:$0xff]
        %v8730 = vld [vmem:[#allocation20 + $0x298] sm:$0xff]
        %v8731 = vld [vmem:[#allocation20 + $0x2a0] sm:$0xff]
        %v8732 = vld [vmem:[#allocation20 + $0x2a8] sm:$0xff]
        %v8733 = vld [vmem:[#allocation20 + $0x2b0] sm:$0xff]
        %v8734 = vld [vmem:[#allocation20 + $0x2b8] sm:$0xff]
        %v8735 = vld [vmem:[#allocation20 + $0x2c0] sm:$0xff]
        %v8736 = vld [vmem:[#allocation20 + $0x2c8] sm:$0xff]
        %v8737 = vld [vmem:[#allocation20 + $0x2d0] sm:$0xff]
        %v8738 = vld [vmem:[#allocation20 + $0x2d8] sm:$0xff]
        %v8739 = vld [vmem:[#allocation20 + $0x2e0] sm:$0xff]
        %v8740 = vld [vmem:[#allocation20 + $0x2e8] sm:$0xff]
        %v8741 = vld [vmem:[#allocation20 + $0x2f0] sm:$0xff]
        %v8742 = vld [vmem:[#allocation20 + $0x2f8] sm:$0xff]
        %v8743 = vld [vmem:[#allocation20 + $0x300] sm:$0xff]
        %v8744 = vld [vmem:[#allocation20 + $0x308] sm:$0xff]
        %v8745 = vld [vmem:[#allocation20 + $0x310] sm:$0xff]
        %v8746 = vld [vmem:[#allocation20 + $0x318] sm:$0xff]
        %v8747 = vld [vmem:[#allocation20 + $0x320] sm:$0xff]
        %v8748 = vld [vmem:[#allocation20 + $0x328] sm:$0xff]
        %v8749 = vld [vmem:[#allocation20 + $0x330] sm:$0xff]
        %v8750 = vld [vmem:[#allocation20 + $0x338] sm:$0xff]
        %v8751 = vld [vmem:[#allocation20 + $0x340] sm:$0xff]
        %v8752 = vld [vmem:[#allocation20 + $0x348] sm:$0xff]
        %v8753 = vld [vmem:[#allocation20 + $0x350] sm:$0xff]
        %v8754 = vld [vmem:[#allocation20 + $0x358] sm:$0xff]
        %v8755 = vld [vmem:[#allocation20 + $0x360] sm:$0xff]
        %v8756 = vld [vmem:[#allocation20 + $0x368] sm:$0xff]
        %v8757 = vld [vmem:[#allocation20 + $0x370] sm:$0xff]
        %v8758 = vld [vmem:[#allocation20 + $0x378] sm:$0xff]
        %v8759 = vld [vmem:[#allocation20 + $0x380] sm:$0xff]
        %v8760 = vld [vmem:[#allocation20 + $0x388] sm:$0xff]
        %v8761 = vld [vmem:[#allocation20 + $0x390] sm:$0xff]
        %v8762 = vld [vmem:[#allocation20 + $0x398] sm:$0xff]
        %v8763 = vld [vmem:[#allocation20 + $0x3a0] sm:$0xff]
        %v8764 = vld [vmem:[#allocation20 + $0x3a8] sm:$0xff]
        %v8765 = vld [vmem:[#allocation20 + $0x3b0] sm:$0xff]
        %v8766 = vld [vmem:[#allocation20 + $0x3b8] sm:$0xff]
        %v8767 = vld [vmem:[#allocation20 + $0x3c0] sm:$0xff]
        %v8768 = vld [vmem:[#allocation20 + $0x3c8] sm:$0xff]
        %v8769 = vld [vmem:[#allocation20 + $0x3d0] sm:$0xff]
        %v8770 = vld [vmem:[#allocation20 + $0x3d8] sm:$0xff]
        %v8771 = vld [vmem:[#allocation20 + $0x3e0] sm:$0xff]
        %v8772 = vld [vmem:[#allocation20 + $0x3e8] sm:$0xff]
        %v8773 = vld [vmem:[#allocation20 + $0x3f0] sm:$0xff]
        %v8774 = vld [vmem:[#allocation20 + $0x3f8] sm:$0xff]
        %v8775 = vld [vmem:[#allocation22] sm:$0xf]
        %v8777 = vlaneseq
        %v8778 = vshrl.u32 %v8777, 7
        %v8779 = vsub.s32 0, %v8778
        %v8780 = vrot.slane %v8775, %v8779
        %v8781 = vlaneseq
        %v8782 = vshrl.u32 %v8781, 7
        %v8783 = vsub.s32 1, %v8782
        %v8784 = vrot.slane %v8775, %v8783
        %v8785 = vlaneseq
        %v8786 = vshrl.u32 %v8785, 7
        %v8787 = vsub.s32 2, %v8786
        %v8788 = vrot.slane %v8775, %v8787
        %v8789 = vlaneseq
        %v8790 = vshrl.u32 %v8789, 7
        %v8791 = vsub.s32 3, %v8790
        %v8792 = vrot.slane %v8775, %v8791
        %v8925 = vunpack.c.l.b16 %v8647
        %v8926 = vunpack.c.h.b16 %v8647
        %v8927 = vunpack.c.l.b16 %v8648
        %v8928 = vunpack.c.h.b16 %v8648
        %v8929 = vunpack.c.l.b16 %v8649
        %v8930 = vunpack.c.h.b16 %v8649
        %v8931 = vunpack.c.l.b16 %v8650
        %v8932 = vunpack.c.h.b16 %v8650
        %v8933 = vunpack.c.l.b16 %v8651
        %v8934 = vunpack.c.h.b16 %v8651
        %v8935 = vunpack.c.l.b16 %v8652
        %v8936 = vunpack.c.h.b16 %v8652
        %v8937 = vunpack.c.l.b16 %v8653
        %v8938 = vunpack.c.h.b16 %v8653
        %v8939 = vunpack.c.l.b16 %v8654
        %v8940 = vunpack.c.h.b16 %v8654
        %v8941 = vunpack.c.l.b16 %v8655
        %v8942 = vunpack.c.h.b16 %v8655
        %v8943 = vunpack.c.l.b16 %v8656
        %v8944 = vunpack.c.h.b16 %v8656
        %v8945 = vunpack.c.l.b16 %v8657
        %v8946 = vunpack.c.h.b16 %v8657
        %v8947 = vunpack.c.l.b16 %v8658
        %v8948 = vunpack.c.h.b16 %v8658
        %v8949 = vunpack.c.l.b16 %v8659
        %v8950 = vunpack.c.h.b16 %v8659
        %v8951 = vunpack.c.l.b16 %v8660
        %v8952 = vunpack.c.h.b16 %v8660
        %v8953 = vunpack.c.l.b16 %v8661
        %v8954 = vunpack.c.h.b16 %v8661
        %v8955 = vunpack.c.l.b16 %v8662
        %v8956 = vunpack.c.h.b16 %v8662
        %v8957 = vunpack.c.l.b16 %v8663
        %v8958 = vunpack.c.h.b16 %v8663
        %v8959 = vunpack.c.l.b16 %v8664
        %v8960 = vunpack.c.h.b16 %v8664
        %v8961 = vunpack.c.l.b16 %v8665
        %v8962 = vunpack.c.h.b16 %v8665
        %v8963 = vunpack.c.l.b16 %v8666
        %v8964 = vunpack.c.h.b16 %v8666
        %v8965 = vunpack.c.l.b16 %v8667
        %v8966 = vunpack.c.h.b16 %v8667
        %v8967 = vunpack.c.l.b16 %v8668
        %v8968 = vunpack.c.h.b16 %v8668
        %v8969 = vunpack.c.l.b16 %v8669
        %v8970 = vunpack.c.h.b16 %v8669
        %v8971 = vunpack.c.l.b16 %v8670
        %v8972 = vunpack.c.h.b16 %v8670
        %v8973 = vunpack.c.l.b16 %v8671
        %v8974 = vunpack.c.h.b16 %v8671
        %v8975 = vunpack.c.l.b16 %v8672
        %v8976 = vunpack.c.h.b16 %v8672
        %v8977 = vunpack.c.l.b16 %v8673
        %v8978 = vunpack.c.h.b16 %v8673
        %v8979 = vunpack.c.l.b16 %v8674
        %v8980 = vunpack.c.h.b16 %v8674
        %v8981 = vunpack.c.l.b16 %v8675
        %v8982 = vunpack.c.h.b16 %v8675
        %v8983 = vunpack.c.l.b16 %v8676
        %v8984 = vunpack.c.h.b16 %v8676
        %v8985 = vunpack.c.l.b16 %v8677
        %v8986 = vunpack.c.h.b16 %v8677
        %v8987 = vunpack.c.l.b16 %v8678
        %v8988 = vunpack.c.h.b16 %v8678
        %v8989 = vunpack.c.l.b16 %v8679
        %v8990 = vunpack.c.h.b16 %v8679
        %v8991 = vunpack.c.l.b16 %v8680
        %v8992 = vunpack.c.h.b16 %v8680
        %v8993 = vunpack.c.l.b16 %v8681
        %v8994 = vunpack.c.h.b16 %v8681
        %v8995 = vunpack.c.l.b16 %v8682
        %v8996 = vunpack.c.h.b16 %v8682
        %v8997 = vunpack.c.l.b16 %v8683
        %v8998 = vunpack.c.h.b16 %v8683
        %v8999 = vunpack.c.l.b16 %v8684
        %v9000 = vunpack.c.h.b16 %v8684
        %v9001 = vunpack.c.l.b16 %v8685
        %v9002 = vunpack.c.h.b16 %v8685
        %v9003 = vunpack.c.l.b16 %v8686
        %v9004 = vunpack.c.h.b16 %v8686
        %v9005 = vunpack.c.l.b16 %v8687
        %v9006 = vunpack.c.h.b16 %v8687
        %v9007 = vunpack.c.l.b16 %v8688
        %v9008 = vunpack.c.h.b16 %v8688
        %v9009 = vunpack.c.l.b16 %v8689
        %v9010 = vunpack.c.h.b16 %v8689
        %v9011 = vunpack.c.l.b16 %v8690
        %v9012 = vunpack.c.h.b16 %v8690
        %v9013 = vunpack.c.l.b16 %v8691
        %v9014 = vunpack.c.h.b16 %v8691
        %v9015 = vunpack.c.l.b16 %v8692
        %v9016 = vunpack.c.h.b16 %v8692
        %v9017 = vunpack.c.l.b16 %v8693
        %v9018 = vunpack.c.h.b16 %v8693
        %v9019 = vunpack.c.l.b16 %v8694
        %v9020 = vunpack.c.h.b16 %v8694
        %v9021 = vunpack.c.l.b16 %v8695
        %v9022 = vunpack.c.h.b16 %v8695
        %v9023 = vunpack.c.l.b16 %v8696
        %v9024 = vunpack.c.h.b16 %v8696
        %v9025 = vunpack.c.l.b16 %v8697
        %v9026 = vunpack.c.h.b16 %v8697
        %v9027 = vunpack.c.l.b16 %v8698
        %v9028 = vunpack.c.h.b16 %v8698
        %v9029 = vunpack.c.l.b16 %v8699
        %v9030 = vunpack.c.h.b16 %v8699
        %v9031 = vunpack.c.l.b16 %v8700
        %v9032 = vunpack.c.h.b16 %v8700
        %v9033 = vunpack.c.l.b16 %v8701
        %v9034 = vunpack.c.h.b16 %v8701
        %v9035 = vunpack.c.l.b16 %v8702
        %v9036 = vunpack.c.h.b16 %v8702
        %v9037 = vunpack.c.l.b16 %v8703
        %v9038 = vunpack.c.h.b16 %v8703
        %v9039 = vunpack.c.l.b16 %v8704
        %v9040 = vunpack.c.h.b16 %v8704
        %v9041 = vunpack.c.l.b16 %v8705
        %v9042 = vunpack.c.h.b16 %v8705
        %v9043 = vunpack.c.l.b16 %v8706
        %v9044 = vunpack.c.h.b16 %v8706
        %v9045 = vunpack.c.l.b16 %v8707
        %v9046 = vunpack.c.h.b16 %v8707
        %v9047 = vunpack.c.l.b16 %v8708
        %v9048 = vunpack.c.h.b16 %v8708
        %v9049 = vunpack.c.l.b16 %v8709
        %v9050 = vunpack.c.h.b16 %v8709
        %v9051 = vunpack.c.l.b16 %v8710
        %v9052 = vunpack.c.h.b16 %v8710
        %v9053 = vunpack.c.l.b16 %v8711
        %v9054 = vunpack.c.h.b16 %v8711
        %v9055 = vunpack.c.l.b16 %v8712
        %v9056 = vunpack.c.h.b16 %v8712
        %v9057 = vunpack.c.l.b16 %v8713
        %v9058 = vunpack.c.h.b16 %v8713
        %v9059 = vunpack.c.l.b16 %v8714
        %v9060 = vunpack.c.h.b16 %v8714
        %v9061 = vunpack.c.l.b16 %v8715
        %v9062 = vunpack.c.h.b16 %v8715
        %v9063 = vunpack.c.l.b16 %v8716
        %v9064 = vunpack.c.h.b16 %v8716
        %v9065 = vunpack.c.l.b16 %v8717
        %v9066 = vunpack.c.h.b16 %v8717
        %v9067 = vunpack.c.l.b16 %v8718
        %v9068 = vunpack.c.h.b16 %v8718
        %v9069 = vunpack.c.l.b16 %v8719
        %v9070 = vunpack.c.h.b16 %v8719
        %v9071 = vunpack.c.l.b16 %v8720
        %v9072 = vunpack.c.h.b16 %v8720
        %v9073 = vunpack.c.l.b16 %v8721
        %v9074 = vunpack.c.h.b16 %v8721
        %v9075 = vunpack.c.l.b16 %v8722
        %v9076 = vunpack.c.h.b16 %v8722
        %v9077 = vunpack.c.l.b16 %v8723
        %v9078 = vunpack.c.h.b16 %v8723
        %v9079 = vunpack.c.l.b16 %v8724
        %v9080 = vunpack.c.h.b16 %v8724
        %v9081 = vunpack.c.l.b16 %v8725
        %v9082 = vunpack.c.h.b16 %v8725
        %v9083 = vunpack.c.l.b16 %v8726
        %v9084 = vunpack.c.h.b16 %v8726
        %v9085 = vunpack.c.l.b16 %v8727
        %v9086 = vunpack.c.h.b16 %v8727
        %v9087 = vunpack.c.l.b16 %v8728
        %v9088 = vunpack.c.h.b16 %v8728
        %v9089 = vunpack.c.l.b16 %v8729
        %v9090 = vunpack.c.h.b16 %v8729
        %v9091 = vunpack.c.l.b16 %v8730
        %v9092 = vunpack.c.h.b16 %v8730
        %v9093 = vunpack.c.l.b16 %v8731
        %v9094 = vunpack.c.h.b16 %v8731
        %v9095 = vunpack.c.l.b16 %v8732
        %v9096 = vunpack.c.h.b16 %v8732
        %v9097 = vunpack.c.l.b16 %v8733
        %v9098 = vunpack.c.h.b16 %v8733
        %v9099 = vunpack.c.l.b16 %v8734
        %v9100 = vunpack.c.h.b16 %v8734
        %v9101 = vunpack.c.l.b16 %v8735
        %v9102 = vunpack.c.h.b16 %v8735
        %v9103 = vunpack.c.l.b16 %v8736
        %v9104 = vunpack.c.h.b16 %v8736
        %v9105 = vunpack.c.l.b16 %v8737
        %v9106 = vunpack.c.h.b16 %v8737
        %v9107 = vunpack.c.l.b16 %v8738
        %v9108 = vunpack.c.h.b16 %v8738
        %v9109 = vunpack.c.l.b16 %v8739
        %v9110 = vunpack.c.h.b16 %v8739
        %v9111 = vunpack.c.l.b16 %v8740
        %v9112 = vunpack.c.h.b16 %v8740
        %v9113 = vunpack.c.l.b16 %v8741
        %v9114 = vunpack.c.h.b16 %v8741
        %v9115 = vunpack.c.l.b16 %v8742
        %v9116 = vunpack.c.h.b16 %v8742
        %v9117 = vunpack.c.l.b16 %v8743
        %v9118 = vunpack.c.h.b16 %v8743
        %v9119 = vunpack.c.l.b16 %v8744
        %v9120 = vunpack.c.h.b16 %v8744
        %v9121 = vunpack.c.l.b16 %v8745
        %v9122 = vunpack.c.h.b16 %v8745
        %v9123 = vunpack.c.l.b16 %v8746
        %v9124 = vunpack.c.h.b16 %v8746
        %v9125 = vunpack.c.l.b16 %v8747
        %v9126 = vunpack.c.h.b16 %v8747
        %v9127 = vunpack.c.l.b16 %v8748
        %v9128 = vunpack.c.h.b16 %v8748
        %v9129 = vunpack.c.l.b16 %v8749
        %v9130 = vunpack.c.h.b16 %v8749
        %v9131 = vunpack.c.l.b16 %v8750
        %v9132 = vunpack.c.h.b16 %v8750
        %v9133 = vunpack.c.l.b16 %v8751
        %v9134 = vunpack.c.h.b16 %v8751
        %v9135 = vunpack.c.l.b16 %v8752
        %v9136 = vunpack.c.h.b16 %v8752
        %v9137 = vunpack.c.l.b16 %v8753
        %v9138 = vunpack.c.h.b16 %v8753
        %v9139 = vunpack.c.l.b16 %v8754
        %v9140 = vunpack.c.h.b16 %v8754
        %v9141 = vunpack.c.l.b16 %v8755
        %v9142 = vunpack.c.h.b16 %v8755
        %v9143 = vunpack.c.l.b16 %v8756
        %v9144 = vunpack.c.h.b16 %v8756
        %v9145 = vunpack.c.l.b16 %v8757
        %v9146 = vunpack.c.h.b16 %v8757
        %v9147 = vunpack.c.l.b16 %v8758
        %v9148 = vunpack.c.h.b16 %v8758
        %v9149 = vunpack.c.l.b16 %v8759
        %v9150 = vunpack.c.h.b16 %v8759
        %v9151 = vunpack.c.l.b16 %v8760
        %v9152 = vunpack.c.h.b16 %v8760
        %v9153 = vunpack.c.l.b16 %v8761
        %v9154 = vunpack.c.h.b16 %v8761
        %v9155 = vunpack.c.l.b16 %v8762
        %v9156 = vunpack.c.h.b16 %v8762
        %v9157 = vunpack.c.l.b16 %v8763
        %v9158 = vunpack.c.h.b16 %v8763
        %v9159 = vunpack.c.l.b16 %v8764
        %v9160 = vunpack.c.h.b16 %v8764
        %v9161 = vunpack.c.l.b16 %v8765
        %v9162 = vunpack.c.h.b16 %v8765
        %v9163 = vunpack.c.l.b16 %v8766
        %v9164 = vunpack.c.h.b16 %v8766
        %v9165 = vunpack.c.l.b16 %v8767
        %v9166 = vunpack.c.h.b16 %v8767
        %v9167 = vunpack.c.l.b16 %v8768
        %v9168 = vunpack.c.h.b16 %v8768
        %v9169 = vunpack.c.l.b16 %v8769
        %v9170 = vunpack.c.h.b16 %v8769
        %v9171 = vunpack.c.l.b16 %v8770
        %v9172 = vunpack.c.h.b16 %v8770
        %v9173 = vunpack.c.l.b16 %v8771
        %v9174 = vunpack.c.h.b16 %v8771
        %v9175 = vunpack.c.l.b16 %v8772
        %v9176 = vunpack.c.h.b16 %v8772
        %v9177 = vunpack.c.l.b16 %v8773
        %v9178 = vunpack.c.h.b16 %v8773
        %v9179 = vunpack.c.l.b16 %v8774
        %v9180 = vunpack.c.h.b16 %v8774
        %v9181 = vpack.c.b16 %v8929, %v8925
        %v9182 = vpack.c.b16 %v8930, %v8926
        %v9183 = vpack.c.b16 %v8931, %v8927
        %v9184 = vpack.c.b16 %v8932, %v8928
        %v9185 = vpack.c.b16 %v8937, %v8933
        %v9186 = vpack.c.b16 %v8938, %v8934
        %v9187 = vpack.c.b16 %v8939, %v8935
        %v9188 = vpack.c.b16 %v8940, %v8936
        %v9189 = vpack.c.b16 %v8945, %v8941
        %v9190 = vpack.c.b16 %v8946, %v8942
        %v9191 = vpack.c.b16 %v8947, %v8943
        %v9192 = vpack.c.b16 %v8948, %v8944
        %v9193 = vpack.c.b16 %v8953, %v8949
        %v9194 = vpack.c.b16 %v8954, %v8950
        %v9195 = vpack.c.b16 %v8955, %v8951
        %v9196 = vpack.c.b16 %v8956, %v8952
        %v9197 = vpack.c.b16 %v8961, %v8957
        %v9198 = vpack.c.b16 %v8962, %v8958
        %v9199 = vpack.c.b16 %v8963, %v8959
        %v9200 = vpack.c.b16 %v8964, %v8960
        %v9201 = vpack.c.b16 %v8969, %v8965
        %v9202 = vpack.c.b16 %v8970, %v8966
        %v9203 = vpack.c.b16 %v8971, %v8967
        %v9204 = vpack.c.b16 %v8972, %v8968
        %v9205 = vpack.c.b16 %v8977, %v8973
        %v9206 = vpack.c.b16 %v8978, %v8974
        %v9207 = vpack.c.b16 %v8979, %v8975
        %v9208 = vpack.c.b16 %v8980, %v8976
        %v9209 = vpack.c.b16 %v8985, %v8981
        %v9210 = vpack.c.b16 %v8986, %v8982
        %v9211 = vpack.c.b16 %v8987, %v8983
        %v9212 = vpack.c.b16 %v8988, %v8984
        %v9213 = vpack.c.b16 %v8993, %v8989
        %v9214 = vpack.c.b16 %v8994, %v8990
        %v9215 = vpack.c.b16 %v8995, %v8991
        %v9216 = vpack.c.b16 %v8996, %v8992
        %v9217 = vpack.c.b16 %v9001, %v8997
        %v9218 = vpack.c.b16 %v9002, %v8998
        %v9219 = vpack.c.b16 %v9003, %v8999
        %v9220 = vpack.c.b16 %v9004, %v9000
        %v9221 = vpack.c.b16 %v9009, %v9005
        %v9222 = vpack.c.b16 %v9010, %v9006
        %v9223 = vpack.c.b16 %v9011, %v9007
        %v9224 = vpack.c.b16 %v9012, %v9008
        %v9225 = vpack.c.b16 %v9017, %v9013
        %v9226 = vpack.c.b16 %v9018, %v9014
        %v9227 = vpack.c.b16 %v9019, %v9015
        %v9228 = vpack.c.b16 %v9020, %v9016
        %v9229 = vpack.c.b16 %v9025, %v9021
        %v9230 = vpack.c.b16 %v9026, %v9022
        %v9231 = vpack.c.b16 %v9027, %v9023
        %v9232 = vpack.c.b16 %v9028, %v9024
        %v9233 = vpack.c.b16 %v9033, %v9029
        %v9234 = vpack.c.b16 %v9034, %v9030
        %v9235 = vpack.c.b16 %v9035, %v9031
        %v9236 = vpack.c.b16 %v9036, %v9032
        %v9237 = vpack.c.b16 %v9041, %v9037
        %v9238 = vpack.c.b16 %v9042, %v9038
        %v9239 = vpack.c.b16 %v9043, %v9039
        %v9240 = vpack.c.b16 %v9044, %v9040
        %v9241 = vpack.c.b16 %v9049, %v9045
        %v9242 = vpack.c.b16 %v9050, %v9046
        %v9243 = vpack.c.b16 %v9051, %v9047
        %v9244 = vpack.c.b16 %v9052, %v9048
        %v9245 = vpack.c.b16 %v9057, %v9053
        %v9246 = vpack.c.b16 %v9058, %v9054
        %v9247 = vpack.c.b16 %v9059, %v9055
        %v9248 = vpack.c.b16 %v9060, %v9056
        %v9249 = vpack.c.b16 %v9065, %v9061
        %v9250 = vpack.c.b16 %v9066, %v9062
        %v9251 = vpack.c.b16 %v9067, %v9063
        %v9252 = vpack.c.b16 %v9068, %v9064
        %v9253 = vpack.c.b16 %v9073, %v9069
        %v9254 = vpack.c.b16 %v9074, %v9070
        %v9255 = vpack.c.b16 %v9075, %v9071
        %v9256 = vpack.c.b16 %v9076, %v9072
        %v9257 = vpack.c.b16 %v9081, %v9077
        %v9258 = vpack.c.b16 %v9082, %v9078
        %v9259 = vpack.c.b16 %v9083, %v9079
        %v9260 = vpack.c.b16 %v9084, %v9080
        %v9261 = vpack.c.b16 %v9089, %v9085
        %v9262 = vpack.c.b16 %v9090, %v9086
        %v9263 = vpack.c.b16 %v9091, %v9087
        %v9264 = vpack.c.b16 %v9092, %v9088
        %v9265 = vpack.c.b16 %v9097, %v9093
        %v9266 = vpack.c.b16 %v9098, %v9094
        %v9267 = vpack.c.b16 %v9099, %v9095
        %v9268 = vpack.c.b16 %v9100, %v9096
        %v9269 = vpack.c.b16 %v9105, %v9101
        %v9270 = vpack.c.b16 %v9106, %v9102
        %v9271 = vpack.c.b16 %v9107, %v9103
        %v9272 = vpack.c.b16 %v9108, %v9104
        %v9273 = vpack.c.b16 %v9113, %v9109
        %v9274 = vpack.c.b16 %v9114, %v9110
        %v9275 = vpack.c.b16 %v9115, %v9111
        %v9276 = vpack.c.b16 %v9116, %v9112
        %v9277 = vpack.c.b16 %v9121, %v9117
        %v9278 = vpack.c.b16 %v9122, %v9118
        %v9279 = vpack.c.b16 %v9123, %v9119
        %v9280 = vpack.c.b16 %v9124, %v9120
        %v9281 = vpack.c.b16 %v9129, %v9125
        %v9282 = vpack.c.b16 %v9130, %v9126
        %v9283 = vpack.c.b16 %v9131, %v9127
        %v9284 = vpack.c.b16 %v9132, %v9128
        %v9285 = vpack.c.b16 %v9137, %v9133
        %v9286 = vpack.c.b16 %v9138, %v9134
        %v9287 = vpack.c.b16 %v9139, %v9135
        %v9288 = vpack.c.b16 %v9140, %v9136
        %v9289 = vpack.c.b16 %v9145, %v9141
        %v9290 = vpack.c.b16 %v9146, %v9142
        %v9291 = vpack.c.b16 %v9147, %v9143
        %v9292 = vpack.c.b16 %v9148, %v9144
        %v9293 = vpack.c.b16 %v9153, %v9149
        %v9294 = vpack.c.b16 %v9154, %v9150
        %v9295 = vpack.c.b16 %v9155, %v9151
        %v9296 = vpack.c.b16 %v9156, %v9152
        %v9297 = vpack.c.b16 %v9161, %v9157
        %v9298 = vpack.c.b16 %v9162, %v9158
        %v9299 = vpack.c.b16 %v9163, %v9159
        %v9300 = vpack.c.b16 %v9164, %v9160
        %v9301 = vpack.c.b16 %v9169, %v9165
        %v9302 = vpack.c.b16 %v9170, %v9166
        %v9303 = vpack.c.b16 %v9171, %v9167
        %v9304 = vpack.c.b16 %v9172, %v9168
        %v9305 = vpack.c.b16 %v9177, %v9173
        %v9306 = vpack.c.b16 %v9178, %v9174
        %v9307 = vpack.c.b16 %v9179, %v9175
        %v9308 = vpack.c.b16 %v9180, %v9176
        %9437 = vmatprep.subr.bf16.mxu0 %v9182
        %9438 = vmatpush1.bf16.msra.mxu0 %v9181
        %9439 = vmatprep.subr.bf16.mxu0 %v9186
        %9440 = vmatpush1.bf16.msra.mxu0 %v9185
        %9441 = vmatprep.subr.bf16.mxu0 %v9190
        %9442 = vmatpush1.bf16.msra.mxu0 %v9189
        %9443 = vmatprep.subr.bf16.mxu0 %v9194
        %9444 = vmatpush1.bf16.msra.mxu0 %v9193
        %9445 = vmatprep.subr.bf16.mxu0 %v9198
        %9446 = vmatpush1.bf16.msra.mxu0 %v9197
        %9447 = vmatprep.subr.bf16.mxu0 %v9202
        %9448 = vmatpush1.bf16.msra.mxu0 %v9201
        %9449 = vmatprep.subr.bf16.mxu0 %v9206
        %9450 = vmatpush1.bf16.msra.mxu0 %v9205
        %9451 = vmatprep.subr.bf16.mxu0 %v9210
        %9452 = vmatpush1.bf16.msra.mxu0 %v9209
        %9453 = vmatprep.subr.bf16.mxu0 %v9214
        %9454 = vmatpush1.bf16.msra.mxu0 %v9213
        %9455 = vmatprep.subr.bf16.mxu0 %v9218
        %9456 = vmatpush1.bf16.msra.mxu0 %v9217
        %9457 = vmatprep.subr.bf16.mxu0 %v9222
        %9458 = vmatpush1.bf16.msra.mxu0 %v9221
        %9459 = vmatprep.subr.bf16.mxu0 %v9226
        %9460 = vmatpush1.bf16.msra.mxu0 %v9225
        %9461 = vmatprep.subr.bf16.mxu0 %v9230
        %9462 = vmatpush1.bf16.msra.mxu0 %v9229
        %9463 = vmatprep.subr.bf16.mxu0 %v9234
        %9464 = vmatpush1.bf16.msra.mxu0 %v9233
        %9465 = vmatprep.subr.bf16.mxu0 %v9238
        %9466 = vmatpush1.bf16.msra.mxu0 %v9237
        %9467 = vmatprep.subr.bf16.mxu0 %v9242
        %9468 = vmatpush1.bf16.msra.mxu0 %v9241
        %9469 = vmatprep.mubr.bf16.mxu0 %v8644
        %9470 = vmatmul.mubr.bf16.gmra.mrb[0].mxu0 %v8643
        %v9471 = vpop.f32.mrb[0].mxu0
        %v9472 = vadd.f32 %v8780, %v9471
        %v9473 = vpop.f32.mrb[0].mxu0
        %v9474 = vadd.f32 %v8784, %v9473
        %v9475 = vpop.f32.mrb[0].mxu0
        %v9476 = vadd.f32 %v8780, %v9475
        %v9477 = vpop.f32.mrb[0].mxu0
        %v9478 = vadd.f32 %v8784, %v9477
        %9479 = vdwg.mxu0
        %9480 = vmatprep.subr.bf16.mxu0 %v9246
        %9481 = vmatpush1.bf16.msra.mxu0 %v9245
        %9482 = vmatprep.subr.bf16.mxu0 %v9250
        %9483 = vmatpush1.bf16.msra.mxu0 %v9249
        %9484 = vmatprep.subr.bf16.mxu0 %v9254
        %9485 = vmatpush1.bf16.msra.mxu0 %v9253
        %9486 = vmatprep.subr.bf16.mxu0 %v9258
        %9487 = vmatpush1.bf16.msra.mxu0 %v9257
        %9488 = vmatprep.subr.bf16.mxu0 %v9262
        %9489 = vmatpush1.bf16.msra.mxu0 %v9261
        %9490 = vmatprep.subr.bf16.mxu0 %v9266
        %9491 = vmatpush1.bf16.msra.mxu0 %v9265
        %9492 = vmatprep.subr.bf16.mxu0 %v9270
        %9493 = vmatpush1.bf16.msra.mxu0 %v9269
        %9494 = vmatprep.subr.bf16.mxu0 %v9274
        %9495 = vmatpush1.bf16.msra.mxu0 %v9273
        %9496 = vmatprep.subr.bf16.mxu0 %v9278
        %9497 = vmatpush1.bf16.msra.mxu0 %v9277
        %9498 = vmatprep.subr.bf16.mxu0 %v9282
        %9499 = vmatpush1.bf16.msra.mxu0 %v9281
        %9500 = vmatprep.subr.bf16.mxu0 %v9286
        %9501 = vmatpush1.bf16.msra.mxu0 %v9285
        %9502 = vmatprep.subr.bf16.mxu0 %v9290
        %9503 = vmatpush1.bf16.msra.mxu0 %v9289
        %9504 = vmatprep.subr.bf16.mxu0 %v9294
        %9505 = vmatpush1.bf16.msra.mxu0 %v9293
        %9506 = vmatprep.subr.bf16.mxu0 %v9298
        %9507 = vmatpush1.bf16.msra.mxu0 %v9297
        %9508 = vmatprep.subr.bf16.mxu0 %v9302
        %9509 = vmatpush1.bf16.msra.mxu0 %v9301
        %9510 = vmatprep.subr.bf16.mxu0 %v9306
        %9511 = vmatpush1.bf16.msra.mxu0 %v9305
        %9512 = vmatprep.mubr.bf16.mxu0 %v8646
        %9513 = vmatmul.mubr.bf16.gmra.mrb[0].mxu0 %v8645
        %v9514 = vpop.f32.mrb[0].mxu0
        %v9515 = vadd.f32 %v9472, %v9514
        %v9516 = vpop.f32.mrb[0].mxu0
        %v9517 = vadd.f32 %v9474, %v9516
        %v9518 = vpop.f32.mrb[0].mxu0
        %v9519 = vadd.f32 %v9476, %v9518
        %v9520 = vpop.f32.mrb[0].mxu0
        %v9521 = vadd.f32 %v9478, %v9520
        %9522 = vdwg.mxu0
        %9523 = vmatprep.subr.bf16.mxu0 %v9184
        %9524 = vmatpush1.bf16.msra.mxu0 %v9183
        %9525 = vmatprep.subr.bf16.mxu0 %v9188
        %9526 = vmatpush1.bf16.msra.mxu0 %v9187
        %9527 = vmatprep.subr.bf16.mxu0 %v9192
        %9528 = vmatpush1.bf16.msra.mxu0 %v9191
        %9529 = vmatprep.subr.bf16.mxu0 %v9196
        %9530 = vmatpush1.bf16.msra.mxu0 %v9195
        %9531 = vmatprep.subr.bf16.mxu0 %v9200
        %9532 = vmatpush1.bf16.msra.mxu0 %v9199
        %9533 = vmatprep.subr.bf16.mxu0 %v9204
        %9534 = vmatpush1.bf16.msra.mxu0 %v9203
        %9535 = vmatprep.subr.bf16.mxu0 %v9208
        %9536 = vmatpush1.bf16.msra.mxu0 %v9207
        %9537 = vmatprep.subr.bf16.mxu0 %v9212
        %9538 = vmatpush1.bf16.msra.mxu0 %v9211
        %9539 = vmatprep.subr.bf16.mxu0 %v9216
        %9540 = vmatpush1.bf16.msra.mxu0 %v9215
        %9541 = vmatprep.subr.bf16.mxu0 %v9220
        %9542 = vmatpush1.bf16.msra.mxu0 %v9219
        %9543 = vmatprep.subr.bf16.mxu0 %v9224
        %9544 = vmatpush1.bf16.msra.mxu0 %v9223
        %9545 = vmatprep.subr.bf16.mxu0 %v9228
        %9546 = vmatpush1.bf16.msra.mxu0 %v9227
        %9547 = vmatprep.subr.bf16.mxu0 %v9232
        %9548 = vmatpush1.bf16.msra.mxu0 %v9231
        %9549 = vmatprep.subr.bf16.mxu0 %v9236
        %9550 = vmatpush1.bf16.msra.mxu0 %v9235
        %9551 = vmatprep.subr.bf16.mxu0 %v9240
        %9552 = vmatpush1.bf16.msra.mxu0 %v9239
        %9553 = vmatprep.subr.bf16.mxu0 %v9244
        %9554 = vmatpush1.bf16.msra.mxu0 %v9243
        %9555 = vmatprep.mubr.bf16.mxu0 %v8644
        %9556 = vmatmul.mubr.bf16.gmra.mrb[0].mxu0 %v8643
        %v9557 = vpop.f32.mrb[0].mxu0
        %v9558 = vadd.f32 %v8788, %v9557
        %v9559 = vpop.f32.mrb[0].mxu0
        %v9560 = vadd.f32 %v8792, %v9559
        %v9561 = vpop.f32.mrb[0].mxu0
        %v9562 = vadd.f32 %v8788, %v9561
        %v9563 = vpop.f32.mrb[0].mxu0
        %v9564 = vadd.f32 %v8792, %v9563
        %9565 = vdwg.mxu0
        %9566 = vmatprep.subr.bf16.mxu0 %v9248
        %9567 = vmatpush1.bf16.msra.mxu0 %v9247
        %9568 = vmatprep.subr.bf16.mxu0 %v9252
        %9569 = vmatpush1.bf16.msra.mxu0 %v9251
        %9570 = vmatprep.subr.bf16.mxu0 %v9256
        %9571 = vmatpush1.bf16.msra.mxu0 %v9255
        %9572 = vmatprep.subr.bf16.mxu0 %v9260
        %9573 = vmatpush1.bf16.msra.mxu0 %v9259
        %9574 = vmatprep.subr.bf16.mxu0 %v9264
        %9575 = vmatpush1.bf16.msra.mxu0 %v9263
        %9576 = vmatprep.subr.bf16.mxu0 %v9268
        %9577 = vmatpush1.bf16.msra.mxu0 %v9267
        %9578 = vmatprep.subr.bf16.mxu0 %v9272
        %9579 = vmatpush1.bf16.msra.mxu0 %v9271
        %9580 = vmatprep.subr.bf16.mxu0 %v9276
        %9581 = vmatpush1.bf16.msra.mxu0 %v9275
        %9582 = vmatprep.subr.bf16.mxu0 %v9280
        %9583 = vmatpush1.bf16.msra.mxu0 %v9279
        %9584 = vmatprep.subr.bf16.mxu0 %v9284
        %9585 = vmatpush1.bf16.msra.mxu0 %v9283
        %9586 = vmatprep.subr.bf16.mxu0 %v9288
        %9587 = vmatpush1.bf16.msra.mxu0 %v9287
        %9588 = vmatprep.subr.bf16.mxu0 %v9292
        %9589 = vmatpush1.bf16.msra.mxu0 %v9291
        %9590 = vmatprep.subr.bf16.mxu0 %v9296
        %9591 = vmatpush1.bf16.msra.mxu0 %v9295
        %9592 = vmatprep.subr.bf16.mxu0 %v9300
        %9593 = vmatpush1.bf16.msra.mxu0 %v9299
        %9594 = vmatprep.subr.bf16.mxu0 %v9304
        %9595 = vmatpush1.bf16.msra.mxu0 %v9303
        %9596 = vmatprep.subr.bf16.mxu0 %v9308
        %9597 = vmatpush1.bf16.msra.mxu0 %v9307
        %9598 = vmatprep.mubr.bf16.mxu0 %v8646
        %9599 = vmatmul.mubr.bf16.gmra.mrb[0].mxu0 %v8645
        %v9600 = vpop.f32.mrb[0].mxu0
        %v9601 = vadd.f32 %v9558, %v9600
        %v9602 = vpop.f32.mrb[0].mxu0
        %v9603 = vadd.f32 %v9560, %v9602
        %v9604 = vpop.f32.mrb[0].mxu0
        %v9605 = vadd.f32 %v9562, %v9604
        %v9606 = vpop.f32.mrb[0].mxu0
        %v9607 = vadd.f32 %v9564, %v9606
        %9608 = vdwg.mxu0
        %v9609 = vld [vmem:[#allocation10] sm:$0xff]
        %v9610 = vld [vmem:[#allocation10 + $0x8] sm:$0xff]
        %v9611 = vld [vmem:[#allocation10 + $0x10] sm:$0xff]
        %v9612 = vld [vmem:[#allocation10 + $0x18] sm:$0xff]
        %v9613 = vld [vmem:[#allocation10 + $0x20] sm:$0xff]
        %v9614 = vld [vmem:[#allocation10 + $0x28] sm:$0xff]
        %v9615 = vld [vmem:[#allocation10 + $0x30] sm:$0xff]
        %v9616 = vld [vmem:[#allocation10 + $0x38] sm:$0xff]
        %v9617 = vld [vmem:[#allocation10 + $0x40] sm:$0xff]
        %v9618 = vld [vmem:[#allocation10 + $0x48] sm:$0xff]
        %v9619 = vld [vmem:[#allocation10 + $0x50] sm:$0xff]
        %v9620 = vld [vmem:[#allocation10 + $0x58] sm:$0xff]
        %v9621 = vld [vmem:[#allocation10 + $0x60] sm:$0xff]
        %v9622 = vld [vmem:[#allocation10 + $0x68] sm:$0xff]
        %v9623 = vld [vmem:[#allocation10 + $0x70] sm:$0xff]
        %v9624 = vld [vmem:[#allocation10 + $0x78] sm:$0xff]
        %v9625 = vld [vmem:[#allocation10 + $0x80] sm:$0xff]
        %v9626 = vld [vmem:[#allocation10 + $0x88] sm:$0xff]
        %v9627 = vld [vmem:[#allocation10 + $0x90] sm:$0xff]
        %v9628 = vld [vmem:[#allocation10 + $0x98] sm:$0xff]
        %v9629 = vld [vmem:[#allocation10 + $0xa0] sm:$0xff]
        %v9630 = vld [vmem:[#allocation10 + $0xa8] sm:$0xff]
        %v9631 = vld [vmem:[#allocation10 + $0xb0] sm:$0xff]
        %v9632 = vld [vmem:[#allocation10 + $0xb8] sm:$0xff]
        %v9633 = vld [vmem:[#allocation10 + $0xc0] sm:$0xff]
        %v9634 = vld [vmem:[#allocation10 + $0xc8] sm:$0xff]
        %v9635 = vld [vmem:[#allocation10 + $0xd0] sm:$0xff]
        %v9636 = vld [vmem:[#allocation10 + $0xd8] sm:$0xff]
        %v9637 = vld [vmem:[#allocation10 + $0xe0] sm:$0xff]
        %v9638 = vld [vmem:[#allocation10 + $0xe8] sm:$0xff]
        %v9639 = vld [vmem:[#allocation10 + $0xf0] sm:$0xff]
        %v9640 = vld [vmem:[#allocation10 + $0xf8] sm:$0xff]
        %v9641 = vld [vmem:[#allocation10 + $0x100] sm:$0xff]
        %v9642 = vld [vmem:[#allocation10 + $0x108] sm:$0xff]
        %v9643 = vld [vmem:[#allocation10 + $0x110] sm:$0xff]
        %v9644 = vld [vmem:[#allocation10 + $0x118] sm:$0xff]
        %v9645 = vld [vmem:[#allocation10 + $0x120] sm:$0xff]
        %v9646 = vld [vmem:[#allocation10 + $0x128] sm:$0xff]
        %v9647 = vld [vmem:[#allocation10 + $0x130] sm:$0xff]
        %v9648 = vld [vmem:[#allocation10 + $0x138] sm:$0xff]
        %v9649 = vld [vmem:[#allocation10 + $0x140] sm:$0xff]
        %v9650 = vld [vmem:[#allocation10 + $0x148] sm:$0xff]
        %v9651 = vld [vmem:[#allocation10 + $0x150] sm:$0xff]
        %v9652 = vld [vmem:[#allocation10 + $0x158] sm:$0xff]
        %v9653 = vld [vmem:[#allocation10 + $0x160] sm:$0xff]
        %v9654 = vld [vmem:[#allocation10 + $0x168] sm:$0xff]
        %v9655 = vld [vmem:[#allocation10 + $0x170] sm:$0xff]
        %v9656 = vld [vmem:[#allocation10 + $0x178] sm:$0xff]
        %v9657 = vld [vmem:[#allocation10 + $0x180] sm:$0xff]
        %v9658 = vld [vmem:[#allocation10 + $0x188] sm:$0xff]
        %v9659 = vld [vmem:[#allocation10 + $0x190] sm:$0xff]
        %v9660 = vld [vmem:[#allocation10 + $0x198] sm:$0xff]
        %v9661 = vld [vmem:[#allocation10 + $0x1a0] sm:$0xff]
        %v9662 = vld [vmem:[#allocation10 + $0x1a8] sm:$0xff]
        %v9663 = vld [vmem:[#allocation10 + $0x1b0] sm:$0xff]
        %v9664 = vld [vmem:[#allocation10 + $0x1b8] sm:$0xff]
        %v9665 = vld [vmem:[#allocation10 + $0x1c0] sm:$0xff]
        %v9666 = vld [vmem:[#allocation10 + $0x1c8] sm:$0xff]
        %v9667 = vld [vmem:[#allocation10 + $0x1d0] sm:$0xff]
        %v9668 = vld [vmem:[#allocation10 + $0x1d8] sm:$0xff]
        %v9669 = vld [vmem:[#allocation10 + $0x1e0] sm:$0xff]
        %v9670 = vld [vmem:[#allocation10 + $0x1e8] sm:$0xff]
        %v9671 = vld [vmem:[#allocation10 + $0x1f0] sm:$0xff]
        %v9672 = vld [vmem:[#allocation10 + $0x1f8] sm:$0xff]
        %v9673 = vld [vmem:[#allocation10 + $0x200] sm:$0xff]
        %v9674 = vld [vmem:[#allocation10 + $0x208] sm:$0xff]
        %v9675 = vld [vmem:[#allocation10 + $0x210] sm:$0xff]
        %v9676 = vld [vmem:[#allocation10 + $0x218] sm:$0xff]
        %v9677 = vld [vmem:[#allocation10 + $0x220] sm:$0xff]
        %v9678 = vld [vmem:[#allocation10 + $0x228] sm:$0xff]
        %v9679 = vld [vmem:[#allocation10 + $0x230] sm:$0xff]
        %v9680 = vld [vmem:[#allocation10 + $0x238] sm:$0xff]
        %v9681 = vld [vmem:[#allocation10 + $0x240] sm:$0xff]
        %v9682 = vld [vmem:[#allocation10 + $0x248] sm:$0xff]
        %v9683 = vld [vmem:[#allocation10 + $0x250] sm:$0xff]
        %v9684 = vld [vmem:[#allocation10 + $0x258] sm:$0xff]
        %v9685 = vld [vmem:[#allocation10 + $0x260] sm:$0xff]
        %v9686 = vld [vmem:[#allocation10 + $0x268] sm:$0xff]
        %v9687 = vld [vmem:[#allocation10 + $0x270] sm:$0xff]
        %v9688 = vld [vmem:[#allocation10 + $0x278] sm:$0xff]
        %v9689 = vld [vmem:[#allocation10 + $0x280] sm:$0xff]
        %v9690 = vld [vmem:[#allocation10 + $0x288] sm:$0xff]
        %v9691 = vld [vmem:[#allocation10 + $0x290] sm:$0xff]
        %v9692 = vld [vmem:[#allocation10 + $0x298] sm:$0xff]
        %v9693 = vld [vmem:[#allocation10 + $0x2a0] sm:$0xff]
        %v9694 = vld [vmem:[#allocation10 + $0x2a8] sm:$0xff]
        %v9695 = vld [vmem:[#allocation10 + $0x2b0] sm:$0xff]
        %v9696 = vld [vmem:[#allocation10 + $0x2b8] sm:$0xff]
        %v9697 = vld [vmem:[#allocation10 + $0x2c0] sm:$0xff]
        %v9698 = vld [vmem:[#allocation10 + $0x2c8] sm:$0xff]
        %v9699 = vld [vmem:[#allocation10 + $0x2d0] sm:$0xff]
        %v9700 = vld [vmem:[#allocation10 + $0x2d8] sm:$0xff]
        %v9701 = vld [vmem:[#allocation10 + $0x2e0] sm:$0xff]
        %v9702 = vld [vmem:[#allocation10 + $0x2e8] sm:$0xff]
        %v9703 = vld [vmem:[#allocation10 + $0x2f0] sm:$0xff]
        %v9704 = vld [vmem:[#allocation10 + $0x2f8] sm:$0xff]
        %v9705 = vld [vmem:[#allocation10 + $0x300] sm:$0xff]
        %v9706 = vld [vmem:[#allocation10 + $0x308] sm:$0xff]
        %v9707 = vld [vmem:[#allocation10 + $0x310] sm:$0xff]
        %v9708 = vld [vmem:[#allocation10 + $0x318] sm:$0xff]
        %v9709 = vld [vmem:[#allocation10 + $0x320] sm:$0xff]
        %v9710 = vld [vmem:[#allocation10 + $0x328] sm:$0xff]
        %v9711 = vld [vmem:[#allocation10 + $0x330] sm:$0xff]
        %v9712 = vld [vmem:[#allocation10 + $0x338] sm:$0xff]
        %v9713 = vld [vmem:[#allocation10 + $0x340] sm:$0xff]
        %v9714 = vld [vmem:[#allocation10 + $0x348] sm:$0xff]
        %v9715 = vld [vmem:[#allocation10 + $0x350] sm:$0xff]
        %v9716 = vld [vmem:[#allocation10 + $0x358] sm:$0xff]
        %v9717 = vld [vmem:[#allocation10 + $0x360] sm:$0xff]
        %v9718 = vld [vmem:[#allocation10 + $0x368] sm:$0xff]
        %v9719 = vld [vmem:[#allocation10 + $0x370] sm:$0xff]
        %v9720 = vld [vmem:[#allocation10 + $0x378] sm:$0xff]
        %v9721 = vld [vmem:[#allocation10 + $0x380] sm:$0xff]
        %v9722 = vld [vmem:[#allocation10 + $0x388] sm:$0xff]
        %v9723 = vld [vmem:[#allocation10 + $0x390] sm:$0xff]
        %v9724 = vld [vmem:[#allocation10 + $0x398] sm:$0xff]
        %v9725 = vld [vmem:[#allocation10 + $0x3a0] sm:$0xff]
        %v9726 = vld [vmem:[#allocation10 + $0x3a8] sm:$0xff]
        %v9727 = vld [vmem:[#allocation10 + $0x3b0] sm:$0xff]
        %v9728 = vld [vmem:[#allocation10 + $0x3b8] sm:$0xff]
        %v9729 = vld [vmem:[#allocation10 + $0x3c0] sm:$0xff]
        %v9730 = vld [vmem:[#allocation10 + $0x3c8] sm:$0xff]
        %v9731 = vld [vmem:[#allocation10 + $0x3d0] sm:$0xff]
        %v9732 = vld [vmem:[#allocation10 + $0x3d8] sm:$0xff]
        %v9733 = vld [vmem:[#allocation10 + $0x3e0] sm:$0xff]
        %v9734 = vld [vmem:[#allocation10 + $0x3e8] sm:$0xff]
        %v9735 = vld [vmem:[#allocation10 + $0x3f0] sm:$0xff]
        %v9736 = vld [vmem:[#allocation10 + $0x3f8] sm:$0xff]
        %v9737 = vld [vmem:[#allocation10 + $0x400] sm:$0xff]
        %v9738 = vld [vmem:[#allocation10 + $0x408] sm:$0xff]
        %v9739 = vld [vmem:[#allocation10 + $0x410] sm:$0xff]
        %v9740 = vld [vmem:[#allocation10 + $0x418] sm:$0xff]
        %v9741 = vld [vmem:[#allocation10 + $0x420] sm:$0xff]
        %v9742 = vld [vmem:[#allocation10 + $0x428] sm:$0xff]
        %v9743 = vld [vmem:[#allocation10 + $0x430] sm:$0xff]
        %v9744 = vld [vmem:[#allocation10 + $0x438] sm:$0xff]
        %v9745 = vld [vmem:[#allocation10 + $0x440] sm:$0xff]
        %v9746 = vld [vmem:[#allocation10 + $0x448] sm:$0xff]
        %v9747 = vld [vmem:[#allocation10 + $0x450] sm:$0xff]
        %v9748 = vld [vmem:[#allocation10 + $0x458] sm:$0xff]
        %v9749 = vld [vmem:[#allocation10 + $0x460] sm:$0xff]
        %v9750 = vld [vmem:[#allocation10 + $0x468] sm:$0xff]
        %v9751 = vld [vmem:[#allocation10 + $0x470] sm:$0xff]
        %v9752 = vld [vmem:[#allocation10 + $0x478] sm:$0xff]
        %v9753 = vld [vmem:[#allocation10 + $0x480] sm:$0xff]
        %v9754 = vld [vmem:[#allocation10 + $0x488] sm:$0xff]
        %v9755 = vld [vmem:[#allocation10 + $0x490] sm:$0xff]
        %v9756 = vld [vmem:[#allocation10 + $0x498] sm:$0xff]
        %v9757 = vld [vmem:[#allocation10 + $0x4a0] sm:$0xff]
        %v9758 = vld [vmem:[#allocation10 + $0x4a8] sm:$0xff]
        %v9759 = vld [vmem:[#allocation10 + $0x4b0] sm:$0xff]
        %v9760 = vld [vmem:[#allocation10 + $0x4b8] sm:$0xff]
        %v9761 = vld [vmem:[#allocation10 + $0x4c0] sm:$0xff]
        %v9762 = vld [vmem:[#allocation10 + $0x4c8] sm:$0xff]
        %v9763 = vld [vmem:[#allocation10 + $0x4d0] sm:$0xff]
        %v9764 = vld [vmem:[#allocation10 + $0x4d8] sm:$0xff]
        %v9765 = vld [vmem:[#allocation10 + $0x4e0] sm:$0xff]
        %v9766 = vld [vmem:[#allocation10 + $0x4e8] sm:$0xff]
        %v9767 = vld [vmem:[#allocation10 + $0x4f0] sm:$0xff]
        %v9768 = vld [vmem:[#allocation10 + $0x4f8] sm:$0xff]
        %v9769 = vld [vmem:[#allocation10 + $0x500] sm:$0xff]
        %v9770 = vld [vmem:[#allocation10 + $0x508] sm:$0xff]
        %v9771 = vld [vmem:[#allocation10 + $0x510] sm:$0xff]
        %v9772 = vld [vmem:[#allocation10 + $0x518] sm:$0xff]
        %v9773 = vld [vmem:[#allocation10 + $0x520] sm:$0xff]
        %v9774 = vld [vmem:[#allocation10 + $0x528] sm:$0xff]
        %v9775 = vld [vmem:[#allocation10 + $0x530] sm:$0xff]
        %v9776 = vld [vmem:[#allocation10 + $0x538] sm:$0xff]
        %v9777 = vld [vmem:[#allocation10 + $0x540] sm:$0xff]
        %v9778 = vld [vmem:[#allocation10 + $0x548] sm:$0xff]
        %v9779 = vld [vmem:[#allocation10 + $0x550] sm:$0xff]
        %v9780 = vld [vmem:[#allocation10 + $0x558] sm:$0xff]
        %v9781 = vld [vmem:[#allocation10 + $0x560] sm:$0xff]
        %v9782 = vld [vmem:[#allocation10 + $0x568] sm:$0xff]
        %v9783 = vld [vmem:[#allocation10 + $0x570] sm:$0xff]
        %v9784 = vld [vmem:[#allocation10 + $0x578] sm:$0xff]
        %v9785 = vld [vmem:[#allocation10 + $0x580] sm:$0xff]
        %v9786 = vld [vmem:[#allocation10 + $0x588] sm:$0xff]
        %v9787 = vld [vmem:[#allocation10 + $0x590] sm:$0xff]
        %v9788 = vld [vmem:[#allocation10 + $0x598] sm:$0xff]
        %v9789 = vld [vmem:[#allocation10 + $0x5a0] sm:$0xff]
        %v9790 = vld [vmem:[#allocation10 + $0x5a8] sm:$0xff]
        %v9791 = vld [vmem:[#allocation10 + $0x5b0] sm:$0xff]
        %v9792 = vld [vmem:[#allocation10 + $0x5b8] sm:$0xff]
        %v9793 = vld [vmem:[#allocation10 + $0x5c0] sm:$0xff]
        %v9794 = vld [vmem:[#allocation10 + $0x5c8] sm:$0xff]
        %v9795 = vld [vmem:[#allocation10 + $0x5d0] sm:$0xff]
        %v9796 = vld [vmem:[#allocation10 + $0x5d8] sm:$0xff]
        %v9797 = vld [vmem:[#allocation10 + $0x5e0] sm:$0xff]
        %v9798 = vld [vmem:[#allocation10 + $0x5e8] sm:$0xff]
        %v9799 = vld [vmem:[#allocation10 + $0x5f0] sm:$0xff]
        %v9800 = vld [vmem:[#allocation10 + $0x5f8] sm:$0xff]
        %v9801 = vld [vmem:[#allocation10 + $0x600] sm:$0xff]
        %v9802 = vld [vmem:[#allocation10 + $0x608] sm:$0xff]
        %v9803 = vld [vmem:[#allocation10 + $0x610] sm:$0xff]
        %v9804 = vld [vmem:[#allocation10 + $0x618] sm:$0xff]
        %v9805 = vld [vmem:[#allocation10 + $0x620] sm:$0xff]
        %v9806 = vld [vmem:[#allocation10 + $0x628] sm:$0xff]
        %v9807 = vld [vmem:[#allocation10 + $0x630] sm:$0xff]
        %v9808 = vld [vmem:[#allocation10 + $0x638] sm:$0xff]
        %v9809 = vld [vmem:[#allocation10 + $0x640] sm:$0xff]
        %v9810 = vld [vmem:[#allocation10 + $0x648] sm:$0xff]
        %v9811 = vld [vmem:[#allocation10 + $0x650] sm:$0xff]
        %v9812 = vld [vmem:[#allocation10 + $0x658] sm:$0xff]
        %v9813 = vld [vmem:[#allocation10 + $0x660] sm:$0xff]
        %v9814 = vld [vmem:[#allocation10 + $0x668] sm:$0xff]
        %v9815 = vld [vmem:[#allocation10 + $0x670] sm:$0xff]
        %v9816 = vld [vmem:[#allocation10 + $0x678] sm:$0xff]
        %v9817 = vld [vmem:[#allocation10 + $0x680] sm:$0xff]
        %v9818 = vld [vmem:[#allocation10 + $0x688] sm:$0xff]
        %v9819 = vld [vmem:[#allocation10 + $0x690] sm:$0xff]
        %v9820 = vld [vmem:[#allocation10 + $0x698] sm:$0xff]
        %v9821 = vld [vmem:[#allocation10 + $0x6a0] sm:$0xff]
        %v9822 = vld [vmem:[#allocation10 + $0x6a8] sm:$0xff]
        %v9823 = vld [vmem:[#allocation10 + $0x6b0] sm:$0xff]
        %v9824 = vld [vmem:[#allocation10 + $0x6b8] sm:$0xff]
        %v9825 = vld [vmem:[#allocation10 + $0x6c0] sm:$0xff]
        %v9826 = vld [vmem:[#allocation10 + $0x6c8] sm:$0xff]
        %v9827 = vld [vmem:[#allocation10 + $0x6d0] sm:$0xff]
        %v9828 = vld [vmem:[#allocation10 + $0x6d8] sm:$0xff]
        %v9829 = vld [vmem:[#allocation10 + $0x6e0] sm:$0xff]
        %v9830 = vld [vmem:[#allocation10 + $0x6e8] sm:$0xff]
        %v9831 = vld [vmem:[#allocation10 + $0x6f0] sm:$0xff]
        %v9832 = vld [vmem:[#allocation10 + $0x6f8] sm:$0xff]
        %v9833 = vld [vmem:[#allocation10 + $0x700] sm:$0xff]
        %v9834 = vld [vmem:[#allocation10 + $0x708] sm:$0xff]
        %v9835 = vld [vmem:[#allocation10 + $0x710] sm:$0xff]
        %v9836 = vld [vmem:[#allocation10 + $0x718] sm:$0xff]
        %v9837 = vld [vmem:[#allocation10 + $0x720] sm:$0xff]
        %v9838 = vld [vmem:[#allocation10 + $0x728] sm:$0xff]
        %v9839 = vld [vmem:[#allocation10 + $0x730] sm:$0xff]
        %v9840 = vld [vmem:[#allocation10 + $0x738] sm:$0xff]
        %v9841 = vld [vmem:[#allocation10 + $0x740] sm:$0xff]
        %v9842 = vld [vmem:[#allocation10 + $0x748] sm:$0xff]
        %v9843 = vld [vmem:[#allocation10 + $0x750] sm:$0xff]
        %v9844 = vld [vmem:[#allocation10 + $0x758] sm:$0xff]
        %v9845 = vld [vmem:[#allocation10 + $0x760] sm:$0xff]
        %v9846 = vld [vmem:[#allocation10 + $0x768] sm:$0xff]
        %v9847 = vld [vmem:[#allocation10 + $0x770] sm:$0xff]
        %v9848 = vld [vmem:[#allocation10 + $0x778] sm:$0xff]
        %v9849 = vld [vmem:[#allocation10 + $0x780] sm:$0xff]
        %v9850 = vld [vmem:[#allocation10 + $0x788] sm:$0xff]
        %v9851 = vld [vmem:[#allocation10 + $0x790] sm:$0xff]
        %v9852 = vld [vmem:[#allocation10 + $0x798] sm:$0xff]
        %v9853 = vld [vmem:[#allocation10 + $0x7a0] sm:$0xff]
        %v9854 = vld [vmem:[#allocation10 + $0x7a8] sm:$0xff]
        %v9855 = vld [vmem:[#allocation10 + $0x7b0] sm:$0xff]
        %v9856 = vld [vmem:[#allocation10 + $0x7b8] sm:$0xff]
        %v9857 = vld [vmem:[#allocation10 + $0x7c0] sm:$0xff]
        %v9858 = vld [vmem:[#allocation10 + $0x7c8] sm:$0xff]
        %v9859 = vld [vmem:[#allocation10 + $0x7d0] sm:$0xff]
        %v9860 = vld [vmem:[#allocation10 + $0x7d8] sm:$0xff]
        %v9861 = vld [vmem:[#allocation10 + $0x7e0] sm:$0xff]
        %v9862 = vld [vmem:[#allocation10 + $0x7e8] sm:$0xff]
        %v9863 = vld [vmem:[#allocation10 + $0x7f0] sm:$0xff]
        %v9864 = vld [vmem:[#allocation10 + $0x7f8] sm:$0xff]
        %9865 = vmatprep.subr.mxu0 %v9610
        %9866 = vmatpush1.msra.mxu0 %v9609
        %9867 = vmatprep.subr.mxu0 %v9614
        %9868 = vmatpush1.msra.mxu0 %v9613
        %9869 = vmatprep.subr.mxu0 %v9618
        %9870 = vmatpush1.msra.mxu0 %v9617
        %9871 = vmatprep.subr.mxu0 %v9622
        %9872 = vmatpush1.msra.mxu0 %v9621
        %9873 = vmatprep.subr.mxu0 %v9626
        %9874 = vmatpush1.msra.mxu0 %v9625
        %9875 = vmatprep.subr.mxu0 %v9630
        %9876 = vmatpush1.msra.mxu0 %v9629
        %9877 = vmatprep.subr.mxu0 %v9634
        %9878 = vmatpush1.msra.mxu0 %v9633
        %9879 = vmatprep.subr.mxu0 %v9638
        %9880 = vmatpush1.msra.mxu0 %v9637
        %9881 = vmatprep.subr.mxu0 %v9642
        %9882 = vmatpush1.msra.mxu0 %v9641
        %9883 = vmatprep.subr.mxu0 %v9646
        %9884 = vmatpush1.msra.mxu0 %v9645
        %9885 = vmatprep.subr.mxu0 %v9650
        %9886 = vmatpush1.msra.mxu0 %v9649
        %9887 = vmatprep.subr.mxu0 %v9654
        %9888 = vmatpush1.msra.mxu0 %v9653
        %9889 = vmatprep.subr.mxu0 %v9658
        %9890 = vmatpush1.msra.mxu0 %v9657
        %9891 = vmatprep.subr.mxu0 %v9662
        %9892 = vmatpush1.msra.mxu0 %v9661
        %9893 = vmatprep.subr.mxu0 %v9666
        %9894 = vmatpush1.msra.mxu0 %v9665
        %9895 = vmatprep.subr.mxu0 %v9670
        %9896 = vmatpush1.msra.mxu0 %v9669
        %9897 = vmatprep.subr.mxu0 %v9674
        %9898 = vmatpush1.msra.mxu0 %v9673
        %9899 = vmatprep.subr.mxu0 %v9678
        %9900 = vmatpush1.msra.mxu0 %v9677
        %9901 = vmatprep.subr.mxu0 %v9682
        %9902 = vmatpush1.msra.mxu0 %v9681
        %9903 = vmatprep.subr.mxu0 %v9686
        %9904 = vmatpush1.msra.mxu0 %v9685
        %9905 = vmatprep.subr.mxu0 %v9690
        %9906 = vmatpush1.msra.mxu0 %v9689
        %9907 = vmatprep.subr.mxu0 %v9694
        %9908 = vmatpush1.msra.mxu0 %v9693
        %9909 = vmatprep.subr.mxu0 %v9698
        %9910 = vmatpush1.msra.mxu0 %v9697
        %9911 = vmatprep.subr.mxu0 %v9702
        %9912 = vmatpush1.msra.mxu0 %v9701
        %9913 = vmatprep.subr.mxu0 %v9706
        %9914 = vmatpush1.msra.mxu0 %v9705
        %9915 = vmatprep.subr.mxu0 %v9710
        %9916 = vmatpush1.msra.mxu0 %v9709
        %9917 = vmatprep.subr.mxu0 %v9714
        %9918 = vmatpush1.msra.mxu0 %v9713
        %9919 = vmatprep.subr.mxu0 %v9718
        %9920 = vmatpush1.msra.mxu0 %v9717
        %9921 = vmatprep.subr.mxu0 %v9722
        %9922 = vmatpush1.msra.mxu0 %v9721
        %9923 = vmatprep.subr.mxu0 %v9726
        %9924 = vmatpush1.msra.mxu0 %v9725
        %9925 = vmatprep.subr.mxu0 %v9730
        %9926 = vmatpush1.msra.mxu0 %v9729
        %9927 = vmatprep.subr.mxu0 %v9734
        %9928 = vmatpush1.msra.mxu0 %v9733
        %9929 = vmatprep.mubr.f32.mxu0 %v8636
        %9930 = vmatmul.mubr.f32.gmra.mrb[0].mxu0 %v8635
        %v9931 = vpop.f32.mrb[0].mxu0
        %v9932 = vadd.f32 0.0, %v9931
        %v9933 = vpop.f32.mrb[0].mxu0
        %v9934 = vadd.f32 0.0, %v9933
        %9935 = vmatprep.mubr.f32.mxu0 %v8640
        %9936 = vmatmul.mubr.f32.gmra.mrb[0].mxu0 %v8639
        %v9937 = vpop.f32.mrb[0].mxu0
        %v9938 = vadd.f32 0.0, %v9937
        %v9939 = vpop.f32.mrb[0].mxu0
        %v9940 = vadd.f32 0.0, %v9939
        %9941 = vdwg.mxu0
        %9942 = vmatprep.subr.mxu0 %v9738
        %9943 = vmatpush1.msra.mxu0 %v9737
        %9944 = vmatprep.subr.mxu0 %v9742
        %9945 = vmatpush1.msra.mxu0 %v9741
        %9946 = vmatprep.subr.mxu0 %v9746
        %9947 = vmatpush1.msra.mxu0 %v9745
        %9948 = vmatprep.subr.mxu0 %v9750
        %9949 = vmatpush1.msra.mxu0 %v9749
        %9950 = vmatprep.subr.mxu0 %v9754
        %9951 = vmatpush1.msra.mxu0 %v9753
        %9952 = vmatprep.subr.mxu0 %v9758
        %9953 = vmatpush1.msra.mxu0 %v9757
        %9954 = vmatprep.subr.mxu0 %v9762
        %9955 = vmatpush1.msra.mxu0 %v9761
        %9956 = vmatprep.subr.mxu0 %v9766
        %9957 = vmatpush1.msra.mxu0 %v9765
        %9958 = vmatprep.subr.mxu0 %v9770
        %9959 = vmatpush1.msra.mxu0 %v9769
        %9960 = vmatprep.subr.mxu0 %v9774
        %9961 = vmatpush1.msra.mxu0 %v9773
        %9962 = vmatprep.subr.mxu0 %v9778
        %9963 = vmatpush1.msra.mxu0 %v9777
        %9964 = vmatprep.subr.mxu0 %v9782
        %9965 = vmatpush1.msra.mxu0 %v9781
        %9966 = vmatprep.subr.mxu0 %v9786
        %9967 = vmatpush1.msra.mxu0 %v9785
        %9968 = vmatprep.subr.mxu0 %v9790
        %9969 = vmatpush1.msra.mxu0 %v9789
        %9970 = vmatprep.subr.mxu0 %v9794
        %9971 = vmatpush1.msra.mxu0 %v9793
        %9972 = vmatprep.subr.mxu0 %v9798
        %9973 = vmatpush1.msra.mxu0 %v9797
        %9974 = vmatprep.subr.mxu0 %v9802
        %9975 = vmatpush1.msra.mxu0 %v9801
        %9976 = vmatprep.subr.mxu0 %v9806
        %9977 = vmatpush1.msra.mxu0 %v9805
        %9978 = vmatprep.subr.mxu0 %v9810
        %9979 = vmatpush1.msra.mxu0 %v9809
        %9980 = vmatprep.subr.mxu0 %v9814
        %9981 = vmatpush1.msra.mxu0 %v9813
        %9982 = vmatprep.subr.mxu0 %v9818
        %9983 = vmatpush1.msra.mxu0 %v9817
        %9984 = vmatprep.subr.mxu0 %v9822
        %9985 = vmatpush1.msra.mxu0 %v9821
        %9986 = vmatprep.subr.mxu0 %v9826
        %9987 = vmatpush1.msra.mxu0 %v9825
        %9988 = vmatprep.subr.mxu0 %v9830
        %9989 = vmatpush1.msra.mxu0 %v9829
        %9990 = vmatprep.subr.mxu0 %v9834
        %9991 = vmatpush1.msra.mxu0 %v9833
        %9992 = vmatprep.subr.mxu0 %v9838
        %9993 = vmatpush1.msra.mxu0 %v9837
        %9994 = vmatprep.subr.mxu0 %v9842
        %9995 = vmatpush1.msra.mxu0 %v9841
        %9996 = vmatprep.subr.mxu0 %v9846
        %9997 = vmatpush1.msra.mxu0 %v9845
        %9998 = vmatprep.subr.mxu0 %v9850
        %9999 = vmatpush1.msra.mxu0 %v9849
        %10000 = vmatprep.subr.mxu0 %v9854
        %10001 = vmatpush1.msra.mxu0 %v9853
        %10002 = vmatprep.subr.mxu0 %v9858
        %10003 = vmatpush1.msra.mxu0 %v9857
        %10004 = vmatprep.subr.mxu0 %v9862
        %10005 = vmatpush1.msra.mxu0 %v9861
        %10006 = vmatprep.mubr.f32.mxu0 %v8638
        %10007 = vmatmul.mubr.f32.gmra.mrb[0].mxu0 %v8637
        %v10008 = vpop.f32.mrb[0].mxu0
        %v10009 = vadd.f32 %v9932, %v10008
        %v10010 = vpop.f32.mrb[0].mxu0
        %v10011 = vadd.f32 %v9934, %v10010
        %10012 = vmatprep.mubr.f32.mxu0 %v8642
        %10013 = vmatmul.mubr.f32.gmra.mrb[0].mxu0 %v8641
        %v10014 = vpop.f32.mrb[0].mxu0
        %v10015 = vadd.f32 %v9938, %v10014
        %v10016 = vpop.f32.mrb[0].mxu0
        %v10017 = vadd.f32 %v9940, %v10016
        %10018 = vdwg.mxu0
        %10019 = vmatprep.subr.mxu0 %v9612
        %10020 = vmatpush1.msra.mxu0 %v9611
        %10021 = vmatprep.subr.mxu0 %v9616
        %10022 = vmatpush1.msra.mxu0 %v9615
        %10023 = vmatprep.subr.mxu0 %v9620
        %10024 = vmatpush1.msra.mxu0 %v9619
        %10025 = vmatprep.subr.mxu0 %v9624
        %10026 = vmatpush1.msra.mxu0 %v9623
        %10027 = vmatprep.subr.mxu0 %v9628
        %10028 = vmatpush1.msra.mxu0 %v9627
        %10029 = vmatprep.subr.mxu0 %v9632
        %10030 = vmatpush1.msra.mxu0 %v9631
        %10031 = vmatprep.subr.mxu0 %v9636
        %10032 = vmatpush1.msra.mxu0 %v9635
        %10033 = vmatprep.subr.mxu0 %v9640
        %10034 = vmatpush1.msra.mxu0 %v9639
        %10035 = vmatprep.subr.mxu0 %v9644
        %10036 = vmatpush1.msra.mxu0 %v9643
        %10037 = vmatprep.subr.mxu0 %v9648
        %10038 = vmatpush1.msra.mxu0 %v9647
        %10039 = vmatprep.subr.mxu0 %v9652
        %10040 = vmatpush1.msra.mxu0 %v9651
        %10041 = vmatprep.subr.mxu0 %v9656
        %10042 = vmatpush1.msra.mxu0 %v9655
        %10043 = vmatprep.subr.mxu0 %v9660
        %10044 = vmatpush1.msra.mxu0 %v9659
        %10045 = vmatprep.subr.mxu0 %v9664
        %10046 = vmatpush1.msra.mxu0 %v9663
        %10047 = vmatprep.subr.mxu0 %v9668
        %10048 = vmatpush1.msra.mxu0 %v9667
        %10049 = vmatprep.subr.mxu0 %v9672
        %10050 = vmatpush1.msra.mxu0 %v9671
        %10051 = vmatprep.subr.mxu0 %v9676
        %10052 = vmatpush1.msra.mxu0 %v9675
        %10053 = vmatprep.subr.mxu0 %v9680
        %10054 = vmatpush1.msra.mxu0 %v9679
        %10055 = vmatprep.subr.mxu0 %v9684
        %10056 = vmatpush1.msra.mxu0 %v9683
        %10057 = vmatprep.subr.mxu0 %v9688
        %10058 = vmatpush1.msra.mxu0 %v9687
        %10059 = vmatprep.subr.mxu0 %v9692
        %10060 = vmatpush1.msra.mxu0 %v9691
        %10061 = vmatprep.subr.mxu0 %v9696
        %10062 = vmatpush1.msra.mxu0 %v9695
        %10063 = vmatprep.subr.mxu0 %v9700
        %10064 = vmatpush1.msra.mxu0 %v9699
        %10065 = vmatprep.subr.mxu0 %v9704
        %10066 = vmatpush1.msra.mxu0 %v9703
        %10067 = vmatprep.subr.mxu0 %v9708
        %10068 = vmatpush1.msra.mxu0 %v9707
        %10069 = vmatprep.subr.mxu0 %v9712
        %10070 = vmatpush1.msra.mxu0 %v9711
        %10071 = vmatprep.subr.mxu0 %v9716
        %10072 = vmatpush1.msra.mxu0 %v9715
        %10073 = vmatprep.subr.mxu0 %v9720
        %10074 = vmatpush1.msra.mxu0 %v9719
        %10075 = vmatprep.subr.mxu0 %v9724
        %10076 = vmatpush1.msra.mxu0 %v9723
        %10077 = vmatprep.subr.mxu0 %v9728
        %10078 = vmatpush1.msra.mxu0 %v9727
        %10079 = vmatprep.subr.mxu0 %v9732
        %10080 = vmatpush1.msra.mxu0 %v9731
        %10081 = vmatprep.subr.mxu0 %v9736
        %10082 = vmatpush1.msra.mxu0 %v9735
        %10083 = vmatprep.mubr.f32.mxu0 %v8636
        %10084 = vmatmul.mubr.f32.gmra.mrb[0].mxu0 %v8635
        %v10085 = vpop.f32.mrb[0].mxu0
        %v10086 = vadd.f32 0.0, %v10085
        %v10087 = vpop.f32.mrb[0].mxu0
        %v10088 = vadd.f32 0.0, %v10087
        %10089 = vmatprep.mubr.f32.mxu0 %v8640
        %10090 = vmatmul.mubr.f32.gmra.mrb[0].mxu0 %v8639
        %v10091 = vpop.f32.mrb[0].mxu0
        %v10092 = vadd.f32 0.0, %v10091
        %v10093 = vpop.f32.mrb[0].mxu0
        %v10094 = vadd.f32 0.0, %v10093
        %10095 = vdwg.mxu0
        %10096 = vmatprep.subr.mxu0 %v9740
        %10097 = vmatpush1.msra.mxu0 %v9739
        %10098 = vmatprep.subr.mxu0 %v9744
        %10099 = vmatpush1.msra.mxu0 %v9743
        %10100 = vmatprep.subr.mxu0 %v9748
        %10101 = vmatpush1.msra.mxu0 %v9747
        %10102 = vmatprep.subr.mxu0 %v9752
        %10103 = vmatpush1.msra.mxu0 %v9751
        %10104 = vmatprep.subr.mxu0 %v9756
        %10105 = vmatpush1.msra.mxu0 %v9755
        %10106 = vmatprep.subr.mxu0 %v9760
        %10107 = vmatpush1.msra.mxu0 %v9759
        %10108 = vmatprep.subr.mxu0 %v9764
        %10109 = vmatpush1.msra.mxu0 %v9763
        %10110 = vmatprep.subr.mxu0 %v9768
        %10111 = vmatpush1.msra.mxu0 %v9767
        %10112 = vmatprep.subr.mxu0 %v9772
        %10113 = vmatpush1.msra.mxu0 %v9771
        %10114 = vmatprep.subr.mxu0 %v9776
        %10115 = vmatpush1.msra.mxu0 %v9775
        %10116 = vmatprep.subr.mxu0 %v9780
        %10117 = vmatpush1.msra.mxu0 %v9779
        %10118 = vmatprep.subr.mxu0 %v9784
        %10119 = vmatpush1.msra.mxu0 %v9783
        %10120 = vmatprep.subr.mxu0 %v9788
        %10121 = vmatpush1.msra.mxu0 %v9787
        %10122 = vmatprep.subr.mxu0 %v9792
        %10123 = vmatpush1.msra.mxu0 %v9791
        %10124 = vmatprep.subr.mxu0 %v9796
        %10125 = vmatpush1.msra.mxu0 %v9795
        %10126 = vmatprep.subr.mxu0 %v9800
        %10127 = vmatpush1.msra.mxu0 %v9799
        %10128 = vmatprep.subr.mxu0 %v9804
        %10129 = vmatpush1.msra.mxu0 %v9803
        %10130 = vmatprep.subr.mxu0 %v9808
        %10131 = vmatpush1.msra.mxu0 %v9807
        %10132 = vmatprep.subr.mxu0 %v9812
        %10133 = vmatpush1.msra.mxu0 %v9811
        %10134 = vmatprep.subr.mxu0 %v9816
        %10135 = vmatpush1.msra.mxu0 %v9815
        %10136 = vmatprep.subr.mxu0 %v9820
        %10137 = vmatpush1.msra.mxu0 %v9819
        %10138 = vmatprep.subr.mxu0 %v9824
        %10139 = vmatpush1.msra.mxu0 %v9823
        %10140 = vmatprep.subr.mxu0 %v9828
        %10141 = vmatpush1.msra.mxu0 %v9827
        %10142 = vmatprep.subr.mxu0 %v9832
        %10143 = vmatpush1.msra.mxu0 %v9831
        %10144 = vmatprep.subr.mxu0 %v9836
        %10145 = vmatpush1.msra.mxu0 %v9835
        %10146 = vmatprep.subr.mxu0 %v9840
        %10147 = vmatpush1.msra.mxu0 %v9839
        %10148 = vmatprep.subr.mxu0 %v9844
        %10149 = vmatpush1.msra.mxu0 %v9843
        %10150 = vmatprep.subr.mxu0 %v9848
        %10151 = vmatpush1.msra.mxu0 %v9847
        %10152 = vmatprep.subr.mxu0 %v9852
        %10153 = vmatpush1.msra.mxu0 %v9851
        %10154 = vmatprep.subr.mxu0 %v9856
        %10155 = vmatpush1.msra.mxu0 %v9855
        %10156 = vmatprep.subr.mxu0 %v9860
        %10157 = vmatpush1.msra.mxu0 %v9859
        %10158 = vmatprep.subr.mxu0 %v9864
        %10159 = vmatpush1.msra.mxu0 %v9863
        %10160 = vmatprep.mubr.f32.mxu0 %v8638
        %10161 = vmatmul.mubr.f32.gmra.mrb[0].mxu0 %v8637
        %v10162 = vpop.f32.mrb[0].mxu0
        %v10163 = vadd.f32 %v10086, %v10162
        %v10164 = vpop.f32.mrb[0].mxu0
        %v10165 = vadd.f32 %v10088, %v10164
        %10166 = vmatprep.mubr.f32.mxu0 %v8642
        %10167 = vmatmul.mubr.f32.gmra.mrb[0].mxu0 %v8641
        %v10168 = vpop.f32.mrb[0].mxu0
        %v10169 = vadd.f32 %v10092, %v10168
        %v10170 = vpop.f32.mrb[0].mxu0
        %v10171 = vadd.f32 %v10094, %v10170
        %10172 = vdwg.mxu0
        %v10173 = vadd.f32 %v10009, %v10015
        %v10174 = vrot.slane %v10173, 4
        %v10175 = vadd.f32 %v10173, %v10174
        %v10176 = vrot.slane %v10175, 2
        %v10177 = vadd.f32 %v10175, %v10176
        %v10178 = vrot.slane %v10177, 1
        %v10179 = vadd.f32 %v10177, %v10178
        %v10180 = vadd.f32 %v10011, %v10017
        %v10181 = vrot.slane %v10180, 4
        %v10182 = vadd.f32 %v10180, %v10181
        %v10183 = vrot.slane %v10182, 2
        %v10184 = vadd.f32 %v10182, %v10183
        %v10185 = vrot.slane %v10184, 1
        %v10186 = vadd.f32 %v10184, %v10185
        %v10187 = vadd.f32 %v10163, %v10169
        %v10188 = vrot.slane %v10187, 4
        %v10189 = vadd.f32 %v10187, %v10188
        %v10190 = vrot.slane %v10189, 2
        %v10191 = vadd.f32 %v10189, %v10190
        %v10192 = vrot.slane %v10191, 1
        %v10193 = vadd.f32 %v10191, %v10192
        %v10194 = vadd.f32 %v10165, %v10171
        %v10195 = vrot.slane %v10194, 4
        %v10196 = vadd.f32 %v10194, %v10195
        %v10197 = vrot.slane %v10196, 2
        %v10198 = vadd.f32 %v10196, %v10197
        %v10199 = vrot.slane %v10198, 1
        %v10200 = vadd.f32 %v10198, %v10199
        %v10201 = vrcp.pop 16.0
        %v10202 = vmul.f32 %v10179, %v10201
        %v10203 = vmul.f32 %v10186, %v10201
        %v10204 = vmul.f32 %v10193, %v10201
        %v10205 = vmul.f32 %v10200, %v10201
        %v10206 = vld [vmem:[#allocation27] sm:$0xf]
        %v10207 = vld [vmem:[#allocation23] ss:$2 sm:$0xf]
        %v10209 = vlaneseq
        %v10210 = vshrl.u32 %v10209, 7
        %v10211 = vsub.s32 0, %v10210
        %v10212 = vrot.slane %v10207, %v10211
        %v10213 = vlaneseq
        %v10214 = vshrl.u32 %v10213, 7
        %v10215 = vsub.s32 1, %v10214
        %v10216 = vrot.slane %v10207, %v10215
        %v10217 = vlaneseq
        %v10218 = vshrl.u32 %v10217, 7
        %v10219 = vsub.s32 2, %v10218
        %v10220 = vrot.slane %v10207, %v10219
        %v10221 = vlaneseq
        %v10222 = vshrl.u32 %v10221, 7
        %v10223 = vsub.s32 3, %v10222
        %v10224 = vrot.slane %v10207, %v10223
        %v10229 = vmul.f32 %v10202, %v10212
        %v10230 = vmul.f32 %v10203, %v10216
        %v10231 = vmul.f32 %v10204, %v10220
        %v10232 = vmul.f32 %v10205, %v10224
        %v10233 = vsel %vm1817, %v10229, 0.0
        %v10234 = vsel %vm1817, %v10230, 0.0
        %v10235 = vadd.f32 %v10233, %v10234
        %v10236 = vsel %vm1817, %v10231, 0.0
        %v10237 = vadd.f32 %v10235, %v10236
        %v10238 = vsel %vm1817, %v10232, 0.0
        %v10239 = vadd.f32 %v10237, %v10238
        %10240 = vadd.xlane.f32.xlu0 %v10239
        %v10241 = vpop.xlane.xlu0 %10240
        %s10242 = sld [smem:[#allocation25]]
        %v10243 = vstv %s10242
        %v10244 = vadd.f32 %v10241, %v10243
        %v10245 = vmax.f32 %v10244, 0.0
        %v10246 = vld [vmem:[#allocation26] ss:$2 sm:$0xf]
        %v10248 = vlaneseq
        %v10249 = vshrl.u32 %v10248, 7
        %v10250 = vsub.s32 0, %v10249
        %v10251 = vrot.slane %v10246, %v10250
        %v10252 = vlaneseq
        %v10253 = vshrl.u32 %v10252, 7
        %v10254 = vsub.s32 1, %v10253
        %v10255 = vrot.slane %v10246, %v10254
        %v10256 = vlaneseq
        %v10257 = vshrl.u32 %v10256, 7
        %v10258 = vsub.s32 2, %v10257
        %v10259 = vrot.slane %v10246, %v10258
        %v10260 = vlaneseq
        %v10261 = vshrl.u32 %v10260, 7
        %v10262 = vsub.s32 3, %v10261
        %v10263 = vrot.slane %v10246, %v10262
        %v10268 = vmul.f32 %v10245, %v10251
        %v10269 = vmul.f32 %v10245, %v10255
        %v10270 = vmul.f32 %v10245, %v10259
        %v10271 = vmul.f32 %v10245, %v10263
        %v10276 = vcombine.low %v10268, %v10269
        %v10277 = vcombine.low %v10270, %v10271
        %v10279 = vunpack.c.l.s4 1966171168
        %v10280 = vunpack.c.0.s8 %v10279
        %v10281 = vlaneseq
        %v10282 = vshrl.u32 %v10281, 7
        %v10283 = vsub.s32 %v10280, %v10282
        %v10284 = vrot.slane %v10276, %v10283
        %v10286 = vunpack.c.l.s4 1966171168
        %v10287 = vunpack.c.0.s8 %v10286
        %v10288 = vlaneseq
        %v10289 = vshrl.u32 %v10288, 7
        %v10290 = vsub.s32 %v10287, %v10289
        %v10291 = vrot.slane %v10277, %v10290
        %v10292 = vcombine.low %v10284, %v10291
        %v10294 = vunpack.c.l.s4 1966171168
        %v10295 = vunpack.c.0.s8 %v10294
        %v10296 = vlaneseq
        %v10297 = vshrl.u32 %v10296, 7
        %v10298 = vsub.s32 %v10295, %v10297
        %v10299 = vrot.slane %v10292, %v10298
        %v10301 = vadd.f32 %v10206, %v10299
        %s10302 = scalar_lea.vmem [#allocation23], 1
        %v10303 = vld [vmem:[%s10302] ss:$2 sm:$0xf]
        %v10305 = vlaneseq
        %v10306 = vshrl.u32 %v10305, 7
        %v10307 = vsub.s32 0, %v10306
        %v10308 = vrot.slane %v10303, %v10307
        %v10309 = vlaneseq
        %v10310 = vshrl.u32 %v10309, 7
        %v10311 = vsub.s32 1, %v10310
        %v10312 = vrot.slane %v10303, %v10311
        %v10313 = vlaneseq
        %v10314 = vshrl.u32 %v10313, 7
        %v10315 = vsub.s32 2, %v10314
        %v10316 = vrot.slane %v10303, %v10315
        %v10317 = vlaneseq
        %v10318 = vshrl.u32 %v10317, 7
        %v10319 = vsub.s32 3, %v10318
        %v10320 = vrot.slane %v10303, %v10319
        %v10325 = vmul.f32 %v10202, %v10308
        %v10326 = vmul.f32 %v10203, %v10312
        %v10327 = vmul.f32 %v10204, %v10316
        %v10328 = vmul.f32 %v10205, %v10320
        %v10329 = vsel %vm1817, %v10325, 0.0
        %v10330 = vsel %vm1817, %v10326, 0.0
        %v10331 = vadd.f32 %v10329, %v10330
        %v10332 = vsel %vm1817, %v10327, 0.0
        %v10333 = vadd.f32 %v10331, %v10332
        %v10334 = vsel %vm1817, %v10328, 0.0
        %v10335 = vadd.f32 %v10333, %v10334
        %10336 = vadd.xlane.f32.xlu0 %v10335
        %v10337 = vpop.xlane.xlu0 %10336
        %s10338 = sld [smem:[#allocation25 + $0x1]]
        %v10339 = vstv %s10338
        %v10340 = vadd.f32 %v10337, %v10339
        %v10341 = vmax.f32 %v10340, 0.0
        %s10342 = scalar_lea.vmem [#allocation26], 1
        %v10343 = vld [vmem:[%s10342] ss:$2 sm:$0xf]
        %v10345 = vlaneseq
        %v10346 = vshrl.u32 %v10345, 7
        %v10347 = vsub.s32 0, %v10346
        %v10348 = vrot.slane %v10343, %v10347
        %v10349 = vlaneseq
        %v10350 = vshrl.u32 %v10349, 7
        %v10351 = vsub.s32 1, %v10350
        %v10352 = vrot.slane %v10343, %v10351
        %v10353 = vlaneseq
        %v10354 = vshrl.u32 %v10353, 7
        %v10355 = vsub.s32 2, %v10354
        %v10356 = vrot.slane %v10343, %v10355
        %v10357 = vlaneseq
        %v10358 = vshrl.u32 %v10357, 7
        %v10359 = vsub.s32 3, %v10358
        %v10360 = vrot.slane %v10343, %v10359
        %v10365 = vmul.f32 %v10341, %v10348
        %v10366 = vmul.f32 %v10341, %v10352
        %v10367 = vmul.f32 %v10341, %v10356
        %v10368 = vmul.f32 %v10341, %v10360
        %v10373 = vcombine.low %v10365, %v10366
        %v10374 = vcombine.low %v10367, %v10368
        %v10376 = vunpack.c.l.s4 1966171168
        %v10377 = vunpack.c.0.s8 %v10376
        %v10378 = vlaneseq
        %v10379 = vshrl.u32 %v10378, 7
        %v10380 = vsub.s32 %v10377, %v10379
        %v10381 = vrot.slane %v10373, %v10380
        %v10383 = vunpack.c.l.s4 1966171168
        %v10384 = vunpack.c.0.s8 %v10383
        %v10385 = vlaneseq
        %v10386 = vshrl.u32 %v10385, 7
        %v10387 = vsub.s32 %v10384, %v10386
        %v10388 = vrot.slane %v10374, %v10387
        %v10389 = vcombine.low %v10381, %v10388
        %v10391 = vunpack.c.l.s4 1966171168
        %v10392 = vunpack.c.0.s8 %v10391
        %v10393 = vlaneseq
        %v10394 = vshrl.u32 %v10393, 7
        %v10395 = vsub.s32 %v10392, %v10394
        %v10396 = vrot.slane %v10389, %v10395
        %v10398 = vadd.f32 %v10301, %v10396
        %v10399 = vsub.f32 0.0, %v10398
        %v10400 = vmul.f32 %v10399, 1.442695
        %v10401 = vpow.pop %v10400
        %v10402 = vadd.f32 %v10401, 1.0
        %v10403 = vrcp.pop %v10402
        %v10404 = vmul.f32 1.0, %v10403
        %v10406 = vlaneseq
        %v10407 = vshrl.u32 %v10406, 7
        %v10408 = vsub.s32 0, %v10407
        %v10409 = vrot.slane %v10404, %v10408
        %v10410 = vlaneseq
        %v10411 = vshrl.u32 %v10410, 7
        %v10412 = vsub.s32 1, %v10411
        %v10413 = vrot.slane %v10404, %v10412
        %v10414 = vlaneseq
        %v10415 = vshrl.u32 %v10414, 7
        %v10416 = vsub.s32 2, %v10415
        %v10417 = vrot.slane %v10404, %v10416
        %v10418 = vlaneseq
        %v10419 = vshrl.u32 %v10418, 7
        %v10420 = vsub.s32 3, %v10419
        %v10421 = vrot.slane %v10404, %v10420
        %v10426 = vmul.f32 %v8635, %v10409
        %v10427 = vmul.f32 %v8636, %v10413
        %v10428 = vmul.f32 %v8637, %v10417
        %v10429 = vmul.f32 %v8638, %v10421
        %v10430 = vmul.f32 %v8639, %v10409
        %v10431 = vmul.f32 %v8640, %v10413
        %v10432 = vmul.f32 %v8641, %v10417
        %v10433 = vmul.f32 %v8642, %v10421
        %v10434 = vmul.f32 %v9515, %v10426
        %v10435 = vmul.f32 %v9517, %v10427
        %v10436 = vmul.f32 %v9601, %v10428
        %v10437 = vmul.f32 %v9603, %v10429
        %v10438 = vmul.f32 %v9519, %v10430
        %v10439 = vmul.f32 %v9521, %v10431
        %v10440 = vmul.f32 %v9605, %v10432
        %v10441 = vmul.f32 %v9607, %v10433
        %v10442 = vadd.f32 %v8635, %v10434
        %v10443 = vadd.f32 %v8636, %v10435
        %v10444 = vadd.f32 %v8637, %v10436
        %v10445 = vadd.f32 %v8638, %v10437
        %v10446 = vadd.f32 %v8639, %v10438
        %v10447 = vadd.f32 %v8640, %v10439
        %v10448 = vadd.f32 %v8641, %v10440
        %v10449 = vadd.f32 %v8642, %v10441
        %v10450 = vpack.c.bf16 %v10446, %v10442
        %v10451 = vpack.c.bf16 %v10447, %v10443
        %v10452 = vpack.c.bf16 %v10448, %v10444
        %v10453 = vpack.c.bf16 %v10449, %v10445
        %v10454 = vld [vmem:[#allocation29] sm:$0xff]
        %v10455 = vld [vmem:[#allocation29 + $0x8] sm:$0xff]
        %v10456 = vld [vmem:[#allocation29 + $0x10] sm:$0xff]
        %v10457 = vld [vmem:[#allocation29 + $0x18] sm:$0xff]
        %v10458 = vld [vmem:[#allocation29 + $0x20] sm:$0xff]
        %v10459 = vld [vmem:[#allocation29 + $0x28] sm:$0xff]
        %v10460 = vld [vmem:[#allocation29 + $0x30] sm:$0xff]
        %v10461 = vld [vmem:[#allocation29 + $0x38] sm:$0xff]
        %v10462 = vld [vmem:[#allocation29 + $0x40] sm:$0xff]
        %v10463 = vld [vmem:[#allocation29 + $0x48] sm:$0xff]
        %v10464 = vld [vmem:[#allocation29 + $0x50] sm:$0xff]
        %v10465 = vld [vmem:[#allocation29 + $0x58] sm:$0xff]
        %v10466 = vld [vmem:[#allocation29 + $0x60] sm:$0xff]
        %v10467 = vld [vmem:[#allocation29 + $0x68] sm:$0xff]
        %v10468 = vld [vmem:[#allocation29 + $0x70] sm:$0xff]
        %v10469 = vld [vmem:[#allocation29 + $0x78] sm:$0xff]
        %v10470 = vld [vmem:[#allocation29 + $0x80] sm:$0xff]
        %v10471 = vld [vmem:[#allocation29 + $0x88] sm:$0xff]
        %v10472 = vld [vmem:[#allocation29 + $0x90] sm:$0xff]
        %v10473 = vld [vmem:[#allocation29 + $0x98] sm:$0xff]
        %v10474 = vld [vmem:[#allocation29 + $0xa0] sm:$0xff]
        %v10475 = vld [vmem:[#allocation29 + $0xa8] sm:$0xff]
        %v10476 = vld [vmem:[#allocation29 + $0xb0] sm:$0xff]
        %v10477 = vld [vmem:[#allocation29 + $0xb8] sm:$0xff]
        %v10478 = vld [vmem:[#allocation29 + $0xc0] sm:$0xff]
        %v10479 = vld [vmem:[#allocation29 + $0xc8] sm:$0xff]
        %v10480 = vld [vmem:[#allocation29 + $0xd0] sm:$0xff]
        %v10481 = vld [vmem:[#allocation29 + $0xd8] sm:$0xff]
        %v10482 = vld [vmem:[#allocation29 + $0xe0] sm:$0xff]
        %v10483 = vld [vmem:[#allocation29 + $0xe8] sm:$0xff]
        %v10484 = vld [vmem:[#allocation29 + $0xf0] sm:$0xff]
        %v10485 = vld [vmem:[#allocation29 + $0xf8] sm:$0xff]
        %v10486 = vld [vmem:[#allocation29 + $0x100] sm:$0xff]
        %v10487 = vld [vmem:[#allocation29 + $0x108] sm:$0xff]
        %v10488 = vld [vmem:[#allocation29 + $0x110] sm:$0xff]
        %v10489 = vld [vmem:[#allocation29 + $0x118] sm:$0xff]
        %v10490 = vld [vmem:[#allocation29 + $0x120] sm:$0xff]
        %v10491 = vld [vmem:[#allocation29 + $0x128] sm:$0xff]
        %v10492 = vld [vmem:[#allocation29 + $0x130] sm:$0xff]
        %v10493 = vld [vmem:[#allocation29 + $0x138] sm:$0xff]
        %v10494 = vld [vmem:[#allocation29 + $0x140] sm:$0xff]
        %v10495 = vld [vmem:[#allocation29 + $0x148] sm:$0xff]
        %v10496 = vld [vmem:[#allocation29 + $0x150] sm:$0xff]
        %v10497 = vld [vmem:[#allocation29 + $0x158] sm:$0xff]
        %v10498 = vld [vmem:[#allocation29 + $0x160] sm:$0xff]
        %v10499 = vld [vmem:[#allocation29 + $0x168] sm:$0xff]
        %v10500 = vld [vmem:[#allocation29 + $0x170] sm:$0xff]
        %v10501 = vld [vmem:[#allocation29 + $0x178] sm:$0xff]
        %v10502 = vld [vmem:[#allocation29 + $0x180] sm:$0xff]
        %v10503 = vld [vmem:[#allocation29 + $0x188] sm:$0xff]
        %v10504 = vld [vmem:[#allocation29 + $0x190] sm:$0xff]
        %v10505 = vld [vmem:[#allocation29 + $0x198] sm:$0xff]
        %v10506 = vld [vmem:[#allocation29 + $0x1a0] sm:$0xff]
        %v10507 = vld [vmem:[#allocation29 + $0x1a8] sm:$0xff]
        %v10508 = vld [vmem:[#allocation29 + $0x1b0] sm:$0xff]
        %v10509 = vld [vmem:[#allocation29 + $0x1b8] sm:$0xff]
        %v10510 = vld [vmem:[#allocation29 + $0x1c0] sm:$0xff]
        %v10511 = vld [vmem:[#allocation29 + $0x1c8] sm:$0xff]
        %v10512 = vld [vmem:[#allocation29 + $0x1d0] sm:$0xff]
        %v10513 = vld [vmem:[#allocation29 + $0x1d8] sm:$0xff]
        %v10514 = vld [vmem:[#allocation29 + $0x1e0] sm:$0xff]
        %v10515 = vld [vmem:[#allocation29 + $0x1e8] sm:$0xff]
        %v10516 = vld [vmem:[#allocation29 + $0x1f0] sm:$0xff]
        %v10517 = vld [vmem:[#allocation29 + $0x1f8] sm:$0xff]
        %v10518 = vld [vmem:[#allocation29 + $0x200] sm:$0xff]
        %v10519 = vld [vmem:[#allocation29 + $0x208] sm:$0xff]
        %v10520 = vld [vmem:[#allocation29 + $0x210] sm:$0xff]
        %v10521 = vld [vmem:[#allocation29 + $0x218] sm:$0xff]
        %v10522 = vld [vmem:[#allocation29 + $0x220] sm:$0xff]
        %v10523 = vld [vmem:[#allocation29 + $0x228] sm:$0xff]
        %v10524 = vld [vmem:[#allocation29 + $0x230] sm:$0xff]
        %v10525 = vld [vmem:[#allocation29 + $0x238] sm:$0xff]
        %v10526 = vld [vmem:[#allocation29 + $0x240] sm:$0xff]
        %v10527 = vld [vmem:[#allocation29 + $0x248] sm:$0xff]
        %v10528 = vld [vmem:[#allocation29 + $0x250] sm:$0xff]
        %v10529 = vld [vmem:[#allocation29 + $0x258] sm:$0xff]
        %v10530 = vld [vmem:[#allocation29 + $0x260] sm:$0xff]
        %v10531 = vld [vmem:[#allocation29 + $0x268] sm:$0xff]
        %v10532 = vld [vmem:[#allocation29 + $0x270] sm:$0xff]
        %v10533 = vld [vmem:[#allocation29 + $0x278] sm:$0xff]
        %v10534 = vld [vmem:[#allocation29 + $0x280] sm:$0xff]
        %v10535 = vld [vmem:[#allocation29 + $0x288] sm:$0xff]
        %v10536 = vld [vmem:[#allocation29 + $0x290] sm:$0xff]
        %v10537 = vld [vmem:[#allocation29 + $0x298] sm:$0xff]
        %v10538 = vld [vmem:[#allocation29 + $0x2a0] sm:$0xff]
        %v10539 = vld [vmem:[#allocation29 + $0x2a8] sm:$0xff]
        %v10540 = vld [vmem:[#allocation29 + $0x2b0] sm:$0xff]
        %v10541 = vld [vmem:[#allocation29 + $0x2b8] sm:$0xff]
        %v10542 = vld [vmem:[#allocation29 + $0x2c0] sm:$0xff]
        %v10543 = vld [vmem:[#allocation29 + $0x2c8] sm:$0xff]
        %v10544 = vld [vmem:[#allocation29 + $0x2d0] sm:$0xff]
        %v10545 = vld [vmem:[#allocation29 + $0x2d8] sm:$0xff]
        %v10546 = vld [vmem:[#allocation29 + $0x2e0] sm:$0xff]
        %v10547 = vld [vmem:[#allocation29 + $0x2e8] sm:$0xff]
        %v10548 = vld [vmem:[#allocation29 + $0x2f0] sm:$0xff]
        %v10549 = vld [vmem:[#allocation29 + $0x2f8] sm:$0xff]
        %v10550 = vld [vmem:[#allocation29 + $0x300] sm:$0xff]
        %v10551 = vld [vmem:[#allocation29 + $0x308] sm:$0xff]
        %v10552 = vld [vmem:[#allocation29 + $0x310] sm:$0xff]
        %v10553 = vld [vmem:[#allocation29 + $0x318] sm:$0xff]
        %v10554 = vld [vmem:[#allocation29 + $0x320] sm:$0xff]
        %v10555 = vld [vmem:[#allocation29 + $0x328] sm:$0xff]
        %v10556 = vld [vmem:[#allocation29 + $0x330] sm:$0xff]
        %v10557 = vld [vmem:[#allocation29 + $0x338] sm:$0xff]
        %v10558 = vld [vmem:[#allocation29 + $0x340] sm:$0xff]
        %v10559 = vld [vmem:[#allocation29 + $0x348] sm:$0xff]
        %v10560 = vld [vmem:[#allocation29 + $0x350] sm:$0xff]
        %v10561 = vld [vmem:[#allocation29 + $0x358] sm:$0xff]
        %v10562 = vld [vmem:[#allocation29 + $0x360] sm:$0xff]
        %v10563 = vld [vmem:[#allocation29 + $0x368] sm:$0xff]
        %v10564 = vld [vmem:[#allocation29 + $0x370] sm:$0xff]
        %v10565 = vld [vmem:[#allocation29 + $0x378] sm:$0xff]
        %v10566 = vld [vmem:[#allocation29 + $0x380] sm:$0xff]
        %v10567 = vld [vmem:[#allocation29 + $0x388] sm:$0xff]
        %v10568 = vld [vmem:[#allocation29 + $0x390] sm:$0xff]
        %v10569 = vld [vmem:[#allocation29 + $0x398] sm:$0xff]
        %v10570 = vld [vmem:[#allocation29 + $0x3a0] sm:$0xff]
        %v10571 = vld [vmem:[#allocation29 + $0x3a8] sm:$0xff]
        %v10572 = vld [vmem:[#allocation29 + $0x3b0] sm:$0xff]
        %v10573 = vld [vmem:[#allocation29 + $0x3b8] sm:$0xff]
        %v10574 = vld [vmem:[#allocation29 + $0x3c0] sm:$0xff]
        %v10575 = vld [vmem:[#allocation29 + $0x3c8] sm:$0xff]
        %v10576 = vld [vmem:[#allocation29 + $0x3d0] sm:$0xff]
        %v10577 = vld [vmem:[#allocation29 + $0x3d8] sm:$0xff]
        %v10578 = vld [vmem:[#allocation29 + $0x3e0] sm:$0xff]
        %v10579 = vld [vmem:[#allocation29 + $0x3e8] sm:$0xff]
        %v10580 = vld [vmem:[#allocation29 + $0x3f0] sm:$0xff]
        %v10581 = vld [vmem:[#allocation29 + $0x3f8] sm:$0xff]
        %v10582 = vld [vmem:[#allocation30] sm:$0xf]
        %v10584 = vlaneseq
        %v10585 = vshrl.u32 %v10584, 7
        %v10586 = vsub.s32 0, %v10585
        %v10587 = vrot.slane %v10582, %v10586
        %v10588 = vlaneseq
        %v10589 = vshrl.u32 %v10588, 7
        %v10590 = vsub.s32 1, %v10589
        %v10591 = vrot.slane %v10582, %v10590
        %v10592 = vlaneseq
        %v10593 = vshrl.u32 %v10592, 7
        %v10594 = vsub.s32 2, %v10593
        %v10595 = vrot.slane %v10582, %v10594
        %v10596 = vlaneseq
        %v10597 = vshrl.u32 %v10596, 7
        %v10598 = vsub.s32 3, %v10597
        %v10599 = vrot.slane %v10582, %v10598
        %v10732 = vunpack.c.l.b16 %v10454
        %v10733 = vunpack.c.h.b16 %v10454
        %v10734 = vunpack.c.l.b16 %v10455
        %v10735 = vunpack.c.h.b16 %v10455
        %v10736 = vunpack.c.l.b16 %v10456
        %v10737 = vunpack.c.h.b16 %v10456
        %v10738 = vunpack.c.l.b16 %v10457
        %v10739 = vunpack.c.h.b16 %v10457
        %v10740 = vunpack.c.l.b16 %v10458
        %v10741 = vunpack.c.h.b16 %v10458
        %v10742 = vunpack.c.l.b16 %v10459
        %v10743 = vunpack.c.h.b16 %v10459
        %v10744 = vunpack.c.l.b16 %v10460
        %v10745 = vunpack.c.h.b16 %v10460
        %v10746 = vunpack.c.l.b16 %v10461
        %v10747 = vunpack.c.h.b16 %v10461
        %v10748 = vunpack.c.l.b16 %v10462
        %v10749 = vunpack.c.h.b16 %v10462
        %v10750 = vunpack.c.l.b16 %v10463
        %v10751 = vunpack.c.h.b16 %v10463
        %v10752 = vunpack.c.l.b16 %v10464
        %v10753 = vunpack.c.h.b16 %v10464
        %v10754 = vunpack.c.l.b16 %v10465
        %v10755 = vunpack.c.h.b16 %v10465
        %v10756 = vunpack.c.l.b16 %v10466
        %v10757 = vunpack.c.h.b16 %v10466
        %v10758 = vunpack.c.l.b16 %v10467
        %v10759 = vunpack.c.h.b16 %v10467
        %v10760 = vunpack.c.l.b16 %v10468
        %v10761 = vunpack.c.h.b16 %v10468
        %v10762 = vunpack.c.l.b16 %v10469
        %v10763 = vunpack.c.h.b16 %v10469
        %v10764 = vunpack.c.l.b16 %v10470
        %v10765 = vunpack.c.h.b16 %v10470
        %v10766 = vunpack.c.l.b16 %v10471
        %v10767 = vunpack.c.h.b16 %v10471
        %v10768 = vunpack.c.l.b16 %v10472
        %v10769 = vunpack.c.h.b16 %v10472
        %v10770 = vunpack.c.l.b16 %v10473
        %v10771 = vunpack.c.h.b16 %v10473
        %v10772 = vunpack.c.l.b16 %v10474
        %v10773 = vunpack.c.h.b16 %v10474
        %v10774 = vunpack.c.l.b16 %v10475
        %v10775 = vunpack.c.h.b16 %v10475
        %v10776 = vunpack.c.l.b16 %v10476
        %v10777 = vunpack.c.h.b16 %v10476
        %v10778 = vunpack.c.l.b16 %v10477
        %v10779 = vunpack.c.h.b16 %v10477
        %v10780 = vunpack.c.l.b16 %v10478
        %v10781 = vunpack.c.h.b16 %v10478
        %v10782 = vunpack.c.l.b16 %v10479
        %v10783 = vunpack.c.h.b16 %v10479
        %v10784 = vunpack.c.l.b16 %v10480
        %v10785 = vunpack.c.h.b16 %v10480
        %v10786 = vunpack.c.l.b16 %v10481
        %v10787 = vunpack.c.h.b16 %v10481
        %v10788 = vunpack.c.l.b16 %v10482
        %v10789 = vunpack.c.h.b16 %v10482
        %v10790 = vunpack.c.l.b16 %v10483
        %v10791 = vunpack.c.h.b16 %v10483
        %v10792 = vunpack.c.l.b16 %v10484
        %v10793 = vunpack.c.h.b16 %v10484
        %v10794 = vunpack.c.l.b16 %v10485
        %v10795 = vunpack.c.h.b16 %v10485
        %v10796 = vunpack.c.l.b16 %v10486
        %v10797 = vunpack.c.h.b16 %v10486
        %v10798 = vunpack.c.l.b16 %v10487
        %v10799 = vunpack.c.h.b16 %v10487
        %v10800 = vunpack.c.l.b16 %v10488
        %v10801 = vunpack.c.h.b16 %v10488
        %v10802 = vunpack.c.l.b16 %v10489
        %v10803 = vunpack.c.h.b16 %v10489
        %v10804 = vunpack.c.l.b16 %v10490
        %v10805 = vunpack.c.h.b16 %v10490
        %v10806 = vunpack.c.l.b16 %v10491
        %v10807 = vunpack.c.h.b16 %v10491
        %v10808 = vunpack.c.l.b16 %v10492
        %v10809 = vunpack.c.h.b16 %v10492
        %v10810 = vunpack.c.l.b16 %v10493
        %v10811 = vunpack.c.h.b16 %v10493
        %v10812 = vunpack.c.l.b16 %v10494
        %v10813 = vunpack.c.h.b16 %v10494
        %v10814 = vunpack.c.l.b16 %v10495
        %v10815 = vunpack.c.h.b16 %v10495
        %v10816 = vunpack.c.l.b16 %v10496
        %v10817 = vunpack.c.h.b16 %v10496
        %v10818 = vunpack.c.l.b16 %v10497
        %v10819 = vunpack.c.h.b16 %v10497
        %v10820 = vunpack.c.l.b16 %v10498
        %v10821 = vunpack.c.h.b16 %v10498
        %v10822 = vunpack.c.l.b16 %v10499
        %v10823 = vunpack.c.h.b16 %v10499
        %v10824 = vunpack.c.l.b16 %v10500
        %v10825 = vunpack.c.h.b16 %v10500
        %v10826 = vunpack.c.l.b16 %v10501
        %v10827 = vunpack.c.h.b16 %v10501
        %v10828 = vunpack.c.l.b16 %v10502
        %v10829 = vunpack.c.h.b16 %v10502
        %v10830 = vunpack.c.l.b16 %v10503
        %v10831 = vunpack.c.h.b16 %v10503
        %v10832 = vunpack.c.l.b16 %v10504
        %v10833 = vunpack.c.h.b16 %v10504
        %v10834 = vunpack.c.l.b16 %v10505
        %v10835 = vunpack.c.h.b16 %v10505
        %v10836 = vunpack.c.l.b16 %v10506
        %v10837 = vunpack.c.h.b16 %v10506
        %v10838 = vunpack.c.l.b16 %v10507
        %v10839 = vunpack.c.h.b16 %v10507
        %v10840 = vunpack.c.l.b16 %v10508
        %v10841 = vunpack.c.h.b16 %v10508
        %v10842 = vunpack.c.l.b16 %v10509
        %v10843 = vunpack.c.h.b16 %v10509
        %v10844 = vunpack.c.l.b16 %v10510
        %v10845 = vunpack.c.h.b16 %v10510
        %v10846 = vunpack.c.l.b16 %v10511
        %v10847 = vunpack.c.h.b16 %v10511
        %v10848 = vunpack.c.l.b16 %v10512
        %v10849 = vunpack.c.h.b16 %v10512
        %v10850 = vunpack.c.l.b16 %v10513
        %v10851 = vunpack.c.h.b16 %v10513
        %v10852 = vunpack.c.l.b16 %v10514
        %v10853 = vunpack.c.h.b16 %v10514
        %v10854 = vunpack.c.l.b16 %v10515
        %v10855 = vunpack.c.h.b16 %v10515
        %v10856 = vunpack.c.l.b16 %v10516
        %v10857 = vunpack.c.h.b16 %v10516
        %v10858 = vunpack.c.l.b16 %v10517
        %v10859 = vunpack.c.h.b16 %v10517
        %v10860 = vunpack.c.l.b16 %v10518
        %v10861 = vunpack.c.h.b16 %v10518
        %v10862 = vunpack.c.l.b16 %v10519
        %v10863 = vunpack.c.h.b16 %v10519
        %v10864 = vunpack.c.l.b16 %v10520
        %v10865 = vunpack.c.h.b16 %v10520
        %v10866 = vunpack.c.l.b16 %v10521
        %v10867 = vunpack.c.h.b16 %v10521
        %v10868 = vunpack.c.l.b16 %v10522
        %v10869 = vunpack.c.h.b16 %v10522
        %v10870 = vunpack.c.l.b16 %v10523
        %v10871 = vunpack.c.h.b16 %v10523
        %v10872 = vunpack.c.l.b16 %v10524
        %v10873 = vunpack.c.h.b16 %v10524
        %v10874 = vunpack.c.l.b16 %v10525
        %v10875 = vunpack.c.h.b16 %v10525
        %v10876 = vunpack.c.l.b16 %v10526
        %v10877 = vunpack.c.h.b16 %v10526
        %v10878 = vunpack.c.l.b16 %v10527
        %v10879 = vunpack.c.h.b16 %v10527
        %v10880 = vunpack.c.l.b16 %v10528
        %v10881 = vunpack.c.h.b16 %v10528
        %v10882 = vunpack.c.l.b16 %v10529
        %v10883 = vunpack.c.h.b16 %v10529
        %v10884 = vunpack.c.l.b16 %v10530
        %v10885 = vunpack.c.h.b16 %v10530
        %v10886 = vunpack.c.l.b16 %v10531
        %v10887 = vunpack.c.h.b16 %v10531
        %v10888 = vunpack.c.l.b16 %v10532
        %v10889 = vunpack.c.h.b16 %v10532
        %v10890 = vunpack.c.l.b16 %v10533
        %v10891 = vunpack.c.h.b16 %v10533
        %v10892 = vunpack.c.l.b16 %v10534
        %v10893 = vunpack.c.h.b16 %v10534
        %v10894 = vunpack.c.l.b16 %v10535
        %v10895 = vunpack.c.h.b16 %v10535
        %v10896 = vunpack.c.l.b16 %v10536
        %v10897 = vunpack.c.h.b16 %v10536
        %v10898 = vunpack.c.l.b16 %v10537
        %v10899 = vunpack.c.h.b16 %v10537
        %v10900 = vunpack.c.l.b16 %v10538
        %v10901 = vunpack.c.h.b16 %v10538
        %v10902 = vunpack.c.l.b16 %v10539
        %v10903 = vunpack.c.h.b16 %v10539
        %v10904 = vunpack.c.l.b16 %v10540
        %v10905 = vunpack.c.h.b16 %v10540
        %v10906 = vunpack.c.l.b16 %v10541
        %v10907 = vunpack.c.h.b16 %v10541
        %v10908 = vunpack.c.l.b16 %v10542
        %v10909 = vunpack.c.h.b16 %v10542
        %v10910 = vunpack.c.l.b16 %v10543
        %v10911 = vunpack.c.h.b16 %v10543
        %v10912 = vunpack.c.l.b16 %v10544
        %v10913 = vunpack.c.h.b16 %v10544
        %v10914 = vunpack.c.l.b16 %v10545
        %v10915 = vunpack.c.h.b16 %v10545
        %v10916 = vunpack.c.l.b16 %v10546
        %v10917 = vunpack.c.h.b16 %v10546
        %v10918 = vunpack.c.l.b16 %v10547
        %v10919 = vunpack.c.h.b16 %v10547
        %v10920 = vunpack.c.l.b16 %v10548
        %v10921 = vunpack.c.h.b16 %v10548
        %v10922 = vunpack.c.l.b16 %v10549
        %v10923 = vunpack.c.h.b16 %v10549
        %v10924 = vunpack.c.l.b16 %v10550
        %v10925 = vunpack.c.h.b16 %v10550
        %v10926 = vunpack.c.l.b16 %v10551
        %v10927 = vunpack.c.h.b16 %v10551
        %v10928 = vunpack.c.l.b16 %v10552
        %v10929 = vunpack.c.h.b16 %v10552
        %v10930 = vunpack.c.l.b16 %v10553
        %v10931 = vunpack.c.h.b16 %v10553
        %v10932 = vunpack.c.l.b16 %v10554
        %v10933 = vunpack.c.h.b16 %v10554
        %v10934 = vunpack.c.l.b16 %v10555
        %v10935 = vunpack.c.h.b16 %v10555
        %v10936 = vunpack.c.l.b16 %v10556
        %v10937 = vunpack.c.h.b16 %v10556
        %v10938 = vunpack.c.l.b16 %v10557
        %v10939 = vunpack.c.h.b16 %v10557
        %v10940 = vunpack.c.l.b16 %v10558
        %v10941 = vunpack.c.h.b16 %v10558
        %v10942 = vunpack.c.l.b16 %v10559
        %v10943 = vunpack.c.h.b16 %v10559
        %v10944 = vunpack.c.l.b16 %v10560
        %v10945 = vunpack.c.h.b16 %v10560
        %v10946 = vunpack.c.l.b16 %v10561
        %v10947 = vunpack.c.h.b16 %v10561
        %v10948 = vunpack.c.l.b16 %v10562
        %v10949 = vunpack.c.h.b16 %v10562
        %v10950 = vunpack.c.l.b16 %v10563
        %v10951 = vunpack.c.h.b16 %v10563
        %v10952 = vunpack.c.l.b16 %v10564
        %v10953 = vunpack.c.h.b16 %v10564
        %v10954 = vunpack.c.l.b16 %v10565
        %v10955 = vunpack.c.h.b16 %v10565
        %v10956 = vunpack.c.l.b16 %v10566
        %v10957 = vunpack.c.h.b16 %v10566
        %v10958 = vunpack.c.l.b16 %v10567
        %v10959 = vunpack.c.h.b16 %v10567
        %v10960 = vunpack.c.l.b16 %v10568
        %v10961 = vunpack.c.h.b16 %v10568
        %v10962 = vunpack.c.l.b16 %v10569
        %v10963 = vunpack.c.h.b16 %v10569
        %v10964 = vunpack.c.l.b16 %v10570
        %v10965 = vunpack.c.h.b16 %v10570
        %v10966 = vunpack.c.l.b16 %v10571
        %v10967 = vunpack.c.h.b16 %v10571
        %v10968 = vunpack.c.l.b16 %v10572
        %v10969 = vunpack.c.h.b16 %v10572
        %v10970 = vunpack.c.l.b16 %v10573
        %v10971 = vunpack.c.h.b16 %v10573
        %v10972 = vunpack.c.l.b16 %v10574
        %v10973 = vunpack.c.h.b16 %v10574
        %v10974 = vunpack.c.l.b16 %v10575
        %v10975 = vunpack.c.h.b16 %v10575
        %v10976 = vunpack.c.l.b16 %v10576
        %v10977 = vunpack.c.h.b16 %v10576
        %v10978 = vunpack.c.l.b16 %v10577
        %v10979 = vunpack.c.h.b16 %v10577
        %v10980 = vunpack.c.l.b16 %v10578
        %v10981 = vunpack.c.h.b16 %v10578
        %v10982 = vunpack.c.l.b16 %v10579
        %v10983 = vunpack.c.h.b16 %v10579
        %v10984 = vunpack.c.l.b16 %v10580
        %v10985 = vunpack.c.h.b16 %v10580
        %v10986 = vunpack.c.l.b16 %v10581
        %v10987 = vunpack.c.h.b16 %v10581
        %v10988 = vpack.c.b16 %v10736, %v10732
        %v10989 = vpack.c.b16 %v10737, %v10733
        %v10990 = vpack.c.b16 %v10738, %v10734
        %v10991 = vpack.c.b16 %v10739, %v10735
        %v10992 = vpack.c.b16 %v10744, %v10740
        %v10993 = vpack.c.b16 %v10745, %v10741
        %v10994 = vpack.c.b16 %v10746, %v10742
        %v10995 = vpack.c.b16 %v10747, %v10743
        %v10996 = vpack.c.b16 %v10752, %v10748
        %v10997 = vpack.c.b16 %v10753, %v10749
        %v10998 = vpack.c.b16 %v10754, %v10750
        %v10999 = vpack.c.b16 %v10755, %v10751
        %v11000 = vpack.c.b16 %v10760, %v10756
        %v11001 = vpack.c.b16 %v10761, %v10757
        %v11002 = vpack.c.b16 %v10762, %v10758
        %v11003 = vpack.c.b16 %v10763, %v10759
        %v11004 = vpack.c.b16 %v10768, %v10764
        %v11005 = vpack.c.b16 %v10769, %v10765
        %v11006 = vpack.c.b16 %v10770, %v10766
        %v11007 = vpack.c.b16 %v10771, %v10767
        %v11008 = vpack.c.b16 %v10776, %v10772
        %v11009 = vpack.c.b16 %v10777, %v10773
        %v11010 = vpack.c.b16 %v10778, %v10774
        %v11011 = vpack.c.b16 %v10779, %v10775
        %v11012 = vpack.c.b16 %v10784, %v10780
        %v11013 = vpack.c.b16 %v10785, %v10781
        %v11014 = vpack.c.b16 %v10786, %v10782
        %v11015 = vpack.c.b16 %v10787, %v10783
        %v11016 = vpack.c.b16 %v10792, %v10788
        %v11017 = vpack.c.b16 %v10793, %v10789
        %v11018 = vpack.c.b16 %v10794, %v10790
        %v11019 = vpack.c.b16 %v10795, %v10791
        %v11020 = vpack.c.b16 %v10800, %v10796
        %v11021 = vpack.c.b16 %v10801, %v10797
        %v11022 = vpack.c.b16 %v10802, %v10798
        %v11023 = vpack.c.b16 %v10803, %v10799
        %v11024 = vpack.c.b16 %v10808, %v10804
        %v11025 = vpack.c.b16 %v10809, %v10805
        %v11026 = vpack.c.b16 %v10810, %v10806
        %v11027 = vpack.c.b16 %v10811, %v10807
        %v11028 = vpack.c.b16 %v10816, %v10812
        %v11029 = vpack.c.b16 %v10817, %v10813
        %v11030 = vpack.c.b16 %v10818, %v10814
        %v11031 = vpack.c.b16 %v10819, %v10815
        %v11032 = vpack.c.b16 %v10824, %v10820
        %v11033 = vpack.c.b16 %v10825, %v10821
        %v11034 = vpack.c.b16 %v10826, %v10822
        %v11035 = vpack.c.b16 %v10827, %v10823
        %v11036 = vpack.c.b16 %v10832, %v10828
        %v11037 = vpack.c.b16 %v10833, %v10829
        %v11038 = vpack.c.b16 %v10834, %v10830
        %v11039 = vpack.c.b16 %v10835, %v10831
        %v11040 = vpack.c.b16 %v10840, %v10836
        %v11041 = vpack.c.b16 %v10841, %v10837
        %v11042 = vpack.c.b16 %v10842, %v10838
        %v11043 = vpack.c.b16 %v10843, %v10839
        %v11044 = vpack.c.b16 %v10848, %v10844
        %v11045 = vpack.c.b16 %v10849, %v10845
        %v11046 = vpack.c.b16 %v10850, %v10846
        %v11047 = vpack.c.b16 %v10851, %v10847
        %v11048 = vpack.c.b16 %v10856, %v10852
        %v11049 = vpack.c.b16 %v10857, %v10853
        %v11050 = vpack.c.b16 %v10858, %v10854
        %v11051 = vpack.c.b16 %v10859, %v10855
        %v11052 = vpack.c.b16 %v10864, %v10860
        %v11053 = vpack.c.b16 %v10865, %v10861
        %v11054 = vpack.c.b16 %v10866, %v10862
        %v11055 = vpack.c.b16 %v10867, %v10863
        %v11056 = vpack.c.b16 %v10872, %v10868
        %v11057 = vpack.c.b16 %v10873, %v10869
        %v11058 = vpack.c.b16 %v10874, %v10870
        %v11059 = vpack.c.b16 %v10875, %v10871
        %v11060 = vpack.c.b16 %v10880, %v10876
        %v11061 = vpack.c.b16 %v10881, %v10877
        %v11062 = vpack.c.b16 %v10882, %v10878
        %v11063 = vpack.c.b16 %v10883, %v10879
        %v11064 = vpack.c.b16 %v10888, %v10884
        %v11065 = vpack.c.b16 %v10889, %v10885
        %v11066 = vpack.c.b16 %v10890, %v10886
        %v11067 = vpack.c.b16 %v10891, %v10887
        %v11068 = vpack.c.b16 %v10896, %v10892
        %v11069 = vpack.c.b16 %v10897, %v10893
        %v11070 = vpack.c.b16 %v10898, %v10894
        %v11071 = vpack.c.b16 %v10899, %v10895
        %v11072 = vpack.c.b16 %v10904, %v10900
        %v11073 = vpack.c.b16 %v10905, %v10901
        %v11074 = vpack.c.b16 %v10906, %v10902
        %v11075 = vpack.c.b16 %v10907, %v10903
        %v11076 = vpack.c.b16 %v10912, %v10908
        %v11077 = vpack.c.b16 %v10913, %v10909
        %v11078 = vpack.c.b16 %v10914, %v10910
        %v11079 = vpack.c.b16 %v10915, %v10911
        %v11080 = vpack.c.b16 %v10920, %v10916
        %v11081 = vpack.c.b16 %v10921, %v10917
        %v11082 = vpack.c.b16 %v10922, %v10918
        %v11083 = vpack.c.b16 %v10923, %v10919
        %v11084 = vpack.c.b16 %v10928, %v10924
        %v11085 = vpack.c.b16 %v10929, %v10925
        %v11086 = vpack.c.b16 %v10930, %v10926
        %v11087 = vpack.c.b16 %v10931, %v10927
        %v11088 = vpack.c.b16 %v10936, %v10932
        %v11089 = vpack.c.b16 %v10937, %v10933
        %v11090 = vpack.c.b16 %v10938, %v10934
        %v11091 = vpack.c.b16 %v10939, %v10935
        %v11092 = vpack.c.b16 %v10944, %v10940
        %v11093 = vpack.c.b16 %v10945, %v10941
        %v11094 = vpack.c.b16 %v10946, %v10942
        %v11095 = vpack.c.b16 %v10947, %v10943
        %v11096 = vpack.c.b16 %v10952, %v10948
        %v11097 = vpack.c.b16 %v10953, %v10949
        %v11098 = vpack.c.b16 %v10954, %v10950
        %v11099 = vpack.c.b16 %v10955, %v10951
        %v11100 = vpack.c.b16 %v10960, %v10956
        %v11101 = vpack.c.b16 %v10961, %v10957
        %v11102 = vpack.c.b16 %v10962, %v10958
        %v11103 = vpack.c.b16 %v10963, %v10959
        %v11104 = vpack.c.b16 %v10968, %v10964
        %v11105 = vpack.c.b16 %v10969, %v10965
        %v11106 = vpack.c.b16 %v10970, %v10966
        %v11107 = vpack.c.b16 %v10971, %v10967
        %v11108 = vpack.c.b16 %v10976, %v10972
        %v11109 = vpack.c.b16 %v10977, %v10973
        %v11110 = vpack.c.b16 %v10978, %v10974
        %v11111 = vpack.c.b16 %v10979, %v10975
        %v11112 = vpack.c.b16 %v10984, %v10980
        %v11113 = vpack.c.b16 %v10985, %v10981
        %v11114 = vpack.c.b16 %v10986, %v10982
        %v11115 = vpack.c.b16 %v10987, %v10983
        %11244 = vmatprep.subr.bf16.mxu0 %v10989
        %11245 = vmatpush1.bf16.msra.mxu0 %v10988
        %11246 = vmatprep.subr.bf16.mxu0 %v10993
        %11247 = vmatpush1.bf16.msra.mxu0 %v10992
        %11248 = vmatprep.subr.bf16.mxu0 %v10997
        %11249 = vmatpush1.bf16.msra.mxu0 %v10996
        %11250 = vmatprep.subr.bf16.mxu0 %v11001
        %11251 = vmatpush1.bf16.msra.mxu0 %v11000
        %11252 = vmatprep.subr.bf16.mxu0 %v11005
        %11253 = vmatpush1.bf16.msra.mxu0 %v11004
        %11254 = vmatprep.subr.bf16.mxu0 %v11009
        %11255 = vmatpush1.bf16.msra.mxu0 %v11008
        %11256 = vmatprep.subr.bf16.mxu0 %v11013
        %11257 = vmatpush1.bf16.msra.mxu0 %v11012
        %11258 = vmatprep.subr.bf16.mxu0 %v11017
        %11259 = vmatpush1.bf16.msra.mxu0 %v11016
        %11260 = vmatprep.subr.bf16.mxu0 %v11021
        %11261 = vmatpush1.bf16.msra.mxu0 %v11020
        %11262 = vmatprep.subr.bf16.mxu0 %v11025
        %11263 = vmatpush1.bf16.msra.mxu0 %v11024
        %11264 = vmatprep.subr.bf16.mxu0 %v11029
        %11265 = vmatpush1.bf16.msra.mxu0 %v11028
        %11266 = vmatprep.subr.bf16.mxu0 %v11033
        %11267 = vmatpush1.bf16.msra.mxu0 %v11032
        %11268 = vmatprep.subr.bf16.mxu0 %v11037
        %11269 = vmatpush1.bf16.msra.mxu0 %v11036
        %11270 = vmatprep.subr.bf16.mxu0 %v11041
        %11271 = vmatpush1.bf16.msra.mxu0 %v11040
        %11272 = vmatprep.subr.bf16.mxu0 %v11045
        %11273 = vmatpush1.bf16.msra.mxu0 %v11044
        %11274 = vmatprep.subr.bf16.mxu0 %v11049
        %11275 = vmatpush1.bf16.msra.mxu0 %v11048
        %11276 = vmatprep.mubr.bf16.mxu0 %v10451
        %11277 = vmatmul.mubr.bf16.gmra.mrb[0].mxu0 %v10450
        %v11278 = vpop.f32.mrb[0].mxu0
        %v11279 = vadd.f32 %v10587, %v11278
        %v11280 = vpop.f32.mrb[0].mxu0
        %v11281 = vadd.f32 %v10591, %v11280
        %v11282 = vpop.f32.mrb[0].mxu0
        %v11283 = vadd.f32 %v10587, %v11282
        %v11284 = vpop.f32.mrb[0].mxu0
        %v11285 = vadd.f32 %v10591, %v11284
        %11286 = vdwg.mxu0
        %11287 = vmatprep.subr.bf16.mxu0 %v11053
        %11288 = vmatpush1.bf16.msra.mxu0 %v11052
        %11289 = vmatprep.subr.bf16.mxu0 %v11057
        %11290 = vmatpush1.bf16.msra.mxu0 %v11056
        %11291 = vmatprep.subr.bf16.mxu0 %v11061
        %11292 = vmatpush1.bf16.msra.mxu0 %v11060
        %11293 = vmatprep.subr.bf16.mxu0 %v11065
        %11294 = vmatpush1.bf16.msra.mxu0 %v11064
        %11295 = vmatprep.subr.bf16.mxu0 %v11069
        %11296 = vmatpush1.bf16.msra.mxu0 %v11068
        %11297 = vmatprep.subr.bf16.mxu0 %v11073
        %11298 = vmatpush1.bf16.msra.mxu0 %v11072
        %11299 = vmatprep.subr.bf16.mxu0 %v11077
        %11300 = vmatpush1.bf16.msra.mxu0 %v11076
        %11301 = vmatprep.subr.bf16.mxu0 %v11081
        %11302 = vmatpush1.bf16.msra.mxu0 %v11080
        %11303 = vmatprep.subr.bf16.mxu0 %v11085
        %11304 = vmatpush1.bf16.msra.mxu0 %v11084
        %11305 = vmatprep.subr.bf16.mxu0 %v11089
        %11306 = vmatpush1.bf16.msra.mxu0 %v11088
        %11307 = vmatprep.subr.bf16.mxu0 %v11093
        %11308 = vmatpush1.bf16.msra.mxu0 %v11092
        %11309 = vmatprep.subr.bf16.mxu0 %v11097
        %11310 = vmatpush1.bf16.msra.mxu0 %v11096
        %11311 = vmatprep.subr.bf16.mxu0 %v11101
        %11312 = vmatpush1.bf16.msra.mxu0 %v11100
        %11313 = vmatprep.subr.bf16.mxu0 %v11105
        %11314 = vmatpush1.bf16.msra.mxu0 %v11104
        %11315 = vmatprep.subr.bf16.mxu0 %v11109
        %11316 = vmatpush1.bf16.msra.mxu0 %v11108
        %11317 = vmatprep.subr.bf16.mxu0 %v11113
        %11318 = vmatpush1.bf16.msra.mxu0 %v11112
        %11319 = vmatprep.mubr.bf16.mxu0 %v10453
        %11320 = vmatmul.mubr.bf16.gmra.mrb[0].mxu0 %v10452
        %v11321 = vpop.f32.mrb[0].mxu0
        %v11322 = vadd.f32 %v11279, %v11321
        %v11323 = vpop.f32.mrb[0].mxu0
        %v11324 = vadd.f32 %v11281, %v11323
        %v11325 = vpop.f32.mrb[0].mxu0
        %v11326 = vadd.f32 %v11283, %v11325
        %v11327 = vpop.f32.mrb[0].mxu0
        %v11328 = vadd.f32 %v11285, %v11327
        %11329 = vdwg.mxu0
        %11330 = vmatprep.subr.bf16.mxu0 %v10991
        %11331 = vmatpush1.bf16.msra.mxu0 %v10990
        %11332 = vmatprep.subr.bf16.mxu0 %v10995
        %11333 = vmatpush1.bf16.msra.mxu0 %v10994
        %11334 = vmatprep.subr.bf16.mxu0 %v10999
        %11335 = vmatpush1.bf16.msra.mxu0 %v10998
        %11336 = vmatprep.subr.bf16.mxu0 %v11003
        %11337 = vmatpush1.bf16.msra.mxu0 %v11002
        %11338 = vmatprep.subr.bf16.mxu0 %v11007
        %11339 = vmatpush1.bf16.msra.mxu0 %v11006
        %11340 = vmatprep.subr.bf16.mxu0 %v11011
        %11341 = vmatpush1.bf16.msra.mxu0 %v11010
        %11342 = vmatprep.subr.bf16.mxu0 %v11015
        %11343 = vmatpush1.bf16.msra.mxu0 %v11014
        %11344 = vmatprep.subr.bf16.mxu0 %v11019
        %11345 = vmatpush1.bf16.msra.mxu0 %v11018
        %11346 = vmatprep.subr.bf16.mxu0 %v11023
        %11347 = vmatpush1.bf16.msra.mxu0 %v11022
        %11348 = vmatprep.subr.bf16.mxu0 %v11027
        %11349 = vmatpush1.bf16.msra.mxu0 %v11026
        %11350 = vmatprep.subr.bf16.mxu0 %v11031
        %11351 = vmatpush1.bf16.msra.mxu0 %v11030
        %11352 = vmatprep.subr.bf16.mxu0 %v11035
        %11353 = vmatpush1.bf16.msra.mxu0 %v11034
        %11354 = vmatprep.subr.bf16.mxu0 %v11039
        %11355 = vmatpush1.bf16.msra.mxu0 %v11038
        %11356 = vmatprep.subr.bf16.mxu0 %v11043
        %11357 = vmatpush1.bf16.msra.mxu0 %v11042
        %11358 = vmatprep.subr.bf16.mxu0 %v11047
        %11359 = vmatpush1.bf16.msra.mxu0 %v11046
        %11360 = vmatprep.subr.bf16.mxu0 %v11051
        %11361 = vmatpush1.bf16.msra.mxu0 %v11050
        %11362 = vmatprep.mubr.bf16.mxu0 %v10451
        %11363 = vmatmul.mubr.bf16.gmra.mrb[0].mxu0 %v10450
        %v11364 = vpop.f32.mrb[0].mxu0
        %v11365 = vadd.f32 %v10595, %v11364
        %v11366 = vpop.f32.mrb[0].mxu0
        %v11367 = vadd.f32 %v10599, %v11366
        %v11368 = vpop.f32.mrb[0].mxu0
        %v11369 = vadd.f32 %v10595, %v11368
        %v11370 = vpop.f32.mrb[0].mxu0
        %v11371 = vadd.f32 %v10599, %v11370
        %11372 = vdwg.mxu0
        %11373 = vmatprep.subr.bf16.mxu0 %v11055
        %11374 = vmatpush1.bf16.msra.mxu0 %v11054
        %11375 = vmatprep.subr.bf16.mxu0 %v11059
        %11376 = vmatpush1.bf16.msra.mxu0 %v11058
        %11377 = vmatprep.subr.bf16.mxu0 %v11063
        %11378 = vmatpush1.bf16.msra.mxu0 %v11062
        %11379 = vmatprep.subr.bf16.mxu0 %v11067
        %11380 = vmatpush1.bf16.msra.mxu0 %v11066
        %11381 = vmatprep.subr.bf16.mxu0 %v11071
        %11382 = vmatpush1.bf16.msra.mxu0 %v11070
        %11383 = vmatprep.subr.bf16.mxu0 %v11075
        %11384 = vmatpush1.bf16.msra.mxu0 %v11074
        %11385 = vmatprep.subr.bf16.mxu0 %v11079
        %11386 = vmatpush1.bf16.msra.mxu0 %v11078
        %11387 = vmatprep.subr.bf16.mxu0 %v11083
        %11388 = vmatpush1.bf16.msra.mxu0 %v11082
        %11389 = vmatprep.subr.bf16.mxu0 %v11087
        %11390 = vmatpush1.bf16.msra.mxu0 %v11086
        %11391 = vmatprep.subr.bf16.mxu0 %v11091
        %11392 = vmatpush1.bf16.msra.mxu0 %v11090
        %11393 = vmatprep.subr.bf16.mxu0 %v11095
        %11394 = vmatpush1.bf16.msra.mxu0 %v11094
        %11395 = vmatprep.subr.bf16.mxu0 %v11099
        %11396 = vmatpush1.bf16.msra.mxu0 %v11098
        %11397 = vmatprep.subr.bf16.mxu0 %v11103
        %11398 = vmatpush1.bf16.msra.mxu0 %v11102
        %11399 = vmatprep.subr.bf16.mxu0 %v11107
        %11400 = vmatpush1.bf16.msra.mxu0 %v11106
        %11401 = vmatprep.subr.bf16.mxu0 %v11111
        %11402 = vmatpush1.bf16.msra.mxu0 %v11110
        %11403 = vmatprep.subr.bf16.mxu0 %v11115
        %11404 = vmatpush1.bf16.msra.mxu0 %v11114
        %11405 = vmatprep.mubr.bf16.mxu0 %v10453
        %11406 = vmatmul.mubr.bf16.gmra.mrb[0].mxu0 %v10452
        %v11407 = vpop.f32.mrb[0].mxu0
        %v11408 = vadd.f32 %v11365, %v11407
        %v11409 = vpop.f32.mrb[0].mxu0
        %v11410 = vadd.f32 %v11367, %v11409
        %v11411 = vpop.f32.mrb[0].mxu0
        %v11412 = vadd.f32 %v11369, %v11411
        %v11413 = vpop.f32.mrb[0].mxu0
        %v11414 = vadd.f32 %v11371, %v11413
        %11415 = vdwg.mxu0
        %v11416 = vadd.f32 %v837, %v11322
        %v11417 = vadd.f32 %v838, %v11324
        %v11418 = vadd.f32 %v839, %v11408
        %v11419 = vadd.f32 %v840, %v11410
        %v11420 = vadd.f32 %v841, %v11326
        %v11421 = vadd.f32 %v842, %v11328
        %v11422 = vadd.f32 %v843, %v11412
        %v11423 = vadd.f32 %v844, %v11414
        %11424 = vst [vmem:[%s836] sm:$0xff] %v11416
        %11425 = vst [vmem:[%s836 + $0x8] sm:$0xff] %v11417
        %11426 = vst [vmem:[%s836 + $0x10] sm:$0xff] %v11418
        %11427 = vst [vmem:[%s836 + $0x18] sm:$0xff] %v11419
        %11428 = vst [vmem:[%s836 + $0x20] sm:$0xff] %v11420
        %11429 = vst [vmem:[%s836 + $0x28] sm:$0xff] %v11421
        %11430 = vst [vmem:[%s836 + $0x30] sm:$0xff] %v11422
        %11431 = vst [vmem:[%s836 + $0x38] sm:$0xff] %v11423
        %s11432 = sand.u32 %s459, 1
        %s11433 = scalar_lea.sflag [#allocation6], %s11432
        %s11434 = sand.u32 %s459, 1
        %s11435 = smul.addr %s11434, 64
        %s11436 = scalar_lea.vmem [#allocation32], %s11435
        // Predicated region
        $region165: #{tpu_custom_call.1} parent=95 // pred_check
          %p11437 = pneg %p469
        $region166: #{tpu_custom_call.1} parent=95 // pred_check_branch
          %11439 = sbr.rel (%p11437) target = $region168
        $region167: #{tpu_custom_call.1} parent=95 // pred_region
          %s11441 = ssub.s32 1024, 1024
          %11442 = vsyncadd %s11433, %s11441
          %s11443 = smul.addr %s47, 8
          %s11444 = smul.addr %s11443, 128
          %s11445 = scalar_lea.hbm %s19, %s11444
          %s11446 = sshll.u32 %s11436, 4
          %s11447 = int_to_ptr.vmem [resolvable:$true] %s11446
          %11452 = dma.vmem_to_hbm [thread:$0]  %s11447, 1024, %s11445, %s11433, 512, 512, 32
        $region168: #{tpu_custom_call.1} parent=95 // pred_fallthru
          _
      $region96: #{tpu_custom_call.1} parent=5 // pred_fallthru
        _
      %p11453 = scmp.le.s32.totalorder 2, %s42
      // Predicated region
      $region169: #{tpu_custom_call.1} parent=5 // pred_check
        %p11454 = pneg %p11453
      $region170: #{tpu_custom_call.1} parent=5 // pred_check_branch
        %11456 = sbr.rel (%p11454) target = $region172
      $region171: #{tpu_custom_call.1} parent=5 // pred_region
        %s11457 = ssub.s32 %s42, 2
        // Predicated region
        $region173: #{tpu_custom_call.1} parent=171 // pred_check
          %p11458 = pneg %p475
        $region174: #{tpu_custom_call.1} parent=171 // pred_check_branch
          %11460 = sbr.rel (%p11458) target = $region176
        $region175: #{tpu_custom_call.1} parent=171 // pred_region
          %s11461 = sand.u32 %s460, 1
          %s11462 = scalar_lea.sflag [#allocation6], %s11461
          %s11463 = sand.u32 %s460, 1
          %s11464 = smul.addr %s11463, 64
          %s11465 = scalar_lea.vmem [#allocation32], %s11464
          %11466 = dma.done %s11462, 1024
        $region176: #{tpu_custom_call.1} parent=171 // pred_fallthru
          _
      $region172: #{tpu_custom_call.1} parent=5 // pred_fallthru
        _
    $region6: #{tpu_custom_call.1} parent=1 // loop_footer
      %s46 = sadd.s32 1, %s42
    $region7: #{tpu_custom_call.1} parent=1 // loop_footer_branch
      %41 = sbr.rel target = $region3
    $region8: #{tpu_custom_call.1} parent=1 // loop_exit
      _
    %11467 = vsyncpa [#allocation5], 1
    %s11468 = scalar_lea.sflag [#allocation5], 1
    %11469 = vsyncpa %s11468, 1
    %11470 = vsyncpa [#allocation9], 1
    %11471 = vsyncpa [#allocation12], 1
    %11472 = vsyncpa [#allocation15], 1
    %11473 = vsyncpa [#allocation18], 1
    %11474 = vsyncpa [#allocation21], 1
    %11475 = vsyncpa [#allocation24], 1
    %11476 = vsyncpa [#allocation28], 1
    %11477 = vsyncpa [#allocation31], 1
    %11478 = vsyncpa [#allocation6], 1
    %s11479 = scalar_lea.sflag [#allocation6], 1
    %11480 = vsyncpa %s11479, 1
    %11481 = vsyncpa [#allocation7], 1
    %s11482 = scalar_lea.sflag [#allocation7], 1
    %11483 = vsyncpa %s11482, 1

</llo_original>
